<compile_context>
chip_gen: v6e
topology: v6e:2x2x1
jax: 0.10.0
libtpu: 0.0.40
codegen_flags: <defaults>
</compile_context>

<pallas_src>
import math

import jax
import jax.numpy as jnp
from jax import lax
from jax.experimental import pallas as pl
from jax.experimental.pallas import tpu as pltpu


def _pick_rows_per_block(H, W, rows_per_block, db_bytes_per_row, vmem_budget):
    """Low-res rows processed per grid step.

    If th < H, th*W must be a multiple of 128 so every flattened lane
    offset/extent stays 128-aligned (dense vld/vst).  th == H (full extent)
    is always legal per the BlockSpec rules.
    """
    u = 128 // math.gcd(W, 128)          # th must be a multiple of u (if th < H)
    if u >= H:
        return H
    th = max(u, (min(rows_per_block, H) // u) * u)
    while th > u and th * db_bytes_per_row > vmem_budget:
        th -= u
    return H if th >= H else th


def weak_deconv(x, skip, conv_w, bn_gamma, bn_beta, bn_mean, bn_var,
                eps=1e-5, rows_per_block=8, compute_dtype=None, out_dtype=None,
                precision=None, vmem_budget_bytes=24 * 1024 * 1024,
                vmem_limit_bytes=48 * 1024 * 1024):
    """WeakDeconv forward (inference-mode BN), NCHW in / NCHW out.

    x:    (N, in_c, H, W)          skip: (N, skip_c, 2H, 2W)
    compute_dtype: storage/DMA dtype of the activations inside the kernel
      (bf16 halves input bandwidth; best when upstream already produces bf16,
       otherwise the wrapper cast adds one extra pass over the inputs).
    out_dtype: output store dtype (bf16 halves output bandwidth).
    """
    N, in_c, H, W = x.shape
    Ns, skip_c, H2, W2 = skip.shape
    assert Ns == N and H2 == 2 * H and W2 == 2 * W
    out_c, C = conv_w.shape[0], conv_w.shape[1]
    assert C == in_c + skip_c and conv_w.shape[2] == 1 and conv_w.shape[3] == 1

    S, S2 = H * W, H2 * W2
    cd = x.dtype if compute_dtype is None else jnp.dtype(compute_dtype)
    od = x.dtype if out_dtype is None else jnp.dtype(out_dtype)
    if precision is None:
        precision = (lax.Precision.HIGHEST if cd == jnp.float32
                     else lax.Precision.DEFAULT)

    # Free metadata reshapes (NCHW kept end-to-end, no transposes, no pads).
    x_flat = x.astype(cd).reshape(N, in_c, S)
    skip_flat = skip.astype(cd).reshape(N, skip_c, S2)

    # Fold BatchNorm (inference running stats) into f32 weights + bias.
    inv = (bn_gamma.astype(jnp.float32)
           / jnp.sqrt(bn_var.astype(jnp.float32) + eps))                # (out_c,)
    w = conv_w.reshape(out_c, C).astype(jnp.float32) * inv[:, None]
    wx = w[:, :in_c]                                                    # (out_c, in_c)  f32
    ws = w[:, in_c:]                                                    # (out_c, skip_c) f32
    bias = (bn_beta.astype(jnp.float32)
            - bn_mean.astype(jnp.float32) * inv).reshape(out_c, 1)      # (out_c, 1) f32

    # Width-expansion matrix for the fused nearest upsample along W:
    #   E[j, p] = 1  iff  p // 2 == j   (so  row @ E  duplicates every column).
    expand = (jnp.arange(2 * W)[None, :] // 2
              == jnp.arange(W)[:, None]).astype(cd)                     # (W, 2W)

    act_b = jnp.dtype(cd).itemsize
    out_b = jnp.dtype(od).itemsize
    # Double-buffered bytes per low-res row (x + skip + out).
    db_bytes_per_row = 2 * W * (in_c * act_b + 4 * skip_c * act_b + 4 * out_c * out_b)
    th = _pick_rows_per_block(H, W, rows_per_block, db_bytes_per_row,
                              vmem_budget_bytes)
    n_row_blocks = pl.cdiv(H, th)        # partial final block handled by Pallas
    ts_lo = th * W                       # low-res lanes per block (x)
    ts_hi = th * 4 * W                   # high-res lanes per block (skip / out)

    def kernel(x_ref, skip_ref, e_ref, wx_ref, ws_ref, b_ref, o_ref):
        # x_ref:    (in_c,   ts_lo)   low-res x rows        (activation dtype)
        # skip_ref: (skip_c, ts_hi)   matching skip rows    (activation dtype)
        # e_ref:    (W, 2W)           0/1 width-expansion   (activation dtype)
        # wx_ref:   (out_c, in_c)     BN-folded weights, x path   (f32)
        # ws_ref:   (out_c, skip_c)   BN-folded weights, skip path (f32)
        # b_ref:    (out_c, 1)        folded BN bias (f32)
        # o_ref:    (out_c, ts_hi)
        e = e_ref[...]
        wxv = wx_ref[...]
        wsv = ws_ref[...]
        bv = b_ref[...]

        def row_body(r, carry):
            # --- x path at low resolution, widened on the MXU (exact dup) ---
            x_row = x_ref[:, pl.ds(r * W, W)]                          # (in_c, W)
            x_wide = jnp.dot(x_row, e, precision=precision,
                             preferred_element_type=jnp.float32)       # (in_c, 2W)
            z_wide = jnp.dot(wxv, x_wide, precision=precision,
                             preferred_element_type=jnp.float32)       # (out_c, 2W)
            # --- skip path at high resolution (one super-row = 2 output rows) ---
            s_row = skip_ref[:, pl.ds(r * (4 * W), 4 * W)]             # (skip_c, 4W)
            acc = jnp.dot(wsv, s_row, precision=precision,
                          preferred_element_type=jnp.float32)          # (out_c, 4W)
            # row doubling: the widened x contribution is identical for both
            # output rows of the pair -> just reuse it for each half.
            acc = acc + jnp.concatenate([z_wide, z_wide], axis=-1) + bv
            o_ref[:, pl.ds(r * (4 * W), 4 * W)] = (
                jnp.maximum(acc, 0.0).astype(o_ref.dtype))             # ReLU
            return carry

        if th <= 32:                     # static unroll for short row groups
            for r in range(th):
                row_body(r, 0)
        else:                            # avoid huge unrolls on odd shapes
            lax.fori_loop(0, th, row_body, 0)

    flops = (2 * N * S2 * out_c * (in_c + skip_c)       # 1x1 conv
             + 2 * N * S * in_c * 2 * W)                # in-kernel expansion dot
    bytes_accessed = (N * (in_c * S * act_b + skip_c * S2 * act_b
                           + out_c * S2 * out_b)
                      + (out_c * (in_c + skip_c) + out_c) * 4
                      + W * 2 * W * act_b)
    cost = pl.CostEstimate(flops=int(flops), transcendentals=0,
                           bytes_accessed=int(bytes_accessed))

    # Grid note (v7x): both axes are 'parallel'; N * n_row_blocks grid points
    # feed the two TensorCores.  For realistic decoder shapes this is large.
    out = pl.pallas_call(
        kernel,
        out_shape=jax.ShapeDtypeStruct((N, out_c, S2), od),
        grid=(N, n_row_blocks),
        in_specs=[
            pl.BlockSpec((None, in_c, ts_lo), lambda n, rb: (n, 0, rb)),
            pl.BlockSpec((None, skip_c, ts_hi), lambda n, rb: (n, 0, rb)),
            pl.BlockSpec((W, 2 * W), lambda n, rb: (0, 0)),
            pl.BlockSpec((out_c, in_c), lambda n, rb: (0, 0)),
            pl.BlockSpec((out_c, skip_c), lambda n, rb: (0, 0)),
            pl.BlockSpec((out_c, 1), lambda n, rb: (0, 0)),
        ],
        out_specs=pl.BlockSpec((None, out_c, ts_hi), lambda n, rb: (n, 0, rb)),
        compiler_params=pltpu.CompilerParams(
            dimension_semantics=("parallel", "parallel"),
            vmem_limit_bytes=vmem_limit_bytes),
        cost_estimate=cost,
    )(x_flat, skip_flat, expand, wx, ws, bias)

    return out.reshape(N, out_c, H2, W2)     # free reshape back to NCHW


def weak_deconv_ref(x, skip, conv_w, bn_gamma, bn_beta, bn_mean, bn_var,
                    eps=1e-5):
    """Pure-JAX reference mirroring the PyTorch op sequence (eval-mode BN)."""
    x_up = jnp.repeat(jnp.repeat(x, 2, axis=2), 2, axis=3)
    xc = jnp.concatenate([x_up, skip], axis=1)
    w = conv_w.reshape(conv_w.shape[0], conv_w.shape[1])          # (out_c, C)
    y = jnp.einsum('nchw,oc->nohw', xc, w, precision='highest')
    inv = bn_gamma / jnp.sqrt(bn_var + eps)
    y = (y - bn_mean[None, :, None, None]) * inv[None, :, None, None] \
        + bn_beta[None, :, None, None]
    return jnp.maximum(y, 0.0)


if __name__ == "__main__":
    key = jax.random.PRNGKey(0)
    ks = jax.random.split(key, 20)

    def make_params(kset, in_c, skip_c, out_c):
        C = in_c + skip_c
        conv_w = jax.random.normal(kset[0], (out_c, C, 1, 1), jnp.float32) * 0.1
        gamma = 1.0 + 0.1 * jax.random.normal(kset[1], (out_c,), jnp.float32)
        beta = 0.1 * jax.random.normal(kset[2], (out_c,), jnp.float32)
        mean = 0.05 * jax.random.normal(kset[3], (out_c,), jnp.float32)
        var = jnp.abs(1.0 + 0.1 * jax.random.normal(kset[4], (out_c,),
                                                    jnp.float32))
        return conv_w, gamma, beta, mean, var

    # Case 1: WeakDeconv(in_c=8, skip_c=8) -> out_c = min(skip_c, 128) = 8,
    # 8x8 low-res input (exercises the full-extent row-group path).
    N, in_c, skip_c, H, W = 2, 8, 8, 8, 8
    out_c = min(skip_c, 128)
    x1 = jax.random.normal(ks[0], (N, in_c, H, W), jnp.float32)
    s1 = jax.random.normal(ks[1], (N, skip_c, 2 * H, 2 * W), jnp.float32)
    p1 = make_params(ks[2:7], in_c, skip_c, out_c)
    ref1 = weak_deconv_ref(x1, s1, *p1)
    out1 = jax.block_until_ready(weak_deconv(x1, s1, *p1))
    assert out1.shape == (N, out_c, 2 * H, 2 * W), out1.shape
    err1 = float(jnp.max(jnp.abs(out1 - ref1)))
    assert err1 < 1e-3, err1

    # Case 2: tiled row-group path (several row blocks per image, in_c != skip_c).
    N, in_c, skip_c, H, W = 1, 4, 8, 16, 32
    out_c = min(skip_c, 128)
    x2 = jax.random.normal(ks[7], (N, in_c, H, W), jnp.float32)
    s2 = jax.random.normal(ks[8], (N, skip_c, 2 * H, 2 * W), jnp.float32)
    p2 = make_params(ks[9:14], in_c, skip_c, out_c)
    ref2 = weak_deconv_ref(x2, s2, *p2)
    out2 = jax.block_until_ready(weak_deconv(x2, s2, *p2))
    assert out2.shape == (N, out_c, 2 * H, 2 * W), out2.shape
    err2 = float(jnp.max(jnp.abs(out2 - ref2)))
    assert err2 < 1e-3, err2

    # Case 3: bf16 activations + bf16 output (bandwidth-optimized path).
    out3 = jax.block_until_ready(
        weak_deconv(x2, s2, *p2, compute_dtype=jnp.bfloat16,
                    out_dtype=jnp.bfloat16))
    assert out3.dtype == jnp.bfloat16
    err3 = float(jnp.max(jnp.abs(out3.astype(jnp.float32) - ref2)))
    assert err3 < 5e-2, err3

    print("KERNEL_OK")
</pallas_src>

<mosaic_0001>
module attributes {stable_mosaic.version = 11 : i64} {
  func.func @kernel(%arg0: i32, %arg1: i32, %arg2: memref<1x8x64xf32, #tpu.memory_space<vmem>>, %arg3: memref<1x8x256xf32, #tpu.memory_space<vmem>>, %arg4: memref<8x16xf32, #tpu.memory_space<vmem>>, %arg5: memref<8x8xf32, #tpu.memory_space<vmem>>, %arg6: memref<8x8xf32, #tpu.memory_space<vmem>>, %arg7: memref<8x1xf32, #tpu.memory_space<vmem>>, %arg8: memref<1x8x256xf32, #tpu.memory_space<vmem>>) attributes {dimension_semantics = [#tpu.dimension_semantics<parallel>, #tpu.dimension_semantics<parallel>], iteration_bounds = array<i64: 2, 1>, scalar_prefetch = 0 : i64, scratch_operands = 0 : i64, tpu.core_type = #tpu.core_type<tc>, window_params = [{transform_indices = @transform_0, window_bounds = array<i64: 1, 8, 64>}, {transform_indices = @transform_1, window_bounds = array<i64: 1, 8, 256>}, {pipeline_mode = #tpu.pipeline_mode<synchronous>, transform_indices = @transform_2, window_bounds = array<i64: 8, 16>}, {pipeline_mode = #tpu.pipeline_mode<synchronous>, transform_indices = @transform_3, window_bounds = array<i64: 8, 8>}, {pipeline_mode = #tpu.pipeline_mode<synchronous>, transform_indices = @transform_4, window_bounds = array<i64: 8, 8>}, {pipeline_mode = #tpu.pipeline_mode<synchronous>, transform_indices = @transform_5, window_bounds = array<i64: 8, 1>}, {transform_indices = @transform_6, window_bounds = array<i64: 1, 8, 256>}]} {
    %c0 = arith.constant 0 : index
    %c0_0 = arith.constant 0 : index
    %0 = vector.load %arg4[%c0, %c0_0] : memref<8x16xf32, #tpu.memory_space<vmem>>, vector<8x16xf32>
    %c0_1 = arith.constant 0 : index
    %c0_2 = arith.constant 0 : index
    %1 = vector.load %arg5[%c0_1, %c0_2] : memref<8x8xf32, #tpu.memory_space<vmem>>, vector<8x8xf32>
    %c0_3 = arith.constant 0 : index
    %c0_4 = arith.constant 0 : index
    %2 = vector.load %arg6[%c0_3, %c0_4] : memref<8x8xf32, #tpu.memory_space<vmem>>, vector<8x8xf32>
    %c0_5 = arith.constant 0 : index
    %c0_6 = arith.constant 0 : index
    %3 = vector.load %arg7[%c0_5, %c0_6] : memref<8x1xf32, #tpu.memory_space<vmem>>, vector<8x1xf32>
    %c0_7 = arith.constant 0 : index
    %c0_8 = arith.constant 0 : index
    %c0_9 = arith.constant 0 : index
    %4 = vector.load %arg2[%c0_7, %c0_8, %c0_9] : memref<1x8x64xf32, #tpu.memory_space<vmem>>, vector<1x8x8xf32>
    %5 = vector.shape_cast %4 : vector<1x8x8xf32> to vector<8x8xf32>
    %cst = arith.constant dense<0.000000e+00> : vector<8x16xf32>
    %6 = tpu.matmul %5, %0, %cst {dimension_numbers = #tpu.dot_dimension_numbers<[1], [0], [0], [1], [0, 0, 1, 1], [], []>, precision = #tpu.contract_precision<fp32>} : vector<8x8xf32>, vector<8x16xf32>, vector<8x16xf32> -> vector<8x16xf32>
    %cst_10 = arith.constant dense<0.000000e+00> : vector<8x16xf32>
    %7 = tpu.matmul %1, %6, %cst_10 {dimension_numbers = #tpu.dot_dimension_numbers<[1], [0], [0], [1], [0, 0, 1, 1], [], []>, precision = #tpu.contract_precision<fp32>} : vector<8x8xf32>, vector<8x16xf32>, vector<8x16xf32> -> vector<8x16xf32>
    %c0_11 = arith.constant 0 : index
    %c0_12 = arith.constant 0 : index
    %c0_13 = arith.constant 0 : index
    %8 = vector.load %arg3[%c0_11, %c0_12, %c0_13] : memref<1x8x256xf32, #tpu.memory_space<vmem>>, vector<1x8x32xf32>
    %9 = vector.shape_cast %8 : vector<1x8x32xf32> to vector<8x32xf32>
    %cst_14 = arith.constant dense<0.000000e+00> : vector<8x32xf32>
    %10 = tpu.matmul %2, %9, %cst_14 {dimension_numbers = #tpu.dot_dimension_numbers<[1], [0], [0], [1], [0, 0, 1, 1], [], []>, precision = #tpu.contract_precision<fp32>} : vector<8x8xf32>, vector<8x32xf32>, vector<8x32xf32> -> vector<8x32xf32>
    %11 = tpu.concatenate %7, %7 in 1 : vector<8x16xf32>, vector<8x16xf32> -> vector<8x32xf32>
    %12 = arith.addf %10, %11 : vector<8x32xf32>
    %13 = vector.broadcast %3 : vector<8x1xf32> to vector<8x32xf32>
    %14 = arith.addf %12, %13 : vector<8x32xf32>
    %cst_15 = arith.constant 0.000000e+00 : f32
    %15 = vector.broadcast %cst_15 : f32 to vector<8x32xf32>
    %16 = arith.maximumf %14, %15 : vector<8x32xf32>
    %c0_16 = arith.constant 0 : index
    %c0_17 = arith.constant 0 : index
    %c0_18 = arith.constant 0 : index
    %17 = vector.load %arg8[%c0_16, %c0_17, %c0_18] : memref<1x8x256xf32, #tpu.memory_space<vmem>>, vector<1x8x32xf32>
    %18 = vector.shape_cast %17 : vector<1x8x32xf32> to vector<8x32xf32>
    %19 = vector.shape_cast %16 : vector<8x32xf32> to vector<1x8x32xf32>
    tpu.vector_store %arg8[%c0_16, %c0_17, %c0_18], %19 {strides = array<i32>} : memref<1x8x256xf32, #tpu.memory_space<vmem>>, vector<1x8x32xf32>,
    %c0_19 = arith.constant 0 : index
    %c0_20 = arith.constant 0 : index
    %c8 = arith.constant 8 : index
    %20 = vector.load %arg2[%c0_19, %c0_20, %c8] : memref<1x8x64xf32, #tpu.memory_space<vmem>>, vector<1x8x8xf32>
    %21 = vector.shape_cast %20 : vector<1x8x8xf32> to vector<8x8xf32>
    %cst_21 = arith.constant dense<0.000000e+00> : vector<8x16xf32>
    %22 = tpu.matmul %21, %0, %cst_21 {dimension_numbers = #tpu.dot_dimension_numbers<[1], [0], [0], [1], [0, 0, 1, 1], [], []>, precision = #tpu.contract_precision<fp32>} : vector<8x8xf32>, vector<8x16xf32>, vector<8x16xf32> -> vector<8x16xf32>
    %cst_22 = arith.constant dense<0.000000e+00> : vector<8x16xf32>
    %23 = tpu.matmul %1, %22, %cst_22 {dimension_numbers = #tpu.dot_dimension_numbers<[1], [0], [0], [1], [0, 0, 1, 1], [], []>, precision = #tpu.contract_precision<fp32>} : vector<8x8xf32>, vector<8x16xf32>, vector<8x16xf32> -> vector<8x16xf32>
    %c0_23 = arith.constant 0 : index
    %c0_24 = arith.constant 0 : index
    %c32 = arith.constant 32 : index
    %24 = vector.load %arg3[%c0_23, %c0_24, %c32] : memref<1x8x256xf32, #tpu.memory_space<vmem>>, vector<1x8x32xf32>
    %25 = vector.shape_cast %24 : vector<1x8x32xf32> to vector<8x32xf32>
    %cst_25 = arith.constant dense<0.000000e+00> : vector<8x32xf32>
    %26 = tpu.matmul %2, %25, %cst_25 {dimension_numbers = #tpu.dot_dimension_numbers<[1], [0], [0], [1], [0, 0, 1, 1], [], []>, precision = #tpu.contract_precision<fp32>} : vector<8x8xf32>, vector<8x32xf32>, vector<8x32xf32> -> vector<8x32xf32>
    %27 = tpu.concatenate %23, %23 in 1 : vector<8x16xf32>, vector<8x16xf32> -> vector<8x32xf32>
    %28 = arith.addf %26, %27 : vector<8x32xf32>
    %29 = vector.broadcast %3 : vector<8x1xf32> to vector<8x32xf32>
    %30 = arith.addf %28, %29 : vector<8x32xf32>
    %cst_26 = arith.constant 0.000000e+00 : f32
    %31 = vector.broadcast %cst_26 : f32 to vector<8x32xf32>
    %32 = arith.maximumf %30, %31 : vector<8x32xf32>
    %c0_27 = arith.constant 0 : index
    %c0_28 = arith.constant 0 : index
    %c32_29 = arith.constant 32 : index
    %33 = vector.load %arg8[%c0_27, %c0_28, %c32_29] : memref<1x8x256xf32, #tpu.memory_space<vmem>>, vector<1x8x32xf32>
    %34 = vector.shape_cast %33 : vector<1x8x32xf32> to vector<8x32xf32>
    %35 = vector.shape_cast %32 : vector<8x32xf32> to vector<1x8x32xf32>
    tpu.vector_store %arg8[%c0_27, %c0_28, %c32_29], %35 {strides = array<i32>} : memref<1x8x256xf32, #tpu.memory_space<vmem>>, vector<1x8x32xf32>,
    %c0_30 = arith.constant 0 : index
    %c0_31 = arith.constant 0 : index
    %c16 = arith.constant 16 : index
    %36 = vector.load %arg2[%c0_30, %c0_31, %c16] : memref<1x8x64xf32, #tpu.memory_space<vmem>>, vector<1x8x8xf32>
    %37 = vector.shape_cast %36 : vector<1x8x8xf32> to vector<8x8xf32>
    %cst_32 = arith.constant dense<0.000000e+00> : vector<8x16xf32>
    %38 = tpu.matmul %37, %0, %cst_32 {dimension_numbers = #tpu.dot_dimension_numbers<[1], [0], [0], [1], [0, 0, 1, 1], [], []>, precision = #tpu.contract_precision<fp32>} : vector<8x8xf32>, vector<8x16xf32>, vector<8x16xf32> -> vector<8x16xf32>
    %cst_33 = arith.constant dense<0.000000e+00> : vector<8x16xf32>
    %39 = tpu.matmul %1, %38, %cst_33 {dimension_numbers = #tpu.dot_dimension_numbers<[1], [0], [0], [1], [0, 0, 1, 1], [], []>, precision = #tpu.contract_precision<fp32>} : vector<8x8xf32>, vector<8x16xf32>, vector<8x16xf32> -> vector<8x16xf32>
    %c0_34 = arith.constant 0 : index
    %c0_35 = arith.constant 0 : index
    %c64 = arith.constant 64 : index
    %40 = vector.load %arg3[%c0_34, %c0_35, %c64] : memref<1x8x256xf32, #tpu.memory_space<vmem>>, vector<1x8x32xf32>
    %41 = vector.shape_cast %40 : vector<1x8x32xf32> to vector<8x32xf32>
    %cst_36 = arith.constant dense<0.000000e+00> : vector<8x32xf32>
    %42 = tpu.matmul %2, %41, %cst_36 {dimension_numbers = #tpu.dot_dimension_numbers<[1], [0], [0], [1], [0, 0, 1, 1], [], []>, precision = #tpu.contract_precision<fp32>} : vector<8x8xf32>, vector<8x32xf32>, vector<8x32xf32> -> vector<8x32xf32>
    %43 = tpu.concatenate %39, %39 in 1 : vector<8x16xf32>, vector<8x16xf32> -> vector<8x32xf32>
    %44 = arith.addf %42, %43 : vector<8x32xf32>
    %45 = vector.broadcast %3 : vector<8x1xf32> to vector<8x32xf32>
    %46 = arith.addf %44, %45 : vector<8x32xf32>
    %cst_37 = arith.constant 0.000000e+00 : f32
    %47 = vector.broadcast %cst_37 : f32 to vector<8x32xf32>
    %48 = arith.maximumf %46, %47 : vector<8x32xf32>
    %c0_38 = arith.constant 0 : index
    %c0_39 = arith.constant 0 : index
    %c64_40 = arith.constant 64 : index
    %49 = vector.load %arg8[%c0_38, %c0_39, %c64_40] : memref<1x8x256xf32, #tpu.memory_space<vmem>>, vector<1x8x32xf32>
    %50 = vector.shape_cast %49 : vector<1x8x32xf32> to vector<8x32xf32>
    %51 = vector.shape_cast %48 : vector<8x32xf32> to vector<1x8x32xf32>
    tpu.vector_store %arg8[%c0_38, %c0_39, %c64_40], %51 {strides = array<i32>} : memref<1x8x256xf32, #tpu.memory_space<vmem>>, vector<1x8x32xf32>,
    %c0_41 = arith.constant 0 : index
    %c0_42 = arith.constant 0 : index
    %c24 = arith.constant 24 : index
    %52 = vector.load %arg2[%c0_41, %c0_42, %c24] : memref<1x8x64xf32, #tpu.memory_space<vmem>>, vector<1x8x8xf32>
    %53 = vector.shape_cast %52 : vector<1x8x8xf32> to vector<8x8xf32>
    %cst_43 = arith.constant dense<0.000000e+00> : vector<8x16xf32>
    %54 = tpu.matmul %53, %0, %cst_43 {dimension_numbers = #tpu.dot_dimension_numbers<[1], [0], [0], [1], [0, 0, 1, 1], [], []>, precision = #tpu.contract_precision<fp32>} : vector<8x8xf32>, vector<8x16xf32>, vector<8x16xf32> -> vector<8x16xf32>
    %cst_44 = arith.constant dense<0.000000e+00> : vector<8x16xf32>
    %55 = tpu.matmul %1, %54, %cst_44 {dimension_numbers = #tpu.dot_dimension_numbers<[1], [0], [0], [1], [0, 0, 1, 1], [], []>, precision = #tpu.contract_precision<fp32>} : vector<8x8xf32>, vector<8x16xf32>, vector<8x16xf32> -> vector<8x16xf32>
    %c0_45 = arith.constant 0 : index
    %c0_46 = arith.constant 0 : index
    %c96 = arith.constant 96 : index
    %56 = vector.load %arg3[%c0_45, %c0_46, %c96] : memref<1x8x256xf32, #tpu.memory_space<vmem>>, vector<1x8x32xf32>
    %57 = vector.shape_cast %56 : vector<1x8x32xf32> to vector<8x32xf32>
    %cst_47 = arith.constant dense<0.000000e+00> : vector<8x32xf32>
    %58 = tpu.matmul %2, %57, %cst_47 {dimension_numbers = #tpu.dot_dimension_numbers<[1], [0], [0], [1], [0, 0, 1, 1], [], []>, precision = #tpu.contract_precision<fp32>} : vector<8x8xf32>, vector<8x32xf32>, vector<8x32xf32> -> vector<8x32xf32>
    %59 = tpu.concatenate %55, %55 in 1 : vector<8x16xf32>, vector<8x16xf32> -> vector<8x32xf32>
    %60 = arith.addf %58, %59 : vector<8x32xf32>
    %61 = vector.broadcast %3 : vector<8x1xf32> to vector<8x32xf32>
    %62 = arith.addf %60, %61 : vector<8x32xf32>
    %cst_48 = arith.constant 0.000000e+00 : f32
    %63 = vector.broadcast %cst_48 : f32 to vector<8x32xf32>
    %64 = arith.maximumf %62, %63 : vector<8x32xf32>
    %c0_49 = arith.constant 0 : index
    %c0_50 = arith.constant 0 : index
    %c96_51 = arith.constant 96 : index
    %65 = vector.load %arg8[%c0_49, %c0_50, %c96_51] : memref<1x8x256xf32, #tpu.memory_space<vmem>>, vector<1x8x32xf32>
    %66 = vector.shape_cast %65 : vector<1x8x32xf32> to vector<8x32xf32>
    %67 = vector.shape_cast %64 : vector<8x32xf32> to vector<1x8x32xf32>
    tpu.vector_store %arg8[%c0_49, %c0_50, %c96_51], %67 {strides = array<i32>} : memref<1x8x256xf32, #tpu.memory_space<vmem>>, vector<1x8x32xf32>,
    %c0_52 = arith.constant 0 : index
    %c0_53 = arith.constant 0 : index
    %c32_54 = arith.constant 32 : index
    %68 = vector.load %arg2[%c0_52, %c0_53, %c32_54] : memref<1x8x64xf32, #tpu.memory_space<vmem>>, vector<1x8x8xf32>
    %69 = vector.shape_cast %68 : vector<1x8x8xf32> to vector<8x8xf32>
    %cst_55 = arith.constant dense<0.000000e+00> : vector<8x16xf32>
    %70 = tpu.matmul %69, %0, %cst_55 {dimension_numbers = #tpu.dot_dimension_numbers<[1], [0], [0], [1], [0, 0, 1, 1], [], []>, precision = #tpu.contract_precision<fp32>} : vector<8x8xf32>, vector<8x16xf32>, vector<8x16xf32> -> vector<8x16xf32>
    %cst_56 = arith.constant dense<0.000000e+00> : vector<8x16xf32>
    %71 = tpu.matmul %1, %70, %cst_56 {dimension_numbers = #tpu.dot_dimension_numbers<[1], [0], [0], [1], [0, 0, 1, 1], [], []>, precision = #tpu.contract_precision<fp32>} : vector<8x8xf32>, vector<8x16xf32>, vector<8x16xf32> -> vector<8x16xf32>
    %c0_57 = arith.constant 0 : index
    %c0_58 = arith.constant 0 : index
    %c128 = arith.constant 128 : index
    %72 = vector.load %arg3[%c0_57, %c0_58, %c128] : memref<1x8x256xf32, #tpu.memory_space<vmem>>, vector<1x8x32xf32>
    %73 = vector.shape_cast %72 : vector<1x8x32xf32> to vector<8x32xf32>
    %cst_59 = arith.constant dense<0.000000e+00> : vector<8x32xf32>
    %74 = tpu.matmul %2, %73, %cst_59 {dimension_numbers = #tpu.dot_dimension_numbers<[1], [0], [0], [1], [0, 0, 1, 1], [], []>, precision = #tpu.contract_precision<fp32>} : vector<8x8xf32>, vector<8x32xf32>, vector<8x32xf32> -> vector<8x32xf32>
    %75 = tpu.concatenate %71, %71 in 1 : vector<8x16xf32>, vector<8x16xf32> -> vector<8x32xf32>
    %76 = arith.addf %74, %75 : vector<8x32xf32>
    %77 = vector.broadcast %3 : vector<8x1xf32> to vector<8x32xf32>
    %78 = arith.addf %76, %77 : vector<8x32xf32>
    %cst_60 = arith.constant 0.000000e+00 : f32
    %79 = vector.broadcast %cst_60 : f32 to vector<8x32xf32>
    %80 = arith.maximumf %78, %79 : vector<8x32xf32>
    %c0_61 = arith.constant 0 : index
    %c0_62 = arith.constant 0 : index
    %c128_63 = arith.constant 128 : index
    %81 = vector.load %arg8[%c0_61, %c0_62, %c128_63] : memref<1x8x256xf32, #tpu.memory_space<vmem>>, vector<1x8x32xf32>
    %82 = vector.shape_cast %81 : vector<1x8x32xf32> to vector<8x32xf32>
    %83 = vector.shape_cast %80 : vector<8x32xf32> to vector<1x8x32xf32>
    tpu.vector_store %arg8[%c0_61, %c0_62, %c128_63], %83 {strides = array<i32>} : memref<1x8x256xf32, #tpu.memory_space<vmem>>, vector<1x8x32xf32>,
    %c0_64 = arith.constant 0 : index
    %c0_65 = arith.constant 0 : index
    %c40 = arith.constant 40 : index
    %84 = vector.load %arg2[%c0_64, %c0_65, %c40] : memref<1x8x64xf32, #tpu.memory_space<vmem>>, vector<1x8x8xf32>
    %85 = vector.shape_cast %84 : vector<1x8x8xf32> to vector<8x8xf32>
    %cst_66 = arith.constant dense<0.000000e+00> : vector<8x16xf32>
    %86 = tpu.matmul %85, %0, %cst_66 {dimension_numbers = #tpu.dot_dimension_numbers<[1], [0], [0], [1], [0, 0, 1, 1], [], []>, precision = #tpu.contract_precision<fp32>} : vector<8x8xf32>, vector<8x16xf32>, vector<8x16xf32> -> vector<8x16xf32>
    %cst_67 = arith.constant dense<0.000000e+00> : vector<8x16xf32>
    %87 = tpu.matmul %1, %86, %cst_67 {dimension_numbers = #tpu.dot_dimension_numbers<[1], [0], [0], [1], [0, 0, 1, 1], [], []>, precision = #tpu.contract_precision<fp32>} : vector<8x8xf32>, vector<8x16xf32>, vector<8x16xf32> -> vector<8x16xf32>
    %c0_68 = arith.constant 0 : index
    %c0_69 = arith.constant 0 : index
    %c160 = arith.constant 160 : index
    %88 = vector.load %arg3[%c0_68, %c0_69, %c160] : memref<1x8x256xf32, #tpu.memory_space<vmem>>, vector<1x8x32xf32>
    %89 = vector.shape_cast %88 : vector<1x8x32xf32> to vector<8x32xf32>
    %cst_70 = arith.constant dense<0.000000e+00> : vector<8x32xf32>
    %90 = tpu.matmul %2, %89, %cst_70 {dimension_numbers = #tpu.dot_dimension_numbers<[1], [0], [0], [1], [0, 0, 1, 1], [], []>, precision = #tpu.contract_precision<fp32>} : vector<8x8xf32>, vector<8x32xf32>, vector<8x32xf32> -> vector<8x32xf32>
    %91 = tpu.concatenate %87, %87 in 1 : vector<8x16xf32>, vector<8x16xf32> -> vector<8x32xf32>
    %92 = arith.addf %90, %91 : vector<8x32xf32>
    %93 = vector.broadcast %3 : vector<8x1xf32> to vector<8x32xf32>
    %94 = arith.addf %92, %93 : vector<8x32xf32>
    %cst_71 = arith.constant 0.000000e+00 : f32
    %95 = vector.broadcast %cst_71 : f32 to vector<8x32xf32>
    %96 = arith.maximumf %94, %95 : vector<8x32xf32>
    %c0_72 = arith.constant 0 : index
    %c0_73 = arith.constant 0 : index
    %c160_74 = arith.constant 160 : index
    %97 = vector.load %arg8[%c0_72, %c0_73, %c160_74] : memref<1x8x256xf32, #tpu.memory_space<vmem>>, vector<1x8x32xf32>
    %98 = vector.shape_cast %97 : vector<1x8x32xf32> to vector<8x32xf32>
    %99 = vector.shape_cast %96 : vector<8x32xf32> to vector<1x8x32xf32>
    tpu.vector_store %arg8[%c0_72, %c0_73, %c160_74], %99 {strides = array<i32>} : memref<1x8x256xf32, #tpu.memory_space<vmem>>, vector<1x8x32xf32>,
    %c0_75 = arith.constant 0 : index
    %c0_76 = arith.constant 0 : index
    %c48 = arith.constant 48 : index
    %100 = vector.load %arg2[%c0_75, %c0_76, %c48] : memref<1x8x64xf32, #tpu.memory_space<vmem>>, vector<1x8x8xf32>
    %101 = vector.shape_cast %100 : vector<1x8x8xf32> to vector<8x8xf32>
    %cst_77 = arith.constant dense<0.000000e+00> : vector<8x16xf32>
    %102 = tpu.matmul %101, %0, %cst_77 {dimension_numbers = #tpu.dot_dimension_numbers<[1], [0], [0], [1], [0, 0, 1, 1], [], []>, precision = #tpu.contract_precision<fp32>} : vector<8x8xf32>, vector<8x16xf32>, vector<8x16xf32> -> vector<8x16xf32>
    %cst_78 = arith.constant dense<0.000000e+00> : vector<8x16xf32>
    %103 = tpu.matmul %1, %102, %cst_78 {dimension_numbers = #tpu.dot_dimension_numbers<[1], [0], [0], [1], [0, 0, 1, 1], [], []>, precision = #tpu.contract_precision<fp32>} : vector<8x8xf32>, vector<8x16xf32>, vector<8x16xf32> -> vector<8x16xf32>
    %c0_79 = arith.constant 0 : index
    %c0_80 = arith.constant 0 : index
    %c192 = arith.constant 192 : index
    %104 = vector.load %arg3[%c0_79, %c0_80, %c192] : memref<1x8x256xf32, #tpu.memory_space<vmem>>, vector<1x8x32xf32>
    %105 = vector.shape_cast %104 : vector<1x8x32xf32> to vector<8x32xf32>
    %cst_81 = arith.constant dense<0.000000e+00> : vector<8x32xf32>
    %106 = tpu.matmul %2, %105, %cst_81 {dimension_numbers = #tpu.dot_dimension_numbers<[1], [0], [0], [1], [0, 0, 1, 1], [], []>, precision = #tpu.contract_precision<fp32>} : vector<8x8xf32>, vector<8x32xf32>, vector<8x32xf32> -> vector<8x32xf32>
    %107 = tpu.concatenate %103, %103 in 1 : vector<8x16xf32>, vector<8x16xf32> -> vector<8x32xf32>
    %108 = arith.addf %106, %107 : vector<8x32xf32>
    %109 = vector.broadcast %3 : vector<8x1xf32> to vector<8x32xf32>
    %110 = arith.addf %108, %109 : vector<8x32xf32>
    %cst_82 = arith.constant 0.000000e+00 : f32
    %111 = vector.broadcast %cst_82 : f32 to vector<8x32xf32>
    %112 = arith.maximumf %110, %111 : vector<8x32xf32>
    %c0_83 = arith.constant 0 : index
    %c0_84 = arith.constant 0 : index
    %c192_85 = arith.constant 192 : index
    %113 = vector.load %arg8[%c0_83, %c0_84, %c192_85] : memref<1x8x256xf32, #tpu.memory_space<vmem>>, vector<1x8x32xf32>
    %114 = vector.shape_cast %113 : vector<1x8x32xf32> to vector<8x32xf32>
    %115 = vector.shape_cast %112 : vector<8x32xf32> to vector<1x8x32xf32>
    tpu.vector_store %arg8[%c0_83, %c0_84, %c192_85], %115 {strides = array<i32>} : memref<1x8x256xf32, #tpu.memory_space<vmem>>, vector<1x8x32xf32>,
    %c0_86 = arith.constant 0 : index
    %c0_87 = arith.constant 0 : index
    %c56 = arith.constant 56 : index
    %116 = vector.load %arg2[%c0_86, %c0_87, %c56] : memref<1x8x64xf32, #tpu.memory_space<vmem>>, vector<1x8x8xf32>
    %117 = vector.shape_cast %116 : vector<1x8x8xf32> to vector<8x8xf32>
    %cst_88 = arith.constant dense<0.000000e+00> : vector<8x16xf32>
    %118 = tpu.matmul %117, %0, %cst_88 {dimension_numbers = #tpu.dot_dimension_numbers<[1], [0], [0], [1], [0, 0, 1, 1], [], []>, precision = #tpu.contract_precision<fp32>} : vector<8x8xf32>, vector<8x16xf32>, vector<8x16xf32> -> vector<8x16xf32>
    %cst_89 = arith.constant dense<0.000000e+00> : vector<8x16xf32>
    %119 = tpu.matmul %1, %118, %cst_89 {dimension_numbers = #tpu.dot_dimension_numbers<[1], [0], [0], [1], [0, 0, 1, 1], [], []>, precision = #tpu.contract_precision<fp32>} : vector<8x8xf32>, vector<8x16xf32>, vector<8x16xf32> -> vector<8x16xf32>
    %c0_90 = arith.constant 0 : index
    %c0_91 = arith.constant 0 : index
    %c224 = arith.constant 224 : index
    %120 = vector.load %arg3[%c0_90, %c0_91, %c224] : memref<1x8x256xf32, #tpu.memory_space<vmem>>, vector<1x8x32xf32>
    %121 = vector.shape_cast %120 : vector<1x8x32xf32> to vector<8x32xf32>
    %cst_92 = arith.constant dense<0.000000e+00> : vector<8x32xf32>
    %122 = tpu.matmul %2, %121, %cst_92 {dimension_numbers = #tpu.dot_dimension_numbers<[1], [0], [0], [1], [0, 0, 1, 1], [], []>, precision = #tpu.contract_precision<fp32>} : vector<8x8xf32>, vector<8x32xf32>, vector<8x32xf32> -> vector<8x32xf32>
    %123 = tpu.concatenate %119, %119 in 1 : vector<8x16xf32>, vector<8x16xf32> -> vector<8x32xf32>
    %124 = arith.addf %122, %123 : vector<8x32xf32>
    %125 = vector.broadcast %3 : vector<8x1xf32> to vector<8x32xf32>
    %126 = arith.addf %124, %125 : vector<8x32xf32>
    %cst_93 = arith.constant 0.000000e+00 : f32
    %127 = vector.broadcast %cst_93 : f32 to vector<8x32xf32>
    %128 = arith.maximumf %126, %127 : vector<8x32xf32>
    %c0_94 = arith.constant 0 : index
    %c0_95 = arith.constant 0 : index
    %c224_96 = arith.constant 224 : index
    %129 = vector.load %arg8[%c0_94, %c0_95, %c224_96] : memref<1x8x256xf32, #tpu.memory_space<vmem>>, vector<1x8x32xf32>
    %130 = vector.shape_cast %129 : vector<1x8x32xf32> to vector<8x32xf32>
    %131 = vector.shape_cast %128 : vector<8x32xf32> to vector<1x8x32xf32>
    tpu.vector_store %arg8[%c0_94, %c0_95, %c224_96], %131 {strides = array<i32>} : memref<1x8x256xf32, #tpu.memory_space<vmem>>, vector<1x8x32xf32>,
    return
  }
  func.func @transform_0(%arg0: i32, %arg1: i32) -> (i32, i32, i32) {
    %c0_i32 = arith.constant 0 : i32
    %c0_i32_0 = arith.constant 0 : i32
    return %arg0, %c0_i32, %arg1 : i32, i32, i32
  }
  func.func @transform_1(%arg0: i32, %arg1: i32) -> (i32, i32, i32) {
    %c0_i32 = arith.constant 0 : i32
    %c0_i32_0 = arith.constant 0 : i32
    return %arg0, %c0_i32, %arg1 : i32, i32, i32
  }
  func.func @transform_2(%arg0: i32, %arg1: i32) -> (i32, i32) {
    %c0_i32 = arith.constant 0 : i32
    %c0_i32_0 = arith.constant 0 : i32
    %c0_i32_1 = arith.constant 0 : i32
    return %c0_i32, %c0_i32_0 : i32, i32
  }
  func.func @transform_3(%arg0: i32, %arg1: i32) -> (i32, i32) {
    %c0_i32 = arith.constant 0 : i32
    %c0_i32_0 = arith.constant 0 : i32
    %c0_i32_1 = arith.constant 0 : i32
    return %c0_i32, %c0_i32_0 : i32, i32
  }
  func.func @transform_4(%arg0: i32, %arg1: i32) -> (i32, i32) {
    %c0_i32 = arith.constant 0 : i32
    %c0_i32_0 = arith.constant 0 : i32
    %c0_i32_1 = arith.constant 0 : i32
    return %c0_i32, %c0_i32_0 : i32, i32
  }
  func.func @transform_5(%arg0: i32, %arg1: i32) -> (i32, i32) {
    %c0_i32 = arith.constant 0 : i32
    %c0_i32_0 = arith.constant 0 : i32
    %c0_i32_1 = arith.constant 0 : i32
    return %c0_i32, %c0_i32_0 : i32, i32
  }
  func.func @transform_6(%arg0: i32, %arg1: i32) -> (i32, i32, i32) {
    %c0_i32 = arith.constant 0 : i32
    %c0_i32_0 = arith.constant 0 : i32
    return %arg0, %c0_i32, %arg1 : i32, i32, i32
  }
}

</mosaic_0001>

<llo_original>
// kernel: tpu_custom_call.1
$region0: #{tpu_custom_call.1}
  #allocation0 [shape = 'u32[]', space=smem, size = 0x4, offset = 0x4, fixed_abs, tag = 'smem constant byte address 0x4 - core index']
  #allocation1 [shape = 'u32[144,128]{1,0:T(1,128)}', space=vmem, size = 0x12000, scoped, tag = 'internal scratch']
  %s0 = inlined_call_operand.hbm [shape: f32[2,8,64], index: 0, kind: input, shape index: {}]
  %s1 = inlined_call_operand.hbm [shape: f32[2,8,256], index: 1, kind: input, shape index: {}]
  %s2 = inlined_call_operand.vmem [shape: f32[8,16], index: 2, kind: input, shape index: {}]
  %s3 = inlined_call_operand.hbm [shape: f32[8,8], index: 3, kind: input, shape index: {}]
  %s4 = inlined_call_operand.vmem [shape: f32[8,8], index: 4, kind: input, shape index: {}]
  %s5 = inlined_call_operand.vmem [shape: f32[8,1], index: 5, kind: input, shape index: {}]
  %s6 = inlined_call_operand.hbm [shape: f32[2,8,256], index: 6, kind: output, shape index: {}]
  %s7 = sld [smem:[#allocation0]]
  $region69: #{tpu_custom_call.1} parent=0
    _
  %s9 = ssub.s32 1, %s7
  %s10 = scalar_select 0, %s9, %s7
  $region1: #{tpu_custom_call.1} parent=0
    #allocation2 [shape = 'u8[8192]{0}', space=vmem, size = 0x2000, scoped, tag = 'input window, operand 0']
    #allocation3 [shape = 's32[2]{0}', space=sflag, size = 0x8, scoped, tag = 'scoped memory for tpu_custom_call.1']
    #allocation4 [shape = 's32[2]{0}', space=sflag, size = 0x8, scoped, tag = 'scoped memory for tpu_custom_call.1']
    #allocation5 [shape = 'u8[16384]{0}', space=vmem, size = 0x4000, scoped, tag = 'input window, operand 1']
    #allocation6 [shape = 's32[2]{0}', space=sflag, size = 0x8, scoped, tag = 'scoped memory for tpu_custom_call.1']
    #allocation7 [shape = 'u8[4096]{0}', space=vmem, size = 0x1000, scoped, tag = 'input window, operand 3, single buffered']
    #allocation8 [shape = 'u8[16384]{0}', space=vmem, size = 0x4000, scoped, tag = 'output window, operand 0']
    %11 = vsyncpa [#allocation3], 0
    %s12 = scalar_lea.sflag [#allocation3], 1
    %13 = vsyncpa %s12, 0
    %14 = vsyncpa [#allocation6], 0
    %s15 = scalar_lea.sflag [#allocation6], 1
    %16 = vsyncpa %s15, 0
    %17 = vsyncpa [#allocation4], 0
    %s18 = scalar_lea.sflag [#allocation4], 1
    %19 = vsyncpa %s18, 0
    loop: start=0, step=1, limit=4
    $region2: #{tpu_custom_call.1} parent=1 // loop_pre_header
      _
    $region3: #{tpu_custom_call.1} parent=1 // loop_header
      %s21 = sphi 0, %s25
      %p22 = scmp.ge.s32.totalorder %s21, 4
      %s28 = sphi 0, %s40
      %s29 = sphi 0, %s36
      %s30 = sphi 0, %s28
      %s31 = sphi 0, %s29
      %s32 = sphi 0, %s30
      %s33 = sphi 0, %s31
      %s45 = sphi 0, %s47
      %s48 = sphi 0, %s45
      %s49 = sphi 0, %s48
      %s65 = sphi 0, %s49
      %s73 = sphi 0, %s75
      %s76 = sphi 0, %s73
      %s77 = sphi 0, %s76
      %s93 = sphi 0, %s77
      %s97 = sphi 0, %s97
      %s99 = sphi 0, %s97
      %s100 = sphi 0, %s99
      %s114 = sphi 0, %s100
      %s118 = sphi 0, %s118
      %s120 = sphi 0, %s118
      %s121 = sphi 0, %s120
      %s135 = sphi 0, %s121
      %s139 = sphi 0, %s139
      %s141 = sphi 0, %s139
      %s142 = sphi 0, %s141
      %s156 = sphi 0, %s142
      %s160 = sphi 0, %s160
      %s162 = sphi 0, %s160
      %s163 = sphi 0, %s162
      %s177 = sphi 0, %s163
      %s185 = sphi 0, %s187
      %s188 = sphi 0, %s185
      %s189 = sphi 0, %s188
      %s205 = sphi 0, %s189
    $region4: #{tpu_custom_call.1} parent=1 // loop_header_branch
      %24 = sbr.rel (%p22) target = $region8
    $region5: #{tpu_custom_call.1} parent=1 // loop_body
      %s26 = ssub.s32 %s21, 1
      %s27 = ssub.s32 %s21, 2
      %s34 = sadd.s32 1, %s29
      %p35 = scmp.ge.s32.totalorder %s34, 1
      %s36 = scalar_select %p35, 0, %s34
      %s37 = sadd.s32 1, %s28
      %s38 = scalar_select %p35, %s37, %s28
      %p39 = scmp.ge.s32.totalorder %s38, 2
      %s40 = scalar_select %p39, 0, %s38
      %s41 = ssub.s32 %s28, %s40
      %s42 = ssub.s32 %s29, %s36
      %s43 = sor.u32 %s41, %s42
      %p44 = scmp.eq.s32.totalorder %s43, 0
      %s46 = sadd.s32 %s45, 1
      %s47 = scalar_select %p44, %s45, %s46
      %p50 = pneg %p44
      %p51 = scmp.eq.s32.totalorder %s21, 1
      %p52 = por %p50, %p51
      %p53 = scmp.ne.s32.totalorder %s45, %s48
      %p54 = scmp.eq.s32.totalorder %s21, 0
      %p55 = por %p53, %p54
      %p56 = scmp.ne.s32.totalorder %s45, %s48
      %p57 = scmp.eq.s32.totalorder %s26, 1
      %p58 = por %p56, %p57
      %p59 = scmp.ne.s32.totalorder %s48, %s49
      %p60 = scmp.eq.s32.totalorder %s26, 0
      %p61 = por %p59, %p60
      %p62 = scmp.ne.s32.totalorder %s48, %s49
      %p63 = scmp.eq.s32.totalorder %s27, 1
      %p64 = por %p62, %p63
      %p66 = scmp.ne.s32.totalorder %s49, %s65
      %p67 = scmp.eq.s32.totalorder %s27, 0
      %p68 = por %p66, %p67
      %s69 = ssub.s32 %s28, %s40
      %s70 = ssub.s32 %s29, %s36
      %s71 = sor.u32 %s69, %s70
      %p72 = scmp.eq.s32.totalorder %s71, 0
      %s74 = sadd.s32 %s73, 1
      %s75 = scalar_select %p72, %s73, %s74
      %p78 = pneg %p72
      %p79 = scmp.eq.s32.totalorder %s21, 1
      %p80 = por %p78, %p79
      %p81 = scmp.ne.s32.totalorder %s73, %s76
      %p82 = scmp.eq.s32.totalorder %s21, 0
      %p83 = por %p81, %p82
      %p84 = scmp.ne.s32.totalorder %s73, %s76
      %p85 = scmp.eq.s32.totalorder %s26, 1
      %p86 = por %p84, %p85
      %p87 = scmp.ne.s32.totalorder %s76, %s77
      %p88 = scmp.eq.s32.totalorder %s26, 0
      %p89 = por %p87, %p88
      %p90 = scmp.ne.s32.totalorder %s76, %s77
      %p91 = scmp.eq.s32.totalorder %s27, 1
      %p92 = por %p90, %p91
      %p94 = scmp.ne.s32.totalorder %s77, %s93
      %p95 = scmp.eq.s32.totalorder %s27, 0
      %p96 = por %p94, %p95
      %s98 = sadd.s32 %s97, 1
      %p101 = scmp.eq.s32.totalorder %s21, 1
      %p102 = scmp.ne.s32.totalorder %s97, %s99
      %p103 = scmp.eq.s32.totalorder %s21, 0
      %p104 = por %p102, %p103
      %p105 = scmp.ne.s32.totalorder %s97, %s99
      %p106 = scmp.eq.s32.totalorder %s26, 1
      %p107 = por %p105, %p106
      %p108 = scmp.ne.s32.totalorder %s99, %s100
      %p109 = scmp.eq.s32.totalorder %s26, 0
      %p110 = por %p108, %p109
      %p111 = scmp.ne.s32.totalorder %s99, %s100
      %p112 = scmp.eq.s32.totalorder %s27, 1
      %p113 = por %p111, %p112
      %p115 = scmp.ne.s32.totalorder %s100, %s114
      %p116 = scmp.eq.s32.totalorder %s27, 0
      %p117 = por %p115, %p116
      %s119 = sadd.s32 %s118, 1
      %p122 = scmp.eq.s32.totalorder %s21, 1
      %p123 = scmp.ne.s32.totalorder %s118, %s120
      %p124 = scmp.eq.s32.totalorder %s21, 0
      %p125 = por %p123, %p124
      %p126 = scmp.ne.s32.totalorder %s118, %s120
      %p127 = scmp.eq.s32.totalorder %s26, 1
      %p128 = por %p126, %p127
      %p129 = scmp.ne.s32.totalorder %s120, %s121
      %p130 = scmp.eq.s32.totalorder %s26, 0
      %p131 = por %p129, %p130
      %p132 = scmp.ne.s32.totalorder %s120, %s121
      %p133 = scmp.eq.s32.totalorder %s27, 1
      %p134 = por %p132, %p133
      %p136 = scmp.ne.s32.totalorder %s121, %s135
      %p137 = scmp.eq.s32.totalorder %s27, 0
      %p138 = por %p136, %p137
      %s140 = sadd.s32 %s139, 1
      %p143 = scmp.eq.s32.totalorder %s21, 1
      %p144 = scmp.ne.s32.totalorder %s139, %s141
      %p145 = scmp.eq.s32.totalorder %s21, 0
      %p146 = por %p144, %p145
      %p147 = scmp.ne.s32.totalorder %s139, %s141
      %p148 = scmp.eq.s32.totalorder %s26, 1
      %p149 = por %p147, %p148
      %p150 = scmp.ne.s32.totalorder %s141, %s142
      %p151 = scmp.eq.s32.totalorder %s26, 0
      %p152 = por %p150, %p151
      %p153 = scmp.ne.s32.totalorder %s141, %s142
      %p154 = scmp.eq.s32.totalorder %s27, 1
      %p155 = por %p153, %p154
      %p157 = scmp.ne.s32.totalorder %s142, %s156
      %p158 = scmp.eq.s32.totalorder %s27, 0
      %p159 = por %p157, %p158
      %s161 = sadd.s32 %s160, 1
      %p164 = scmp.eq.s32.totalorder %s21, 1
      %p165 = scmp.ne.s32.totalorder %s160, %s162
      %p166 = scmp.eq.s32.totalorder %s21, 0
      %p167 = por %p165, %p166
      %p168 = scmp.ne.s32.totalorder %s160, %s162
      %p169 = scmp.eq.s32.totalorder %s26, 1
      %p170 = por %p168, %p169
      %p171 = scmp.ne.s32.totalorder %s162, %s163
      %p172 = scmp.eq.s32.totalorder %s26, 0
      %p173 = por %p171, %p172
      %p174 = scmp.ne.s32.totalorder %s162, %s163
      %p175 = scmp.eq.s32.totalorder %s27, 1
      %p176 = por %p174, %p175
      %p178 = scmp.ne.s32.totalorder %s163, %s177
      %p179 = scmp.eq.s32.totalorder %s27, 0
      %p180 = por %p178, %p179
      %s181 = ssub.s32 %s28, %s40
      %s182 = ssub.s32 %s29, %s36
      %s183 = sor.u32 %s181, %s182
      %p184 = scmp.eq.s32.totalorder %s183, 0
      %s186 = sadd.s32 %s185, 1
      %s187 = scalar_select %p184, %s185, %s186
      %p190 = pneg %p184
      %p191 = scmp.eq.s32.totalorder %s21, 1
      %p192 = por %p190, %p191
      %p193 = scmp.ne.s32.totalorder %s185, %s188
      %p194 = scmp.eq.s32.totalorder %s21, 0
      %p195 = por %p193, %p194
      %p196 = scmp.ne.s32.totalorder %s185, %s188
      %p197 = scmp.eq.s32.totalorder %s26, 1
      %p198 = por %p196, %p197
      %p199 = scmp.ne.s32.totalorder %s188, %s189
      %p200 = scmp.eq.s32.totalorder %s26, 0
      %p201 = por %p199, %p200
      %p202 = scmp.ne.s32.totalorder %s188, %s189
      %p203 = scmp.eq.s32.totalorder %s27, 1
      %p204 = por %p202, %p203
      %p206 = scmp.ne.s32.totalorder %s189, %s205
      %p207 = scmp.eq.s32.totalorder %s27, 0
      %p208 = por %p206, %p207
      %p209 = scmp.le.s32.totalorder 1, %s21
      %p210 = scmp.lt.s32.totalorder %s21, 3
      %p211 = pnand %p209, %p210
      %p212 = pneg %p211
      // Predicated region
      $region9: #{tpu_custom_call.1} parent=5 // pred_check
        _
      $region10: #{tpu_custom_call.1} parent=5 // pred_check_branch
        %214 = sbr.rel (%p211) target = $region12
      $region11: #{tpu_custom_call.1} parent=5 // pred_region
        %s215 = ssub.s32 %s21, 1
        // Predicated region
        $region13: #{tpu_custom_call.1} parent=11 // pred_check
          %p216 = pneg %p110
        $region14: #{tpu_custom_call.1} parent=11 // pred_check_branch
          %218 = sbr.rel (%p216) target = $region16
        $region15: #{tpu_custom_call.1} parent=11 // pred_region
          _
        $region16: #{tpu_custom_call.1} parent=11 // pred_fallthru
          _
        // Predicated region
        $region17: #{tpu_custom_call.1} parent=11 // pred_check
          %p219 = pneg %p131
        $region18: #{tpu_custom_call.1} parent=11 // pred_check_branch
          %221 = sbr.rel (%p219) target = $region20
        $region19: #{tpu_custom_call.1} parent=11 // pred_region
          %s223 = ssub.s32 128, 128
          %224 = vsyncadd [#allocation6], %s223
          %s226 = sshll.u32 [#allocation7], 4
          %s227 = int_to_ptr.vmem [resolvable:$true] %s226
          %229 = dma.hbm_to_vmem [thread:$0]  %s3, 128, %s227, [#allocation6]
        $region20: #{tpu_custom_call.1} parent=11 // pred_fallthru
          _
        // Predicated region
        $region21: #{tpu_custom_call.1} parent=11 // pred_check
          %p230 = pneg %p152
        $region22: #{tpu_custom_call.1} parent=11 // pred_check_branch
          %232 = sbr.rel (%p230) target = $region24
        $region23: #{tpu_custom_call.1} parent=11 // pred_region
          _
        $region24: #{tpu_custom_call.1} parent=11 // pred_fallthru
          _
        // Predicated region
        $region25: #{tpu_custom_call.1} parent=11 // pred_check
          %p233 = pneg %p173
        $region26: #{tpu_custom_call.1} parent=11 // pred_check_branch
          %235 = sbr.rel (%p233) target = $region28
        $region27: #{tpu_custom_call.1} parent=11 // pred_region
          _
        $region28: #{tpu_custom_call.1} parent=11 // pred_fallthru
          _
      $region12: #{tpu_custom_call.1} parent=5 // pred_fallthru
        _
      %p236 = scmp.lt.s32.totalorder %s21, 2
      // Predicated region
      $region29: #{tpu_custom_call.1} parent=5 // pred_check
        %p237 = pneg %p236
      $region30: #{tpu_custom_call.1} parent=5 // pred_check_branch
        %239 = sbr.rel (%p237) target = $region32
      $region31: #{tpu_custom_call.1} parent=5 // pred_region
        // Predicated region
        $region33: #{tpu_custom_call.1} parent=31 // pred_check
          %p240 = pneg %p55
        $region34: #{tpu_custom_call.1} parent=31 // pred_check_branch
          %242 = sbr.rel (%p240) target = $region36
        $region35: #{tpu_custom_call.1} parent=31 // pred_region
          %s243 = sand.u32 %s45, 1
          %s244 = scalar_lea.sflag [#allocation3], %s243
          %s245 = sand.u32 %s45, 1
          %s246 = smul.addr %s245, 8
          %s247 = scalar_lea.vmem [#allocation2], %s246
          %s249 = ssub.s32 128, 128
          %250 = vsyncadd %s244, %s249
          %s251 = sadd.s32 %s29, %s28
          %s252 = smul.addr %s251, 128
          %s253 = scalar_lea.hbm %s0, %s252
          %s255 = sshll.u32 %s247, 4
          %s256 = int_to_ptr.vmem [resolvable:$true] %s255
          %258 = dma.hbm_to_vmem [thread:$0]  %s253, 128, %s256, %s244
        $region36: #{tpu_custom_call.1} parent=31 // pred_fallthru
          _
        // Predicated region
        $region37: #{tpu_custom_call.1} parent=31 // pred_check
          %p259 = pneg %p83
        $region38: #{tpu_custom_call.1} parent=31 // pred_check_branch
          %261 = sbr.rel (%p259) target = $region40
        $region39: #{tpu_custom_call.1} parent=31 // pred_region
          %s262 = sand.u32 %s21, 1
          %s263 = scalar_lea.sflag [#allocation6], %s262
          %s264 = sand.u32 %s73, 1
          %s265 = smul.addr %s264, 16
          %s266 = scalar_lea.vmem [#allocation5], %s265
          %s267 = smul.u32 2, %s29
          %s269 = ssub.s32 256, 256
          %270 = vsyncadd %s263, %s269
          %s271 = smul.addr %s28, 2
          %s272 = sadd.s32 %s267, %s271
          %s273 = smul.addr %s272, 128
          %s274 = scalar_lea.hbm %s1, %s273
          %s276 = sshll.u32 %s266, 4
          %s277 = int_to_ptr.vmem [resolvable:$true] %s276
          %279 = dma.hbm_to_vmem [thread:$0]  %s274, 256, %s277, %s263
        $region40: #{tpu_custom_call.1} parent=31 // pred_fallthru
          _
      $region32: #{tpu_custom_call.1} parent=5 // pred_fallthru
        _
      %p280 = scmp.le.s32.totalorder 1, %s21
      %p281 = scmp.lt.s32.totalorder %s21, 3
      %p282 = pnand %p280, %p281
      %p283 = pneg %p282
      // Predicated region
      $region41: #{tpu_custom_call.1} parent=5 // pred_check
        _
      $region42: #{tpu_custom_call.1} parent=5 // pred_check_branch
        %285 = sbr.rel (%p282) target = $region44
      $region43: #{tpu_custom_call.1} parent=5 // pred_region
        %s286 = ssub.s32 %s21, 1
        %s287 = sand.u32 %s48, 1
        %s288 = scalar_lea.sflag [#allocation3], %s287
        %s289 = sand.u32 %s48, 1
        %s290 = smul.addr %s289, 8
        %s291 = scalar_lea.vmem [#allocation2], %s290
        // Predicated region
        $region45: #{tpu_custom_call.1} parent=43 // pred_check
          %p292 = pneg %p61
        $region46: #{tpu_custom_call.1} parent=43 // pred_check_branch
          %294 = sbr.rel (%p292) target = $region48
        $region47: #{tpu_custom_call.1} parent=43 // pred_region
          %295 = dma.done %s288, 128
        $region48: #{tpu_custom_call.1} parent=43 // pred_fallthru
          _
        %s296 = sand.u32 %s26, 1
        %s297 = scalar_lea.sflag [#allocation6], %s296
        %s298 = sand.u32 %s76, 1
        %s299 = smul.addr %s298, 16
        %s300 = scalar_lea.vmem [#allocation5], %s299
        // Predicated region
        $region49: #{tpu_custom_call.1} parent=43 // pred_check
          %p301 = pneg %p89
        $region50: #{tpu_custom_call.1} parent=43 // pred_check_branch
          %303 = sbr.rel (%p301) target = $region52
        $region51: #{tpu_custom_call.1} parent=43 // pred_region
          %304 = dma.done %s297, 256
        $region52: #{tpu_custom_call.1} parent=43 // pred_fallthru
          _
        // Predicated region
        $region53: #{tpu_custom_call.1} parent=43 // pred_check
          %p305 = pneg %p131
        $region54: #{tpu_custom_call.1} parent=43 // pred_check_branch
          %307 = sbr.rel (%p305) target = $region56
        $region55: #{tpu_custom_call.1} parent=43 // pred_region
          %308 = dma.done [#allocation6], 128
        $region56: #{tpu_custom_call.1} parent=43 // pred_fallthru
          _
        %s309 = sand.u32 %s48, 1
        %s310 = scalar_lea.sflag [#allocation3], %s309
        %s311 = sand.u32 %s48, 1
        %s312 = smul.addr %s311, 8
        %s313 = scalar_lea.vmem [#allocation2], %s312
        %p314 = pneg %p61
        %p315 = pneg %p58
        %s316 = sand.u32 %s26, 1
        %s317 = scalar_lea.sflag [#allocation6], %s316
        %s318 = sand.u32 %s76, 1
        %s319 = smul.addr %s318, 16
        %s320 = scalar_lea.vmem [#allocation5], %s319
        %p321 = pneg %p89
        %p322 = pneg %p86
        %p323 = pneg %p110
        %p324 = pneg %p107
        %p325 = pneg %p131
        %p326 = pneg %p128
        %p327 = pneg %p152
        %p328 = pneg %p149
        %p329 = pneg %p173
        %p330 = pneg %p170
        %p331 = pneg %p201
        %p332 = pneg %p198
        %s333 = sand.u32 %s188, 1
        %s334 = scalar_lea.sflag [#allocation4], %s333
        %s335 = sand.u32 %s188, 1
        %s336 = smul.addr %s335, 16
        %s337 = scalar_lea.vmem [#allocation8], %s336
        %s338 = smul.u32 2, %s31
        %s339 = smul.u32 2, %s31
        %v340 = vld [vmem:[%s2] sm:$0xff]
        %v341 = vld [vmem:[#allocation7] sm:$0xff]
        %v342 = vld [vmem:[%s4] sm:$0xff]
        %v343 = vld [vmem:[%s5] sm:$0xff]
        %v344 = vld [vmem:[%s291] sm:$0xff]
        %vm345 = vcmask 64512
        %v347 = vsel %vm345, %v344, 0
        %349 = vmatprep.subr.mxu0 0.0
        %350 = vmatpush1.msra.mxu0 0.0
        %351 = vmatprep.subr.mxu0 0.0
        %352 = vmatpush1.msra.mxu0 0.0
        %353 = vmatprep.subr.mxu0 0.0
        %354 = vmatpush1.msra.mxu0 0.0
        %355 = vmatprep.subr.mxu0 0.0
        %356 = vmatpush1.msra.mxu0 0.0
        %357 = vmatprep.subr.mxu0 0.0
        %358 = vmatpush1.msra.mxu0 0.0
        %359 = vmatprep.subr.mxu0 0.0
        %360 = vmatpush1.msra.mxu0 0.0
        %361 = vmatprep.subr.mxu0 0.0
        %362 = vmatpush1.msra.mxu0 0.0
        %363 = vmatprep.subr.mxu0 0.0
        %364 = vmatpush1.msra.mxu0 0.0
        %365 = vmatprep.subr.mxu0 0.0
        %366 = vmatpush1.msra.mxu0 0.0
        %367 = vmatprep.subr.mxu0 0.0
        %368 = vmatpush1.msra.mxu0 0.0
        %369 = vmatprep.subr.mxu0 0.0
        %370 = vmatpush1.msra.mxu0 0.0
        %371 = vmatprep.subr.mxu0 0.0
        %372 = vmatpush1.msra.mxu0 0.0
        %373 = vmatprep.subr.mxu0 0.0
        %374 = vmatpush1.msra.mxu0 0.0
        %375 = vmatprep.subr.mxu0 0.0
        %376 = vmatpush1.msra.mxu0 0.0
        %377 = vmatprep.subr.mxu0 0.0
        %378 = vmatpush1.msra.mxu0 0.0
        %379 = vmatprep.subr.mxu0 0.0
        %v380 = vand.u32 %v340, 4294901760
        %381 = vmatpush1.msra.mxu0 %v380
        %382 = vmatprep.subr.mxu0 0.0
        %383 = vmatpush2.msra.mxu0 0.0
        %384 = vmatprep.subr.mxu0 0.0
        %385 = vmatpush2.msra.mxu0 0.0
        %386 = vmatprep.subr.mxu0 0.0
        %387 = vmatpush2.msra.mxu0 0.0
        %388 = vmatprep.subr.mxu0 0.0
        %389 = vmatpush2.msra.mxu0 0.0
        %390 = vmatprep.subr.mxu0 0.0
        %391 = vmatpush2.msra.mxu0 0.0
        %392 = vmatprep.subr.mxu0 0.0
        %393 = vmatpush2.msra.mxu0 0.0
        %394 = vmatprep.subr.mxu0 0.0
        %395 = vmatpush2.msra.mxu0 0.0
        %396 = vmatprep.subr.mxu0 0.0
        %397 = vmatpush2.msra.mxu0 0.0
        %398 = vmatprep.subr.mxu0 0.0
        %399 = vmatpush2.msra.mxu0 0.0
        %400 = vmatprep.subr.mxu0 0.0
        %401 = vmatpush2.msra.mxu0 0.0
        %402 = vmatprep.subr.mxu0 0.0
        %403 = vmatpush2.msra.mxu0 0.0
        %404 = vmatprep.subr.mxu0 0.0
        %405 = vmatpush2.msra.mxu0 0.0
        %406 = vmatprep.subr.mxu0 0.0
        %407 = vmatpush2.msra.mxu0 0.0
        %408 = vmatprep.subr.mxu0 0.0
        %409 = vmatpush2.msra.mxu0 0.0
        %410 = vmatprep.subr.mxu0 0.0
        %411 = vmatpush2.msra.mxu0 0.0
        %412 = vmatprep.subr.mxu0 0.0
        %413 = vmatpush2.msra.mxu0 0.0
        %414 = vmatprep.mubr.f32.mxu0 0.0
        %v415 = vand.u32 %v347, 4294901760
        %v416 = vsub.f32 %v347, %v415
        %v417 = vand.u32 %v416, 4294901760
        %v418 = vsub.f32 %v416, %v417
        %v419 = vand.u32 %v418, 4294901760
        %420 = vmatmul.mubr.f32.gmra.mxu0 %v419
        %v421 = vpop.f32.mrf.mxu0
        %v422 = vadd.f32 0.0, %v421
        %v423 = vpop.f32.mrf.mxu0
        %424 = vdwg.mxu0
        %425 = vmatprep.subr.mxu0 0.0
        %426 = vmatpush1.msra.mxu0 0.0
        %427 = vmatprep.subr.mxu0 0.0
        %428 = vmatpush1.msra.mxu0 0.0
        %429 = vmatprep.subr.mxu0 0.0
        %430 = vmatpush1.msra.mxu0 0.0
        %431 = vmatprep.subr.mxu0 0.0
        %432 = vmatpush1.msra.mxu0 0.0
        %433 = vmatprep.subr.mxu0 0.0
        %434 = vmatpush1.msra.mxu0 0.0
        %435 = vmatprep.subr.mxu0 0.0
        %436 = vmatpush1.msra.mxu0 0.0
        %437 = vmatprep.subr.mxu0 0.0
        %438 = vmatpush1.msra.mxu0 0.0
        %439 = vmatprep.subr.mxu0 0.0
        %440 = vmatpush1.msra.mxu0 0.0
        %441 = vmatprep.subr.mxu0 0.0
        %442 = vmatpush1.msra.mxu0 0.0
        %443 = vmatprep.subr.mxu0 0.0
        %444 = vmatpush1.msra.mxu0 0.0
        %445 = vmatprep.subr.mxu0 0.0
        %446 = vmatpush1.msra.mxu0 0.0
        %447 = vmatprep.subr.mxu0 0.0
        %448 = vmatpush1.msra.mxu0 0.0
        %449 = vmatprep.subr.mxu0 0.0
        %450 = vmatpush1.msra.mxu0 0.0
        %451 = vmatprep.subr.mxu0 0.0
        %452 = vmatpush1.msra.mxu0 0.0
        %453 = vmatprep.subr.mxu0 0.0
        %454 = vmatpush1.msra.mxu0 0.0
        %455 = vmatprep.subr.mxu0 0.0
        %v456 = vand.u32 %v340, 4294901760
        %v457 = vsub.f32 %v340, %v456
        %v458 = vand.u32 %v457, 4294901760
        %v459 = vsub.f32 %v457, %v458
        %v460 = vand.u32 %v459, 4294901760
        %461 = vmatpush1.msra.mxu0 %v460
        %462 = vmatprep.subr.mxu0 0.0
        %463 = vmatpush2.msra.mxu0 0.0
        %464 = vmatprep.subr.mxu0 0.0
        %465 = vmatpush2.msra.mxu0 0.0
        %466 = vmatprep.subr.mxu0 0.0
        %467 = vmatpush2.msra.mxu0 0.0
        %468 = vmatprep.subr.mxu0 0.0
        %469 = vmatpush2.msra.mxu0 0.0
        %470 = vmatprep.subr.mxu0 0.0
        %471 = vmatpush2.msra.mxu0 0.0
        %472 = vmatprep.subr.mxu0 0.0
        %473 = vmatpush2.msra.mxu0 0.0
        %474 = vmatprep.subr.mxu0 0.0
        %475 = vmatpush2.msra.mxu0 0.0
        %476 = vmatprep.subr.mxu0 0.0
        %477 = vmatpush2.msra.mxu0 0.0
        %478 = vmatprep.subr.mxu0 0.0
        %479 = vmatpush2.msra.mxu0 0.0
        %480 = vmatprep.subr.mxu0 0.0
        %481 = vmatpush2.msra.mxu0 0.0
        %482 = vmatprep.subr.mxu0 0.0
        %483 = vmatpush2.msra.mxu0 0.0
        %484 = vmatprep.subr.mxu0 0.0
        %485 = vmatpush2.msra.mxu0 0.0
        %486 = vmatprep.subr.mxu0 0.0
        %487 = vmatpush2.msra.mxu0 0.0
        %488 = vmatprep.subr.mxu0 0.0
        %489 = vmatpush2.msra.mxu0 0.0
        %490 = vmatprep.subr.mxu0 0.0
        %491 = vmatpush2.msra.mxu0 0.0
        %492 = vmatprep.subr.mxu0 0.0
        %493 = vmatpush2.msra.mxu0 0.0
        %494 = vmatprep.mubr.f32.mxu0 0.0
        %v495 = vand.u32 %v347, 4294901760
        %496 = vmatmul.mubr.f32.gmra.mxu0 %v495
        %v497 = vpop.f32.mrf.mxu0
        %v498 = vadd.f32 %v422, %v497
        %v499 = vpop.f32.mrf.mxu0
        %500 = vdwg.mxu0
        %501 = vmatprep.subr.mxu0 0.0
        %502 = vmatpush1.msra.mxu0 0.0
        %503 = vmatprep.subr.mxu0 0.0
        %504 = vmatpush1.msra.mxu0 0.0
        %505 = vmatprep.subr.mxu0 0.0
        %506 = vmatpush1.msra.mxu0 0.0
        %507 = vmatprep.subr.mxu0 0.0
        %508 = vmatpush1.msra.mxu0 0.0
        %509 = vmatprep.subr.mxu0 0.0
        %510 = vmatpush1.msra.mxu0 0.0
        %511 = vmatprep.subr.mxu0 0.0
        %512 = vmatpush1.msra.mxu0 0.0
        %513 = vmatprep.subr.mxu0 0.0
        %514 = vmatpush1.msra.mxu0 0.0
        %515 = vmatprep.subr.mxu0 0.0
        %516 = vmatpush1.msra.mxu0 0.0
        %517 = vmatprep.subr.mxu0 0.0
        %518 = vmatpush1.msra.mxu0 0.0
        %519 = vmatprep.subr.mxu0 0.0
        %520 = vmatpush1.msra.mxu0 0.0
        %521 = vmatprep.subr.mxu0 0.0
        %522 = vmatpush1.msra.mxu0 0.0
        %523 = vmatprep.subr.mxu0 0.0
        %524 = vmatpush1.msra.mxu0 0.0
        %525 = vmatprep.subr.mxu0 0.0
        %526 = vmatpush1.msra.mxu0 0.0
        %527 = vmatprep.subr.mxu0 0.0
        %528 = vmatpush1.msra.mxu0 0.0
        %529 = vmatprep.subr.mxu0 0.0
        %530 = vmatpush1.msra.mxu0 0.0
        %531 = vmatprep.subr.mxu0 0.0
        %v532 = vand.u32 %v340, 4294901760
        %v533 = vsub.f32 %v340, %v532
        %534 = vmatpush1.msra.mxu0 %v533
        %535 = vmatprep.subr.mxu0 0.0
        %536 = vmatpush2.msra.mxu0 0.0
        %537 = vmatprep.subr.mxu0 0.0
        %538 = vmatpush2.msra.mxu0 0.0
        %539 = vmatprep.subr.mxu0 0.0
        %540 = vmatpush2.msra.mxu0 0.0
        %541 = vmatprep.subr.mxu0 0.0
        %542 = vmatpush2.msra.mxu0 0.0
        %543 = vmatprep.subr.mxu0 0.0
        %544 = vmatpush2.msra.mxu0 0.0
        %545 = vmatprep.subr.mxu0 0.0
        %546 = vmatpush2.msra.mxu0 0.0
        %547 = vmatprep.subr.mxu0 0.0
        %548 = vmatpush2.msra.mxu0 0.0
        %549 = vmatprep.subr.mxu0 0.0
        %550 = vmatpush2.msra.mxu0 0.0
        %551 = vmatprep.subr.mxu0 0.0
        %552 = vmatpush2.msra.mxu0 0.0
        %553 = vmatprep.subr.mxu0 0.0
        %554 = vmatpush2.msra.mxu0 0.0
        %555 = vmatprep.subr.mxu0 0.0
        %556 = vmatpush2.msra.mxu0 0.0
        %557 = vmatprep.subr.mxu0 0.0
        %558 = vmatpush2.msra.mxu0 0.0
        %559 = vmatprep.subr.mxu0 0.0
        %560 = vmatpush2.msra.mxu0 0.0
        %561 = vmatprep.subr.mxu0 0.0
        %562 = vmatpush2.msra.mxu0 0.0
        %563 = vmatprep.subr.mxu0 0.0
        %564 = vmatpush2.msra.mxu0 0.0
        %565 = vmatprep.subr.mxu0 0.0
        %566 = vmatpush2.msra.mxu0 0.0
        %567 = vmatprep.mubr.f32.mxu0 0.0
        %v568 = vand.u32 %v347, 4294901760
        %v569 = vsub.f32 %v347, %v568
        %570 = vmatmul.mubr.f32.gmra.mxu0 %v569
        %v571 = vpop.f32.mrf.mxu0
        %v572 = vadd.f32 %v498, %v571
        %v573 = vpop.f32.mrf.mxu0
        %574 = vdwg.mxu0
        %575 = vmatprep.subr.mxu0 0.0
        %576 = vmatpush1.msra.mxu0 0.0
        %577 = vmatprep.subr.mxu0 0.0
        %578 = vmatpush1.msra.mxu0 0.0
        %579 = vmatprep.subr.mxu0 0.0
        %580 = vmatpush1.msra.mxu0 0.0
        %581 = vmatprep.subr.mxu0 0.0
        %582 = vmatpush1.msra.mxu0 0.0
        %583 = vmatprep.subr.mxu0 0.0
        %584 = vmatpush1.msra.mxu0 0.0
        %585 = vmatprep.subr.mxu0 0.0
        %586 = vmatpush1.msra.mxu0 0.0
        %587 = vmatprep.subr.mxu0 0.0
        %588 = vmatpush1.msra.mxu0 0.0
        %589 = vmatprep.subr.mxu0 0.0
        %590 = vmatpush1.msra.mxu0 0.0
        %591 = vmatprep.subr.mxu0 0.0
        %592 = vmatpush1.msra.mxu0 0.0
        %593 = vmatprep.subr.mxu0 0.0
        %594 = vmatpush1.msra.mxu0 0.0
        %595 = vmatprep.subr.mxu0 0.0
        %596 = vmatpush1.msra.mxu0 0.0
        %597 = vmatprep.subr.mxu0 0.0
        %598 = vmatpush1.msra.mxu0 0.0
        %599 = vmatprep.subr.mxu0 0.0
        %600 = vmatpush1.msra.mxu0 0.0
        %601 = vmatprep.subr.mxu0 0.0
        %602 = vmatpush1.msra.mxu0 0.0
        %603 = vmatprep.subr.mxu0 0.0
        %604 = vmatpush1.msra.mxu0 0.0
        %605 = vmatprep.subr.mxu0 0.0
        %v606 = vand.u32 %v340, 4294901760
        %607 = vmatpush1.msra.mxu0 %v606
        %608 = vmatprep.subr.mxu0 0.0
        %609 = vmatpush2.msra.mxu0 0.0
        %610 = vmatprep.subr.mxu0 0.0
        %611 = vmatpush2.msra.mxu0 0.0
        %612 = vmatprep.subr.mxu0 0.0
        %613 = vmatpush2.msra.mxu0 0.0
        %614 = vmatprep.subr.mxu0 0.0
        %615 = vmatpush2.msra.mxu0 0.0
        %616 = vmatprep.subr.mxu0 0.0
        %617 = vmatpush2.msra.mxu0 0.0
        %618 = vmatprep.subr.mxu0 0.0
        %619 = vmatpush2.msra.mxu0 0.0
        %620 = vmatprep.subr.mxu0 0.0
        %621 = vmatpush2.msra.mxu0 0.0
        %622 = vmatprep.subr.mxu0 0.0
        %623 = vmatpush2.msra.mxu0 0.0
        %624 = vmatprep.subr.mxu0 0.0
        %625 = vmatpush2.msra.mxu0 0.0
        %626 = vmatprep.subr.mxu0 0.0
        %627 = vmatpush2.msra.mxu0 0.0
        %628 = vmatprep.subr.mxu0 0.0
        %629 = vmatpush2.msra.mxu0 0.0
        %630 = vmatprep.subr.mxu0 0.0
        %631 = vmatpush2.msra.mxu0 0.0
        %632 = vmatprep.subr.mxu0 0.0
        %633 = vmatpush2.msra.mxu0 0.0
        %634 = vmatprep.subr.mxu0 0.0
        %635 = vmatpush2.msra.mxu0 0.0
        %636 = vmatprep.subr.mxu0 0.0
        %637 = vmatpush2.msra.mxu0 0.0
        %638 = vmatprep.subr.mxu0 0.0
        %639 = vmatpush2.msra.mxu0 0.0
        %640 = vmatprep.mubr.f32.mxu0 0.0
        %v641 = vand.u32 %v347, 4294901760
        %v642 = vsub.f32 %v347, %v641
        %v643 = vand.u32 %v642, 4294901760
        %644 = vmatmul.mubr.f32.gmra.mxu0 %v643
        %v645 = vpop.f32.mrf.mxu0
        %v646 = vadd.f32 %v572, %v645
        %v647 = vpop.f32.mrf.mxu0
        %648 = vdwg.mxu0
        %649 = vmatprep.subr.mxu0 0.0
        %650 = vmatpush1.msra.mxu0 0.0
        %651 = vmatprep.subr.mxu0 0.0
        %652 = vmatpush1.msra.mxu0 0.0
        %653 = vmatprep.subr.mxu0 0.0
        %654 = vmatpush1.msra.mxu0 0.0
        %655 = vmatprep.subr.mxu0 0.0
        %656 = vmatpush1.msra.mxu0 0.0
        %657 = vmatprep.subr.mxu0 0.0
        %658 = vmatpush1.msra.mxu0 0.0
        %659 = vmatprep.subr.mxu0 0.0
        %660 = vmatpush1.msra.mxu0 0.0
        %661 = vmatprep.subr.mxu0 0.0
        %662 = vmatpush1.msra.mxu0 0.0
        %663 = vmatprep.subr.mxu0 0.0
        %664 = vmatpush1.msra.mxu0 0.0
        %665 = vmatprep.subr.mxu0 0.0
        %666 = vmatpush1.msra.mxu0 0.0
        %667 = vmatprep.subr.mxu0 0.0
        %668 = vmatpush1.msra.mxu0 0.0
        %669 = vmatprep.subr.mxu0 0.0
        %670 = vmatpush1.msra.mxu0 0.0
        %671 = vmatprep.subr.mxu0 0.0
        %672 = vmatpush1.msra.mxu0 0.0
        %673 = vmatprep.subr.mxu0 0.0
        %674 = vmatpush1.msra.mxu0 0.0
        %675 = vmatprep.subr.mxu0 0.0
        %676 = vmatpush1.msra.mxu0 0.0
        %677 = vmatprep.subr.mxu0 0.0
        %678 = vmatpush1.msra.mxu0 0.0
        %679 = vmatprep.subr.mxu0 0.0
        %v680 = vand.u32 %v340, 4294901760
        %v681 = vsub.f32 %v340, %v680
        %v682 = vand.u32 %v681, 4294901760
        %683 = vmatpush1.msra.mxu0 %v682
        %684 = vmatprep.subr.mxu0 0.0
        %685 = vmatpush2.msra.mxu0 0.0
        %686 = vmatprep.subr.mxu0 0.0
        %687 = vmatpush2.msra.mxu0 0.0
        %688 = vmatprep.subr.mxu0 0.0
        %689 = vmatpush2.msra.mxu0 0.0
        %690 = vmatprep.subr.mxu0 0.0
        %691 = vmatpush2.msra.mxu0 0.0
        %692 = vmatprep.subr.mxu0 0.0
        %693 = vmatpush2.msra.mxu0 0.0
        %694 = vmatprep.subr.mxu0 0.0
        %695 = vmatpush2.msra.mxu0 0.0
        %696 = vmatprep.subr.mxu0 0.0
        %697 = vmatpush2.msra.mxu0 0.0
        %698 = vmatprep.subr.mxu0 0.0
        %699 = vmatpush2.msra.mxu0 0.0
        %700 = vmatprep.subr.mxu0 0.0
        %701 = vmatpush2.msra.mxu0 0.0
        %702 = vmatprep.subr.mxu0 0.0
        %703 = vmatpush2.msra.mxu0 0.0
        %704 = vmatprep.subr.mxu0 0.0
        %705 = vmatpush2.msra.mxu0 0.0
        %706 = vmatprep.subr.mxu0 0.0
        %707 = vmatpush2.msra.mxu0 0.0
        %708 = vmatprep.subr.mxu0 0.0
        %709 = vmatpush2.msra.mxu0 0.0
        %710 = vmatprep.subr.mxu0 0.0
        %711 = vmatpush2.msra.mxu0 0.0
        %712 = vmatprep.subr.mxu0 0.0
        %713 = vmatpush2.msra.mxu0 0.0
        %714 = vmatprep.subr.mxu0 0.0
        %715 = vmatpush2.msra.mxu0 0.0
        %716 = vmatprep.mubr.f32.mxu0 0.0
        %v717 = vand.u32 %v347, 4294901760
        %718 = vmatmul.mubr.f32.gmra.mxu0 %v717
        %v719 = vpop.f32.mrf.mxu0
        %v720 = vadd.f32 %v646, %v719
        %v721 = vpop.f32.mrf.mxu0
        %722 = vdwg.mxu0
        %723 = vmatprep.subr.mxu0 0.0
        %724 = vmatpush1.msra.mxu0 0.0
        %725 = vmatprep.subr.mxu0 0.0
        %726 = vmatpush1.msra.mxu0 0.0
        %727 = vmatprep.subr.mxu0 0.0
        %728 = vmatpush1.msra.mxu0 0.0
        %729 = vmatprep.subr.mxu0 0.0
        %730 = vmatpush1.msra.mxu0 0.0
        %731 = vmatprep.subr.mxu0 0.0
        %732 = vmatpush1.msra.mxu0 0.0
        %733 = vmatprep.subr.mxu0 0.0
        %734 = vmatpush1.msra.mxu0 0.0
        %735 = vmatprep.subr.mxu0 0.0
        %736 = vmatpush1.msra.mxu0 0.0
        %737 = vmatprep.subr.mxu0 0.0
        %738 = vmatpush1.msra.mxu0 0.0
        %739 = vmatprep.subr.mxu0 0.0
        %740 = vmatpush1.msra.mxu0 0.0
        %741 = vmatprep.subr.mxu0 0.0
        %742 = vmatpush1.msra.mxu0 0.0
        %743 = vmatprep.subr.mxu0 0.0
        %744 = vmatpush1.msra.mxu0 0.0
        %745 = vmatprep.subr.mxu0 0.0
        %746 = vmatpush1.msra.mxu0 0.0
        %747 = vmatprep.subr.mxu0 0.0
        %748 = vmatpush1.msra.mxu0 0.0
        %749 = vmatprep.subr.mxu0 0.0
        %750 = vmatpush1.msra.mxu0 0.0
        %751 = vmatprep.subr.mxu0 0.0
        %752 = vmatpush1.msra.mxu0 0.0
        %753 = vmatprep.subr.mxu0 0.0
        %v754 = vand.u32 %v340, 4294901760
        %755 = vmatpush1.msra.mxu0 %v754
        %756 = vmatprep.subr.mxu0 0.0
        %757 = vmatpush2.msra.mxu0 0.0
        %758 = vmatprep.subr.mxu0 0.0
        %759 = vmatpush2.msra.mxu0 0.0
        %760 = vmatprep.subr.mxu0 0.0
        %761 = vmatpush2.msra.mxu0 0.0
        %762 = vmatprep.subr.mxu0 0.0
        %763 = vmatpush2.msra.mxu0 0.0
        %764 = vmatprep.subr.mxu0 0.0
        %765 = vmatpush2.msra.mxu0 0.0
        %766 = vmatprep.subr.mxu0 0.0
        %767 = vmatpush2.msra.mxu0 0.0
        %768 = vmatprep.subr.mxu0 0.0
        %769 = vmatpush2.msra.mxu0 0.0
        %770 = vmatprep.subr.mxu0 0.0
        %771 = vmatpush2.msra.mxu0 0.0
        %772 = vmatprep.subr.mxu0 0.0
        %773 = vmatpush2.msra.mxu0 0.0
        %774 = vmatprep.subr.mxu0 0.0
        %775 = vmatpush2.msra.mxu0 0.0
        %776 = vmatprep.subr.mxu0 0.0
        %777 = vmatpush2.msra.mxu0 0.0
        %778 = vmatprep.subr.mxu0 0.0
        %779 = vmatpush2.msra.mxu0 0.0
        %780 = vmatprep.subr.mxu0 0.0
        %781 = vmatpush2.msra.mxu0 0.0
        %782 = vmatprep.subr.mxu0 0.0
        %783 = vmatpush2.msra.mxu0 0.0
        %784 = vmatprep.subr.mxu0 0.0
        %785 = vmatpush2.msra.mxu0 0.0
        %786 = vmatprep.subr.mxu0 0.0
        %787 = vmatpush2.msra.mxu0 0.0
        %788 = vmatprep.mubr.f32.mxu0 0.0
        %v789 = vand.u32 %v347, 4294901760
        %790 = vmatmul.mubr.f32.gmra.mxu0 %v789
        %v791 = vpop.f32.mrf.mxu0
        %v792 = vadd.f32 %v720, %v791
        %v793 = vpop.f32.mrf.mxu0
        %794 = vdwg.mxu0
        %v796 = vsel %vm345, %v341, 0
        %798 = vmatprep.subr.mxu0 0.0
        %799 = vmatpush1.msra.mxu0 0.0
        %800 = vmatprep.subr.mxu0 0.0
        %801 = vmatpush1.msra.mxu0 0.0
        %802 = vmatprep.subr.mxu0 0.0
        %803 = vmatpush1.msra.mxu0 0.0
        %804 = vmatprep.subr.mxu0 0.0
        %805 = vmatpush1.msra.mxu0 0.0
        %806 = vmatprep.subr.mxu0 0.0
        %807 = vmatpush1.msra.mxu0 0.0
        %808 = vmatprep.subr.mxu0 0.0
        %809 = vmatpush1.msra.mxu0 0.0
        %810 = vmatprep.subr.mxu0 0.0
        %811 = vmatpush1.msra.mxu0 0.0
        %812 = vmatprep.subr.mxu0 0.0
        %813 = vmatpush1.msra.mxu0 0.0
        %814 = vmatprep.subr.mxu0 0.0
        %815 = vmatpush1.msra.mxu0 0.0
        %816 = vmatprep.subr.mxu0 0.0
        %817 = vmatpush1.msra.mxu0 0.0
        %818 = vmatprep.subr.mxu0 0.0
        %819 = vmatpush1.msra.mxu0 0.0
        %820 = vmatprep.subr.mxu0 0.0
        %821 = vmatpush1.msra.mxu0 0.0
        %822 = vmatprep.subr.mxu0 0.0
        %823 = vmatpush1.msra.mxu0 0.0
        %824 = vmatprep.subr.mxu0 0.0
        %825 = vmatpush1.msra.mxu0 0.0
        %826 = vmatprep.subr.mxu0 0.0
        %827 = vmatpush1.msra.mxu0 0.0
        %828 = vmatprep.subr.mxu0 0.0
        %v829 = vand.u32 %v792, 4294901760
        %830 = vmatpush1.msra.mxu0 %v829
        %831 = vmatprep.subr.mxu0 0.0
        %832 = vmatpush2.msra.mxu0 0.0
        %833 = vmatprep.subr.mxu0 0.0
        %834 = vmatpush2.msra.mxu0 0.0
        %835 = vmatprep.subr.mxu0 0.0
        %836 = vmatpush2.msra.mxu0 0.0
        %837 = vmatprep.subr.mxu0 0.0
        %838 = vmatpush2.msra.mxu0 0.0
        %839 = vmatprep.subr.mxu0 0.0
        %840 = vmatpush2.msra.mxu0 0.0
        %841 = vmatprep.subr.mxu0 0.0
        %842 = vmatpush2.msra.mxu0 0.0
        %843 = vmatprep.subr.mxu0 0.0
        %844 = vmatpush2.msra.mxu0 0.0
        %845 = vmatprep.subr.mxu0 0.0
        %846 = vmatpush2.msra.mxu0 0.0
        %847 = vmatprep.subr.mxu0 0.0
        %848 = vmatpush2.msra.mxu0 0.0
        %849 = vmatprep.subr.mxu0 0.0
        %850 = vmatpush2.msra.mxu0 0.0
        %851 = vmatprep.subr.mxu0 0.0
        %852 = vmatpush2.msra.mxu0 0.0
        %853 = vmatprep.subr.mxu0 0.0
        %854 = vmatpush2.msra.mxu0 0.0
        %855 = vmatprep.subr.mxu0 0.0
        %856 = vmatpush2.msra.mxu0 0.0
        %857 = vmatprep.subr.mxu0 0.0
        %858 = vmatpush2.msra.mxu0 0.0
        %859 = vmatprep.subr.mxu0 0.0
        %860 = vmatpush2.msra.mxu0 0.0
        %861 = vmatprep.subr.mxu0 0.0
        %862 = vmatpush2.msra.mxu0 0.0
        %863 = vmatprep.mubr.f32.mxu0 0.0
        %v864 = vand.u32 %v796, 4294901760
        %v865 = vsub.f32 %v796, %v864
        %v866 = vand.u32 %v865, 4294901760
        %v867 = vsub.f32 %v865, %v866
        %v868 = vand.u32 %v867, 4294901760
        %869 = vmatmul.mubr.f32.gmra.mxu0 %v868
        %v870 = vpop.f32.mrf.mxu0
        %v871 = vadd.f32 0.0, %v870
        %v872 = vpop.f32.mrf.mxu0
        %873 = vdwg.mxu0
        %874 = vmatprep.subr.mxu0 0.0
        %875 = vmatpush1.msra.mxu0 0.0
        %876 = vmatprep.subr.mxu0 0.0
        %877 = vmatpush1.msra.mxu0 0.0
        %878 = vmatprep.subr.mxu0 0.0
        %879 = vmatpush1.msra.mxu0 0.0
        %880 = vmatprep.subr.mxu0 0.0
        %881 = vmatpush1.msra.mxu0 0.0
        %882 = vmatprep.subr.mxu0 0.0
        %883 = vmatpush1.msra.mxu0 0.0
        %884 = vmatprep.subr.mxu0 0.0
        %885 = vmatpush1.msra.mxu0 0.0
        %886 = vmatprep.subr.mxu0 0.0
        %887 = vmatpush1.msra.mxu0 0.0
        %888 = vmatprep.subr.mxu0 0.0
        %889 = vmatpush1.msra.mxu0 0.0
        %890 = vmatprep.subr.mxu0 0.0
        %891 = vmatpush1.msra.mxu0 0.0
        %892 = vmatprep.subr.mxu0 0.0
        %893 = vmatpush1.msra.mxu0 0.0
        %894 = vmatprep.subr.mxu0 0.0
        %895 = vmatpush1.msra.mxu0 0.0
        %896 = vmatprep.subr.mxu0 0.0
        %897 = vmatpush1.msra.mxu0 0.0
        %898 = vmatprep.subr.mxu0 0.0
        %899 = vmatpush1.msra.mxu0 0.0
        %900 = vmatprep.subr.mxu0 0.0
        %901 = vmatpush1.msra.mxu0 0.0
        %902 = vmatprep.subr.mxu0 0.0
        %903 = vmatpush1.msra.mxu0 0.0
        %904 = vmatprep.subr.mxu0 0.0
        %v905 = vand.u32 %v792, 4294901760
        %v906 = vsub.f32 %v792, %v905
        %v907 = vand.u32 %v906, 4294901760
        %v908 = vsub.f32 %v906, %v907
        %v909 = vand.u32 %v908, 4294901760
        %910 = vmatpush1.msra.mxu0 %v909
        %911 = vmatprep.subr.mxu0 0.0
        %912 = vmatpush2.msra.mxu0 0.0
        %913 = vmatprep.subr.mxu0 0.0
        %914 = vmatpush2.msra.mxu0 0.0
        %915 = vmatprep.subr.mxu0 0.0
        %916 = vmatpush2.msra.mxu0 0.0
        %917 = vmatprep.subr.mxu0 0.0
        %918 = vmatpush2.msra.mxu0 0.0
        %919 = vmatprep.subr.mxu0 0.0
        %920 = vmatpush2.msra.mxu0 0.0
        %921 = vmatprep.subr.mxu0 0.0
        %922 = vmatpush2.msra.mxu0 0.0
        %923 = vmatprep.subr.mxu0 0.0
        %924 = vmatpush2.msra.mxu0 0.0
        %925 = vmatprep.subr.mxu0 0.0
        %926 = vmatpush2.msra.mxu0 0.0
        %927 = vmatprep.subr.mxu0 0.0
        %928 = vmatpush2.msra.mxu0 0.0
        %929 = vmatprep.subr.mxu0 0.0
        %930 = vmatpush2.msra.mxu0 0.0
        %931 = vmatprep.subr.mxu0 0.0
        %932 = vmatpush2.msra.mxu0 0.0
        %933 = vmatprep.subr.mxu0 0.0
        %934 = vmatpush2.msra.mxu0 0.0
        %935 = vmatprep.subr.mxu0 0.0
        %936 = vmatpush2.msra.mxu0 0.0
        %937 = vmatprep.subr.mxu0 0.0
        %938 = vmatpush2.msra.mxu0 0.0
        %939 = vmatprep.subr.mxu0 0.0
        %940 = vmatpush2.msra.mxu0 0.0
        %941 = vmatprep.subr.mxu0 0.0
        %942 = vmatpush2.msra.mxu0 0.0
        %943 = vmatprep.mubr.f32.mxu0 0.0
        %v944 = vand.u32 %v796, 4294901760
        %945 = vmatmul.mubr.f32.gmra.mxu0 %v944
        %v946 = vpop.f32.mrf.mxu0
        %v947 = vadd.f32 %v871, %v946
        %v948 = vpop.f32.mrf.mxu0
        %949 = vdwg.mxu0
        %950 = vmatprep.subr.mxu0 0.0
        %951 = vmatpush1.msra.mxu0 0.0
        %952 = vmatprep.subr.mxu0 0.0
        %953 = vmatpush1.msra.mxu0 0.0
        %954 = vmatprep.subr.mxu0 0.0
        %955 = vmatpush1.msra.mxu0 0.0
        %956 = vmatprep.subr.mxu0 0.0
        %957 = vmatpush1.msra.mxu0 0.0
        %958 = vmatprep.subr.mxu0 0.0
        %959 = vmatpush1.msra.mxu0 0.0
        %960 = vmatprep.subr.mxu0 0.0
        %961 = vmatpush1.msra.mxu0 0.0
        %962 = vmatprep.subr.mxu0 0.0
        %963 = vmatpush1.msra.mxu0 0.0
        %964 = vmatprep.subr.mxu0 0.0
        %965 = vmatpush1.msra.mxu0 0.0
        %966 = vmatprep.subr.mxu0 0.0
        %967 = vmatpush1.msra.mxu0 0.0
        %968 = vmatprep.subr.mxu0 0.0
        %969 = vmatpush1.msra.mxu0 0.0
        %970 = vmatprep.subr.mxu0 0.0
        %971 = vmatpush1.msra.mxu0 0.0
        %972 = vmatprep.subr.mxu0 0.0
        %973 = vmatpush1.msra.mxu0 0.0
        %974 = vmatprep.subr.mxu0 0.0
        %975 = vmatpush1.msra.mxu0 0.0
        %976 = vmatprep.subr.mxu0 0.0
        %977 = vmatpush1.msra.mxu0 0.0
        %978 = vmatprep.subr.mxu0 0.0
        %979 = vmatpush1.msra.mxu0 0.0
        %980 = vmatprep.subr.mxu0 0.0
        %v981 = vand.u32 %v792, 4294901760
        %v982 = vsub.f32 %v792, %v981
        %983 = vmatpush1.msra.mxu0 %v982
        %984 = vmatprep.subr.mxu0 0.0
        %985 = vmatpush2.msra.mxu0 0.0
        %986 = vmatprep.subr.mxu0 0.0
        %987 = vmatpush2.msra.mxu0 0.0
        %988 = vmatprep.subr.mxu0 0.0
        %989 = vmatpush2.msra.mxu0 0.0
        %990 = vmatprep.subr.mxu0 0.0
        %991 = vmatpush2.msra.mxu0 0.0
        %992 = vmatprep.subr.mxu0 0.0
        %993 = vmatpush2.msra.mxu0 0.0
        %994 = vmatprep.subr.mxu0 0.0
        %995 = vmatpush2.msra.mxu0 0.0
        %996 = vmatprep.subr.mxu0 0.0
        %997 = vmatpush2.msra.mxu0 0.0
        %998 = vmatprep.subr.mxu0 0.0
        %999 = vmatpush2.msra.mxu0 0.0
        %1000 = vmatprep.subr.mxu0 0.0
        %1001 = vmatpush2.msra.mxu0 0.0
        %1002 = vmatprep.subr.mxu0 0.0
        %1003 = vmatpush2.msra.mxu0 0.0
        %1004 = vmatprep.subr.mxu0 0.0
        %1005 = vmatpush2.msra.mxu0 0.0
        %1006 = vmatprep.subr.mxu0 0.0
        %1007 = vmatpush2.msra.mxu0 0.0
        %1008 = vmatprep.subr.mxu0 0.0
        %1009 = vmatpush2.msra.mxu0 0.0
        %1010 = vmatprep.subr.mxu0 0.0
        %1011 = vmatpush2.msra.mxu0 0.0
        %1012 = vmatprep.subr.mxu0 0.0
        %1013 = vmatpush2.msra.mxu0 0.0
        %1014 = vmatprep.subr.mxu0 0.0
        %1015 = vmatpush2.msra.mxu0 0.0
        %1016 = vmatprep.mubr.f32.mxu0 0.0
        %v1017 = vand.u32 %v796, 4294901760
        %v1018 = vsub.f32 %v796, %v1017
        %1019 = vmatmul.mubr.f32.gmra.mxu0 %v1018
        %v1020 = vpop.f32.mrf.mxu0
        %v1021 = vadd.f32 %v947, %v1020
        %v1022 = vpop.f32.mrf.mxu0
        %1023 = vdwg.mxu0
        %1024 = vmatprep.subr.mxu0 0.0
        %1025 = vmatpush1.msra.mxu0 0.0
        %1026 = vmatprep.subr.mxu0 0.0
        %1027 = vmatpush1.msra.mxu0 0.0
        %1028 = vmatprep.subr.mxu0 0.0
        %1029 = vmatpush1.msra.mxu0 0.0
        %1030 = vmatprep.subr.mxu0 0.0
        %1031 = vmatpush1.msra.mxu0 0.0
        %1032 = vmatprep.subr.mxu0 0.0
        %1033 = vmatpush1.msra.mxu0 0.0
        %1034 = vmatprep.subr.mxu0 0.0
        %1035 = vmatpush1.msra.mxu0 0.0
        %1036 = vmatprep.subr.mxu0 0.0
        %1037 = vmatpush1.msra.mxu0 0.0
        %1038 = vmatprep.subr.mxu0 0.0
        %1039 = vmatpush1.msra.mxu0 0.0
        %1040 = vmatprep.subr.mxu0 0.0
        %1041 = vmatpush1.msra.mxu0 0.0
        %1042 = vmatprep.subr.mxu0 0.0
        %1043 = vmatpush1.msra.mxu0 0.0
        %1044 = vmatprep.subr.mxu0 0.0
        %1045 = vmatpush1.msra.mxu0 0.0
        %1046 = vmatprep.subr.mxu0 0.0
        %1047 = vmatpush1.msra.mxu0 0.0
        %1048 = vmatprep.subr.mxu0 0.0
        %1049 = vmatpush1.msra.mxu0 0.0
        %1050 = vmatprep.subr.mxu0 0.0
        %1051 = vmatpush1.msra.mxu0 0.0
        %1052 = vmatprep.subr.mxu0 0.0
        %1053 = vmatpush1.msra.mxu0 0.0
        %1054 = vmatprep.subr.mxu0 0.0
        %v1055 = vand.u32 %v792, 4294901760
        %1056 = vmatpush1.msra.mxu0 %v1055
        %1057 = vmatprep.subr.mxu0 0.0
        %1058 = vmatpush2.msra.mxu0 0.0
        %1059 = vmatprep.subr.mxu0 0.0
        %1060 = vmatpush2.msra.mxu0 0.0
        %1061 = vmatprep.subr.mxu0 0.0
        %1062 = vmatpush2.msra.mxu0 0.0
        %1063 = vmatprep.subr.mxu0 0.0
        %1064 = vmatpush2.msra.mxu0 0.0
        %1065 = vmatprep.subr.mxu0 0.0
        %1066 = vmatpush2.msra.mxu0 0.0
        %1067 = vmatprep.subr.mxu0 0.0
        %1068 = vmatpush2.msra.mxu0 0.0
        %1069 = vmatprep.subr.mxu0 0.0
        %1070 = vmatpush2.msra.mxu0 0.0
        %1071 = vmatprep.subr.mxu0 0.0
        %1072 = vmatpush2.msra.mxu0 0.0
        %1073 = vmatprep.subr.mxu0 0.0
        %1074 = vmatpush2.msra.mxu0 0.0
        %1075 = vmatprep.subr.mxu0 0.0
        %1076 = vmatpush2.msra.mxu0 0.0
        %1077 = vmatprep.subr.mxu0 0.0
        %1078 = vmatpush2.msra.mxu0 0.0
        %1079 = vmatprep.subr.mxu0 0.0
        %1080 = vmatpush2.msra.mxu0 0.0
        %1081 = vmatprep.subr.mxu0 0.0
        %1082 = vmatpush2.msra.mxu0 0.0
        %1083 = vmatprep.subr.mxu0 0.0
        %1084 = vmatpush2.msra.mxu0 0.0
        %1085 = vmatprep.subr.mxu0 0.0
        %1086 = vmatpush2.msra.mxu0 0.0
        %1087 = vmatprep.subr.mxu0 0.0
        %1088 = vmatpush2.msra.mxu0 0.0
        %1089 = vmatprep.mubr.f32.mxu0 0.0
        %v1090 = vand.u32 %v796, 4294901760
        %v1091 = vsub.f32 %v796, %v1090
        %v1092 = vand.u32 %v1091, 4294901760
        %1093 = vmatmul.mubr.f32.gmra.mxu0 %v1092
        %v1094 = vpop.f32.mrf.mxu0
        %v1095 = vadd.f32 %v1021, %v1094
        %v1096 = vpop.f32.mrf.mxu0
        %1097 = vdwg.mxu0
        %1098 = vmatprep.subr.mxu0 0.0
        %1099 = vmatpush1.msra.mxu0 0.0
        %1100 = vmatprep.subr.mxu0 0.0
        %1101 = vmatpush1.msra.mxu0 0.0
        %1102 = vmatprep.subr.mxu0 0.0
        %1103 = vmatpush1.msra.mxu0 0.0
        %1104 = vmatprep.subr.mxu0 0.0
        %1105 = vmatpush1.msra.mxu0 0.0
        %1106 = vmatprep.subr.mxu0 0.0
        %1107 = vmatpush1.msra.mxu0 0.0
        %1108 = vmatprep.subr.mxu0 0.0
        %1109 = vmatpush1.msra.mxu0 0.0
        %1110 = vmatprep.subr.mxu0 0.0
        %1111 = vmatpush1.msra.mxu0 0.0
        %1112 = vmatprep.subr.mxu0 0.0
        %1113 = vmatpush1.msra.mxu0 0.0
        %1114 = vmatprep.subr.mxu0 0.0
        %1115 = vmatpush1.msra.mxu0 0.0
        %1116 = vmatprep.subr.mxu0 0.0
        %1117 = vmatpush1.msra.mxu0 0.0
        %1118 = vmatprep.subr.mxu0 0.0
        %1119 = vmatpush1.msra.mxu0 0.0
        %1120 = vmatprep.subr.mxu0 0.0
        %1121 = vmatpush1.msra.mxu0 0.0
        %1122 = vmatprep.subr.mxu0 0.0
        %1123 = vmatpush1.msra.mxu0 0.0
        %1124 = vmatprep.subr.mxu0 0.0
        %1125 = vmatpush1.msra.mxu0 0.0
        %1126 = vmatprep.subr.mxu0 0.0
        %1127 = vmatpush1.msra.mxu0 0.0
        %1128 = vmatprep.subr.mxu0 0.0
        %v1129 = vand.u32 %v792, 4294901760
        %v1130 = vsub.f32 %v792, %v1129
        %v1131 = vand.u32 %v1130, 4294901760
        %1132 = vmatpush1.msra.mxu0 %v1131
        %1133 = vmatprep.subr.mxu0 0.0
        %1134 = vmatpush2.msra.mxu0 0.0
        %1135 = vmatprep.subr.mxu0 0.0
        %1136 = vmatpush2.msra.mxu0 0.0
        %1137 = vmatprep.subr.mxu0 0.0
        %1138 = vmatpush2.msra.mxu0 0.0
        %1139 = vmatprep.subr.mxu0 0.0
        %1140 = vmatpush2.msra.mxu0 0.0
        %1141 = vmatprep.subr.mxu0 0.0
        %1142 = vmatpush2.msra.mxu0 0.0
        %1143 = vmatprep.subr.mxu0 0.0
        %1144 = vmatpush2.msra.mxu0 0.0
        %1145 = vmatprep.subr.mxu0 0.0
        %1146 = vmatpush2.msra.mxu0 0.0
        %1147 = vmatprep.subr.mxu0 0.0
        %1148 = vmatpush2.msra.mxu0 0.0
        %1149 = vmatprep.subr.mxu0 0.0
        %1150 = vmatpush2.msra.mxu0 0.0
        %1151 = vmatprep.subr.mxu0 0.0
        %1152 = vmatpush2.msra.mxu0 0.0
        %1153 = vmatprep.subr.mxu0 0.0
        %1154 = vmatpush2.msra.mxu0 0.0
        %1155 = vmatprep.subr.mxu0 0.0
        %1156 = vmatpush2.msra.mxu0 0.0
        %1157 = vmatprep.subr.mxu0 0.0
        %1158 = vmatpush2.msra.mxu0 0.0
        %1159 = vmatprep.subr.mxu0 0.0
        %1160 = vmatpush2.msra.mxu0 0.0
        %1161 = vmatprep.subr.mxu0 0.0
        %1162 = vmatpush2.msra.mxu0 0.0
        %1163 = vmatprep.subr.mxu0 0.0
        %1164 = vmatpush2.msra.mxu0 0.0
        %1165 = vmatprep.mubr.f32.mxu0 0.0
        %v1166 = vand.u32 %v796, 4294901760
        %1167 = vmatmul.mubr.f32.gmra.mxu0 %v1166
        %v1168 = vpop.f32.mrf.mxu0
        %v1169 = vadd.f32 %v1095, %v1168
        %v1170 = vpop.f32.mrf.mxu0
        %1171 = vdwg.mxu0
        %1172 = vmatprep.subr.mxu0 0.0
        %1173 = vmatpush1.msra.mxu0 0.0
        %1174 = vmatprep.subr.mxu0 0.0
        %1175 = vmatpush1.msra.mxu0 0.0
        %1176 = vmatprep.subr.mxu0 0.0
        %1177 = vmatpush1.msra.mxu0 0.0
        %1178 = vmatprep.subr.mxu0 0.0
        %1179 = vmatpush1.msra.mxu0 0.0
        %1180 = vmatprep.subr.mxu0 0.0
        %1181 = vmatpush1.msra.mxu0 0.0
        %1182 = vmatprep.subr.mxu0 0.0
        %1183 = vmatpush1.msra.mxu0 0.0
        %1184 = vmatprep.subr.mxu0 0.0
        %1185 = vmatpush1.msra.mxu0 0.0
        %1186 = vmatprep.subr.mxu0 0.0
        %1187 = vmatpush1.msra.mxu0 0.0
        %1188 = vmatprep.subr.mxu0 0.0
        %1189 = vmatpush1.msra.mxu0 0.0
        %1190 = vmatprep.subr.mxu0 0.0
        %1191 = vmatpush1.msra.mxu0 0.0
        %1192 = vmatprep.subr.mxu0 0.0
        %1193 = vmatpush1.msra.mxu0 0.0
        %1194 = vmatprep.subr.mxu0 0.0
        %1195 = vmatpush1.msra.mxu0 0.0
        %1196 = vmatprep.subr.mxu0 0.0
        %1197 = vmatpush1.msra.mxu0 0.0
        %1198 = vmatprep.subr.mxu0 0.0
        %1199 = vmatpush1.msra.mxu0 0.0
        %1200 = vmatprep.subr.mxu0 0.0
        %1201 = vmatpush1.msra.mxu0 0.0
        %1202 = vmatprep.subr.mxu0 0.0
        %v1203 = vand.u32 %v792, 4294901760
        %1204 = vmatpush1.msra.mxu0 %v1203
        %1205 = vmatprep.subr.mxu0 0.0
        %1206 = vmatpush2.msra.mxu0 0.0
        %1207 = vmatprep.subr.mxu0 0.0
        %1208 = vmatpush2.msra.mxu0 0.0
        %1209 = vmatprep.subr.mxu0 0.0
        %1210 = vmatpush2.msra.mxu0 0.0
        %1211 = vmatprep.subr.mxu0 0.0
        %1212 = vmatpush2.msra.mxu0 0.0
        %1213 = vmatprep.subr.mxu0 0.0
        %1214 = vmatpush2.msra.mxu0 0.0
        %1215 = vmatprep.subr.mxu0 0.0
        %1216 = vmatpush2.msra.mxu0 0.0
        %1217 = vmatprep.subr.mxu0 0.0
        %1218 = vmatpush2.msra.mxu0 0.0
        %1219 = vmatprep.subr.mxu0 0.0
        %1220 = vmatpush2.msra.mxu0 0.0
        %1221 = vmatprep.subr.mxu0 0.0
        %1222 = vmatpush2.msra.mxu0 0.0
        %1223 = vmatprep.subr.mxu0 0.0
        %1224 = vmatpush2.msra.mxu0 0.0
        %1225 = vmatprep.subr.mxu0 0.0
        %1226 = vmatpush2.msra.mxu0 0.0
        %1227 = vmatprep.subr.mxu0 0.0
        %1228 = vmatpush2.msra.mxu0 0.0
        %1229 = vmatprep.subr.mxu0 0.0
        %1230 = vmatpush2.msra.mxu0 0.0
        %1231 = vmatprep.subr.mxu0 0.0
        %1232 = vmatpush2.msra.mxu0 0.0
        %1233 = vmatprep.subr.mxu0 0.0
        %1234 = vmatpush2.msra.mxu0 0.0
        %1235 = vmatprep.subr.mxu0 0.0
        %1236 = vmatpush2.msra.mxu0 0.0
        %1237 = vmatprep.mubr.f32.mxu0 0.0
        %v1238 = vand.u32 %v796, 4294901760
        %1239 = vmatmul.mubr.f32.gmra.mxu0 %v1238
        %v1240 = vpop.f32.mrf.mxu0
        %v1241 = vadd.f32 %v1169, %v1240
        %v1242 = vpop.f32.mrf.mxu0
        %1243 = vdwg.mxu0
        %v1244 = vld [vmem:[%s300] sm:$0xff]
        %1246 = vrot.lane.b32.xlu0 %v1241, 16
        %v1247 = vpop.permute.xlu0 %1246
        %vm1249 = vcmask 130048
        %v1250 = vsel %vm1249, %v1241, %v1247
        %v1252 = vsel %vm345, %v342, 0
        %1254 = vmatprep.subr.mxu0 0.0
        %1255 = vmatpush1.msra.mxu0 0.0
        %1256 = vmatprep.subr.mxu0 0.0
        %1257 = vmatpush1.msra.mxu0 0.0
        %1258 = vmatprep.subr.mxu0 0.0
        %1259 = vmatpush1.msra.mxu0 0.0
        %1260 = vmatprep.subr.mxu0 0.0
        %1261 = vmatpush1.msra.mxu0 0.0
        %1262 = vmatprep.subr.mxu0 0.0
        %1263 = vmatpush1.msra.mxu0 0.0
        %1264 = vmatprep.subr.mxu0 0.0
        %1265 = vmatpush1.msra.mxu0 0.0
        %1266 = vmatprep.subr.mxu0 0.0
        %1267 = vmatpush1.msra.mxu0 0.0
        %1268 = vmatprep.subr.mxu0 0.0
        %1269 = vmatpush1.msra.mxu0 0.0
        %1270 = vmatprep.subr.mxu0 0.0
        %1271 = vmatpush1.msra.mxu0 0.0
        %1272 = vmatprep.subr.mxu0 0.0
        %1273 = vmatpush1.msra.mxu0 0.0
        %1274 = vmatprep.subr.mxu0 0.0
        %1275 = vmatpush1.msra.mxu0 0.0
        %1276 = vmatprep.subr.mxu0 0.0
        %1277 = vmatpush1.msra.mxu0 0.0
        %1278 = vmatprep.subr.mxu0 0.0
        %1279 = vmatpush1.msra.mxu0 0.0
        %1280 = vmatprep.subr.mxu0 0.0
        %1281 = vmatpush1.msra.mxu0 0.0
        %1282 = vmatprep.subr.mxu0 0.0
        %1283 = vmatpush1.msra.mxu0 0.0
        %1284 = vmatprep.subr.mxu0 0.0
        %v1285 = vand.u32 %v1244, 4294901760
        %1286 = vmatpush1.msra.mxu0 %v1285
        %1287 = vmatprep.subr.mxu0 0.0
        %1288 = vmatpush2.msra.mxu0 0.0
        %1289 = vmatprep.subr.mxu0 0.0
        %1290 = vmatpush2.msra.mxu0 0.0
        %1291 = vmatprep.subr.mxu0 0.0
        %1292 = vmatpush2.msra.mxu0 0.0
        %1293 = vmatprep.subr.mxu0 0.0
        %1294 = vmatpush2.msra.mxu0 0.0
        %1295 = vmatprep.subr.mxu0 0.0
        %1296 = vmatpush2.msra.mxu0 0.0
        %1297 = vmatprep.subr.mxu0 0.0
        %1298 = vmatpush2.msra.mxu0 0.0
        %1299 = vmatprep.subr.mxu0 0.0
        %1300 = vmatpush2.msra.mxu0 0.0
        %1301 = vmatprep.subr.mxu0 0.0
        %1302 = vmatpush2.msra.mxu0 0.0
        %1303 = vmatprep.subr.mxu0 0.0
        %1304 = vmatpush2.msra.mxu0 0.0
        %1305 = vmatprep.subr.mxu0 0.0
        %1306 = vmatpush2.msra.mxu0 0.0
        %1307 = vmatprep.subr.mxu0 0.0
        %1308 = vmatpush2.msra.mxu0 0.0
        %1309 = vmatprep.subr.mxu0 0.0
        %1310 = vmatpush2.msra.mxu0 0.0
        %1311 = vmatprep.subr.mxu0 0.0
        %1312 = vmatpush2.msra.mxu0 0.0
        %1313 = vmatprep.subr.mxu0 0.0
        %1314 = vmatpush2.msra.mxu0 0.0
        %1315 = vmatprep.subr.mxu0 0.0
        %1316 = vmatpush2.msra.mxu0 0.0
        %1317 = vmatprep.subr.mxu0 0.0
        %1318 = vmatpush2.msra.mxu0 0.0
        %1319 = vmatprep.mubr.f32.mxu0 0.0
        %v1320 = vand.u32 %v1252, 4294901760
        %v1321 = vsub.f32 %v1252, %v1320
        %v1322 = vand.u32 %v1321, 4294901760
        %v1323 = vsub.f32 %v1321, %v1322
        %v1324 = vand.u32 %v1323, 4294901760
        %1325 = vmatmul.mubr.f32.gmra.mxu0 %v1324
        %v1326 = vpop.f32.mrf.mxu0
        %v1327 = vadd.f32 %v1250, %v1326
        %v1328 = vpop.f32.mrf.mxu0
        %1329 = vdwg.mxu0
        %1330 = vmatprep.subr.mxu0 0.0
        %1331 = vmatpush1.msra.mxu0 0.0
        %1332 = vmatprep.subr.mxu0 0.0
        %1333 = vmatpush1.msra.mxu0 0.0
        %1334 = vmatprep.subr.mxu0 0.0
        %1335 = vmatpush1.msra.mxu0 0.0
        %1336 = vmatprep.subr.mxu0 0.0
        %1337 = vmatpush1.msra.mxu0 0.0
        %1338 = vmatprep.subr.mxu0 0.0
        %1339 = vmatpush1.msra.mxu0 0.0
        %1340 = vmatprep.subr.mxu0 0.0
        %1341 = vmatpush1.msra.mxu0 0.0
        %1342 = vmatprep.subr.mxu0 0.0
        %1343 = vmatpush1.msra.mxu0 0.0
        %1344 = vmatprep.subr.mxu0 0.0
        %1345 = vmatpush1.msra.mxu0 0.0
        %1346 = vmatprep.subr.mxu0 0.0
        %1347 = vmatpush1.msra.mxu0 0.0
        %1348 = vmatprep.subr.mxu0 0.0
        %1349 = vmatpush1.msra.mxu0 0.0
        %1350 = vmatprep.subr.mxu0 0.0
        %1351 = vmatpush1.msra.mxu0 0.0
        %1352 = vmatprep.subr.mxu0 0.0
        %1353 = vmatpush1.msra.mxu0 0.0
        %1354 = vmatprep.subr.mxu0 0.0
        %1355 = vmatpush1.msra.mxu0 0.0
        %1356 = vmatprep.subr.mxu0 0.0
        %1357 = vmatpush1.msra.mxu0 0.0
        %1358 = vmatprep.subr.mxu0 0.0
        %1359 = vmatpush1.msra.mxu0 0.0
        %1360 = vmatprep.subr.mxu0 0.0
        %v1361 = vand.u32 %v1244, 4294901760
        %v1362 = vsub.f32 %v1244, %v1361
        %v1363 = vand.u32 %v1362, 4294901760
        %v1364 = vsub.f32 %v1362, %v1363
        %v1365 = vand.u32 %v1364, 4294901760
        %1366 = vmatpush1.msra.mxu0 %v1365
        %1367 = vmatprep.subr.mxu0 0.0
        %1368 = vmatpush2.msra.mxu0 0.0
        %1369 = vmatprep.subr.mxu0 0.0
        %1370 = vmatpush2.msra.mxu0 0.0
        %1371 = vmatprep.subr.mxu0 0.0
        %1372 = vmatpush2.msra.mxu0 0.0
        %1373 = vmatprep.subr.mxu0 0.0
        %1374 = vmatpush2.msra.mxu0 0.0
        %1375 = vmatprep.subr.mxu0 0.0
        %1376 = vmatpush2.msra.mxu0 0.0
        %1377 = vmatprep.subr.mxu0 0.0
        %1378 = vmatpush2.msra.mxu0 0.0
        %1379 = vmatprep.subr.mxu0 0.0
        %1380 = vmatpush2.msra.mxu0 0.0
        %1381 = vmatprep.subr.mxu0 0.0
        %1382 = vmatpush2.msra.mxu0 0.0
        %1383 = vmatprep.subr.mxu0 0.0
        %1384 = vmatpush2.msra.mxu0 0.0
        %1385 = vmatprep.subr.mxu0 0.0
        %1386 = vmatpush2.msra.mxu0 0.0
        %1387 = vmatprep.subr.mxu0 0.0
        %1388 = vmatpush2.msra.mxu0 0.0
        %1389 = vmatprep.subr.mxu0 0.0
        %1390 = vmatpush2.msra.mxu0 0.0
        %1391 = vmatprep.subr.mxu0 0.0
        %1392 = vmatpush2.msra.mxu0 0.0
        %1393 = vmatprep.subr.mxu0 0.0
        %1394 = vmatpush2.msra.mxu0 0.0
        %1395 = vmatprep.subr.mxu0 0.0
        %1396 = vmatpush2.msra.mxu0 0.0
        %1397 = vmatprep.subr.mxu0 0.0
        %1398 = vmatpush2.msra.mxu0 0.0
        %1399 = vmatprep.mubr.f32.mxu0 0.0
        %v1400 = vand.u32 %v1252, 4294901760
        %1401 = vmatmul.mubr.f32.gmra.mxu0 %v1400
        %v1402 = vpop.f32.mrf.mxu0
        %v1403 = vadd.f32 %v1327, %v1402
        %v1404 = vpop.f32.mrf.mxu0
        %1405 = vdwg.mxu0
        %1406 = vmatprep.subr.mxu0 0.0
        %1407 = vmatpush1.msra.mxu0 0.0
        %1408 = vmatprep.subr.mxu0 0.0
        %1409 = vmatpush1.msra.mxu0 0.0
        %1410 = vmatprep.subr.mxu0 0.0
        %1411 = vmatpush1.msra.mxu0 0.0
        %1412 = vmatprep.subr.mxu0 0.0
        %1413 = vmatpush1.msra.mxu0 0.0
        %1414 = vmatprep.subr.mxu0 0.0
        %1415 = vmatpush1.msra.mxu0 0.0
        %1416 = vmatprep.subr.mxu0 0.0
        %1417 = vmatpush1.msra.mxu0 0.0
        %1418 = vmatprep.subr.mxu0 0.0
        %1419 = vmatpush1.msra.mxu0 0.0
        %1420 = vmatprep.subr.mxu0 0.0
        %1421 = vmatpush1.msra.mxu0 0.0
        %1422 = vmatprep.subr.mxu0 0.0
        %1423 = vmatpush1.msra.mxu0 0.0
        %1424 = vmatprep.subr.mxu0 0.0
        %1425 = vmatpush1.msra.mxu0 0.0
        %1426 = vmatprep.subr.mxu0 0.0
        %1427 = vmatpush1.msra.mxu0 0.0
        %1428 = vmatprep.subr.mxu0 0.0
        %1429 = vmatpush1.msra.mxu0 0.0
        %1430 = vmatprep.subr.mxu0 0.0
        %1431 = vmatpush1.msra.mxu0 0.0
        %1432 = vmatprep.subr.mxu0 0.0
        %1433 = vmatpush1.msra.mxu0 0.0
        %1434 = vmatprep.subr.mxu0 0.0
        %1435 = vmatpush1.msra.mxu0 0.0
        %1436 = vmatprep.subr.mxu0 0.0
        %v1437 = vand.u32 %v1244, 4294901760
        %v1438 = vsub.f32 %v1244, %v1437
        %1439 = vmatpush1.msra.mxu0 %v1438
        %1440 = vmatprep.subr.mxu0 0.0
        %1441 = vmatpush2.msra.mxu0 0.0
        %1442 = vmatprep.subr.mxu0 0.0
        %1443 = vmatpush2.msra.mxu0 0.0
        %1444 = vmatprep.subr.mxu0 0.0
        %1445 = vmatpush2.msra.mxu0 0.0
        %1446 = vmatprep.subr.mxu0 0.0
        %1447 = vmatpush2.msra.mxu0 0.0
        %1448 = vmatprep.subr.mxu0 0.0
        %1449 = vmatpush2.msra.mxu0 0.0
        %1450 = vmatprep.subr.mxu0 0.0
        %1451 = vmatpush2.msra.mxu0 0.0
        %1452 = vmatprep.subr.mxu0 0.0
        %1453 = vmatpush2.msra.mxu0 0.0
        %1454 = vmatprep.subr.mxu0 0.0
        %1455 = vmatpush2.msra.mxu0 0.0
        %1456 = vmatprep.subr.mxu0 0.0
        %1457 = vmatpush2.msra.mxu0 0.0
        %1458 = vmatprep.subr.mxu0 0.0
        %1459 = vmatpush2.msra.mxu0 0.0
        %1460 = vmatprep.subr.mxu0 0.0
        %1461 = vmatpush2.msra.mxu0 0.0
        %1462 = vmatprep.subr.mxu0 0.0
        %1463 = vmatpush2.msra.mxu0 0.0
        %1464 = vmatprep.subr.mxu0 0.0
        %1465 = vmatpush2.msra.mxu0 0.0
        %1466 = vmatprep.subr.mxu0 0.0
        %1467 = vmatpush2.msra.mxu0 0.0
        %1468 = vmatprep.subr.mxu0 0.0
        %1469 = vmatpush2.msra.mxu0 0.0
        %1470 = vmatprep.subr.mxu0 0.0
        %1471 = vmatpush2.msra.mxu0 0.0
        %1472 = vmatprep.mubr.f32.mxu0 0.0
        %v1473 = vand.u32 %v1252, 4294901760
        %v1474 = vsub.f32 %v1252, %v1473
        %1475 = vmatmul.mubr.f32.gmra.mxu0 %v1474
        %v1476 = vpop.f32.mrf.mxu0
        %v1477 = vadd.f32 %v1403, %v1476
        %v1478 = vpop.f32.mrf.mxu0
        %1479 = vdwg.mxu0
        %1480 = vmatprep.subr.mxu0 0.0
        %1481 = vmatpush1.msra.mxu0 0.0
        %1482 = vmatprep.subr.mxu0 0.0
        %1483 = vmatpush1.msra.mxu0 0.0
        %1484 = vmatprep.subr.mxu0 0.0
        %1485 = vmatpush1.msra.mxu0 0.0
        %1486 = vmatprep.subr.mxu0 0.0
        %1487 = vmatpush1.msra.mxu0 0.0
        %1488 = vmatprep.subr.mxu0 0.0
        %1489 = vmatpush1.msra.mxu0 0.0
        %1490 = vmatprep.subr.mxu0 0.0
        %1491 = vmatpush1.msra.mxu0 0.0
        %1492 = vmatprep.subr.mxu0 0.0
        %1493 = vmatpush1.msra.mxu0 0.0
        %1494 = vmatprep.subr.mxu0 0.0
        %1495 = vmatpush1.msra.mxu0 0.0
        %1496 = vmatprep.subr.mxu0 0.0
        %1497 = vmatpush1.msra.mxu0 0.0
        %1498 = vmatprep.subr.mxu0 0.0
        %1499 = vmatpush1.msra.mxu0 0.0
        %1500 = vmatprep.subr.mxu0 0.0
        %1501 = vmatpush1.msra.mxu0 0.0
        %1502 = vmatprep.subr.mxu0 0.0
        %1503 = vmatpush1.msra.mxu0 0.0
        %1504 = vmatprep.subr.mxu0 0.0
        %1505 = vmatpush1.msra.mxu0 0.0
        %1506 = vmatprep.subr.mxu0 0.0
        %1507 = vmatpush1.msra.mxu0 0.0
        %1508 = vmatprep.subr.mxu0 0.0
        %1509 = vmatpush1.msra.mxu0 0.0
        %1510 = vmatprep.subr.mxu0 0.0
        %v1511 = vand.u32 %v1244, 4294901760
        %1512 = vmatpush1.msra.mxu0 %v1511
        %1513 = vmatprep.subr.mxu0 0.0
        %1514 = vmatpush2.msra.mxu0 0.0
        %1515 = vmatprep.subr.mxu0 0.0
        %1516 = vmatpush2.msra.mxu0 0.0
        %1517 = vmatprep.subr.mxu0 0.0
        %1518 = vmatpush2.msra.mxu0 0.0
        %1519 = vmatprep.subr.mxu0 0.0
        %1520 = vmatpush2.msra.mxu0 0.0
        %1521 = vmatprep.subr.mxu0 0.0
        %1522 = vmatpush2.msra.mxu0 0.0
        %1523 = vmatprep.subr.mxu0 0.0
        %1524 = vmatpush2.msra.mxu0 0.0
        %1525 = vmatprep.subr.mxu0 0.0
        %1526 = vmatpush2.msra.mxu0 0.0
        %1527 = vmatprep.subr.mxu0 0.0
        %1528 = vmatpush2.msra.mxu0 0.0
        %1529 = vmatprep.subr.mxu0 0.0
        %1530 = vmatpush2.msra.mxu0 0.0
        %1531 = vmatprep.subr.mxu0 0.0
        %1532 = vmatpush2.msra.mxu0 0.0
        %1533 = vmatprep.subr.mxu0 0.0
        %1534 = vmatpush2.msra.mxu0 0.0
        %1535 = vmatprep.subr.mxu0 0.0
        %1536 = vmatpush2.msra.mxu0 0.0
        %1537 = vmatprep.subr.mxu0 0.0
        %1538 = vmatpush2.msra.mxu0 0.0
        %1539 = vmatprep.subr.mxu0 0.0
        %1540 = vmatpush2.msra.mxu0 0.0
        %1541 = vmatprep.subr.mxu0 0.0
        %1542 = vmatpush2.msra.mxu0 0.0
        %1543 = vmatprep.subr.mxu0 0.0
        %1544 = vmatpush2.msra.mxu0 0.0
        %1545 = vmatprep.mubr.f32.mxu0 0.0
        %v1546 = vand.u32 %v1252, 4294901760
        %v1547 = vsub.f32 %v1252, %v1546
        %v1548 = vand.u32 %v1547, 4294901760
        %1549 = vmatmul.mubr.f32.gmra.mxu0 %v1548
        %v1550 = vpop.f32.mrf.mxu0
        %v1551 = vadd.f32 %v1477, %v1550
        %v1552 = vpop.f32.mrf.mxu0
        %1553 = vdwg.mxu0
        %1554 = vmatprep.subr.mxu0 0.0
        %1555 = vmatpush1.msra.mxu0 0.0
        %1556 = vmatprep.subr.mxu0 0.0
        %1557 = vmatpush1.msra.mxu0 0.0
        %1558 = vmatprep.subr.mxu0 0.0
        %1559 = vmatpush1.msra.mxu0 0.0
        %1560 = vmatprep.subr.mxu0 0.0
        %1561 = vmatpush1.msra.mxu0 0.0
        %1562 = vmatprep.subr.mxu0 0.0
        %1563 = vmatpush1.msra.mxu0 0.0
        %1564 = vmatprep.subr.mxu0 0.0
        %1565 = vmatpush1.msra.mxu0 0.0
        %1566 = vmatprep.subr.mxu0 0.0
        %1567 = vmatpush1.msra.mxu0 0.0
        %1568 = vmatprep.subr.mxu0 0.0
        %1569 = vmatpush1.msra.mxu0 0.0
        %1570 = vmatprep.subr.mxu0 0.0
        %1571 = vmatpush1.msra.mxu0 0.0
        %1572 = vmatprep.subr.mxu0 0.0
        %1573 = vmatpush1.msra.mxu0 0.0
        %1574 = vmatprep.subr.mxu0 0.0
        %1575 = vmatpush1.msra.mxu0 0.0
        %1576 = vmatprep.subr.mxu0 0.0
        %1577 = vmatpush1.msra.mxu0 0.0
        %1578 = vmatprep.subr.mxu0 0.0
        %1579 = vmatpush1.msra.mxu0 0.0
        %1580 = vmatprep.subr.mxu0 0.0
        %1581 = vmatpush1.msra.mxu0 0.0
        %1582 = vmatprep.subr.mxu0 0.0
        %1583 = vmatpush1.msra.mxu0 0.0
        %1584 = vmatprep.subr.mxu0 0.0
        %v1585 = vand.u32 %v1244, 4294901760
        %v1586 = vsub.f32 %v1244, %v1585
        %v1587 = vand.u32 %v1586, 4294901760
        %1588 = vmatpush1.msra.mxu0 %v1587
        %1589 = vmatprep.subr.mxu0 0.0
        %1590 = vmatpush2.msra.mxu0 0.0
        %1591 = vmatprep.subr.mxu0 0.0
        %1592 = vmatpush2.msra.mxu0 0.0
        %1593 = vmatprep.subr.mxu0 0.0
        %1594 = vmatpush2.msra.mxu0 0.0
        %1595 = vmatprep.subr.mxu0 0.0
        %1596 = vmatpush2.msra.mxu0 0.0
        %1597 = vmatprep.subr.mxu0 0.0
        %1598 = vmatpush2.msra.mxu0 0.0
        %1599 = vmatprep.subr.mxu0 0.0
        %1600 = vmatpush2.msra.mxu0 0.0
        %1601 = vmatprep.subr.mxu0 0.0
        %1602 = vmatpush2.msra.mxu0 0.0
        %1603 = vmatprep.subr.mxu0 0.0
        %1604 = vmatpush2.msra.mxu0 0.0
        %1605 = vmatprep.subr.mxu0 0.0
        %1606 = vmatpush2.msra.mxu0 0.0
        %1607 = vmatprep.subr.mxu0 0.0
        %1608 = vmatpush2.msra.mxu0 0.0
        %1609 = vmatprep.subr.mxu0 0.0
        %1610 = vmatpush2.msra.mxu0 0.0
        %1611 = vmatprep.subr.mxu0 0.0
        %1612 = vmatpush2.msra.mxu0 0.0
        %1613 = vmatprep.subr.mxu0 0.0
        %1614 = vmatpush2.msra.mxu0 0.0
        %1615 = vmatprep.subr.mxu0 0.0
        %1616 = vmatpush2.msra.mxu0 0.0
        %1617 = vmatprep.subr.mxu0 0.0
        %1618 = vmatpush2.msra.mxu0 0.0
        %1619 = vmatprep.subr.mxu0 0.0
        %1620 = vmatpush2.msra.mxu0 0.0
        %1621 = vmatprep.mubr.f32.mxu0 0.0
        %v1622 = vand.u32 %v1252, 4294901760
        %1623 = vmatmul.mubr.f32.gmra.mxu0 %v1622
        %v1624 = vpop.f32.mrf.mxu0
        %v1625 = vadd.f32 %v1551, %v1624
        %v1626 = vpop.f32.mrf.mxu0
        %1627 = vdwg.mxu0
        %1628 = vmatprep.subr.mxu0 0.0
        %1629 = vmatpush1.msra.mxu0 0.0
        %1630 = vmatprep.subr.mxu0 0.0
        %1631 = vmatpush1.msra.mxu0 0.0
        %1632 = vmatprep.subr.mxu0 0.0
        %1633 = vmatpush1.msra.mxu0 0.0
        %1634 = vmatprep.subr.mxu0 0.0
        %1635 = vmatpush1.msra.mxu0 0.0
        %1636 = vmatprep.subr.mxu0 0.0
        %1637 = vmatpush1.msra.mxu0 0.0
        %1638 = vmatprep.subr.mxu0 0.0
        %1639 = vmatpush1.msra.mxu0 0.0
        %1640 = vmatprep.subr.mxu0 0.0
        %1641 = vmatpush1.msra.mxu0 0.0
        %1642 = vmatprep.subr.mxu0 0.0
        %1643 = vmatpush1.msra.mxu0 0.0
        %1644 = vmatprep.subr.mxu0 0.0
        %1645 = vmatpush1.msra.mxu0 0.0
        %1646 = vmatprep.subr.mxu0 0.0
        %1647 = vmatpush1.msra.mxu0 0.0
        %1648 = vmatprep.subr.mxu0 0.0
        %1649 = vmatpush1.msra.mxu0 0.0
        %1650 = vmatprep.subr.mxu0 0.0
        %1651 = vmatpush1.msra.mxu0 0.0
        %1652 = vmatprep.subr.mxu0 0.0
        %1653 = vmatpush1.msra.mxu0 0.0
        %1654 = vmatprep.subr.mxu0 0.0
        %1655 = vmatpush1.msra.mxu0 0.0
        %1656 = vmatprep.subr.mxu0 0.0
        %1657 = vmatpush1.msra.mxu0 0.0
        %1658 = vmatprep.subr.mxu0 0.0
        %v1659 = vand.u32 %v1244, 4294901760
        %1660 = vmatpush1.msra.mxu0 %v1659
        %1661 = vmatprep.subr.mxu0 0.0
        %1662 = vmatpush2.msra.mxu0 0.0
        %1663 = vmatprep.subr.mxu0 0.0
        %1664 = vmatpush2.msra.mxu0 0.0
        %1665 = vmatprep.subr.mxu0 0.0
        %1666 = vmatpush2.msra.mxu0 0.0
        %1667 = vmatprep.subr.mxu0 0.0
        %1668 = vmatpush2.msra.mxu0 0.0
        %1669 = vmatprep.subr.mxu0 0.0
        %1670 = vmatpush2.msra.mxu0 0.0
        %1671 = vmatprep.subr.mxu0 0.0
        %1672 = vmatpush2.msra.mxu0 0.0
        %1673 = vmatprep.subr.mxu0 0.0
        %1674 = vmatpush2.msra.mxu0 0.0
        %1675 = vmatprep.subr.mxu0 0.0
        %1676 = vmatpush2.msra.mxu0 0.0
        %1677 = vmatprep.subr.mxu0 0.0
        %1678 = vmatpush2.msra.mxu0 0.0
        %1679 = vmatprep.subr.mxu0 0.0
        %1680 = vmatpush2.msra.mxu0 0.0
        %1681 = vmatprep.subr.mxu0 0.0
        %1682 = vmatpush2.msra.mxu0 0.0
        %1683 = vmatprep.subr.mxu0 0.0
        %1684 = vmatpush2.msra.mxu0 0.0
        %1685 = vmatprep.subr.mxu0 0.0
        %1686 = vmatpush2.msra.mxu0 0.0
        %1687 = vmatprep.subr.mxu0 0.0
        %1688 = vmatpush2.msra.mxu0 0.0
        %1689 = vmatprep.subr.mxu0 0.0
        %1690 = vmatpush2.msra.mxu0 0.0
        %1691 = vmatprep.subr.mxu0 0.0
        %1692 = vmatpush2.msra.mxu0 0.0
        %1693 = vmatprep.mubr.f32.mxu0 0.0
        %v1694 = vand.u32 %v1252, 4294901760
        %1695 = vmatmul.mubr.f32.gmra.mxu0 %v1694
        %v1696 = vpop.f32.mrf.mxu0
        %v1697 = vadd.f32 %v1625, %v1696
        %v1698 = vpop.f32.mrf.mxu0
        %1699 = vdwg.mxu0
        %1701 = vset.pattern.permute.xlu0 0
        %1702 = vperm.xlu0 %1701, %v343
        %v1703 = vpop.permute.xlu0 %1702
        %v1705 = vadd.f32 %v1697, %v1703
        %v1706 = vmax.f32 %v1705, 0.0
        %vm1707 = vcmask 261120
        %1708 = vst.msk [vmem:[%s337] sm:$0xff] %vm1707, %v1706
        %v1709 = vld [vmem:[%s291] sm:$0xff]
        %1711 = vrot.lane.b32.xlu0 %v1709, 120
        %v1712 = vpop.permute.xlu0 %1711
        %v1713 = vsel %vm345, %v1712, 0
        %1715 = vmatprep.subr.mxu0 0.0
        %1716 = vmatpush1.msra.mxu0 0.0
        %1717 = vmatprep.subr.mxu0 0.0
        %1718 = vmatpush1.msra.mxu0 0.0
        %1719 = vmatprep.subr.mxu0 0.0
        %1720 = vmatpush1.msra.mxu0 0.0
        %1721 = vmatprep.subr.mxu0 0.0
        %1722 = vmatpush1.msra.mxu0 0.0
        %1723 = vmatprep.subr.mxu0 0.0
        %1724 = vmatpush1.msra.mxu0 0.0
        %1725 = vmatprep.subr.mxu0 0.0
        %1726 = vmatpush1.msra.mxu0 0.0
        %1727 = vmatprep.subr.mxu0 0.0
        %1728 = vmatpush1.msra.mxu0 0.0
        %1729 = vmatprep.subr.mxu0 0.0
        %1730 = vmatpush1.msra.mxu0 0.0
        %1731 = vmatprep.subr.mxu0 0.0
        %1732 = vmatpush1.msra.mxu0 0.0
        %1733 = vmatprep.subr.mxu0 0.0
        %1734 = vmatpush1.msra.mxu0 0.0
        %1735 = vmatprep.subr.mxu0 0.0
        %1736 = vmatpush1.msra.mxu0 0.0
        %1737 = vmatprep.subr.mxu0 0.0
        %1738 = vmatpush1.msra.mxu0 0.0
        %1739 = vmatprep.subr.mxu0 0.0
        %1740 = vmatpush1.msra.mxu0 0.0
        %1741 = vmatprep.subr.mxu0 0.0
        %1742 = vmatpush1.msra.mxu0 0.0
        %1743 = vmatprep.subr.mxu0 0.0
        %1744 = vmatpush1.msra.mxu0 0.0
        %1745 = vmatprep.subr.mxu0 0.0
        %v1746 = vand.u32 %v340, 4294901760
        %1747 = vmatpush1.msra.mxu0 %v1746
        %1748 = vmatprep.subr.mxu0 0.0
        %1749 = vmatpush2.msra.mxu0 0.0
        %1750 = vmatprep.subr.mxu0 0.0
        %1751 = vmatpush2.msra.mxu0 0.0
        %1752 = vmatprep.subr.mxu0 0.0
        %1753 = vmatpush2.msra.mxu0 0.0
        %1754 = vmatprep.subr.mxu0 0.0
        %1755 = vmatpush2.msra.mxu0 0.0
        %1756 = vmatprep.subr.mxu0 0.0
        %1757 = vmatpush2.msra.mxu0 0.0
        %1758 = vmatprep.subr.mxu0 0.0
        %1759 = vmatpush2.msra.mxu0 0.0
        %1760 = vmatprep.subr.mxu0 0.0
        %1761 = vmatpush2.msra.mxu0 0.0
        %1762 = vmatprep.subr.mxu0 0.0
        %1763 = vmatpush2.msra.mxu0 0.0
        %1764 = vmatprep.subr.mxu0 0.0
        %1765 = vmatpush2.msra.mxu0 0.0
        %1766 = vmatprep.subr.mxu0 0.0
        %1767 = vmatpush2.msra.mxu0 0.0
        %1768 = vmatprep.subr.mxu0 0.0
        %1769 = vmatpush2.msra.mxu0 0.0
        %1770 = vmatprep.subr.mxu0 0.0
        %1771 = vmatpush2.msra.mxu0 0.0
        %1772 = vmatprep.subr.mxu0 0.0
        %1773 = vmatpush2.msra.mxu0 0.0
        %1774 = vmatprep.subr.mxu0 0.0
        %1775 = vmatpush2.msra.mxu0 0.0
        %1776 = vmatprep.subr.mxu0 0.0
        %1777 = vmatpush2.msra.mxu0 0.0
        %1778 = vmatprep.subr.mxu0 0.0
        %1779 = vmatpush2.msra.mxu0 0.0
        %1780 = vmatprep.mubr.f32.mxu0 0.0
        %v1781 = vand.u32 %v1713, 4294901760
        %v1782 = vsub.f32 %v1713, %v1781
        %v1783 = vand.u32 %v1782, 4294901760
        %v1784 = vsub.f32 %v1782, %v1783
        %v1785 = vand.u32 %v1784, 4294901760
        %1786 = vmatmul.mubr.f32.gmra.mxu0 %v1785
        %v1787 = vpop.f32.mrf.mxu0
        %v1788 = vadd.f32 0.0, %v1787
        %v1789 = vpop.f32.mrf.mxu0
        %1790 = vdwg.mxu0
        %1791 = vmatprep.subr.mxu0 0.0
        %1792 = vmatpush1.msra.mxu0 0.0
        %1793 = vmatprep.subr.mxu0 0.0
        %1794 = vmatpush1.msra.mxu0 0.0
        %1795 = vmatprep.subr.mxu0 0.0
        %1796 = vmatpush1.msra.mxu0 0.0
        %1797 = vmatprep.subr.mxu0 0.0
        %1798 = vmatpush1.msra.mxu0 0.0
        %1799 = vmatprep.subr.mxu0 0.0
        %1800 = vmatpush1.msra.mxu0 0.0
        %1801 = vmatprep.subr.mxu0 0.0
        %1802 = vmatpush1.msra.mxu0 0.0
        %1803 = vmatprep.subr.mxu0 0.0
        %1804 = vmatpush1.msra.mxu0 0.0
        %1805 = vmatprep.subr.mxu0 0.0
        %1806 = vmatpush1.msra.mxu0 0.0
        %1807 = vmatprep.subr.mxu0 0.0
        %1808 = vmatpush1.msra.mxu0 0.0
        %1809 = vmatprep.subr.mxu0 0.0
        %1810 = vmatpush1.msra.mxu0 0.0
        %1811 = vmatprep.subr.mxu0 0.0
        %1812 = vmatpush1.msra.mxu0 0.0
        %1813 = vmatprep.subr.mxu0 0.0
        %1814 = vmatpush1.msra.mxu0 0.0
        %1815 = vmatprep.subr.mxu0 0.0
        %1816 = vmatpush1.msra.mxu0 0.0
        %1817 = vmatprep.subr.mxu0 0.0
        %1818 = vmatpush1.msra.mxu0 0.0
        %1819 = vmatprep.subr.mxu0 0.0
        %1820 = vmatpush1.msra.mxu0 0.0
        %1821 = vmatprep.subr.mxu0 0.0
        %v1822 = vand.u32 %v340, 4294901760
        %v1823 = vsub.f32 %v340, %v1822
        %v1824 = vand.u32 %v1823, 4294901760
        %v1825 = vsub.f32 %v1823, %v1824
        %v1826 = vand.u32 %v1825, 4294901760
        %1827 = vmatpush1.msra.mxu0 %v1826
        %1828 = vmatprep.subr.mxu0 0.0
        %1829 = vmatpush2.msra.mxu0 0.0
        %1830 = vmatprep.subr.mxu0 0.0
        %1831 = vmatpush2.msra.mxu0 0.0
        %1832 = vmatprep.subr.mxu0 0.0
        %1833 = vmatpush2.msra.mxu0 0.0
        %1834 = vmatprep.subr.mxu0 0.0
        %1835 = vmatpush2.msra.mxu0 0.0
        %1836 = vmatprep.subr.mxu0 0.0
        %1837 = vmatpush2.msra.mxu0 0.0
        %1838 = vmatprep.subr.mxu0 0.0
        %1839 = vmatpush2.msra.mxu0 0.0
        %1840 = vmatprep.subr.mxu0 0.0
        %1841 = vmatpush2.msra.mxu0 0.0
        %1842 = vmatprep.subr.mxu0 0.0
        %1843 = vmatpush2.msra.mxu0 0.0
        %1844 = vmatprep.subr.mxu0 0.0
        %1845 = vmatpush2.msra.mxu0 0.0
        %1846 = vmatprep.subr.mxu0 0.0
        %1847 = vmatpush2.msra.mxu0 0.0
        %1848 = vmatprep.subr.mxu0 0.0
        %1849 = vmatpush2.msra.mxu0 0.0
        %1850 = vmatprep.subr.mxu0 0.0
        %1851 = vmatpush2.msra.mxu0 0.0
        %1852 = vmatprep.subr.mxu0 0.0
        %1853 = vmatpush2.msra.mxu0 0.0
        %1854 = vmatprep.subr.mxu0 0.0
        %1855 = vmatpush2.msra.mxu0 0.0
        %1856 = vmatprep.subr.mxu0 0.0
        %1857 = vmatpush2.msra.mxu0 0.0
        %1858 = vmatprep.subr.mxu0 0.0
        %1859 = vmatpush2.msra.mxu0 0.0
        %1860 = vmatprep.mubr.f32.mxu0 0.0
        %v1861 = vand.u32 %v1713, 4294901760
        %1862 = vmatmul.mubr.f32.gmra.mxu0 %v1861
        %v1863 = vpop.f32.mrf.mxu0
        %v1864 = vadd.f32 %v1788, %v1863
        %v1865 = vpop.f32.mrf.mxu0
        %1866 = vdwg.mxu0
        %1867 = vmatprep.subr.mxu0 0.0
        %1868 = vmatpush1.msra.mxu0 0.0
        %1869 = vmatprep.subr.mxu0 0.0
        %1870 = vmatpush1.msra.mxu0 0.0
        %1871 = vmatprep.subr.mxu0 0.0
        %1872 = vmatpush1.msra.mxu0 0.0
        %1873 = vmatprep.subr.mxu0 0.0
        %1874 = vmatpush1.msra.mxu0 0.0
        %1875 = vmatprep.subr.mxu0 0.0
        %1876 = vmatpush1.msra.mxu0 0.0
        %1877 = vmatprep.subr.mxu0 0.0
        %1878 = vmatpush1.msra.mxu0 0.0
        %1879 = vmatprep.subr.mxu0 0.0
        %1880 = vmatpush1.msra.mxu0 0.0
        %1881 = vmatprep.subr.mxu0 0.0
        %1882 = vmatpush1.msra.mxu0 0.0
        %1883 = vmatprep.subr.mxu0 0.0
        %1884 = vmatpush1.msra.mxu0 0.0
        %1885 = vmatprep.subr.mxu0 0.0
        %1886 = vmatpush1.msra.mxu0 0.0
        %1887 = vmatprep.subr.mxu0 0.0
        %1888 = vmatpush1.msra.mxu0 0.0
        %1889 = vmatprep.subr.mxu0 0.0
        %1890 = vmatpush1.msra.mxu0 0.0
        %1891 = vmatprep.subr.mxu0 0.0
        %1892 = vmatpush1.msra.mxu0 0.0
        %1893 = vmatprep.subr.mxu0 0.0
        %1894 = vmatpush1.msra.mxu0 0.0
        %1895 = vmatprep.subr.mxu0 0.0
        %1896 = vmatpush1.msra.mxu0 0.0
        %1897 = vmatprep.subr.mxu0 0.0
        %v1898 = vand.u32 %v340, 4294901760
        %v1899 = vsub.f32 %v340, %v1898
        %1900 = vmatpush1.msra.mxu0 %v1899
        %1901 = vmatprep.subr.mxu0 0.0
        %1902 = vmatpush2.msra.mxu0 0.0
        %1903 = vmatprep.subr.mxu0 0.0
        %1904 = vmatpush2.msra.mxu0 0.0
        %1905 = vmatprep.subr.mxu0 0.0
        %1906 = vmatpush2.msra.mxu0 0.0
        %1907 = vmatprep.subr.mxu0 0.0
        %1908 = vmatpush2.msra.mxu0 0.0
        %1909 = vmatprep.subr.mxu0 0.0
        %1910 = vmatpush2.msra.mxu0 0.0
        %1911 = vmatprep.subr.mxu0 0.0
        %1912 = vmatpush2.msra.mxu0 0.0
        %1913 = vmatprep.subr.mxu0 0.0
        %1914 = vmatpush2.msra.mxu0 0.0
        %1915 = vmatprep.subr.mxu0 0.0
        %1916 = vmatpush2.msra.mxu0 0.0
        %1917 = vmatprep.subr.mxu0 0.0
        %1918 = vmatpush2.msra.mxu0 0.0
        %1919 = vmatprep.subr.mxu0 0.0
        %1920 = vmatpush2.msra.mxu0 0.0
        %1921 = vmatprep.subr.mxu0 0.0
        %1922 = vmatpush2.msra.mxu0 0.0
        %1923 = vmatprep.subr.mxu0 0.0
        %1924 = vmatpush2.msra.mxu0 0.0
        %1925 = vmatprep.subr.mxu0 0.0
        %1926 = vmatpush2.msra.mxu0 0.0
        %1927 = vmatprep.subr.mxu0 0.0
        %1928 = vmatpush2.msra.mxu0 0.0
        %1929 = vmatprep.subr.mxu0 0.0
        %1930 = vmatpush2.msra.mxu0 0.0
        %1931 = vmatprep.subr.mxu0 0.0
        %1932 = vmatpush2.msra.mxu0 0.0
        %1933 = vmatprep.mubr.f32.mxu0 0.0
        %v1934 = vand.u32 %v1713, 4294901760
        %v1935 = vsub.f32 %v1713, %v1934
        %1936 = vmatmul.mubr.f32.gmra.mxu0 %v1935
        %v1937 = vpop.f32.mrf.mxu0
        %v1938 = vadd.f32 %v1864, %v1937
        %v1939 = vpop.f32.mrf.mxu0
        %1940 = vdwg.mxu0
        %1941 = vmatprep.subr.mxu0 0.0
        %1942 = vmatpush1.msra.mxu0 0.0
        %1943 = vmatprep.subr.mxu0 0.0
        %1944 = vmatpush1.msra.mxu0 0.0
        %1945 = vmatprep.subr.mxu0 0.0
        %1946 = vmatpush1.msra.mxu0 0.0
        %1947 = vmatprep.subr.mxu0 0.0
        %1948 = vmatpush1.msra.mxu0 0.0
        %1949 = vmatprep.subr.mxu0 0.0
        %1950 = vmatpush1.msra.mxu0 0.0
        %1951 = vmatprep.subr.mxu0 0.0
        %1952 = vmatpush1.msra.mxu0 0.0
        %1953 = vmatprep.subr.mxu0 0.0
        %1954 = vmatpush1.msra.mxu0 0.0
        %1955 = vmatprep.subr.mxu0 0.0
        %1956 = vmatpush1.msra.mxu0 0.0
        %1957 = vmatprep.subr.mxu0 0.0
        %1958 = vmatpush1.msra.mxu0 0.0
        %1959 = vmatprep.subr.mxu0 0.0
        %1960 = vmatpush1.msra.mxu0 0.0
        %1961 = vmatprep.subr.mxu0 0.0
        %1962 = vmatpush1.msra.mxu0 0.0
        %1963 = vmatprep.subr.mxu0 0.0
        %1964 = vmatpush1.msra.mxu0 0.0
        %1965 = vmatprep.subr.mxu0 0.0
        %1966 = vmatpush1.msra.mxu0 0.0
        %1967 = vmatprep.subr.mxu0 0.0
        %1968 = vmatpush1.msra.mxu0 0.0
        %1969 = vmatprep.subr.mxu0 0.0
        %1970 = vmatpush1.msra.mxu0 0.0
        %1971 = vmatprep.subr.mxu0 0.0
        %v1972 = vand.u32 %v340, 4294901760
        %1973 = vmatpush1.msra.mxu0 %v1972
        %1974 = vmatprep.subr.mxu0 0.0
        %1975 = vmatpush2.msra.mxu0 0.0
        %1976 = vmatprep.subr.mxu0 0.0
        %1977 = vmatpush2.msra.mxu0 0.0
        %1978 = vmatprep.subr.mxu0 0.0
        %1979 = vmatpush2.msra.mxu0 0.0
        %1980 = vmatprep.subr.mxu0 0.0
        %1981 = vmatpush2.msra.mxu0 0.0
        %1982 = vmatprep.subr.mxu0 0.0
        %1983 = vmatpush2.msra.mxu0 0.0
        %1984 = vmatprep.subr.mxu0 0.0
        %1985 = vmatpush2.msra.mxu0 0.0
        %1986 = vmatprep.subr.mxu0 0.0
        %1987 = vmatpush2.msra.mxu0 0.0
        %1988 = vmatprep.subr.mxu0 0.0
        %1989 = vmatpush2.msra.mxu0 0.0
        %1990 = vmatprep.subr.mxu0 0.0
        %1991 = vmatpush2.msra.mxu0 0.0
        %1992 = vmatprep.subr.mxu0 0.0
        %1993 = vmatpush2.msra.mxu0 0.0
        %1994 = vmatprep.subr.mxu0 0.0
        %1995 = vmatpush2.msra.mxu0 0.0
        %1996 = vmatprep.subr.mxu0 0.0
        %1997 = vmatpush2.msra.mxu0 0.0
        %1998 = vmatprep.subr.mxu0 0.0
        %1999 = vmatpush2.msra.mxu0 0.0
        %2000 = vmatprep.subr.mxu0 0.0
        %2001 = vmatpush2.msra.mxu0 0.0
        %2002 = vmatprep.subr.mxu0 0.0
        %2003 = vmatpush2.msra.mxu0 0.0
        %2004 = vmatprep.subr.mxu0 0.0
        %2005 = vmatpush2.msra.mxu0 0.0
        %2006 = vmatprep.mubr.f32.mxu0 0.0
        %v2007 = vand.u32 %v1713, 4294901760
        %v2008 = vsub.f32 %v1713, %v2007
        %v2009 = vand.u32 %v2008, 4294901760
        %2010 = vmatmul.mubr.f32.gmra.mxu0 %v2009
        %v2011 = vpop.f32.mrf.mxu0
        %v2012 = vadd.f32 %v1938, %v2011
        %v2013 = vpop.f32.mrf.mxu0
        %2014 = vdwg.mxu0
        %2015 = vmatprep.subr.mxu0 0.0
        %2016 = vmatpush1.msra.mxu0 0.0
        %2017 = vmatprep.subr.mxu0 0.0
        %2018 = vmatpush1.msra.mxu0 0.0
        %2019 = vmatprep.subr.mxu0 0.0
        %2020 = vmatpush1.msra.mxu0 0.0
        %2021 = vmatprep.subr.mxu0 0.0
        %2022 = vmatpush1.msra.mxu0 0.0
        %2023 = vmatprep.subr.mxu0 0.0
        %2024 = vmatpush1.msra.mxu0 0.0
        %2025 = vmatprep.subr.mxu0 0.0
        %2026 = vmatpush1.msra.mxu0 0.0
        %2027 = vmatprep.subr.mxu0 0.0
        %2028 = vmatpush1.msra.mxu0 0.0
        %2029 = vmatprep.subr.mxu0 0.0
        %2030 = vmatpush1.msra.mxu0 0.0
        %2031 = vmatprep.subr.mxu0 0.0
        %2032 = vmatpush1.msra.mxu0 0.0
        %2033 = vmatprep.subr.mxu0 0.0
        %2034 = vmatpush1.msra.mxu0 0.0
        %2035 = vmatprep.subr.mxu0 0.0
        %2036 = vmatpush1.msra.mxu0 0.0
        %2037 = vmatprep.subr.mxu0 0.0
        %2038 = vmatpush1.msra.mxu0 0.0
        %2039 = vmatprep.subr.mxu0 0.0
        %2040 = vmatpush1.msra.mxu0 0.0
        %2041 = vmatprep.subr.mxu0 0.0
        %2042 = vmatpush1.msra.mxu0 0.0
        %2043 = vmatprep.subr.mxu0 0.0
        %2044 = vmatpush1.msra.mxu0 0.0
        %2045 = vmatprep.subr.mxu0 0.0
        %v2046 = vand.u32 %v340, 4294901760
        %v2047 = vsub.f32 %v340, %v2046
        %v2048 = vand.u32 %v2047, 4294901760
        %2049 = vmatpush1.msra.mxu0 %v2048
        %2050 = vmatprep.subr.mxu0 0.0
        %2051 = vmatpush2.msra.mxu0 0.0
        %2052 = vmatprep.subr.mxu0 0.0
        %2053 = vmatpush2.msra.mxu0 0.0
        %2054 = vmatprep.subr.mxu0 0.0
        %2055 = vmatpush2.msra.mxu0 0.0
        %2056 = vmatprep.subr.mxu0 0.0
        %2057 = vmatpush2.msra.mxu0 0.0
        %2058 = vmatprep.subr.mxu0 0.0
        %2059 = vmatpush2.msra.mxu0 0.0
        %2060 = vmatprep.subr.mxu0 0.0
        %2061 = vmatpush2.msra.mxu0 0.0
        %2062 = vmatprep.subr.mxu0 0.0
        %2063 = vmatpush2.msra.mxu0 0.0
        %2064 = vmatprep.subr.mxu0 0.0
        %2065 = vmatpush2.msra.mxu0 0.0
        %2066 = vmatprep.subr.mxu0 0.0
        %2067 = vmatpush2.msra.mxu0 0.0
        %2068 = vmatprep.subr.mxu0 0.0
        %2069 = vmatpush2.msra.mxu0 0.0
        %2070 = vmatprep.subr.mxu0 0.0
        %2071 = vmatpush2.msra.mxu0 0.0
        %2072 = vmatprep.subr.mxu0 0.0
        %2073 = vmatpush2.msra.mxu0 0.0
        %2074 = vmatprep.subr.mxu0 0.0
        %2075 = vmatpush2.msra.mxu0 0.0
        %2076 = vmatprep.subr.mxu0 0.0
        %2077 = vmatpush2.msra.mxu0 0.0
        %2078 = vmatprep.subr.mxu0 0.0
        %2079 = vmatpush2.msra.mxu0 0.0
        %2080 = vmatprep.subr.mxu0 0.0
        %2081 = vmatpush2.msra.mxu0 0.0
        %2082 = vmatprep.mubr.f32.mxu0 0.0
        %v2083 = vand.u32 %v1713, 4294901760
        %2084 = vmatmul.mubr.f32.gmra.mxu0 %v2083
        %v2085 = vpop.f32.mrf.mxu0
        %v2086 = vadd.f32 %v2012, %v2085
        %v2087 = vpop.f32.mrf.mxu0
        %2088 = vdwg.mxu0
        %2089 = vmatprep.subr.mxu0 0.0
        %2090 = vmatpush1.msra.mxu0 0.0
        %2091 = vmatprep.subr.mxu0 0.0
        %2092 = vmatpush1.msra.mxu0 0.0
        %2093 = vmatprep.subr.mxu0 0.0
        %2094 = vmatpush1.msra.mxu0 0.0
        %2095 = vmatprep.subr.mxu0 0.0
        %2096 = vmatpush1.msra.mxu0 0.0
        %2097 = vmatprep.subr.mxu0 0.0
        %2098 = vmatpush1.msra.mxu0 0.0
        %2099 = vmatprep.subr.mxu0 0.0
        %2100 = vmatpush1.msra.mxu0 0.0
        %2101 = vmatprep.subr.mxu0 0.0
        %2102 = vmatpush1.msra.mxu0 0.0
        %2103 = vmatprep.subr.mxu0 0.0
        %2104 = vmatpush1.msra.mxu0 0.0
        %2105 = vmatprep.subr.mxu0 0.0
        %2106 = vmatpush1.msra.mxu0 0.0
        %2107 = vmatprep.subr.mxu0 0.0
        %2108 = vmatpush1.msra.mxu0 0.0
        %2109 = vmatprep.subr.mxu0 0.0
        %2110 = vmatpush1.msra.mxu0 0.0
        %2111 = vmatprep.subr.mxu0 0.0
        %2112 = vmatpush1.msra.mxu0 0.0
        %2113 = vmatprep.subr.mxu0 0.0
        %2114 = vmatpush1.msra.mxu0 0.0
        %2115 = vmatprep.subr.mxu0 0.0
        %2116 = vmatpush1.msra.mxu0 0.0
        %2117 = vmatprep.subr.mxu0 0.0
        %2118 = vmatpush1.msra.mxu0 0.0
        %2119 = vmatprep.subr.mxu0 0.0
        %v2120 = vand.u32 %v340, 4294901760
        %2121 = vmatpush1.msra.mxu0 %v2120
        %2122 = vmatprep.subr.mxu0 0.0
        %2123 = vmatpush2.msra.mxu0 0.0
        %2124 = vmatprep.subr.mxu0 0.0
        %2125 = vmatpush2.msra.mxu0 0.0
        %2126 = vmatprep.subr.mxu0 0.0
        %2127 = vmatpush2.msra.mxu0 0.0
        %2128 = vmatprep.subr.mxu0 0.0
        %2129 = vmatpush2.msra.mxu0 0.0
        %2130 = vmatprep.subr.mxu0 0.0
        %2131 = vmatpush2.msra.mxu0 0.0
        %2132 = vmatprep.subr.mxu0 0.0
        %2133 = vmatpush2.msra.mxu0 0.0
        %2134 = vmatprep.subr.mxu0 0.0
        %2135 = vmatpush2.msra.mxu0 0.0
        %2136 = vmatprep.subr.mxu0 0.0
        %2137 = vmatpush2.msra.mxu0 0.0
        %2138 = vmatprep.subr.mxu0 0.0
        %2139 = vmatpush2.msra.mxu0 0.0
        %2140 = vmatprep.subr.mxu0 0.0
        %2141 = vmatpush2.msra.mxu0 0.0
        %2142 = vmatprep.subr.mxu0 0.0
        %2143 = vmatpush2.msra.mxu0 0.0
        %2144 = vmatprep.subr.mxu0 0.0
        %2145 = vmatpush2.msra.mxu0 0.0
        %2146 = vmatprep.subr.mxu0 0.0
        %2147 = vmatpush2.msra.mxu0 0.0
        %2148 = vmatprep.subr.mxu0 0.0
        %2149 = vmatpush2.msra.mxu0 0.0
        %2150 = vmatprep.subr.mxu0 0.0
        %2151 = vmatpush2.msra.mxu0 0.0
        %2152 = vmatprep.subr.mxu0 0.0
        %2153 = vmatpush2.msra.mxu0 0.0
        %2154 = vmatprep.mubr.f32.mxu0 0.0
        %v2155 = vand.u32 %v1713, 4294901760
        %2156 = vmatmul.mubr.f32.gmra.mxu0 %v2155
        %v2157 = vpop.f32.mrf.mxu0
        %v2158 = vadd.f32 %v2086, %v2157
        %v2159 = vpop.f32.mrf.mxu0
        %2160 = vdwg.mxu0
        %2161 = vmatprep.subr.mxu0 0.0
        %2162 = vmatpush1.msra.mxu0 0.0
        %2163 = vmatprep.subr.mxu0 0.0
        %2164 = vmatpush1.msra.mxu0 0.0
        %2165 = vmatprep.subr.mxu0 0.0
        %2166 = vmatpush1.msra.mxu0 0.0
        %2167 = vmatprep.subr.mxu0 0.0
        %2168 = vmatpush1.msra.mxu0 0.0
        %2169 = vmatprep.subr.mxu0 0.0
        %2170 = vmatpush1.msra.mxu0 0.0
        %2171 = vmatprep.subr.mxu0 0.0
        %2172 = vmatpush1.msra.mxu0 0.0
        %2173 = vmatprep.subr.mxu0 0.0
        %2174 = vmatpush1.msra.mxu0 0.0
        %2175 = vmatprep.subr.mxu0 0.0
        %2176 = vmatpush1.msra.mxu0 0.0
        %2177 = vmatprep.subr.mxu0 0.0
        %2178 = vmatpush1.msra.mxu0 0.0
        %2179 = vmatprep.subr.mxu0 0.0
        %2180 = vmatpush1.msra.mxu0 0.0
        %2181 = vmatprep.subr.mxu0 0.0
        %2182 = vmatpush1.msra.mxu0 0.0
        %2183 = vmatprep.subr.mxu0 0.0
        %2184 = vmatpush1.msra.mxu0 0.0
        %2185 = vmatprep.subr.mxu0 0.0
        %2186 = vmatpush1.msra.mxu0 0.0
        %2187 = vmatprep.subr.mxu0 0.0
        %2188 = vmatpush1.msra.mxu0 0.0
        %2189 = vmatprep.subr.mxu0 0.0
        %2190 = vmatpush1.msra.mxu0 0.0
        %2191 = vmatprep.subr.mxu0 0.0
        %v2192 = vand.u32 %v2158, 4294901760
        %2193 = vmatpush1.msra.mxu0 %v2192
        %2194 = vmatprep.subr.mxu0 0.0
        %2195 = vmatpush2.msra.mxu0 0.0
        %2196 = vmatprep.subr.mxu0 0.0
        %2197 = vmatpush2.msra.mxu0 0.0
        %2198 = vmatprep.subr.mxu0 0.0
        %2199 = vmatpush2.msra.mxu0 0.0
        %2200 = vmatprep.subr.mxu0 0.0
        %2201 = vmatpush2.msra.mxu0 0.0
        %2202 = vmatprep.subr.mxu0 0.0
        %2203 = vmatpush2.msra.mxu0 0.0
        %2204 = vmatprep.subr.mxu0 0.0
        %2205 = vmatpush2.msra.mxu0 0.0
        %2206 = vmatprep.subr.mxu0 0.0
        %2207 = vmatpush2.msra.mxu0 0.0
        %2208 = vmatprep.subr.mxu0 0.0
        %2209 = vmatpush2.msra.mxu0 0.0
        %2210 = vmatprep.subr.mxu0 0.0
        %2211 = vmatpush2.msra.mxu0 0.0
        %2212 = vmatprep.subr.mxu0 0.0
        %2213 = vmatpush2.msra.mxu0 0.0
        %2214 = vmatprep.subr.mxu0 0.0
        %2215 = vmatpush2.msra.mxu0 0.0
        %2216 = vmatprep.subr.mxu0 0.0
        %2217 = vmatpush2.msra.mxu0 0.0
        %2218 = vmatprep.subr.mxu0 0.0
        %2219 = vmatpush2.msra.mxu0 0.0
        %2220 = vmatprep.subr.mxu0 0.0
        %2221 = vmatpush2.msra.mxu0 0.0
        %2222 = vmatprep.subr.mxu0 0.0
        %2223 = vmatpush2.msra.mxu0 0.0
        %2224 = vmatprep.subr.mxu0 0.0
        %2225 = vmatpush2.msra.mxu0 0.0
        %2226 = vmatprep.mubr.f32.mxu0 0.0
        %v2227 = vand.u32 %v796, 4294901760
        %v2228 = vsub.f32 %v796, %v2227
        %v2229 = vand.u32 %v2228, 4294901760
        %v2230 = vsub.f32 %v2228, %v2229
        %v2231 = vand.u32 %v2230, 4294901760
        %2232 = vmatmul.mubr.f32.gmra.mxu0 %v2231
        %v2233 = vpop.f32.mrf.mxu0
        %v2234 = vadd.f32 0.0, %v2233
        %v2235 = vpop.f32.mrf.mxu0
        %2236 = vdwg.mxu0
        %2237 = vmatprep.subr.mxu0 0.0
        %2238 = vmatpush1.msra.mxu0 0.0
        %2239 = vmatprep.subr.mxu0 0.0
        %2240 = vmatpush1.msra.mxu0 0.0
        %2241 = vmatprep.subr.mxu0 0.0
        %2242 = vmatpush1.msra.mxu0 0.0
        %2243 = vmatprep.subr.mxu0 0.0
        %2244 = vmatpush1.msra.mxu0 0.0
        %2245 = vmatprep.subr.mxu0 0.0
        %2246 = vmatpush1.msra.mxu0 0.0
        %2247 = vmatprep.subr.mxu0 0.0
        %2248 = vmatpush1.msra.mxu0 0.0
        %2249 = vmatprep.subr.mxu0 0.0
        %2250 = vmatpush1.msra.mxu0 0.0
        %2251 = vmatprep.subr.mxu0 0.0
        %2252 = vmatpush1.msra.mxu0 0.0
        %2253 = vmatprep.subr.mxu0 0.0
        %2254 = vmatpush1.msra.mxu0 0.0
        %2255 = vmatprep.subr.mxu0 0.0
        %2256 = vmatpush1.msra.mxu0 0.0
        %2257 = vmatprep.subr.mxu0 0.0
        %2258 = vmatpush1.msra.mxu0 0.0
        %2259 = vmatprep.subr.mxu0 0.0
        %2260 = vmatpush1.msra.mxu0 0.0
        %2261 = vmatprep.subr.mxu0 0.0
        %2262 = vmatpush1.msra.mxu0 0.0
        %2263 = vmatprep.subr.mxu0 0.0
        %2264 = vmatpush1.msra.mxu0 0.0
        %2265 = vmatprep.subr.mxu0 0.0
        %2266 = vmatpush1.msra.mxu0 0.0
        %2267 = vmatprep.subr.mxu0 0.0
        %v2268 = vand.u32 %v2158, 4294901760
        %v2269 = vsub.f32 %v2158, %v2268
        %v2270 = vand.u32 %v2269, 4294901760
        %v2271 = vsub.f32 %v2269, %v2270
        %v2272 = vand.u32 %v2271, 4294901760
        %2273 = vmatpush1.msra.mxu0 %v2272
        %2274 = vmatprep.subr.mxu0 0.0
        %2275 = vmatpush2.msra.mxu0 0.0
        %2276 = vmatprep.subr.mxu0 0.0
        %2277 = vmatpush2.msra.mxu0 0.0
        %2278 = vmatprep.subr.mxu0 0.0
        %2279 = vmatpush2.msra.mxu0 0.0
        %2280 = vmatprep.subr.mxu0 0.0
        %2281 = vmatpush2.msra.mxu0 0.0
        %2282 = vmatprep.subr.mxu0 0.0
        %2283 = vmatpush2.msra.mxu0 0.0
        %2284 = vmatprep.subr.mxu0 0.0
        %2285 = vmatpush2.msra.mxu0 0.0
        %2286 = vmatprep.subr.mxu0 0.0
        %2287 = vmatpush2.msra.mxu0 0.0
        %2288 = vmatprep.subr.mxu0 0.0
        %2289 = vmatpush2.msra.mxu0 0.0
        %2290 = vmatprep.subr.mxu0 0.0
        %2291 = vmatpush2.msra.mxu0 0.0
        %2292 = vmatprep.subr.mxu0 0.0
        %2293 = vmatpush2.msra.mxu0 0.0
        %2294 = vmatprep.subr.mxu0 0.0
        %2295 = vmatpush2.msra.mxu0 0.0
        %2296 = vmatprep.subr.mxu0 0.0
        %2297 = vmatpush2.msra.mxu0 0.0
        %2298 = vmatprep.subr.mxu0 0.0
        %2299 = vmatpush2.msra.mxu0 0.0
        %2300 = vmatprep.subr.mxu0 0.0
        %2301 = vmatpush2.msra.mxu0 0.0
        %2302 = vmatprep.subr.mxu0 0.0
        %2303 = vmatpush2.msra.mxu0 0.0
        %2304 = vmatprep.subr.mxu0 0.0
        %2305 = vmatpush2.msra.mxu0 0.0
        %2306 = vmatprep.mubr.f32.mxu0 0.0
        %v2307 = vand.u32 %v796, 4294901760
        %2308 = vmatmul.mubr.f32.gmra.mxu0 %v2307
        %v2309 = vpop.f32.mrf.mxu0
        %v2310 = vadd.f32 %v2234, %v2309
        %v2311 = vpop.f32.mrf.mxu0
        %2312 = vdwg.mxu0
        %2313 = vmatprep.subr.mxu0 0.0
        %2314 = vmatpush1.msra.mxu0 0.0
        %2315 = vmatprep.subr.mxu0 0.0
        %2316 = vmatpush1.msra.mxu0 0.0
        %2317 = vmatprep.subr.mxu0 0.0
        %2318 = vmatpush1.msra.mxu0 0.0
        %2319 = vmatprep.subr.mxu0 0.0
        %2320 = vmatpush1.msra.mxu0 0.0
        %2321 = vmatprep.subr.mxu0 0.0
        %2322 = vmatpush1.msra.mxu0 0.0
        %2323 = vmatprep.subr.mxu0 0.0
        %2324 = vmatpush1.msra.mxu0 0.0
        %2325 = vmatprep.subr.mxu0 0.0
        %2326 = vmatpush1.msra.mxu0 0.0
        %2327 = vmatprep.subr.mxu0 0.0
        %2328 = vmatpush1.msra.mxu0 0.0
        %2329 = vmatprep.subr.mxu0 0.0
        %2330 = vmatpush1.msra.mxu0 0.0
        %2331 = vmatprep.subr.mxu0 0.0
        %2332 = vmatpush1.msra.mxu0 0.0
        %2333 = vmatprep.subr.mxu0 0.0
        %2334 = vmatpush1.msra.mxu0 0.0
        %2335 = vmatprep.subr.mxu0 0.0
        %2336 = vmatpush1.msra.mxu0 0.0
        %2337 = vmatprep.subr.mxu0 0.0
        %2338 = vmatpush1.msra.mxu0 0.0
        %2339 = vmatprep.subr.mxu0 0.0
        %2340 = vmatpush1.msra.mxu0 0.0
        %2341 = vmatprep.subr.mxu0 0.0
        %2342 = vmatpush1.msra.mxu0 0.0
        %2343 = vmatprep.subr.mxu0 0.0
        %v2344 = vand.u32 %v2158, 4294901760
        %v2345 = vsub.f32 %v2158, %v2344
        %2346 = vmatpush1.msra.mxu0 %v2345
        %2347 = vmatprep.subr.mxu0 0.0
        %2348 = vmatpush2.msra.mxu0 0.0
        %2349 = vmatprep.subr.mxu0 0.0
        %2350 = vmatpush2.msra.mxu0 0.0
        %2351 = vmatprep.subr.mxu0 0.0
        %2352 = vmatpush2.msra.mxu0 0.0
        %2353 = vmatprep.subr.mxu0 0.0
        %2354 = vmatpush2.msra.mxu0 0.0
        %2355 = vmatprep.subr.mxu0 0.0
        %2356 = vmatpush2.msra.mxu0 0.0
        %2357 = vmatprep.subr.mxu0 0.0
        %2358 = vmatpush2.msra.mxu0 0.0
        %2359 = vmatprep.subr.mxu0 0.0
        %2360 = vmatpush2.msra.mxu0 0.0
        %2361 = vmatprep.subr.mxu0 0.0
        %2362 = vmatpush2.msra.mxu0 0.0
        %2363 = vmatprep.subr.mxu0 0.0
        %2364 = vmatpush2.msra.mxu0 0.0
        %2365 = vmatprep.subr.mxu0 0.0
        %2366 = vmatpush2.msra.mxu0 0.0
        %2367 = vmatprep.subr.mxu0 0.0
        %2368 = vmatpush2.msra.mxu0 0.0
        %2369 = vmatprep.subr.mxu0 0.0
        %2370 = vmatpush2.msra.mxu0 0.0
        %2371 = vmatprep.subr.mxu0 0.0
        %2372 = vmatpush2.msra.mxu0 0.0
        %2373 = vmatprep.subr.mxu0 0.0
        %2374 = vmatpush2.msra.mxu0 0.0
        %2375 = vmatprep.subr.mxu0 0.0
        %2376 = vmatpush2.msra.mxu0 0.0
        %2377 = vmatprep.subr.mxu0 0.0
        %2378 = vmatpush2.msra.mxu0 0.0
        %2379 = vmatprep.mubr.f32.mxu0 0.0
        %v2380 = vand.u32 %v796, 4294901760
        %v2381 = vsub.f32 %v796, %v2380
        %2382 = vmatmul.mubr.f32.gmra.mxu0 %v2381
        %v2383 = vpop.f32.mrf.mxu0
        %v2384 = vadd.f32 %v2310, %v2383
        %v2385 = vpop.f32.mrf.mxu0
        %2386 = vdwg.mxu0
        %2387 = vmatprep.subr.mxu0 0.0
        %2388 = vmatpush1.msra.mxu0 0.0
        %2389 = vmatprep.subr.mxu0 0.0
        %2390 = vmatpush1.msra.mxu0 0.0
        %2391 = vmatprep.subr.mxu0 0.0
        %2392 = vmatpush1.msra.mxu0 0.0
        %2393 = vmatprep.subr.mxu0 0.0
        %2394 = vmatpush1.msra.mxu0 0.0
        %2395 = vmatprep.subr.mxu0 0.0
        %2396 = vmatpush1.msra.mxu0 0.0
        %2397 = vmatprep.subr.mxu0 0.0
        %2398 = vmatpush1.msra.mxu0 0.0
        %2399 = vmatprep.subr.mxu0 0.0
        %2400 = vmatpush1.msra.mxu0 0.0
        %2401 = vmatprep.subr.mxu0 0.0
        %2402 = vmatpush1.msra.mxu0 0.0
        %2403 = vmatprep.subr.mxu0 0.0
        %2404 = vmatpush1.msra.mxu0 0.0
        %2405 = vmatprep.subr.mxu0 0.0
        %2406 = vmatpush1.msra.mxu0 0.0
        %2407 = vmatprep.subr.mxu0 0.0
        %2408 = vmatpush1.msra.mxu0 0.0
        %2409 = vmatprep.subr.mxu0 0.0
        %2410 = vmatpush1.msra.mxu0 0.0
        %2411 = vmatprep.subr.mxu0 0.0
        %2412 = vmatpush1.msra.mxu0 0.0
        %2413 = vmatprep.subr.mxu0 0.0
        %2414 = vmatpush1.msra.mxu0 0.0
        %2415 = vmatprep.subr.mxu0 0.0
        %2416 = vmatpush1.msra.mxu0 0.0
        %2417 = vmatprep.subr.mxu0 0.0
        %v2418 = vand.u32 %v2158, 4294901760
        %2419 = vmatpush1.msra.mxu0 %v2418
        %2420 = vmatprep.subr.mxu0 0.0
        %2421 = vmatpush2.msra.mxu0 0.0
        %2422 = vmatprep.subr.mxu0 0.0
        %2423 = vmatpush2.msra.mxu0 0.0
        %2424 = vmatprep.subr.mxu0 0.0
        %2425 = vmatpush2.msra.mxu0 0.0
        %2426 = vmatprep.subr.mxu0 0.0
        %2427 = vmatpush2.msra.mxu0 0.0
        %2428 = vmatprep.subr.mxu0 0.0
        %2429 = vmatpush2.msra.mxu0 0.0
        %2430 = vmatprep.subr.mxu0 0.0
        %2431 = vmatpush2.msra.mxu0 0.0
        %2432 = vmatprep.subr.mxu0 0.0
        %2433 = vmatpush2.msra.mxu0 0.0
        %2434 = vmatprep.subr.mxu0 0.0
        %2435 = vmatpush2.msra.mxu0 0.0
        %2436 = vmatprep.subr.mxu0 0.0
        %2437 = vmatpush2.msra.mxu0 0.0
        %2438 = vmatprep.subr.mxu0 0.0
        %2439 = vmatpush2.msra.mxu0 0.0
        %2440 = vmatprep.subr.mxu0 0.0
        %2441 = vmatpush2.msra.mxu0 0.0
        %2442 = vmatprep.subr.mxu0 0.0
        %2443 = vmatpush2.msra.mxu0 0.0
        %2444 = vmatprep.subr.mxu0 0.0
        %2445 = vmatpush2.msra.mxu0 0.0
        %2446 = vmatprep.subr.mxu0 0.0
        %2447 = vmatpush2.msra.mxu0 0.0
        %2448 = vmatprep.subr.mxu0 0.0
        %2449 = vmatpush2.msra.mxu0 0.0
        %2450 = vmatprep.subr.mxu0 0.0
        %2451 = vmatpush2.msra.mxu0 0.0
        %2452 = vmatprep.mubr.f32.mxu0 0.0
        %v2453 = vand.u32 %v796, 4294901760
        %v2454 = vsub.f32 %v796, %v2453
        %v2455 = vand.u32 %v2454, 4294901760
        %2456 = vmatmul.mubr.f32.gmra.mxu0 %v2455
        %v2457 = vpop.f32.mrf.mxu0
        %v2458 = vadd.f32 %v2384, %v2457
        %v2459 = vpop.f32.mrf.mxu0
        %2460 = vdwg.mxu0
        %2461 = vmatprep.subr.mxu0 0.0
        %2462 = vmatpush1.msra.mxu0 0.0
        %2463 = vmatprep.subr.mxu0 0.0
        %2464 = vmatpush1.msra.mxu0 0.0
        %2465 = vmatprep.subr.mxu0 0.0
        %2466 = vmatpush1.msra.mxu0 0.0
        %2467 = vmatprep.subr.mxu0 0.0
        %2468 = vmatpush1.msra.mxu0 0.0
        %2469 = vmatprep.subr.mxu0 0.0
        %2470 = vmatpush1.msra.mxu0 0.0
        %2471 = vmatprep.subr.mxu0 0.0
        %2472 = vmatpush1.msra.mxu0 0.0
        %2473 = vmatprep.subr.mxu0 0.0
        %2474 = vmatpush1.msra.mxu0 0.0
        %2475 = vmatprep.subr.mxu0 0.0
        %2476 = vmatpush1.msra.mxu0 0.0
        %2477 = vmatprep.subr.mxu0 0.0
        %2478 = vmatpush1.msra.mxu0 0.0
        %2479 = vmatprep.subr.mxu0 0.0
        %2480 = vmatpush1.msra.mxu0 0.0
        %2481 = vmatprep.subr.mxu0 0.0
        %2482 = vmatpush1.msra.mxu0 0.0
        %2483 = vmatprep.subr.mxu0 0.0
        %2484 = vmatpush1.msra.mxu0 0.0
        %2485 = vmatprep.subr.mxu0 0.0
        %2486 = vmatpush1.msra.mxu0 0.0
        %2487 = vmatprep.subr.mxu0 0.0
        %2488 = vmatpush1.msra.mxu0 0.0
        %2489 = vmatprep.subr.mxu0 0.0
        %2490 = vmatpush1.msra.mxu0 0.0
        %2491 = vmatprep.subr.mxu0 0.0
        %v2492 = vand.u32 %v2158, 4294901760
        %v2493 = vsub.f32 %v2158, %v2492
        %v2494 = vand.u32 %v2493, 4294901760
        %2495 = vmatpush1.msra.mxu0 %v2494
        %2496 = vmatprep.subr.mxu0 0.0
        %2497 = vmatpush2.msra.mxu0 0.0
        %2498 = vmatprep.subr.mxu0 0.0
        %2499 = vmatpush2.msra.mxu0 0.0
        %2500 = vmatprep.subr.mxu0 0.0
        %2501 = vmatpush2.msra.mxu0 0.0
        %2502 = vmatprep.subr.mxu0 0.0
        %2503 = vmatpush2.msra.mxu0 0.0
        %2504 = vmatprep.subr.mxu0 0.0
        %2505 = vmatpush2.msra.mxu0 0.0
        %2506 = vmatprep.subr.mxu0 0.0
        %2507 = vmatpush2.msra.mxu0 0.0
        %2508 = vmatprep.subr.mxu0 0.0
        %2509 = vmatpush2.msra.mxu0 0.0
        %2510 = vmatprep.subr.mxu0 0.0
        %2511 = vmatpush2.msra.mxu0 0.0
        %2512 = vmatprep.subr.mxu0 0.0
        %2513 = vmatpush2.msra.mxu0 0.0
        %2514 = vmatprep.subr.mxu0 0.0
        %2515 = vmatpush2.msra.mxu0 0.0
        %2516 = vmatprep.subr.mxu0 0.0
        %2517 = vmatpush2.msra.mxu0 0.0
        %2518 = vmatprep.subr.mxu0 0.0
        %2519 = vmatpush2.msra.mxu0 0.0
        %2520 = vmatprep.subr.mxu0 0.0
        %2521 = vmatpush2.msra.mxu0 0.0
        %2522 = vmatprep.subr.mxu0 0.0
        %2523 = vmatpush2.msra.mxu0 0.0
        %2524 = vmatprep.subr.mxu0 0.0
        %2525 = vmatpush2.msra.mxu0 0.0
        %2526 = vmatprep.subr.mxu0 0.0
        %2527 = vmatpush2.msra.mxu0 0.0
        %2528 = vmatprep.mubr.f32.mxu0 0.0
        %v2529 = vand.u32 %v796, 4294901760
        %2530 = vmatmul.mubr.f32.gmra.mxu0 %v2529
        %v2531 = vpop.f32.mrf.mxu0
        %v2532 = vadd.f32 %v2458, %v2531
        %v2533 = vpop.f32.mrf.mxu0
        %2534 = vdwg.mxu0
        %2535 = vmatprep.subr.mxu0 0.0
        %2536 = vmatpush1.msra.mxu0 0.0
        %2537 = vmatprep.subr.mxu0 0.0
        %2538 = vmatpush1.msra.mxu0 0.0
        %2539 = vmatprep.subr.mxu0 0.0
        %2540 = vmatpush1.msra.mxu0 0.0
        %2541 = vmatprep.subr.mxu0 0.0
        %2542 = vmatpush1.msra.mxu0 0.0
        %2543 = vmatprep.subr.mxu0 0.0
        %2544 = vmatpush1.msra.mxu0 0.0
        %2545 = vmatprep.subr.mxu0 0.0
        %2546 = vmatpush1.msra.mxu0 0.0
        %2547 = vmatprep.subr.mxu0 0.0
        %2548 = vmatpush1.msra.mxu0 0.0
        %2549 = vmatprep.subr.mxu0 0.0
        %2550 = vmatpush1.msra.mxu0 0.0
        %2551 = vmatprep.subr.mxu0 0.0
        %2552 = vmatpush1.msra.mxu0 0.0
        %2553 = vmatprep.subr.mxu0 0.0
        %2554 = vmatpush1.msra.mxu0 0.0
        %2555 = vmatprep.subr.mxu0 0.0
        %2556 = vmatpush1.msra.mxu0 0.0
        %2557 = vmatprep.subr.mxu0 0.0
        %2558 = vmatpush1.msra.mxu0 0.0
        %2559 = vmatprep.subr.mxu0 0.0
        %2560 = vmatpush1.msra.mxu0 0.0
        %2561 = vmatprep.subr.mxu0 0.0
        %2562 = vmatpush1.msra.mxu0 0.0
        %2563 = vmatprep.subr.mxu0 0.0
        %2564 = vmatpush1.msra.mxu0 0.0
        %2565 = vmatprep.subr.mxu0 0.0
        %v2566 = vand.u32 %v2158, 4294901760
        %2567 = vmatpush1.msra.mxu0 %v2566
        %2568 = vmatprep.subr.mxu0 0.0
        %2569 = vmatpush2.msra.mxu0 0.0
        %2570 = vmatprep.subr.mxu0 0.0
        %2571 = vmatpush2.msra.mxu0 0.0
        %2572 = vmatprep.subr.mxu0 0.0
        %2573 = vmatpush2.msra.mxu0 0.0
        %2574 = vmatprep.subr.mxu0 0.0
        %2575 = vmatpush2.msra.mxu0 0.0
        %2576 = vmatprep.subr.mxu0 0.0
        %2577 = vmatpush2.msra.mxu0 0.0
        %2578 = vmatprep.subr.mxu0 0.0
        %2579 = vmatpush2.msra.mxu0 0.0
        %2580 = vmatprep.subr.mxu0 0.0
        %2581 = vmatpush2.msra.mxu0 0.0
        %2582 = vmatprep.subr.mxu0 0.0
        %2583 = vmatpush2.msra.mxu0 0.0
        %2584 = vmatprep.subr.mxu0 0.0
        %2585 = vmatpush2.msra.mxu0 0.0
        %2586 = vmatprep.subr.mxu0 0.0
        %2587 = vmatpush2.msra.mxu0 0.0
        %2588 = vmatprep.subr.mxu0 0.0
        %2589 = vmatpush2.msra.mxu0 0.0
        %2590 = vmatprep.subr.mxu0 0.0
        %2591 = vmatpush2.msra.mxu0 0.0
        %2592 = vmatprep.subr.mxu0 0.0
        %2593 = vmatpush2.msra.mxu0 0.0
        %2594 = vmatprep.subr.mxu0 0.0
        %2595 = vmatpush2.msra.mxu0 0.0
        %2596 = vmatprep.subr.mxu0 0.0
        %2597 = vmatpush2.msra.mxu0 0.0
        %2598 = vmatprep.subr.mxu0 0.0
        %2599 = vmatpush2.msra.mxu0 0.0
        %2600 = vmatprep.mubr.f32.mxu0 0.0
        %v2601 = vand.u32 %v796, 4294901760
        %2602 = vmatmul.mubr.f32.gmra.mxu0 %v2601
        %v2603 = vpop.f32.mrf.mxu0
        %v2604 = vadd.f32 %v2532, %v2603
        %v2605 = vpop.f32.mrf.mxu0
        %2606 = vdwg.mxu0
        %v2607 = vld [vmem:[%s300] sm:$0xff]
        %2609 = vrot.lane.b32.xlu0 %v2604, 16
        %v2610 = vpop.permute.xlu0 %2609
        %v2612 = vsel %vm1249, %v2604, %v2610
        %2614 = vrot.lane.b32.xlu0 %v2607, 96
        %v2615 = vpop.permute.xlu0 %2614
        %2617 = vmatprep.subr.mxu0 0.0
        %2618 = vmatpush1.msra.mxu0 0.0
        %2619 = vmatprep.subr.mxu0 0.0
        %2620 = vmatpush1.msra.mxu0 0.0
        %2621 = vmatprep.subr.mxu0 0.0
        %2622 = vmatpush1.msra.mxu0 0.0
        %2623 = vmatprep.subr.mxu0 0.0
        %2624 = vmatpush1.msra.mxu0 0.0
        %2625 = vmatprep.subr.mxu0 0.0
        %2626 = vmatpush1.msra.mxu0 0.0
        %2627 = vmatprep.subr.mxu0 0.0
        %2628 = vmatpush1.msra.mxu0 0.0
        %2629 = vmatprep.subr.mxu0 0.0
        %2630 = vmatpush1.msra.mxu0 0.0
        %2631 = vmatprep.subr.mxu0 0.0
        %2632 = vmatpush1.msra.mxu0 0.0
        %2633 = vmatprep.subr.mxu0 0.0
        %2634 = vmatpush1.msra.mxu0 0.0
        %2635 = vmatprep.subr.mxu0 0.0
        %2636 = vmatpush1.msra.mxu0 0.0
        %2637 = vmatprep.subr.mxu0 0.0
        %2638 = vmatpush1.msra.mxu0 0.0
        %2639 = vmatprep.subr.mxu0 0.0
        %2640 = vmatpush1.msra.mxu0 0.0
        %2641 = vmatprep.subr.mxu0 0.0
        %2642 = vmatpush1.msra.mxu0 0.0
        %2643 = vmatprep.subr.mxu0 0.0
        %2644 = vmatpush1.msra.mxu0 0.0
        %2645 = vmatprep.subr.mxu0 0.0
        %2646 = vmatpush1.msra.mxu0 0.0
        %2647 = vmatprep.subr.mxu0 0.0
        %v2648 = vand.u32 %v2615, 4294901760
        %2649 = vmatpush1.msra.mxu0 %v2648
        %2650 = vmatprep.subr.mxu0 0.0
        %2651 = vmatpush2.msra.mxu0 0.0
        %2652 = vmatprep.subr.mxu0 0.0
        %2653 = vmatpush2.msra.mxu0 0.0
        %2654 = vmatprep.subr.mxu0 0.0
        %2655 = vmatpush2.msra.mxu0 0.0
        %2656 = vmatprep.subr.mxu0 0.0
        %2657 = vmatpush2.msra.mxu0 0.0
        %2658 = vmatprep.subr.mxu0 0.0
        %2659 = vmatpush2.msra.mxu0 0.0
        %2660 = vmatprep.subr.mxu0 0.0
        %2661 = vmatpush2.msra.mxu0 0.0
        %2662 = vmatprep.subr.mxu0 0.0
        %2663 = vmatpush2.msra.mxu0 0.0
        %2664 = vmatprep.subr.mxu0 0.0
        %2665 = vmatpush2.msra.mxu0 0.0
        %2666 = vmatprep.subr.mxu0 0.0
        %2667 = vmatpush2.msra.mxu0 0.0
        %2668 = vmatprep.subr.mxu0 0.0
        %2669 = vmatpush2.msra.mxu0 0.0
        %2670 = vmatprep.subr.mxu0 0.0
        %2671 = vmatpush2.msra.mxu0 0.0
        %2672 = vmatprep.subr.mxu0 0.0
        %2673 = vmatpush2.msra.mxu0 0.0
        %2674 = vmatprep.subr.mxu0 0.0
        %2675 = vmatpush2.msra.mxu0 0.0
        %2676 = vmatprep.subr.mxu0 0.0
        %2677 = vmatpush2.msra.mxu0 0.0
        %2678 = vmatprep.subr.mxu0 0.0
        %2679 = vmatpush2.msra.mxu0 0.0
        %2680 = vmatprep.subr.mxu0 0.0
        %2681 = vmatpush2.msra.mxu0 0.0
        %2682 = vmatprep.mubr.f32.mxu0 0.0
        %v2683 = vand.u32 %v1252, 4294901760
        %v2684 = vsub.f32 %v1252, %v2683
        %v2685 = vand.u32 %v2684, 4294901760
        %v2686 = vsub.f32 %v2684, %v2685
        %v2687 = vand.u32 %v2686, 4294901760
        %2688 = vmatmul.mubr.f32.gmra.mxu0 %v2687
        %v2689 = vpop.f32.mrf.mxu0
        %v2690 = vadd.f32 %v2612, %v2689
        %v2691 = vpop.f32.mrf.mxu0
        %2692 = vdwg.mxu0
        %2693 = vmatprep.subr.mxu0 0.0
        %2694 = vmatpush1.msra.mxu0 0.0
        %2695 = vmatprep.subr.mxu0 0.0
        %2696 = vmatpush1.msra.mxu0 0.0
        %2697 = vmatprep.subr.mxu0 0.0
        %2698 = vmatpush1.msra.mxu0 0.0
        %2699 = vmatprep.subr.mxu0 0.0
        %2700 = vmatpush1.msra.mxu0 0.0
        %2701 = vmatprep.subr.mxu0 0.0
        %2702 = vmatpush1.msra.mxu0 0.0
        %2703 = vmatprep.subr.mxu0 0.0
        %2704 = vmatpush1.msra.mxu0 0.0
        %2705 = vmatprep.subr.mxu0 0.0
        %2706 = vmatpush1.msra.mxu0 0.0
        %2707 = vmatprep.subr.mxu0 0.0
        %2708 = vmatpush1.msra.mxu0 0.0
        %2709 = vmatprep.subr.mxu0 0.0
        %2710 = vmatpush1.msra.mxu0 0.0
        %2711 = vmatprep.subr.mxu0 0.0
        %2712 = vmatpush1.msra.mxu0 0.0
        %2713 = vmatprep.subr.mxu0 0.0
        %2714 = vmatpush1.msra.mxu0 0.0
        %2715 = vmatprep.subr.mxu0 0.0
        %2716 = vmatpush1.msra.mxu0 0.0
        %2717 = vmatprep.subr.mxu0 0.0
        %2718 = vmatpush1.msra.mxu0 0.0
        %2719 = vmatprep.subr.mxu0 0.0
        %2720 = vmatpush1.msra.mxu0 0.0
        %2721 = vmatprep.subr.mxu0 0.0
        %2722 = vmatpush1.msra.mxu0 0.0
        %2723 = vmatprep.subr.mxu0 0.0
        %v2724 = vand.u32 %v2615, 4294901760
        %v2725 = vsub.f32 %v2615, %v2724
        %v2726 = vand.u32 %v2725, 4294901760
        %v2727 = vsub.f32 %v2725, %v2726
        %v2728 = vand.u32 %v2727, 4294901760
        %2729 = vmatpush1.msra.mxu0 %v2728
        %2730 = vmatprep.subr.mxu0 0.0
        %2731 = vmatpush2.msra.mxu0 0.0
        %2732 = vmatprep.subr.mxu0 0.0
        %2733 = vmatpush2.msra.mxu0 0.0
        %2734 = vmatprep.subr.mxu0 0.0
        %2735 = vmatpush2.msra.mxu0 0.0
        %2736 = vmatprep.subr.mxu0 0.0
        %2737 = vmatpush2.msra.mxu0 0.0
        %2738 = vmatprep.subr.mxu0 0.0
        %2739 = vmatpush2.msra.mxu0 0.0
        %2740 = vmatprep.subr.mxu0 0.0
        %2741 = vmatpush2.msra.mxu0 0.0
        %2742 = vmatprep.subr.mxu0 0.0
        %2743 = vmatpush2.msra.mxu0 0.0
        %2744 = vmatprep.subr.mxu0 0.0
        %2745 = vmatpush2.msra.mxu0 0.0
        %2746 = vmatprep.subr.mxu0 0.0
        %2747 = vmatpush2.msra.mxu0 0.0
        %2748 = vmatprep.subr.mxu0 0.0
        %2749 = vmatpush2.msra.mxu0 0.0
        %2750 = vmatprep.subr.mxu0 0.0
        %2751 = vmatpush2.msra.mxu0 0.0
        %2752 = vmatprep.subr.mxu0 0.0
        %2753 = vmatpush2.msra.mxu0 0.0
        %2754 = vmatprep.subr.mxu0 0.0
        %2755 = vmatpush2.msra.mxu0 0.0
        %2756 = vmatprep.subr.mxu0 0.0
        %2757 = vmatpush2.msra.mxu0 0.0
        %2758 = vmatprep.subr.mxu0 0.0
        %2759 = vmatpush2.msra.mxu0 0.0
        %2760 = vmatprep.subr.mxu0 0.0
        %2761 = vmatpush2.msra.mxu0 0.0
        %2762 = vmatprep.mubr.f32.mxu0 0.0
        %v2763 = vand.u32 %v1252, 4294901760
        %2764 = vmatmul.mubr.f32.gmra.mxu0 %v2763
        %v2765 = vpop.f32.mrf.mxu0
        %v2766 = vadd.f32 %v2690, %v2765
        %v2767 = vpop.f32.mrf.mxu0
        %2768 = vdwg.mxu0
        %2769 = vmatprep.subr.mxu0 0.0
        %2770 = vmatpush1.msra.mxu0 0.0
        %2771 = vmatprep.subr.mxu0 0.0
        %2772 = vmatpush1.msra.mxu0 0.0
        %2773 = vmatprep.subr.mxu0 0.0
        %2774 = vmatpush1.msra.mxu0 0.0
        %2775 = vmatprep.subr.mxu0 0.0
        %2776 = vmatpush1.msra.mxu0 0.0
        %2777 = vmatprep.subr.mxu0 0.0
        %2778 = vmatpush1.msra.mxu0 0.0
        %2779 = vmatprep.subr.mxu0 0.0
        %2780 = vmatpush1.msra.mxu0 0.0
        %2781 = vmatprep.subr.mxu0 0.0
        %2782 = vmatpush1.msra.mxu0 0.0
        %2783 = vmatprep.subr.mxu0 0.0
        %2784 = vmatpush1.msra.mxu0 0.0
        %2785 = vmatprep.subr.mxu0 0.0
        %2786 = vmatpush1.msra.mxu0 0.0
        %2787 = vmatprep.subr.mxu0 0.0
        %2788 = vmatpush1.msra.mxu0 0.0
        %2789 = vmatprep.subr.mxu0 0.0
        %2790 = vmatpush1.msra.mxu0 0.0
        %2791 = vmatprep.subr.mxu0 0.0
        %2792 = vmatpush1.msra.mxu0 0.0
        %2793 = vmatprep.subr.mxu0 0.0
        %2794 = vmatpush1.msra.mxu0 0.0
        %2795 = vmatprep.subr.mxu0 0.0
        %2796 = vmatpush1.msra.mxu0 0.0
        %2797 = vmatprep.subr.mxu0 0.0
        %2798 = vmatpush1.msra.mxu0 0.0
        %2799 = vmatprep.subr.mxu0 0.0
        %v2800 = vand.u32 %v2615, 4294901760
        %v2801 = vsub.f32 %v2615, %v2800
        %2802 = vmatpush1.msra.mxu0 %v2801
        %2803 = vmatprep.subr.mxu0 0.0
        %2804 = vmatpush2.msra.mxu0 0.0
        %2805 = vmatprep.subr.mxu0 0.0
        %2806 = vmatpush2.msra.mxu0 0.0
        %2807 = vmatprep.subr.mxu0 0.0
        %2808 = vmatpush2.msra.mxu0 0.0
        %2809 = vmatprep.subr.mxu0 0.0
        %2810 = vmatpush2.msra.mxu0 0.0
        %2811 = vmatprep.subr.mxu0 0.0
        %2812 = vmatpush2.msra.mxu0 0.0
        %2813 = vmatprep.subr.mxu0 0.0
        %2814 = vmatpush2.msra.mxu0 0.0
        %2815 = vmatprep.subr.mxu0 0.0
        %2816 = vmatpush2.msra.mxu0 0.0
        %2817 = vmatprep.subr.mxu0 0.0
        %2818 = vmatpush2.msra.mxu0 0.0
        %2819 = vmatprep.subr.mxu0 0.0
        %2820 = vmatpush2.msra.mxu0 0.0
        %2821 = vmatprep.subr.mxu0 0.0
        %2822 = vmatpush2.msra.mxu0 0.0
        %2823 = vmatprep.subr.mxu0 0.0
        %2824 = vmatpush2.msra.mxu0 0.0
        %2825 = vmatprep.subr.mxu0 0.0
        %2826 = vmatpush2.msra.mxu0 0.0
        %2827 = vmatprep.subr.mxu0 0.0
        %2828 = vmatpush2.msra.mxu0 0.0
        %2829 = vmatprep.subr.mxu0 0.0
        %2830 = vmatpush2.msra.mxu0 0.0
        %2831 = vmatprep.subr.mxu0 0.0
        %2832 = vmatpush2.msra.mxu0 0.0
        %2833 = vmatprep.subr.mxu0 0.0
        %2834 = vmatpush2.msra.mxu0 0.0
        %2835 = vmatprep.mubr.f32.mxu0 0.0
        %v2836 = vand.u32 %v1252, 4294901760
        %v2837 = vsub.f32 %v1252, %v2836
        %2838 = vmatmul.mubr.f32.gmra.mxu0 %v2837
        %v2839 = vpop.f32.mrf.mxu0
        %v2840 = vadd.f32 %v2766, %v2839
        %v2841 = vpop.f32.mrf.mxu0
        %2842 = vdwg.mxu0
        %2843 = vmatprep.subr.mxu0 0.0
        %2844 = vmatpush1.msra.mxu0 0.0
        %2845 = vmatprep.subr.mxu0 0.0
        %2846 = vmatpush1.msra.mxu0 0.0
        %2847 = vmatprep.subr.mxu0 0.0
        %2848 = vmatpush1.msra.mxu0 0.0
        %2849 = vmatprep.subr.mxu0 0.0
        %2850 = vmatpush1.msra.mxu0 0.0
        %2851 = vmatprep.subr.mxu0 0.0
        %2852 = vmatpush1.msra.mxu0 0.0
        %2853 = vmatprep.subr.mxu0 0.0
        %2854 = vmatpush1.msra.mxu0 0.0
        %2855 = vmatprep.subr.mxu0 0.0
        %2856 = vmatpush1.msra.mxu0 0.0
        %2857 = vmatprep.subr.mxu0 0.0
        %2858 = vmatpush1.msra.mxu0 0.0
        %2859 = vmatprep.subr.mxu0 0.0
        %2860 = vmatpush1.msra.mxu0 0.0
        %2861 = vmatprep.subr.mxu0 0.0
        %2862 = vmatpush1.msra.mxu0 0.0
        %2863 = vmatprep.subr.mxu0 0.0
        %2864 = vmatpush1.msra.mxu0 0.0
        %2865 = vmatprep.subr.mxu0 0.0
        %2866 = vmatpush1.msra.mxu0 0.0
        %2867 = vmatprep.subr.mxu0 0.0
        %2868 = vmatpush1.msra.mxu0 0.0
        %2869 = vmatprep.subr.mxu0 0.0
        %2870 = vmatpush1.msra.mxu0 0.0
        %2871 = vmatprep.subr.mxu0 0.0
        %2872 = vmatpush1.msra.mxu0 0.0
        %2873 = vmatprep.subr.mxu0 0.0
        %v2874 = vand.u32 %v2615, 4294901760
        %2875 = vmatpush1.msra.mxu0 %v2874
        %2876 = vmatprep.subr.mxu0 0.0
        %2877 = vmatpush2.msra.mxu0 0.0
        %2878 = vmatprep.subr.mxu0 0.0
        %2879 = vmatpush2.msra.mxu0 0.0
        %2880 = vmatprep.subr.mxu0 0.0
        %2881 = vmatpush2.msra.mxu0 0.0
        %2882 = vmatprep.subr.mxu0 0.0
        %2883 = vmatpush2.msra.mxu0 0.0
        %2884 = vmatprep.subr.mxu0 0.0
        %2885 = vmatpush2.msra.mxu0 0.0
        %2886 = vmatprep.subr.mxu0 0.0
        %2887 = vmatpush2.msra.mxu0 0.0
        %2888 = vmatprep.subr.mxu0 0.0
        %2889 = vmatpush2.msra.mxu0 0.0
        %2890 = vmatprep.subr.mxu0 0.0
        %2891 = vmatpush2.msra.mxu0 0.0
        %2892 = vmatprep.subr.mxu0 0.0
        %2893 = vmatpush2.msra.mxu0 0.0
        %2894 = vmatprep.subr.mxu0 0.0
        %2895 = vmatpush2.msra.mxu0 0.0
        %2896 = vmatprep.subr.mxu0 0.0
        %2897 = vmatpush2.msra.mxu0 0.0
        %2898 = vmatprep.subr.mxu0 0.0
        %2899 = vmatpush2.msra.mxu0 0.0
        %2900 = vmatprep.subr.mxu0 0.0
        %2901 = vmatpush2.msra.mxu0 0.0
        %2902 = vmatprep.subr.mxu0 0.0
        %2903 = vmatpush2.msra.mxu0 0.0
        %2904 = vmatprep.subr.mxu0 0.0
        %2905 = vmatpush2.msra.mxu0 0.0
        %2906 = vmatprep.subr.mxu0 0.0
        %2907 = vmatpush2.msra.mxu0 0.0
        %2908 = vmatprep.mubr.f32.mxu0 0.0
        %v2909 = vand.u32 %v1252, 4294901760
        %v2910 = vsub.f32 %v1252, %v2909
        %v2911 = vand.u32 %v2910, 4294901760
        %2912 = vmatmul.mubr.f32.gmra.mxu0 %v2911
        %v2913 = vpop.f32.mrf.mxu0
        %v2914 = vadd.f32 %v2840, %v2913
        %v2915 = vpop.f32.mrf.mxu0
        %2916 = vdwg.mxu0
        %2917 = vmatprep.subr.mxu0 0.0
        %2918 = vmatpush1.msra.mxu0 0.0
        %2919 = vmatprep.subr.mxu0 0.0
        %2920 = vmatpush1.msra.mxu0 0.0
        %2921 = vmatprep.subr.mxu0 0.0
        %2922 = vmatpush1.msra.mxu0 0.0
        %2923 = vmatprep.subr.mxu0 0.0
        %2924 = vmatpush1.msra.mxu0 0.0
        %2925 = vmatprep.subr.mxu0 0.0
        %2926 = vmatpush1.msra.mxu0 0.0
        %2927 = vmatprep.subr.mxu0 0.0
        %2928 = vmatpush1.msra.mxu0 0.0
        %2929 = vmatprep.subr.mxu0 0.0
        %2930 = vmatpush1.msra.mxu0 0.0
        %2931 = vmatprep.subr.mxu0 0.0
        %2932 = vmatpush1.msra.mxu0 0.0
        %2933 = vmatprep.subr.mxu0 0.0
        %2934 = vmatpush1.msra.mxu0 0.0
        %2935 = vmatprep.subr.mxu0 0.0
        %2936 = vmatpush1.msra.mxu0 0.0
        %2937 = vmatprep.subr.mxu0 0.0
        %2938 = vmatpush1.msra.mxu0 0.0
        %2939 = vmatprep.subr.mxu0 0.0
        %2940 = vmatpush1.msra.mxu0 0.0
        %2941 = vmatprep.subr.mxu0 0.0
        %2942 = vmatpush1.msra.mxu0 0.0
        %2943 = vmatprep.subr.mxu0 0.0
        %2944 = vmatpush1.msra.mxu0 0.0
        %2945 = vmatprep.subr.mxu0 0.0
        %2946 = vmatpush1.msra.mxu0 0.0
        %2947 = vmatprep.subr.mxu0 0.0
        %v2948 = vand.u32 %v2615, 4294901760
        %v2949 = vsub.f32 %v2615, %v2948
        %v2950 = vand.u32 %v2949, 4294901760
        %2951 = vmatpush1.msra.mxu0 %v2950
        %2952 = vmatprep.subr.mxu0 0.0
        %2953 = vmatpush2.msra.mxu0 0.0
        %2954 = vmatprep.subr.mxu0 0.0
        %2955 = vmatpush2.msra.mxu0 0.0
        %2956 = vmatprep.subr.mxu0 0.0
        %2957 = vmatpush2.msra.mxu0 0.0
        %2958 = vmatprep.subr.mxu0 0.0
        %2959 = vmatpush2.msra.mxu0 0.0
        %2960 = vmatprep.subr.mxu0 0.0
        %2961 = vmatpush2.msra.mxu0 0.0
        %2962 = vmatprep.subr.mxu0 0.0
        %2963 = vmatpush2.msra.mxu0 0.0
        %2964 = vmatprep.subr.mxu0 0.0
        %2965 = vmatpush2.msra.mxu0 0.0
        %2966 = vmatprep.subr.mxu0 0.0
        %2967 = vmatpush2.msra.mxu0 0.0
        %2968 = vmatprep.subr.mxu0 0.0
        %2969 = vmatpush2.msra.mxu0 0.0
        %2970 = vmatprep.subr.mxu0 0.0
        %2971 = vmatpush2.msra.mxu0 0.0
        %2972 = vmatprep.subr.mxu0 0.0
        %2973 = vmatpush2.msra.mxu0 0.0
        %2974 = vmatprep.subr.mxu0 0.0
        %2975 = vmatpush2.msra.mxu0 0.0
        %2976 = vmatprep.subr.mxu0 0.0
        %2977 = vmatpush2.msra.mxu0 0.0
        %2978 = vmatprep.subr.mxu0 0.0
        %2979 = vmatpush2.msra.mxu0 0.0
        %2980 = vmatprep.subr.mxu0 0.0
        %2981 = vmatpush2.msra.mxu0 0.0
        %2982 = vmatprep.subr.mxu0 0.0
        %2983 = vmatpush2.msra.mxu0 0.0
        %2984 = vmatprep.mubr.f32.mxu0 0.0
        %v2985 = vand.u32 %v1252, 4294901760
        %2986 = vmatmul.mubr.f32.gmra.mxu0 %v2985
        %v2987 = vpop.f32.mrf.mxu0
        %v2988 = vadd.f32 %v2914, %v2987
        %v2989 = vpop.f32.mrf.mxu0
        %2990 = vdwg.mxu0
        %2991 = vmatprep.subr.mxu0 0.0
        %2992 = vmatpush1.msra.mxu0 0.0
        %2993 = vmatprep.subr.mxu0 0.0
        %2994 = vmatpush1.msra.mxu0 0.0
        %2995 = vmatprep.subr.mxu0 0.0
        %2996 = vmatpush1.msra.mxu0 0.0
        %2997 = vmatprep.subr.mxu0 0.0
        %2998 = vmatpush1.msra.mxu0 0.0
        %2999 = vmatprep.subr.mxu0 0.0
        %3000 = vmatpush1.msra.mxu0 0.0
        %3001 = vmatprep.subr.mxu0 0.0
        %3002 = vmatpush1.msra.mxu0 0.0
        %3003 = vmatprep.subr.mxu0 0.0
        %3004 = vmatpush1.msra.mxu0 0.0
        %3005 = vmatprep.subr.mxu0 0.0
        %3006 = vmatpush1.msra.mxu0 0.0
        %3007 = vmatprep.subr.mxu0 0.0
        %3008 = vmatpush1.msra.mxu0 0.0
        %3009 = vmatprep.subr.mxu0 0.0
        %3010 = vmatpush1.msra.mxu0 0.0
        %3011 = vmatprep.subr.mxu0 0.0
        %3012 = vmatpush1.msra.mxu0 0.0
        %3013 = vmatprep.subr.mxu0 0.0
        %3014 = vmatpush1.msra.mxu0 0.0
        %3015 = vmatprep.subr.mxu0 0.0
        %3016 = vmatpush1.msra.mxu0 0.0
        %3017 = vmatprep.subr.mxu0 0.0
        %3018 = vmatpush1.msra.mxu0 0.0
        %3019 = vmatprep.subr.mxu0 0.0
        %3020 = vmatpush1.msra.mxu0 0.0
        %3021 = vmatprep.subr.mxu0 0.0
        %v3022 = vand.u32 %v2615, 4294901760
        %3023 = vmatpush1.msra.mxu0 %v3022
        %3024 = vmatprep.subr.mxu0 0.0
        %3025 = vmatpush2.msra.mxu0 0.0
        %3026 = vmatprep.subr.mxu0 0.0
        %3027 = vmatpush2.msra.mxu0 0.0
        %3028 = vmatprep.subr.mxu0 0.0
        %3029 = vmatpush2.msra.mxu0 0.0
        %3030 = vmatprep.subr.mxu0 0.0
        %3031 = vmatpush2.msra.mxu0 0.0
        %3032 = vmatprep.subr.mxu0 0.0
        %3033 = vmatpush2.msra.mxu0 0.0
        %3034 = vmatprep.subr.mxu0 0.0
        %3035 = vmatpush2.msra.mxu0 0.0
        %3036 = vmatprep.subr.mxu0 0.0
        %3037 = vmatpush2.msra.mxu0 0.0
        %3038 = vmatprep.subr.mxu0 0.0
        %3039 = vmatpush2.msra.mxu0 0.0
        %3040 = vmatprep.subr.mxu0 0.0
        %3041 = vmatpush2.msra.mxu0 0.0
        %3042 = vmatprep.subr.mxu0 0.0
        %3043 = vmatpush2.msra.mxu0 0.0
        %3044 = vmatprep.subr.mxu0 0.0
        %3045 = vmatpush2.msra.mxu0 0.0
        %3046 = vmatprep.subr.mxu0 0.0
        %3047 = vmatpush2.msra.mxu0 0.0
        %3048 = vmatprep.subr.mxu0 0.0
        %3049 = vmatpush2.msra.mxu0 0.0
        %3050 = vmatprep.subr.mxu0 0.0
        %3051 = vmatpush2.msra.mxu0 0.0
        %3052 = vmatprep.subr.mxu0 0.0
        %3053 = vmatpush2.msra.mxu0 0.0
        %3054 = vmatprep.subr.mxu0 0.0
        %3055 = vmatpush2.msra.mxu0 0.0
        %3056 = vmatprep.mubr.f32.mxu0 0.0
        %v3057 = vand.u32 %v1252, 4294901760
        %3058 = vmatmul.mubr.f32.gmra.mxu0 %v3057
        %v3059 = vpop.f32.mrf.mxu0
        %v3060 = vadd.f32 %v2988, %v3059
        %v3061 = vpop.f32.mrf.mxu0
        %3062 = vdwg.mxu0
        %v3063 = vadd.f32 %v3060, %v1703
        %v3064 = vmax.f32 %v3063, 0.0
        %3066 = vrot.lane.b32.xlu0 %v3064, 32
        %v3067 = vpop.permute.xlu0 %3066
        %vm3069 = vcmask 523520
        %3070 = vst.msk [vmem:[%s337] sm:$0xff] %vm3069, %v3067
        %v3071 = vld [vmem:[%s291] sm:$0xff]
        %3073 = vrot.lane.b32.xlu0 %v3071, 112
        %v3074 = vpop.permute.xlu0 %3073
        %v3075 = vsel %vm345, %v3074, 0
        %3077 = vmatprep.subr.mxu0 0.0
        %3078 = vmatpush1.msra.mxu0 0.0
        %3079 = vmatprep.subr.mxu0 0.0
        %3080 = vmatpush1.msra.mxu0 0.0
        %3081 = vmatprep.subr.mxu0 0.0
        %3082 = vmatpush1.msra.mxu0 0.0
        %3083 = vmatprep.subr.mxu0 0.0
        %3084 = vmatpush1.msra.mxu0 0.0
        %3085 = vmatprep.subr.mxu0 0.0
        %3086 = vmatpush1.msra.mxu0 0.0
        %3087 = vmatprep.subr.mxu0 0.0
        %3088 = vmatpush1.msra.mxu0 0.0
        %3089 = vmatprep.subr.mxu0 0.0
        %3090 = vmatpush1.msra.mxu0 0.0
        %3091 = vmatprep.subr.mxu0 0.0
        %3092 = vmatpush1.msra.mxu0 0.0
        %3093 = vmatprep.subr.mxu0 0.0
        %3094 = vmatpush1.msra.mxu0 0.0
        %3095 = vmatprep.subr.mxu0 0.0
        %3096 = vmatpush1.msra.mxu0 0.0
        %3097 = vmatprep.subr.mxu0 0.0
        %3098 = vmatpush1.msra.mxu0 0.0
        %3099 = vmatprep.subr.mxu0 0.0
        %3100 = vmatpush1.msra.mxu0 0.0
        %3101 = vmatprep.subr.mxu0 0.0
        %3102 = vmatpush1.msra.mxu0 0.0
        %3103 = vmatprep.subr.mxu0 0.0
        %3104 = vmatpush1.msra.mxu0 0.0
        %3105 = vmatprep.subr.mxu0 0.0
        %3106 = vmatpush1.msra.mxu0 0.0
        %3107 = vmatprep.subr.mxu0 0.0
        %v3108 = vand.u32 %v340, 4294901760
        %3109 = vmatpush1.msra.mxu0 %v3108
        %3110 = vmatprep.subr.mxu0 0.0
        %3111 = vmatpush2.msra.mxu0 0.0
        %3112 = vmatprep.subr.mxu0 0.0
        %3113 = vmatpush2.msra.mxu0 0.0
        %3114 = vmatprep.subr.mxu0 0.0
        %3115 = vmatpush2.msra.mxu0 0.0
        %3116 = vmatprep.subr.mxu0 0.0
        %3117 = vmatpush2.msra.mxu0 0.0
        %3118 = vmatprep.subr.mxu0 0.0
        %3119 = vmatpush2.msra.mxu0 0.0
        %3120 = vmatprep.subr.mxu0 0.0
        %3121 = vmatpush2.msra.mxu0 0.0
        %3122 = vmatprep.subr.mxu0 0.0
        %3123 = vmatpush2.msra.mxu0 0.0
        %3124 = vmatprep.subr.mxu0 0.0
        %3125 = vmatpush2.msra.mxu0 0.0
        %3126 = vmatprep.subr.mxu0 0.0
        %3127 = vmatpush2.msra.mxu0 0.0
        %3128 = vmatprep.subr.mxu0 0.0
        %3129 = vmatpush2.msra.mxu0 0.0
        %3130 = vmatprep.subr.mxu0 0.0
        %3131 = vmatpush2.msra.mxu0 0.0
        %3132 = vmatprep.subr.mxu0 0.0
        %3133 = vmatpush2.msra.mxu0 0.0
        %3134 = vmatprep.subr.mxu0 0.0
        %3135 = vmatpush2.msra.mxu0 0.0
        %3136 = vmatprep.subr.mxu0 0.0
        %3137 = vmatpush2.msra.mxu0 0.0
        %3138 = vmatprep.subr.mxu0 0.0
        %3139 = vmatpush2.msra.mxu0 0.0
        %3140 = vmatprep.subr.mxu0 0.0
        %3141 = vmatpush2.msra.mxu0 0.0
        %3142 = vmatprep.mubr.f32.mxu0 0.0
        %v3143 = vand.u32 %v3075, 4294901760
        %v3144 = vsub.f32 %v3075, %v3143
        %v3145 = vand.u32 %v3144, 4294901760
        %v3146 = vsub.f32 %v3144, %v3145
        %v3147 = vand.u32 %v3146, 4294901760
        %3148 = vmatmul.mubr.f32.gmra.mxu0 %v3147
        %v3149 = vpop.f32.mrf.mxu0
        %v3150 = vadd.f32 0.0, %v3149
        %v3151 = vpop.f32.mrf.mxu0
        %3152 = vdwg.mxu0
        %3153 = vmatprep.subr.mxu0 0.0
        %3154 = vmatpush1.msra.mxu0 0.0
        %3155 = vmatprep.subr.mxu0 0.0
        %3156 = vmatpush1.msra.mxu0 0.0
        %3157 = vmatprep.subr.mxu0 0.0
        %3158 = vmatpush1.msra.mxu0 0.0
        %3159 = vmatprep.subr.mxu0 0.0
        %3160 = vmatpush1.msra.mxu0 0.0
        %3161 = vmatprep.subr.mxu0 0.0
        %3162 = vmatpush1.msra.mxu0 0.0
        %3163 = vmatprep.subr.mxu0 0.0
        %3164 = vmatpush1.msra.mxu0 0.0
        %3165 = vmatprep.subr.mxu0 0.0
        %3166 = vmatpush1.msra.mxu0 0.0
        %3167 = vmatprep.subr.mxu0 0.0
        %3168 = vmatpush1.msra.mxu0 0.0
        %3169 = vmatprep.subr.mxu0 0.0
        %3170 = vmatpush1.msra.mxu0 0.0
        %3171 = vmatprep.subr.mxu0 0.0
        %3172 = vmatpush1.msra.mxu0 0.0
        %3173 = vmatprep.subr.mxu0 0.0
        %3174 = vmatpush1.msra.mxu0 0.0
        %3175 = vmatprep.subr.mxu0 0.0
        %3176 = vmatpush1.msra.mxu0 0.0
        %3177 = vmatprep.subr.mxu0 0.0
        %3178 = vmatpush1.msra.mxu0 0.0
        %3179 = vmatprep.subr.mxu0 0.0
        %3180 = vmatpush1.msra.mxu0 0.0
        %3181 = vmatprep.subr.mxu0 0.0
        %3182 = vmatpush1.msra.mxu0 0.0
        %3183 = vmatprep.subr.mxu0 0.0
        %v3184 = vand.u32 %v340, 4294901760
        %v3185 = vsub.f32 %v340, %v3184
        %v3186 = vand.u32 %v3185, 4294901760
        %v3187 = vsub.f32 %v3185, %v3186
        %v3188 = vand.u32 %v3187, 4294901760
        %3189 = vmatpush1.msra.mxu0 %v3188
        %3190 = vmatprep.subr.mxu0 0.0
        %3191 = vmatpush2.msra.mxu0 0.0
        %3192 = vmatprep.subr.mxu0 0.0
        %3193 = vmatpush2.msra.mxu0 0.0
        %3194 = vmatprep.subr.mxu0 0.0
        %3195 = vmatpush2.msra.mxu0 0.0
        %3196 = vmatprep.subr.mxu0 0.0
        %3197 = vmatpush2.msra.mxu0 0.0
        %3198 = vmatprep.subr.mxu0 0.0
        %3199 = vmatpush2.msra.mxu0 0.0
        %3200 = vmatprep.subr.mxu0 0.0
        %3201 = vmatpush2.msra.mxu0 0.0
        %3202 = vmatprep.subr.mxu0 0.0
        %3203 = vmatpush2.msra.mxu0 0.0
        %3204 = vmatprep.subr.mxu0 0.0
        %3205 = vmatpush2.msra.mxu0 0.0
        %3206 = vmatprep.subr.mxu0 0.0
        %3207 = vmatpush2.msra.mxu0 0.0
        %3208 = vmatprep.subr.mxu0 0.0
        %3209 = vmatpush2.msra.mxu0 0.0
        %3210 = vmatprep.subr.mxu0 0.0
        %3211 = vmatpush2.msra.mxu0 0.0
        %3212 = vmatprep.subr.mxu0 0.0
        %3213 = vmatpush2.msra.mxu0 0.0
        %3214 = vmatprep.subr.mxu0 0.0
        %3215 = vmatpush2.msra.mxu0 0.0
        %3216 = vmatprep.subr.mxu0 0.0
        %3217 = vmatpush2.msra.mxu0 0.0
        %3218 = vmatprep.subr.mxu0 0.0
        %3219 = vmatpush2.msra.mxu0 0.0
        %3220 = vmatprep.subr.mxu0 0.0
        %3221 = vmatpush2.msra.mxu0 0.0
        %3222 = vmatprep.mubr.f32.mxu0 0.0
        %v3223 = vand.u32 %v3075, 4294901760
        %3224 = vmatmul.mubr.f32.gmra.mxu0 %v3223
        %v3225 = vpop.f32.mrf.mxu0
        %v3226 = vadd.f32 %v3150, %v3225
        %v3227 = vpop.f32.mrf.mxu0
        %3228 = vdwg.mxu0
        %3229 = vmatprep.subr.mxu0 0.0
        %3230 = vmatpush1.msra.mxu0 0.0
        %3231 = vmatprep.subr.mxu0 0.0
        %3232 = vmatpush1.msra.mxu0 0.0
        %3233 = vmatprep.subr.mxu0 0.0
        %3234 = vmatpush1.msra.mxu0 0.0
        %3235 = vmatprep.subr.mxu0 0.0
        %3236 = vmatpush1.msra.mxu0 0.0
        %3237 = vmatprep.subr.mxu0 0.0
        %3238 = vmatpush1.msra.mxu0 0.0
        %3239 = vmatprep.subr.mxu0 0.0
        %3240 = vmatpush1.msra.mxu0 0.0
        %3241 = vmatprep.subr.mxu0 0.0
        %3242 = vmatpush1.msra.mxu0 0.0
        %3243 = vmatprep.subr.mxu0 0.0
        %3244 = vmatpush1.msra.mxu0 0.0
        %3245 = vmatprep.subr.mxu0 0.0
        %3246 = vmatpush1.msra.mxu0 0.0
        %3247 = vmatprep.subr.mxu0 0.0
        %3248 = vmatpush1.msra.mxu0 0.0
        %3249 = vmatprep.subr.mxu0 0.0
        %3250 = vmatpush1.msra.mxu0 0.0
        %3251 = vmatprep.subr.mxu0 0.0
        %3252 = vmatpush1.msra.mxu0 0.0
        %3253 = vmatprep.subr.mxu0 0.0
        %3254 = vmatpush1.msra.mxu0 0.0
        %3255 = vmatprep.subr.mxu0 0.0
        %3256 = vmatpush1.msra.mxu0 0.0
        %3257 = vmatprep.subr.mxu0 0.0
        %3258 = vmatpush1.msra.mxu0 0.0
        %3259 = vmatprep.subr.mxu0 0.0
        %v3260 = vand.u32 %v340, 4294901760
        %v3261 = vsub.f32 %v340, %v3260
        %3262 = vmatpush1.msra.mxu0 %v3261
        %3263 = vmatprep.subr.mxu0 0.0
        %3264 = vmatpush2.msra.mxu0 0.0
        %3265 = vmatprep.subr.mxu0 0.0
        %3266 = vmatpush2.msra.mxu0 0.0
        %3267 = vmatprep.subr.mxu0 0.0
        %3268 = vmatpush2.msra.mxu0 0.0
        %3269 = vmatprep.subr.mxu0 0.0
        %3270 = vmatpush2.msra.mxu0 0.0
        %3271 = vmatprep.subr.mxu0 0.0
        %3272 = vmatpush2.msra.mxu0 0.0
        %3273 = vmatprep.subr.mxu0 0.0
        %3274 = vmatpush2.msra.mxu0 0.0
        %3275 = vmatprep.subr.mxu0 0.0
        %3276 = vmatpush2.msra.mxu0 0.0
        %3277 = vmatprep.subr.mxu0 0.0
        %3278 = vmatpush2.msra.mxu0 0.0
        %3279 = vmatprep.subr.mxu0 0.0
        %3280 = vmatpush2.msra.mxu0 0.0
        %3281 = vmatprep.subr.mxu0 0.0
        %3282 = vmatpush2.msra.mxu0 0.0
        %3283 = vmatprep.subr.mxu0 0.0
        %3284 = vmatpush2.msra.mxu0 0.0
        %3285 = vmatprep.subr.mxu0 0.0
        %3286 = vmatpush2.msra.mxu0 0.0
        %3287 = vmatprep.subr.mxu0 0.0
        %3288 = vmatpush2.msra.mxu0 0.0
        %3289 = vmatprep.subr.mxu0 0.0
        %3290 = vmatpush2.msra.mxu0 0.0
        %3291 = vmatprep.subr.mxu0 0.0
        %3292 = vmatpush2.msra.mxu0 0.0
        %3293 = vmatprep.subr.mxu0 0.0
        %3294 = vmatpush2.msra.mxu0 0.0
        %3295 = vmatprep.mubr.f32.mxu0 0.0
        %v3296 = vand.u32 %v3075, 4294901760
        %v3297 = vsub.f32 %v3075, %v3296
        %3298 = vmatmul.mubr.f32.gmra.mxu0 %v3297
        %v3299 = vpop.f32.mrf.mxu0
        %v3300 = vadd.f32 %v3226, %v3299
        %v3301 = vpop.f32.mrf.mxu0
        %3302 = vdwg.mxu0
        %3303 = vmatprep.subr.mxu0 0.0
        %3304 = vmatpush1.msra.mxu0 0.0
        %3305 = vmatprep.subr.mxu0 0.0
        %3306 = vmatpush1.msra.mxu0 0.0
        %3307 = vmatprep.subr.mxu0 0.0
        %3308 = vmatpush1.msra.mxu0 0.0
        %3309 = vmatprep.subr.mxu0 0.0
        %3310 = vmatpush1.msra.mxu0 0.0
        %3311 = vmatprep.subr.mxu0 0.0
        %3312 = vmatpush1.msra.mxu0 0.0
        %3313 = vmatprep.subr.mxu0 0.0
        %3314 = vmatpush1.msra.mxu0 0.0
        %3315 = vmatprep.subr.mxu0 0.0
        %3316 = vmatpush1.msra.mxu0 0.0
        %3317 = vmatprep.subr.mxu0 0.0
        %3318 = vmatpush1.msra.mxu0 0.0
        %3319 = vmatprep.subr.mxu0 0.0
        %3320 = vmatpush1.msra.mxu0 0.0
        %3321 = vmatprep.subr.mxu0 0.0
        %3322 = vmatpush1.msra.mxu0 0.0
        %3323 = vmatprep.subr.mxu0 0.0
        %3324 = vmatpush1.msra.mxu0 0.0
        %3325 = vmatprep.subr.mxu0 0.0
        %3326 = vmatpush1.msra.mxu0 0.0
        %3327 = vmatprep.subr.mxu0 0.0
        %3328 = vmatpush1.msra.mxu0 0.0
        %3329 = vmatprep.subr.mxu0 0.0
        %3330 = vmatpush1.msra.mxu0 0.0
        %3331 = vmatprep.subr.mxu0 0.0
        %3332 = vmatpush1.msra.mxu0 0.0
        %3333 = vmatprep.subr.mxu0 0.0
        %v3334 = vand.u32 %v340, 4294901760
        %3335 = vmatpush1.msra.mxu0 %v3334
        %3336 = vmatprep.subr.mxu0 0.0
        %3337 = vmatpush2.msra.mxu0 0.0
        %3338 = vmatprep.subr.mxu0 0.0
        %3339 = vmatpush2.msra.mxu0 0.0
        %3340 = vmatprep.subr.mxu0 0.0
        %3341 = vmatpush2.msra.mxu0 0.0
        %3342 = vmatprep.subr.mxu0 0.0
        %3343 = vmatpush2.msra.mxu0 0.0
        %3344 = vmatprep.subr.mxu0 0.0
        %3345 = vmatpush2.msra.mxu0 0.0
        %3346 = vmatprep.subr.mxu0 0.0
        %3347 = vmatpush2.msra.mxu0 0.0
        %3348 = vmatprep.subr.mxu0 0.0
        %3349 = vmatpush2.msra.mxu0 0.0
        %3350 = vmatprep.subr.mxu0 0.0
        %3351 = vmatpush2.msra.mxu0 0.0
        %3352 = vmatprep.subr.mxu0 0.0
        %3353 = vmatpush2.msra.mxu0 0.0
        %3354 = vmatprep.subr.mxu0 0.0
        %3355 = vmatpush2.msra.mxu0 0.0
        %3356 = vmatprep.subr.mxu0 0.0
        %3357 = vmatpush2.msra.mxu0 0.0
        %3358 = vmatprep.subr.mxu0 0.0
        %3359 = vmatpush2.msra.mxu0 0.0
        %3360 = vmatprep.subr.mxu0 0.0
        %3361 = vmatpush2.msra.mxu0 0.0
        %3362 = vmatprep.subr.mxu0 0.0
        %3363 = vmatpush2.msra.mxu0 0.0
        %3364 = vmatprep.subr.mxu0 0.0
        %3365 = vmatpush2.msra.mxu0 0.0
        %3366 = vmatprep.subr.mxu0 0.0
        %3367 = vmatpush2.msra.mxu0 0.0
        %3368 = vmatprep.mubr.f32.mxu0 0.0
        %v3369 = vand.u32 %v3075, 4294901760
        %v3370 = vsub.f32 %v3075, %v3369
        %v3371 = vand.u32 %v3370, 4294901760
        %3372 = vmatmul.mubr.f32.gmra.mxu0 %v3371
        %v3373 = vpop.f32.mrf.mxu0
        %v3374 = vadd.f32 %v3300, %v3373
        %v3375 = vpop.f32.mrf.mxu0
        %3376 = vdwg.mxu0
        %3377 = vmatprep.subr.mxu0 0.0
        %3378 = vmatpush1.msra.mxu0 0.0
        %3379 = vmatprep.subr.mxu0 0.0
        %3380 = vmatpush1.msra.mxu0 0.0
        %3381 = vmatprep.subr.mxu0 0.0
        %3382 = vmatpush1.msra.mxu0 0.0
        %3383 = vmatprep.subr.mxu0 0.0
        %3384 = vmatpush1.msra.mxu0 0.0
        %3385 = vmatprep.subr.mxu0 0.0
        %3386 = vmatpush1.msra.mxu0 0.0
        %3387 = vmatprep.subr.mxu0 0.0
        %3388 = vmatpush1.msra.mxu0 0.0
        %3389 = vmatprep.subr.mxu0 0.0
        %3390 = vmatpush1.msra.mxu0 0.0
        %3391 = vmatprep.subr.mxu0 0.0
        %3392 = vmatpush1.msra.mxu0 0.0
        %3393 = vmatprep.subr.mxu0 0.0
        %3394 = vmatpush1.msra.mxu0 0.0
        %3395 = vmatprep.subr.mxu0 0.0
        %3396 = vmatpush1.msra.mxu0 0.0
        %3397 = vmatprep.subr.mxu0 0.0
        %3398 = vmatpush1.msra.mxu0 0.0
        %3399 = vmatprep.subr.mxu0 0.0
        %3400 = vmatpush1.msra.mxu0 0.0
        %3401 = vmatprep.subr.mxu0 0.0
        %3402 = vmatpush1.msra.mxu0 0.0
        %3403 = vmatprep.subr.mxu0 0.0
        %3404 = vmatpush1.msra.mxu0 0.0
        %3405 = vmatprep.subr.mxu0 0.0
        %3406 = vmatpush1.msra.mxu0 0.0
        %3407 = vmatprep.subr.mxu0 0.0
        %v3408 = vand.u32 %v340, 4294901760
        %v3409 = vsub.f32 %v340, %v3408
        %v3410 = vand.u32 %v3409, 4294901760
        %3411 = vmatpush1.msra.mxu0 %v3410
        %3412 = vmatprep.subr.mxu0 0.0
        %3413 = vmatpush2.msra.mxu0 0.0
        %3414 = vmatprep.subr.mxu0 0.0
        %3415 = vmatpush2.msra.mxu0 0.0
        %3416 = vmatprep.subr.mxu0 0.0
        %3417 = vmatpush2.msra.mxu0 0.0
        %3418 = vmatprep.subr.mxu0 0.0
        %3419 = vmatpush2.msra.mxu0 0.0
        %3420 = vmatprep.subr.mxu0 0.0
        %3421 = vmatpush2.msra.mxu0 0.0
        %3422 = vmatprep.subr.mxu0 0.0
        %3423 = vmatpush2.msra.mxu0 0.0
        %3424 = vmatprep.subr.mxu0 0.0
        %3425 = vmatpush2.msra.mxu0 0.0
        %3426 = vmatprep.subr.mxu0 0.0
        %3427 = vmatpush2.msra.mxu0 0.0
        %3428 = vmatprep.subr.mxu0 0.0
        %3429 = vmatpush2.msra.mxu0 0.0
        %3430 = vmatprep.subr.mxu0 0.0
        %3431 = vmatpush2.msra.mxu0 0.0
        %3432 = vmatprep.subr.mxu0 0.0
        %3433 = vmatpush2.msra.mxu0 0.0
        %3434 = vmatprep.subr.mxu0 0.0
        %3435 = vmatpush2.msra.mxu0 0.0
        %3436 = vmatprep.subr.mxu0 0.0
        %3437 = vmatpush2.msra.mxu0 0.0
        %3438 = vmatprep.subr.mxu0 0.0
        %3439 = vmatpush2.msra.mxu0 0.0
        %3440 = vmatprep.subr.mxu0 0.0
        %3441 = vmatpush2.msra.mxu0 0.0
        %3442 = vmatprep.subr.mxu0 0.0
        %3443 = vmatpush2.msra.mxu0 0.0
        %3444 = vmatprep.mubr.f32.mxu0 0.0
        %v3445 = vand.u32 %v3075, 4294901760
        %3446 = vmatmul.mubr.f32.gmra.mxu0 %v3445
        %v3447 = vpop.f32.mrf.mxu0
        %v3448 = vadd.f32 %v3374, %v3447
        %v3449 = vpop.f32.mrf.mxu0
        %3450 = vdwg.mxu0
        %3451 = vmatprep.subr.mxu0 0.0
        %3452 = vmatpush1.msra.mxu0 0.0
        %3453 = vmatprep.subr.mxu0 0.0
        %3454 = vmatpush1.msra.mxu0 0.0
        %3455 = vmatprep.subr.mxu0 0.0
        %3456 = vmatpush1.msra.mxu0 0.0
        %3457 = vmatprep.subr.mxu0 0.0
        %3458 = vmatpush1.msra.mxu0 0.0
        %3459 = vmatprep.subr.mxu0 0.0
        %3460 = vmatpush1.msra.mxu0 0.0
        %3461 = vmatprep.subr.mxu0 0.0
        %3462 = vmatpush1.msra.mxu0 0.0
        %3463 = vmatprep.subr.mxu0 0.0
        %3464 = vmatpush1.msra.mxu0 0.0
        %3465 = vmatprep.subr.mxu0 0.0
        %3466 = vmatpush1.msra.mxu0 0.0
        %3467 = vmatprep.subr.mxu0 0.0
        %3468 = vmatpush1.msra.mxu0 0.0
        %3469 = vmatprep.subr.mxu0 0.0
        %3470 = vmatpush1.msra.mxu0 0.0
        %3471 = vmatprep.subr.mxu0 0.0
        %3472 = vmatpush1.msra.mxu0 0.0
        %3473 = vmatprep.subr.mxu0 0.0
        %3474 = vmatpush1.msra.mxu0 0.0
        %3475 = vmatprep.subr.mxu0 0.0
        %3476 = vmatpush1.msra.mxu0 0.0
        %3477 = vmatprep.subr.mxu0 0.0
        %3478 = vmatpush1.msra.mxu0 0.0
        %3479 = vmatprep.subr.mxu0 0.0
        %3480 = vmatpush1.msra.mxu0 0.0
        %3481 = vmatprep.subr.mxu0 0.0
        %v3482 = vand.u32 %v340, 4294901760
        %3483 = vmatpush1.msra.mxu0 %v3482
        %3484 = vmatprep.subr.mxu0 0.0
        %3485 = vmatpush2.msra.mxu0 0.0
        %3486 = vmatprep.subr.mxu0 0.0
        %3487 = vmatpush2.msra.mxu0 0.0
        %3488 = vmatprep.subr.mxu0 0.0
        %3489 = vmatpush2.msra.mxu0 0.0
        %3490 = vmatprep.subr.mxu0 0.0
        %3491 = vmatpush2.msra.mxu0 0.0
        %3492 = vmatprep.subr.mxu0 0.0
        %3493 = vmatpush2.msra.mxu0 0.0
        %3494 = vmatprep.subr.mxu0 0.0
        %3495 = vmatpush2.msra.mxu0 0.0
        %3496 = vmatprep.subr.mxu0 0.0
        %3497 = vmatpush2.msra.mxu0 0.0
        %3498 = vmatprep.subr.mxu0 0.0
        %3499 = vmatpush2.msra.mxu0 0.0
        %3500 = vmatprep.subr.mxu0 0.0
        %3501 = vmatpush2.msra.mxu0 0.0
        %3502 = vmatprep.subr.mxu0 0.0
        %3503 = vmatpush2.msra.mxu0 0.0
        %3504 = vmatprep.subr.mxu0 0.0
        %3505 = vmatpush2.msra.mxu0 0.0
        %3506 = vmatprep.subr.mxu0 0.0
        %3507 = vmatpush2.msra.mxu0 0.0
        %3508 = vmatprep.subr.mxu0 0.0
        %3509 = vmatpush2.msra.mxu0 0.0
        %3510 = vmatprep.subr.mxu0 0.0
        %3511 = vmatpush2.msra.mxu0 0.0
        %3512 = vmatprep.subr.mxu0 0.0
        %3513 = vmatpush2.msra.mxu0 0.0
        %3514 = vmatprep.subr.mxu0 0.0
        %3515 = vmatpush2.msra.mxu0 0.0
        %3516 = vmatprep.mubr.f32.mxu0 0.0
        %v3517 = vand.u32 %v3075, 4294901760
        %3518 = vmatmul.mubr.f32.gmra.mxu0 %v3517
        %v3519 = vpop.f32.mrf.mxu0
        %v3520 = vadd.f32 %v3448, %v3519
        %v3521 = vpop.f32.mrf.mxu0
        %3522 = vdwg.mxu0
        %3523 = vmatprep.subr.mxu0 0.0
        %3524 = vmatpush1.msra.mxu0 0.0
        %3525 = vmatprep.subr.mxu0 0.0
        %3526 = vmatpush1.msra.mxu0 0.0
        %3527 = vmatprep.subr.mxu0 0.0
        %3528 = vmatpush1.msra.mxu0 0.0
        %3529 = vmatprep.subr.mxu0 0.0
        %3530 = vmatpush1.msra.mxu0 0.0
        %3531 = vmatprep.subr.mxu0 0.0
        %3532 = vmatpush1.msra.mxu0 0.0
        %3533 = vmatprep.subr.mxu0 0.0
        %3534 = vmatpush1.msra.mxu0 0.0
        %3535 = vmatprep.subr.mxu0 0.0
        %3536 = vmatpush1.msra.mxu0 0.0
        %3537 = vmatprep.subr.mxu0 0.0
        %3538 = vmatpush1.msra.mxu0 0.0
        %3539 = vmatprep.subr.mxu0 0.0
        %3540 = vmatpush1.msra.mxu0 0.0
        %3541 = vmatprep.subr.mxu0 0.0
        %3542 = vmatpush1.msra.mxu0 0.0
        %3543 = vmatprep.subr.mxu0 0.0
        %3544 = vmatpush1.msra.mxu0 0.0
        %3545 = vmatprep.subr.mxu0 0.0
        %3546 = vmatpush1.msra.mxu0 0.0
        %3547 = vmatprep.subr.mxu0 0.0
        %3548 = vmatpush1.msra.mxu0 0.0
        %3549 = vmatprep.subr.mxu0 0.0
        %3550 = vmatpush1.msra.mxu0 0.0
        %3551 = vmatprep.subr.mxu0 0.0
        %3552 = vmatpush1.msra.mxu0 0.0
        %3553 = vmatprep.subr.mxu0 0.0
        %v3554 = vand.u32 %v3520, 4294901760
        %3555 = vmatpush1.msra.mxu0 %v3554
        %3556 = vmatprep.subr.mxu0 0.0
        %3557 = vmatpush2.msra.mxu0 0.0
        %3558 = vmatprep.subr.mxu0 0.0
        %3559 = vmatpush2.msra.mxu0 0.0
        %3560 = vmatprep.subr.mxu0 0.0
        %3561 = vmatpush2.msra.mxu0 0.0
        %3562 = vmatprep.subr.mxu0 0.0
        %3563 = vmatpush2.msra.mxu0 0.0
        %3564 = vmatprep.subr.mxu0 0.0
        %3565 = vmatpush2.msra.mxu0 0.0
        %3566 = vmatprep.subr.mxu0 0.0
        %3567 = vmatpush2.msra.mxu0 0.0
        %3568 = vmatprep.subr.mxu0 0.0
        %3569 = vmatpush2.msra.mxu0 0.0
        %3570 = vmatprep.subr.mxu0 0.0
        %3571 = vmatpush2.msra.mxu0 0.0
        %3572 = vmatprep.subr.mxu0 0.0
        %3573 = vmatpush2.msra.mxu0 0.0
        %3574 = vmatprep.subr.mxu0 0.0
        %3575 = vmatpush2.msra.mxu0 0.0
        %3576 = vmatprep.subr.mxu0 0.0
        %3577 = vmatpush2.msra.mxu0 0.0
        %3578 = vmatprep.subr.mxu0 0.0
        %3579 = vmatpush2.msra.mxu0 0.0
        %3580 = vmatprep.subr.mxu0 0.0
        %3581 = vmatpush2.msra.mxu0 0.0
        %3582 = vmatprep.subr.mxu0 0.0
        %3583 = vmatpush2.msra.mxu0 0.0
        %3584 = vmatprep.subr.mxu0 0.0
        %3585 = vmatpush2.msra.mxu0 0.0
        %3586 = vmatprep.subr.mxu0 0.0
        %3587 = vmatpush2.msra.mxu0 0.0
        %3588 = vmatprep.mubr.f32.mxu0 0.0
        %v3589 = vand.u32 %v796, 4294901760
        %v3590 = vsub.f32 %v796, %v3589
        %v3591 = vand.u32 %v3590, 4294901760
        %v3592 = vsub.f32 %v3590, %v3591
        %v3593 = vand.u32 %v3592, 4294901760
        %3594 = vmatmul.mubr.f32.gmra.mxu0 %v3593
        %v3595 = vpop.f32.mrf.mxu0
        %v3596 = vadd.f32 0.0, %v3595
        %v3597 = vpop.f32.mrf.mxu0
        %3598 = vdwg.mxu0
        %3599 = vmatprep.subr.mxu0 0.0
        %3600 = vmatpush1.msra.mxu0 0.0
        %3601 = vmatprep.subr.mxu0 0.0
        %3602 = vmatpush1.msra.mxu0 0.0
        %3603 = vmatprep.subr.mxu0 0.0
        %3604 = vmatpush1.msra.mxu0 0.0
        %3605 = vmatprep.subr.mxu0 0.0
        %3606 = vmatpush1.msra.mxu0 0.0
        %3607 = vmatprep.subr.mxu0 0.0
        %3608 = vmatpush1.msra.mxu0 0.0
        %3609 = vmatprep.subr.mxu0 0.0
        %3610 = vmatpush1.msra.mxu0 0.0
        %3611 = vmatprep.subr.mxu0 0.0
        %3612 = vmatpush1.msra.mxu0 0.0
        %3613 = vmatprep.subr.mxu0 0.0
        %3614 = vmatpush1.msra.mxu0 0.0
        %3615 = vmatprep.subr.mxu0 0.0
        %3616 = vmatpush1.msra.mxu0 0.0
        %3617 = vmatprep.subr.mxu0 0.0
        %3618 = vmatpush1.msra.mxu0 0.0
        %3619 = vmatprep.subr.mxu0 0.0
        %3620 = vmatpush1.msra.mxu0 0.0
        %3621 = vmatprep.subr.mxu0 0.0
        %3622 = vmatpush1.msra.mxu0 0.0
        %3623 = vmatprep.subr.mxu0 0.0
        %3624 = vmatpush1.msra.mxu0 0.0
        %3625 = vmatprep.subr.mxu0 0.0
        %3626 = vmatpush1.msra.mxu0 0.0
        %3627 = vmatprep.subr.mxu0 0.0
        %3628 = vmatpush1.msra.mxu0 0.0
        %3629 = vmatprep.subr.mxu0 0.0
        %v3630 = vand.u32 %v3520, 4294901760
        %v3631 = vsub.f32 %v3520, %v3630
        %v3632 = vand.u32 %v3631, 4294901760
        %v3633 = vsub.f32 %v3631, %v3632
        %v3634 = vand.u32 %v3633, 4294901760
        %3635 = vmatpush1.msra.mxu0 %v3634
        %3636 = vmatprep.subr.mxu0 0.0
        %3637 = vmatpush2.msra.mxu0 0.0
        %3638 = vmatprep.subr.mxu0 0.0
        %3639 = vmatpush2.msra.mxu0 0.0
        %3640 = vmatprep.subr.mxu0 0.0
        %3641 = vmatpush2.msra.mxu0 0.0
        %3642 = vmatprep.subr.mxu0 0.0
        %3643 = vmatpush2.msra.mxu0 0.0
        %3644 = vmatprep.subr.mxu0 0.0
        %3645 = vmatpush2.msra.mxu0 0.0
        %3646 = vmatprep.subr.mxu0 0.0
        %3647 = vmatpush2.msra.mxu0 0.0
        %3648 = vmatprep.subr.mxu0 0.0
        %3649 = vmatpush2.msra.mxu0 0.0
        %3650 = vmatprep.subr.mxu0 0.0
        %3651 = vmatpush2.msra.mxu0 0.0
        %3652 = vmatprep.subr.mxu0 0.0
        %3653 = vmatpush2.msra.mxu0 0.0
        %3654 = vmatprep.subr.mxu0 0.0
        %3655 = vmatpush2.msra.mxu0 0.0
        %3656 = vmatprep.subr.mxu0 0.0
        %3657 = vmatpush2.msra.mxu0 0.0
        %3658 = vmatprep.subr.mxu0 0.0
        %3659 = vmatpush2.msra.mxu0 0.0
        %3660 = vmatprep.subr.mxu0 0.0
        %3661 = vmatpush2.msra.mxu0 0.0
        %3662 = vmatprep.subr.mxu0 0.0
        %3663 = vmatpush2.msra.mxu0 0.0
        %3664 = vmatprep.subr.mxu0 0.0
        %3665 = vmatpush2.msra.mxu0 0.0
        %3666 = vmatprep.subr.mxu0 0.0
        %3667 = vmatpush2.msra.mxu0 0.0
        %3668 = vmatprep.mubr.f32.mxu0 0.0
        %v3669 = vand.u32 %v796, 4294901760
        %3670 = vmatmul.mubr.f32.gmra.mxu0 %v3669
        %v3671 = vpop.f32.mrf.mxu0
        %v3672 = vadd.f32 %v3596, %v3671
        %v3673 = vpop.f32.mrf.mxu0
        %3674 = vdwg.mxu0
        %3675 = vmatprep.subr.mxu0 0.0
        %3676 = vmatpush1.msra.mxu0 0.0
        %3677 = vmatprep.subr.mxu0 0.0
        %3678 = vmatpush1.msra.mxu0 0.0
        %3679 = vmatprep.subr.mxu0 0.0
        %3680 = vmatpush1.msra.mxu0 0.0
        %3681 = vmatprep.subr.mxu0 0.0
        %3682 = vmatpush1.msra.mxu0 0.0
        %3683 = vmatprep.subr.mxu0 0.0
        %3684 = vmatpush1.msra.mxu0 0.0
        %3685 = vmatprep.subr.mxu0 0.0
        %3686 = vmatpush1.msra.mxu0 0.0
        %3687 = vmatprep.subr.mxu0 0.0
        %3688 = vmatpush1.msra.mxu0 0.0
        %3689 = vmatprep.subr.mxu0 0.0
        %3690 = vmatpush1.msra.mxu0 0.0
        %3691 = vmatprep.subr.mxu0 0.0
        %3692 = vmatpush1.msra.mxu0 0.0
        %3693 = vmatprep.subr.mxu0 0.0
        %3694 = vmatpush1.msra.mxu0 0.0
        %3695 = vmatprep.subr.mxu0 0.0
        %3696 = vmatpush1.msra.mxu0 0.0
        %3697 = vmatprep.subr.mxu0 0.0
        %3698 = vmatpush1.msra.mxu0 0.0
        %3699 = vmatprep.subr.mxu0 0.0
        %3700 = vmatpush1.msra.mxu0 0.0
        %3701 = vmatprep.subr.mxu0 0.0
        %3702 = vmatpush1.msra.mxu0 0.0
        %3703 = vmatprep.subr.mxu0 0.0
        %3704 = vmatpush1.msra.mxu0 0.0
        %3705 = vmatprep.subr.mxu0 0.0
        %v3706 = vand.u32 %v3520, 4294901760
        %v3707 = vsub.f32 %v3520, %v3706
        %3708 = vmatpush1.msra.mxu0 %v3707
        %3709 = vmatprep.subr.mxu0 0.0
        %3710 = vmatpush2.msra.mxu0 0.0
        %3711 = vmatprep.subr.mxu0 0.0
        %3712 = vmatpush2.msra.mxu0 0.0
        %3713 = vmatprep.subr.mxu0 0.0
        %3714 = vmatpush2.msra.mxu0 0.0
        %3715 = vmatprep.subr.mxu0 0.0
        %3716 = vmatpush2.msra.mxu0 0.0
        %3717 = vmatprep.subr.mxu0 0.0
        %3718 = vmatpush2.msra.mxu0 0.0
        %3719 = vmatprep.subr.mxu0 0.0
        %3720 = vmatpush2.msra.mxu0 0.0
        %3721 = vmatprep.subr.mxu0 0.0
        %3722 = vmatpush2.msra.mxu0 0.0
        %3723 = vmatprep.subr.mxu0 0.0
        %3724 = vmatpush2.msra.mxu0 0.0
        %3725 = vmatprep.subr.mxu0 0.0
        %3726 = vmatpush2.msra.mxu0 0.0
        %3727 = vmatprep.subr.mxu0 0.0
        %3728 = vmatpush2.msra.mxu0 0.0
        %3729 = vmatprep.subr.mxu0 0.0
        %3730 = vmatpush2.msra.mxu0 0.0
        %3731 = vmatprep.subr.mxu0 0.0
        %3732 = vmatpush2.msra.mxu0 0.0
        %3733 = vmatprep.subr.mxu0 0.0
        %3734 = vmatpush2.msra.mxu0 0.0
        %3735 = vmatprep.subr.mxu0 0.0
        %3736 = vmatpush2.msra.mxu0 0.0
        %3737 = vmatprep.subr.mxu0 0.0
        %3738 = vmatpush2.msra.mxu0 0.0
        %3739 = vmatprep.subr.mxu0 0.0
        %3740 = vmatpush2.msra.mxu0 0.0
        %3741 = vmatprep.mubr.f32.mxu0 0.0
        %v3742 = vand.u32 %v796, 4294901760
        %v3743 = vsub.f32 %v796, %v3742
        %3744 = vmatmul.mubr.f32.gmra.mxu0 %v3743
        %v3745 = vpop.f32.mrf.mxu0
        %v3746 = vadd.f32 %v3672, %v3745
        %v3747 = vpop.f32.mrf.mxu0
        %3748 = vdwg.mxu0
        %3749 = vmatprep.subr.mxu0 0.0
        %3750 = vmatpush1.msra.mxu0 0.0
        %3751 = vmatprep.subr.mxu0 0.0
        %3752 = vmatpush1.msra.mxu0 0.0
        %3753 = vmatprep.subr.mxu0 0.0
        %3754 = vmatpush1.msra.mxu0 0.0
        %3755 = vmatprep.subr.mxu0 0.0
        %3756 = vmatpush1.msra.mxu0 0.0
        %3757 = vmatprep.subr.mxu0 0.0
        %3758 = vmatpush1.msra.mxu0 0.0
        %3759 = vmatprep.subr.mxu0 0.0
        %3760 = vmatpush1.msra.mxu0 0.0
        %3761 = vmatprep.subr.mxu0 0.0
        %3762 = vmatpush1.msra.mxu0 0.0
        %3763 = vmatprep.subr.mxu0 0.0
        %3764 = vmatpush1.msra.mxu0 0.0
        %3765 = vmatprep.subr.mxu0 0.0
        %3766 = vmatpush1.msra.mxu0 0.0
        %3767 = vmatprep.subr.mxu0 0.0
        %3768 = vmatpush1.msra.mxu0 0.0
        %3769 = vmatprep.subr.mxu0 0.0
        %3770 = vmatpush1.msra.mxu0 0.0
        %3771 = vmatprep.subr.mxu0 0.0
        %3772 = vmatpush1.msra.mxu0 0.0
        %3773 = vmatprep.subr.mxu0 0.0
        %3774 = vmatpush1.msra.mxu0 0.0
        %3775 = vmatprep.subr.mxu0 0.0
        %3776 = vmatpush1.msra.mxu0 0.0
        %3777 = vmatprep.subr.mxu0 0.0
        %3778 = vmatpush1.msra.mxu0 0.0
        %3779 = vmatprep.subr.mxu0 0.0
        %v3780 = vand.u32 %v3520, 4294901760
        %3781 = vmatpush1.msra.mxu0 %v3780
        %3782 = vmatprep.subr.mxu0 0.0
        %3783 = vmatpush2.msra.mxu0 0.0
        %3784 = vmatprep.subr.mxu0 0.0
        %3785 = vmatpush2.msra.mxu0 0.0
        %3786 = vmatprep.subr.mxu0 0.0
        %3787 = vmatpush2.msra.mxu0 0.0
        %3788 = vmatprep.subr.mxu0 0.0
        %3789 = vmatpush2.msra.mxu0 0.0
        %3790 = vmatprep.subr.mxu0 0.0
        %3791 = vmatpush2.msra.mxu0 0.0
        %3792 = vmatprep.subr.mxu0 0.0
        %3793 = vmatpush2.msra.mxu0 0.0
        %3794 = vmatprep.subr.mxu0 0.0
        %3795 = vmatpush2.msra.mxu0 0.0
        %3796 = vmatprep.subr.mxu0 0.0
        %3797 = vmatpush2.msra.mxu0 0.0
        %3798 = vmatprep.subr.mxu0 0.0
        %3799 = vmatpush2.msra.mxu0 0.0
        %3800 = vmatprep.subr.mxu0 0.0
        %3801 = vmatpush2.msra.mxu0 0.0
        %3802 = vmatprep.subr.mxu0 0.0
        %3803 = vmatpush2.msra.mxu0 0.0
        %3804 = vmatprep.subr.mxu0 0.0
        %3805 = vmatpush2.msra.mxu0 0.0
        %3806 = vmatprep.subr.mxu0 0.0
        %3807 = vmatpush2.msra.mxu0 0.0
        %3808 = vmatprep.subr.mxu0 0.0
        %3809 = vmatpush2.msra.mxu0 0.0
        %3810 = vmatprep.subr.mxu0 0.0
        %3811 = vmatpush2.msra.mxu0 0.0
        %3812 = vmatprep.subr.mxu0 0.0
        %3813 = vmatpush2.msra.mxu0 0.0
        %3814 = vmatprep.mubr.f32.mxu0 0.0
        %v3815 = vand.u32 %v796, 4294901760
        %v3816 = vsub.f32 %v796, %v3815
        %v3817 = vand.u32 %v3816, 4294901760
        %3818 = vmatmul.mubr.f32.gmra.mxu0 %v3817
        %v3819 = vpop.f32.mrf.mxu0
        %v3820 = vadd.f32 %v3746, %v3819
        %v3821 = vpop.f32.mrf.mxu0
        %3822 = vdwg.mxu0
        %3823 = vmatprep.subr.mxu0 0.0
        %3824 = vmatpush1.msra.mxu0 0.0
        %3825 = vmatprep.subr.mxu0 0.0
        %3826 = vmatpush1.msra.mxu0 0.0
        %3827 = vmatprep.subr.mxu0 0.0
        %3828 = vmatpush1.msra.mxu0 0.0
        %3829 = vmatprep.subr.mxu0 0.0
        %3830 = vmatpush1.msra.mxu0 0.0
        %3831 = vmatprep.subr.mxu0 0.0
        %3832 = vmatpush1.msra.mxu0 0.0
        %3833 = vmatprep.subr.mxu0 0.0
        %3834 = vmatpush1.msra.mxu0 0.0
        %3835 = vmatprep.subr.mxu0 0.0
        %3836 = vmatpush1.msra.mxu0 0.0
        %3837 = vmatprep.subr.mxu0 0.0
        %3838 = vmatpush1.msra.mxu0 0.0
        %3839 = vmatprep.subr.mxu0 0.0
        %3840 = vmatpush1.msra.mxu0 0.0
        %3841 = vmatprep.subr.mxu0 0.0
        %3842 = vmatpush1.msra.mxu0 0.0
        %3843 = vmatprep.subr.mxu0 0.0
        %3844 = vmatpush1.msra.mxu0 0.0
        %3845 = vmatprep.subr.mxu0 0.0
        %3846 = vmatpush1.msra.mxu0 0.0
        %3847 = vmatprep.subr.mxu0 0.0
        %3848 = vmatpush1.msra.mxu0 0.0
        %3849 = vmatprep.subr.mxu0 0.0
        %3850 = vmatpush1.msra.mxu0 0.0
        %3851 = vmatprep.subr.mxu0 0.0
        %3852 = vmatpush1.msra.mxu0 0.0
        %3853 = vmatprep.subr.mxu0 0.0
        %v3854 = vand.u32 %v3520, 4294901760
        %v3855 = vsub.f32 %v3520, %v3854
        %v3856 = vand.u32 %v3855, 4294901760
        %3857 = vmatpush1.msra.mxu0 %v3856
        %3858 = vmatprep.subr.mxu0 0.0
        %3859 = vmatpush2.msra.mxu0 0.0
        %3860 = vmatprep.subr.mxu0 0.0
        %3861 = vmatpush2.msra.mxu0 0.0
        %3862 = vmatprep.subr.mxu0 0.0
        %3863 = vmatpush2.msra.mxu0 0.0
        %3864 = vmatprep.subr.mxu0 0.0
        %3865 = vmatpush2.msra.mxu0 0.0
        %3866 = vmatprep.subr.mxu0 0.0
        %3867 = vmatpush2.msra.mxu0 0.0
        %3868 = vmatprep.subr.mxu0 0.0
        %3869 = vmatpush2.msra.mxu0 0.0
        %3870 = vmatprep.subr.mxu0 0.0
        %3871 = vmatpush2.msra.mxu0 0.0
        %3872 = vmatprep.subr.mxu0 0.0
        %3873 = vmatpush2.msra.mxu0 0.0
        %3874 = vmatprep.subr.mxu0 0.0
        %3875 = vmatpush2.msra.mxu0 0.0
        %3876 = vmatprep.subr.mxu0 0.0
        %3877 = vmatpush2.msra.mxu0 0.0
        %3878 = vmatprep.subr.mxu0 0.0
        %3879 = vmatpush2.msra.mxu0 0.0
        %3880 = vmatprep.subr.mxu0 0.0
        %3881 = vmatpush2.msra.mxu0 0.0
        %3882 = vmatprep.subr.mxu0 0.0
        %3883 = vmatpush2.msra.mxu0 0.0
        %3884 = vmatprep.subr.mxu0 0.0
        %3885 = vmatpush2.msra.mxu0 0.0
        %3886 = vmatprep.subr.mxu0 0.0
        %3887 = vmatpush2.msra.mxu0 0.0
        %3888 = vmatprep.subr.mxu0 0.0
        %3889 = vmatpush2.msra.mxu0 0.0
        %3890 = vmatprep.mubr.f32.mxu0 0.0
        %v3891 = vand.u32 %v796, 4294901760
        %3892 = vmatmul.mubr.f32.gmra.mxu0 %v3891
        %v3893 = vpop.f32.mrf.mxu0
        %v3894 = vadd.f32 %v3820, %v3893
        %v3895 = vpop.f32.mrf.mxu0
        %3896 = vdwg.mxu0
        %3897 = vmatprep.subr.mxu0 0.0
        %3898 = vmatpush1.msra.mxu0 0.0
        %3899 = vmatprep.subr.mxu0 0.0
        %3900 = vmatpush1.msra.mxu0 0.0
        %3901 = vmatprep.subr.mxu0 0.0
        %3902 = vmatpush1.msra.mxu0 0.0
        %3903 = vmatprep.subr.mxu0 0.0
        %3904 = vmatpush1.msra.mxu0 0.0
        %3905 = vmatprep.subr.mxu0 0.0
        %3906 = vmatpush1.msra.mxu0 0.0
        %3907 = vmatprep.subr.mxu0 0.0
        %3908 = vmatpush1.msra.mxu0 0.0
        %3909 = vmatprep.subr.mxu0 0.0
        %3910 = vmatpush1.msra.mxu0 0.0
        %3911 = vmatprep.subr.mxu0 0.0
        %3912 = vmatpush1.msra.mxu0 0.0
        %3913 = vmatprep.subr.mxu0 0.0
        %3914 = vmatpush1.msra.mxu0 0.0
        %3915 = vmatprep.subr.mxu0 0.0
        %3916 = vmatpush1.msra.mxu0 0.0
        %3917 = vmatprep.subr.mxu0 0.0
        %3918 = vmatpush1.msra.mxu0 0.0
        %3919 = vmatprep.subr.mxu0 0.0
        %3920 = vmatpush1.msra.mxu0 0.0
        %3921 = vmatprep.subr.mxu0 0.0
        %3922 = vmatpush1.msra.mxu0 0.0
        %3923 = vmatprep.subr.mxu0 0.0
        %3924 = vmatpush1.msra.mxu0 0.0
        %3925 = vmatprep.subr.mxu0 0.0
        %3926 = vmatpush1.msra.mxu0 0.0
        %3927 = vmatprep.subr.mxu0 0.0
        %v3928 = vand.u32 %v3520, 4294901760
        %3929 = vmatpush1.msra.mxu0 %v3928
        %3930 = vmatprep.subr.mxu0 0.0
        %3931 = vmatpush2.msra.mxu0 0.0
        %3932 = vmatprep.subr.mxu0 0.0
        %3933 = vmatpush2.msra.mxu0 0.0
        %3934 = vmatprep.subr.mxu0 0.0
        %3935 = vmatpush2.msra.mxu0 0.0
        %3936 = vmatprep.subr.mxu0 0.0
        %3937 = vmatpush2.msra.mxu0 0.0
        %3938 = vmatprep.subr.mxu0 0.0
        %3939 = vmatpush2.msra.mxu0 0.0
        %3940 = vmatprep.subr.mxu0 0.0
        %3941 = vmatpush2.msra.mxu0 0.0
        %3942 = vmatprep.subr.mxu0 0.0
        %3943 = vmatpush2.msra.mxu0 0.0
        %3944 = vmatprep.subr.mxu0 0.0
        %3945 = vmatpush2.msra.mxu0 0.0
        %3946 = vmatprep.subr.mxu0 0.0
        %3947 = vmatpush2.msra.mxu0 0.0
        %3948 = vmatprep.subr.mxu0 0.0
        %3949 = vmatpush2.msra.mxu0 0.0
        %3950 = vmatprep.subr.mxu0 0.0
        %3951 = vmatpush2.msra.mxu0 0.0
        %3952 = vmatprep.subr.mxu0 0.0
        %3953 = vmatpush2.msra.mxu0 0.0
        %3954 = vmatprep.subr.mxu0 0.0
        %3955 = vmatpush2.msra.mxu0 0.0
        %3956 = vmatprep.subr.mxu0 0.0
        %3957 = vmatpush2.msra.mxu0 0.0
        %3958 = vmatprep.subr.mxu0 0.0
        %3959 = vmatpush2.msra.mxu0 0.0
        %3960 = vmatprep.subr.mxu0 0.0
        %3961 = vmatpush2.msra.mxu0 0.0
        %3962 = vmatprep.mubr.f32.mxu0 0.0
        %v3963 = vand.u32 %v796, 4294901760
        %3964 = vmatmul.mubr.f32.gmra.mxu0 %v3963
        %v3965 = vpop.f32.mrf.mxu0
        %v3966 = vadd.f32 %v3894, %v3965
        %v3967 = vpop.f32.mrf.mxu0
        %3968 = vdwg.mxu0
        %v3969 = vld [vmem:[%s300] sm:$0xff]
        %3971 = vrot.lane.b32.xlu0 %v3966, 16
        %v3972 = vpop.permute.xlu0 %3971
        %v3974 = vsel %vm1249, %v3966, %v3972
        %3976 = vrot.lane.b32.xlu0 %v3969, 64
        %v3977 = vpop.permute.xlu0 %3976
        %3979 = vmatprep.subr.mxu0 0.0
        %3980 = vmatpush1.msra.mxu0 0.0
        %3981 = vmatprep.subr.mxu0 0.0
        %3982 = vmatpush1.msra.mxu0 0.0
        %3983 = vmatprep.subr.mxu0 0.0
        %3984 = vmatpush1.msra.mxu0 0.0
        %3985 = vmatprep.subr.mxu0 0.0
        %3986 = vmatpush1.msra.mxu0 0.0
        %3987 = vmatprep.subr.mxu0 0.0
        %3988 = vmatpush1.msra.mxu0 0.0
        %3989 = vmatprep.subr.mxu0 0.0
        %3990 = vmatpush1.msra.mxu0 0.0
        %3991 = vmatprep.subr.mxu0 0.0
        %3992 = vmatpush1.msra.mxu0 0.0
        %3993 = vmatprep.subr.mxu0 0.0
        %3994 = vmatpush1.msra.mxu0 0.0
        %3995 = vmatprep.subr.mxu0 0.0
        %3996 = vmatpush1.msra.mxu0 0.0
        %3997 = vmatprep.subr.mxu0 0.0
        %3998 = vmatpush1.msra.mxu0 0.0
        %3999 = vmatprep.subr.mxu0 0.0
        %4000 = vmatpush1.msra.mxu0 0.0
        %4001 = vmatprep.subr.mxu0 0.0
        %4002 = vmatpush1.msra.mxu0 0.0
        %4003 = vmatprep.subr.mxu0 0.0
        %4004 = vmatpush1.msra.mxu0 0.0
        %4005 = vmatprep.subr.mxu0 0.0
        %4006 = vmatpush1.msra.mxu0 0.0
        %4007 = vmatprep.subr.mxu0 0.0
        %4008 = vmatpush1.msra.mxu0 0.0
        %4009 = vmatprep.subr.mxu0 0.0
        %v4010 = vand.u32 %v3977, 4294901760
        %4011 = vmatpush1.msra.mxu0 %v4010
        %4012 = vmatprep.subr.mxu0 0.0
        %4013 = vmatpush2.msra.mxu0 0.0
        %4014 = vmatprep.subr.mxu0 0.0
        %4015 = vmatpush2.msra.mxu0 0.0
        %4016 = vmatprep.subr.mxu0 0.0
        %4017 = vmatpush2.msra.mxu0 0.0
        %4018 = vmatprep.subr.mxu0 0.0
        %4019 = vmatpush2.msra.mxu0 0.0
        %4020 = vmatprep.subr.mxu0 0.0
        %4021 = vmatpush2.msra.mxu0 0.0
        %4022 = vmatprep.subr.mxu0 0.0
        %4023 = vmatpush2.msra.mxu0 0.0
        %4024 = vmatprep.subr.mxu0 0.0
        %4025 = vmatpush2.msra.mxu0 0.0
        %4026 = vmatprep.subr.mxu0 0.0
        %4027 = vmatpush2.msra.mxu0 0.0
        %4028 = vmatprep.subr.mxu0 0.0
        %4029 = vmatpush2.msra.mxu0 0.0
        %4030 = vmatprep.subr.mxu0 0.0
        %4031 = vmatpush2.msra.mxu0 0.0
        %4032 = vmatprep.subr.mxu0 0.0
        %4033 = vmatpush2.msra.mxu0 0.0
        %4034 = vmatprep.subr.mxu0 0.0
        %4035 = vmatpush2.msra.mxu0 0.0
        %4036 = vmatprep.subr.mxu0 0.0
        %4037 = vmatpush2.msra.mxu0 0.0
        %4038 = vmatprep.subr.mxu0 0.0
        %4039 = vmatpush2.msra.mxu0 0.0
        %4040 = vmatprep.subr.mxu0 0.0
        %4041 = vmatpush2.msra.mxu0 0.0
        %4042 = vmatprep.subr.mxu0 0.0
        %4043 = vmatpush2.msra.mxu0 0.0
        %4044 = vmatprep.mubr.f32.mxu0 0.0
        %v4045 = vand.u32 %v1252, 4294901760
        %v4046 = vsub.f32 %v1252, %v4045
        %v4047 = vand.u32 %v4046, 4294901760
        %v4048 = vsub.f32 %v4046, %v4047
        %v4049 = vand.u32 %v4048, 4294901760
        %4050 = vmatmul.mubr.f32.gmra.mxu0 %v4049
        %v4051 = vpop.f32.mrf.mxu0
        %v4052 = vadd.f32 %v3974, %v4051
        %v4053 = vpop.f32.mrf.mxu0
        %4054 = vdwg.mxu0
        %4055 = vmatprep.subr.mxu0 0.0
        %4056 = vmatpush1.msra.mxu0 0.0
        %4057 = vmatprep.subr.mxu0 0.0
        %4058 = vmatpush1.msra.mxu0 0.0
        %4059 = vmatprep.subr.mxu0 0.0
        %4060 = vmatpush1.msra.mxu0 0.0
        %4061 = vmatprep.subr.mxu0 0.0
        %4062 = vmatpush1.msra.mxu0 0.0
        %4063 = vmatprep.subr.mxu0 0.0
        %4064 = vmatpush1.msra.mxu0 0.0
        %4065 = vmatprep.subr.mxu0 0.0
        %4066 = vmatpush1.msra.mxu0 0.0
        %4067 = vmatprep.subr.mxu0 0.0
        %4068 = vmatpush1.msra.mxu0 0.0
        %4069 = vmatprep.subr.mxu0 0.0
        %4070 = vmatpush1.msra.mxu0 0.0
        %4071 = vmatprep.subr.mxu0 0.0
        %4072 = vmatpush1.msra.mxu0 0.0
        %4073 = vmatprep.subr.mxu0 0.0
        %4074 = vmatpush1.msra.mxu0 0.0
        %4075 = vmatprep.subr.mxu0 0.0
        %4076 = vmatpush1.msra.mxu0 0.0
        %4077 = vmatprep.subr.mxu0 0.0
        %4078 = vmatpush1.msra.mxu0 0.0
        %4079 = vmatprep.subr.mxu0 0.0
        %4080 = vmatpush1.msra.mxu0 0.0
        %4081 = vmatprep.subr.mxu0 0.0
        %4082 = vmatpush1.msra.mxu0 0.0
        %4083 = vmatprep.subr.mxu0 0.0
        %4084 = vmatpush1.msra.mxu0 0.0
        %4085 = vmatprep.subr.mxu0 0.0
        %v4086 = vand.u32 %v3977, 4294901760
        %v4087 = vsub.f32 %v3977, %v4086
        %v4088 = vand.u32 %v4087, 4294901760
        %v4089 = vsub.f32 %v4087, %v4088
        %v4090 = vand.u32 %v4089, 4294901760
        %4091 = vmatpush1.msra.mxu0 %v4090
        %4092 = vmatprep.subr.mxu0 0.0
        %4093 = vmatpush2.msra.mxu0 0.0
        %4094 = vmatprep.subr.mxu0 0.0
        %4095 = vmatpush2.msra.mxu0 0.0
        %4096 = vmatprep.subr.mxu0 0.0
        %4097 = vmatpush2.msra.mxu0 0.0
        %4098 = vmatprep.subr.mxu0 0.0
        %4099 = vmatpush2.msra.mxu0 0.0
        %4100 = vmatprep.subr.mxu0 0.0
        %4101 = vmatpush2.msra.mxu0 0.0
        %4102 = vmatprep.subr.mxu0 0.0
        %4103 = vmatpush2.msra.mxu0 0.0
        %4104 = vmatprep.subr.mxu0 0.0
        %4105 = vmatpush2.msra.mxu0 0.0
        %4106 = vmatprep.subr.mxu0 0.0
        %4107 = vmatpush2.msra.mxu0 0.0
        %4108 = vmatprep.subr.mxu0 0.0
        %4109 = vmatpush2.msra.mxu0 0.0
        %4110 = vmatprep.subr.mxu0 0.0
        %4111 = vmatpush2.msra.mxu0 0.0
        %4112 = vmatprep.subr.mxu0 0.0
        %4113 = vmatpush2.msra.mxu0 0.0
        %4114 = vmatprep.subr.mxu0 0.0
        %4115 = vmatpush2.msra.mxu0 0.0
        %4116 = vmatprep.subr.mxu0 0.0
        %4117 = vmatpush2.msra.mxu0 0.0
        %4118 = vmatprep.subr.mxu0 0.0
        %4119 = vmatpush2.msra.mxu0 0.0
        %4120 = vmatprep.subr.mxu0 0.0
        %4121 = vmatpush2.msra.mxu0 0.0
        %4122 = vmatprep.subr.mxu0 0.0
        %4123 = vmatpush2.msra.mxu0 0.0
        %4124 = vmatprep.mubr.f32.mxu0 0.0
        %v4125 = vand.u32 %v1252, 4294901760
        %4126 = vmatmul.mubr.f32.gmra.mxu0 %v4125
        %v4127 = vpop.f32.mrf.mxu0
        %v4128 = vadd.f32 %v4052, %v4127
        %v4129 = vpop.f32.mrf.mxu0
        %4130 = vdwg.mxu0
        %4131 = vmatprep.subr.mxu0 0.0
        %4132 = vmatpush1.msra.mxu0 0.0
        %4133 = vmatprep.subr.mxu0 0.0
        %4134 = vmatpush1.msra.mxu0 0.0
        %4135 = vmatprep.subr.mxu0 0.0
        %4136 = vmatpush1.msra.mxu0 0.0
        %4137 = vmatprep.subr.mxu0 0.0
        %4138 = vmatpush1.msra.mxu0 0.0
        %4139 = vmatprep.subr.mxu0 0.0
        %4140 = vmatpush1.msra.mxu0 0.0
        %4141 = vmatprep.subr.mxu0 0.0
        %4142 = vmatpush1.msra.mxu0 0.0
        %4143 = vmatprep.subr.mxu0 0.0
        %4144 = vmatpush1.msra.mxu0 0.0
        %4145 = vmatprep.subr.mxu0 0.0
        %4146 = vmatpush1.msra.mxu0 0.0
        %4147 = vmatprep.subr.mxu0 0.0
        %4148 = vmatpush1.msra.mxu0 0.0
        %4149 = vmatprep.subr.mxu0 0.0
        %4150 = vmatpush1.msra.mxu0 0.0
        %4151 = vmatprep.subr.mxu0 0.0
        %4152 = vmatpush1.msra.mxu0 0.0
        %4153 = vmatprep.subr.mxu0 0.0
        %4154 = vmatpush1.msra.mxu0 0.0
        %4155 = vmatprep.subr.mxu0 0.0
        %4156 = vmatpush1.msra.mxu0 0.0
        %4157 = vmatprep.subr.mxu0 0.0
        %4158 = vmatpush1.msra.mxu0 0.0
        %4159 = vmatprep.subr.mxu0 0.0
        %4160 = vmatpush1.msra.mxu0 0.0
        %4161 = vmatprep.subr.mxu0 0.0
        %v4162 = vand.u32 %v3977, 4294901760
        %v4163 = vsub.f32 %v3977, %v4162
        %4164 = vmatpush1.msra.mxu0 %v4163
        %4165 = vmatprep.subr.mxu0 0.0
        %4166 = vmatpush2.msra.mxu0 0.0
        %4167 = vmatprep.subr.mxu0 0.0
        %4168 = vmatpush2.msra.mxu0 0.0
        %4169 = vmatprep.subr.mxu0 0.0
        %4170 = vmatpush2.msra.mxu0 0.0
        %4171 = vmatprep.subr.mxu0 0.0
        %4172 = vmatpush2.msra.mxu0 0.0
        %4173 = vmatprep.subr.mxu0 0.0
        %4174 = vmatpush2.msra.mxu0 0.0
        %4175 = vmatprep.subr.mxu0 0.0
        %4176 = vmatpush2.msra.mxu0 0.0
        %4177 = vmatprep.subr.mxu0 0.0
        %4178 = vmatpush2.msra.mxu0 0.0
        %4179 = vmatprep.subr.mxu0 0.0
        %4180 = vmatpush2.msra.mxu0 0.0
        %4181 = vmatprep.subr.mxu0 0.0
        %4182 = vmatpush2.msra.mxu0 0.0
        %4183 = vmatprep.subr.mxu0 0.0
        %4184 = vmatpush2.msra.mxu0 0.0
        %4185 = vmatprep.subr.mxu0 0.0
        %4186 = vmatpush2.msra.mxu0 0.0
        %4187 = vmatprep.subr.mxu0 0.0
        %4188 = vmatpush2.msra.mxu0 0.0
        %4189 = vmatprep.subr.mxu0 0.0
        %4190 = vmatpush2.msra.mxu0 0.0
        %4191 = vmatprep.subr.mxu0 0.0
        %4192 = vmatpush2.msra.mxu0 0.0
        %4193 = vmatprep.subr.mxu0 0.0
        %4194 = vmatpush2.msra.mxu0 0.0
        %4195 = vmatprep.subr.mxu0 0.0
        %4196 = vmatpush2.msra.mxu0 0.0
        %4197 = vmatprep.mubr.f32.mxu0 0.0
        %v4198 = vand.u32 %v1252, 4294901760
        %v4199 = vsub.f32 %v1252, %v4198
        %4200 = vmatmul.mubr.f32.gmra.mxu0 %v4199
        %v4201 = vpop.f32.mrf.mxu0
        %v4202 = vadd.f32 %v4128, %v4201
        %v4203 = vpop.f32.mrf.mxu0
        %4204 = vdwg.mxu0
        %4205 = vmatprep.subr.mxu0 0.0
        %4206 = vmatpush1.msra.mxu0 0.0
        %4207 = vmatprep.subr.mxu0 0.0
        %4208 = vmatpush1.msra.mxu0 0.0
        %4209 = vmatprep.subr.mxu0 0.0
        %4210 = vmatpush1.msra.mxu0 0.0
        %4211 = vmatprep.subr.mxu0 0.0
        %4212 = vmatpush1.msra.mxu0 0.0
        %4213 = vmatprep.subr.mxu0 0.0
        %4214 = vmatpush1.msra.mxu0 0.0
        %4215 = vmatprep.subr.mxu0 0.0
        %4216 = vmatpush1.msra.mxu0 0.0
        %4217 = vmatprep.subr.mxu0 0.0
        %4218 = vmatpush1.msra.mxu0 0.0
        %4219 = vmatprep.subr.mxu0 0.0
        %4220 = vmatpush1.msra.mxu0 0.0
        %4221 = vmatprep.subr.mxu0 0.0
        %4222 = vmatpush1.msra.mxu0 0.0
        %4223 = vmatprep.subr.mxu0 0.0
        %4224 = vmatpush1.msra.mxu0 0.0
        %4225 = vmatprep.subr.mxu0 0.0
        %4226 = vmatpush1.msra.mxu0 0.0
        %4227 = vmatprep.subr.mxu0 0.0
        %4228 = vmatpush1.msra.mxu0 0.0
        %4229 = vmatprep.subr.mxu0 0.0
        %4230 = vmatpush1.msra.mxu0 0.0
        %4231 = vmatprep.subr.mxu0 0.0
        %4232 = vmatpush1.msra.mxu0 0.0
        %4233 = vmatprep.subr.mxu0 0.0
        %4234 = vmatpush1.msra.mxu0 0.0
        %4235 = vmatprep.subr.mxu0 0.0
        %v4236 = vand.u32 %v3977, 4294901760
        %4237 = vmatpush1.msra.mxu0 %v4236
        %4238 = vmatprep.subr.mxu0 0.0
        %4239 = vmatpush2.msra.mxu0 0.0
        %4240 = vmatprep.subr.mxu0 0.0
        %4241 = vmatpush2.msra.mxu0 0.0
        %4242 = vmatprep.subr.mxu0 0.0
        %4243 = vmatpush2.msra.mxu0 0.0
        %4244 = vmatprep.subr.mxu0 0.0
        %4245 = vmatpush2.msra.mxu0 0.0
        %4246 = vmatprep.subr.mxu0 0.0
        %4247 = vmatpush2.msra.mxu0 0.0
        %4248 = vmatprep.subr.mxu0 0.0
        %4249 = vmatpush2.msra.mxu0 0.0
        %4250 = vmatprep.subr.mxu0 0.0
        %4251 = vmatpush2.msra.mxu0 0.0
        %4252 = vmatprep.subr.mxu0 0.0
        %4253 = vmatpush2.msra.mxu0 0.0
        %4254 = vmatprep.subr.mxu0 0.0
        %4255 = vmatpush2.msra.mxu0 0.0
        %4256 = vmatprep.subr.mxu0 0.0
        %4257 = vmatpush2.msra.mxu0 0.0
        %4258 = vmatprep.subr.mxu0 0.0
        %4259 = vmatpush2.msra.mxu0 0.0
        %4260 = vmatprep.subr.mxu0 0.0
        %4261 = vmatpush2.msra.mxu0 0.0
        %4262 = vmatprep.subr.mxu0 0.0
        %4263 = vmatpush2.msra.mxu0 0.0
        %4264 = vmatprep.subr.mxu0 0.0
        %4265 = vmatpush2.msra.mxu0 0.0
        %4266 = vmatprep.subr.mxu0 0.0
        %4267 = vmatpush2.msra.mxu0 0.0
        %4268 = vmatprep.subr.mxu0 0.0
        %4269 = vmatpush2.msra.mxu0 0.0
        %4270 = vmatprep.mubr.f32.mxu0 0.0
        %v4271 = vand.u32 %v1252, 4294901760
        %v4272 = vsub.f32 %v1252, %v4271
        %v4273 = vand.u32 %v4272, 4294901760
        %4274 = vmatmul.mubr.f32.gmra.mxu0 %v4273
        %v4275 = vpop.f32.mrf.mxu0
        %v4276 = vadd.f32 %v4202, %v4275
        %v4277 = vpop.f32.mrf.mxu0
        %4278 = vdwg.mxu0
        %4279 = vmatprep.subr.mxu0 0.0
        %4280 = vmatpush1.msra.mxu0 0.0
        %4281 = vmatprep.subr.mxu0 0.0
        %4282 = vmatpush1.msra.mxu0 0.0
        %4283 = vmatprep.subr.mxu0 0.0
        %4284 = vmatpush1.msra.mxu0 0.0
        %4285 = vmatprep.subr.mxu0 0.0
        %4286 = vmatpush1.msra.mxu0 0.0
        %4287 = vmatprep.subr.mxu0 0.0
        %4288 = vmatpush1.msra.mxu0 0.0
        %4289 = vmatprep.subr.mxu0 0.0
        %4290 = vmatpush1.msra.mxu0 0.0
        %4291 = vmatprep.subr.mxu0 0.0
        %4292 = vmatpush1.msra.mxu0 0.0
        %4293 = vmatprep.subr.mxu0 0.0
        %4294 = vmatpush1.msra.mxu0 0.0
        %4295 = vmatprep.subr.mxu0 0.0
        %4296 = vmatpush1.msra.mxu0 0.0
        %4297 = vmatprep.subr.mxu0 0.0
        %4298 = vmatpush1.msra.mxu0 0.0
        %4299 = vmatprep.subr.mxu0 0.0
        %4300 = vmatpush1.msra.mxu0 0.0
        %4301 = vmatprep.subr.mxu0 0.0
        %4302 = vmatpush1.msra.mxu0 0.0
        %4303 = vmatprep.subr.mxu0 0.0
        %4304 = vmatpush1.msra.mxu0 0.0
        %4305 = vmatprep.subr.mxu0 0.0
        %4306 = vmatpush1.msra.mxu0 0.0
        %4307 = vmatprep.subr.mxu0 0.0
        %4308 = vmatpush1.msra.mxu0 0.0
        %4309 = vmatprep.subr.mxu0 0.0
        %v4310 = vand.u32 %v3977, 4294901760
        %v4311 = vsub.f32 %v3977, %v4310
        %v4312 = vand.u32 %v4311, 4294901760
        %4313 = vmatpush1.msra.mxu0 %v4312
        %4314 = vmatprep.subr.mxu0 0.0
        %4315 = vmatpush2.msra.mxu0 0.0
        %4316 = vmatprep.subr.mxu0 0.0
        %4317 = vmatpush2.msra.mxu0 0.0
        %4318 = vmatprep.subr.mxu0 0.0
        %4319 = vmatpush2.msra.mxu0 0.0
        %4320 = vmatprep.subr.mxu0 0.0
        %4321 = vmatpush2.msra.mxu0 0.0
        %4322 = vmatprep.subr.mxu0 0.0
        %4323 = vmatpush2.msra.mxu0 0.0
        %4324 = vmatprep.subr.mxu0 0.0
        %4325 = vmatpush2.msra.mxu0 0.0
        %4326 = vmatprep.subr.mxu0 0.0
        %4327 = vmatpush2.msra.mxu0 0.0
        %4328 = vmatprep.subr.mxu0 0.0
        %4329 = vmatpush2.msra.mxu0 0.0
        %4330 = vmatprep.subr.mxu0 0.0
        %4331 = vmatpush2.msra.mxu0 0.0
        %4332 = vmatprep.subr.mxu0 0.0
        %4333 = vmatpush2.msra.mxu0 0.0
        %4334 = vmatprep.subr.mxu0 0.0
        %4335 = vmatpush2.msra.mxu0 0.0
        %4336 = vmatprep.subr.mxu0 0.0
        %4337 = vmatpush2.msra.mxu0 0.0
        %4338 = vmatprep.subr.mxu0 0.0
        %4339 = vmatpush2.msra.mxu0 0.0
        %4340 = vmatprep.subr.mxu0 0.0
        %4341 = vmatpush2.msra.mxu0 0.0
        %4342 = vmatprep.subr.mxu0 0.0
        %4343 = vmatpush2.msra.mxu0 0.0
        %4344 = vmatprep.subr.mxu0 0.0
        %4345 = vmatpush2.msra.mxu0 0.0
        %4346 = vmatprep.mubr.f32.mxu0 0.0
        %v4347 = vand.u32 %v1252, 4294901760
        %4348 = vmatmul.mubr.f32.gmra.mxu0 %v4347
        %v4349 = vpop.f32.mrf.mxu0
        %v4350 = vadd.f32 %v4276, %v4349
        %v4351 = vpop.f32.mrf.mxu0
        %4352 = vdwg.mxu0
        %4353 = vmatprep.subr.mxu0 0.0
        %4354 = vmatpush1.msra.mxu0 0.0
        %4355 = vmatprep.subr.mxu0 0.0
        %4356 = vmatpush1.msra.mxu0 0.0
        %4357 = vmatprep.subr.mxu0 0.0
        %4358 = vmatpush1.msra.mxu0 0.0
        %4359 = vmatprep.subr.mxu0 0.0
        %4360 = vmatpush1.msra.mxu0 0.0
        %4361 = vmatprep.subr.mxu0 0.0
        %4362 = vmatpush1.msra.mxu0 0.0
        %4363 = vmatprep.subr.mxu0 0.0
        %4364 = vmatpush1.msra.mxu0 0.0
        %4365 = vmatprep.subr.mxu0 0.0
        %4366 = vmatpush1.msra.mxu0 0.0
        %4367 = vmatprep.subr.mxu0 0.0
        %4368 = vmatpush1.msra.mxu0 0.0
        %4369 = vmatprep.subr.mxu0 0.0
        %4370 = vmatpush1.msra.mxu0 0.0
        %4371 = vmatprep.subr.mxu0 0.0
        %4372 = vmatpush1.msra.mxu0 0.0
        %4373 = vmatprep.subr.mxu0 0.0
        %4374 = vmatpush1.msra.mxu0 0.0
        %4375 = vmatprep.subr.mxu0 0.0
        %4376 = vmatpush1.msra.mxu0 0.0
        %4377 = vmatprep.subr.mxu0 0.0
        %4378 = vmatpush1.msra.mxu0 0.0
        %4379 = vmatprep.subr.mxu0 0.0
        %4380 = vmatpush1.msra.mxu0 0.0
        %4381 = vmatprep.subr.mxu0 0.0
        %4382 = vmatpush1.msra.mxu0 0.0
        %4383 = vmatprep.subr.mxu0 0.0
        %v4384 = vand.u32 %v3977, 4294901760
        %4385 = vmatpush1.msra.mxu0 %v4384
        %4386 = vmatprep.subr.mxu0 0.0
        %4387 = vmatpush2.msra.mxu0 0.0
        %4388 = vmatprep.subr.mxu0 0.0
        %4389 = vmatpush2.msra.mxu0 0.0
        %4390 = vmatprep.subr.mxu0 0.0
        %4391 = vmatpush2.msra.mxu0 0.0
        %4392 = vmatprep.subr.mxu0 0.0
        %4393 = vmatpush2.msra.mxu0 0.0
        %4394 = vmatprep.subr.mxu0 0.0
        %4395 = vmatpush2.msra.mxu0 0.0
        %4396 = vmatprep.subr.mxu0 0.0
        %4397 = vmatpush2.msra.mxu0 0.0
        %4398 = vmatprep.subr.mxu0 0.0
        %4399 = vmatpush2.msra.mxu0 0.0
        %4400 = vmatprep.subr.mxu0 0.0
        %4401 = vmatpush2.msra.mxu0 0.0
        %4402 = vmatprep.subr.mxu0 0.0
        %4403 = vmatpush2.msra.mxu0 0.0
        %4404 = vmatprep.subr.mxu0 0.0
        %4405 = vmatpush2.msra.mxu0 0.0
        %4406 = vmatprep.subr.mxu0 0.0
        %4407 = vmatpush2.msra.mxu0 0.0
        %4408 = vmatprep.subr.mxu0 0.0
        %4409 = vmatpush2.msra.mxu0 0.0
        %4410 = vmatprep.subr.mxu0 0.0
        %4411 = vmatpush2.msra.mxu0 0.0
        %4412 = vmatprep.subr.mxu0 0.0
        %4413 = vmatpush2.msra.mxu0 0.0
        %4414 = vmatprep.subr.mxu0 0.0
        %4415 = vmatpush2.msra.mxu0 0.0
        %4416 = vmatprep.subr.mxu0 0.0
        %4417 = vmatpush2.msra.mxu0 0.0
        %4418 = vmatprep.mubr.f32.mxu0 0.0
        %v4419 = vand.u32 %v1252, 4294901760
        %4420 = vmatmul.mubr.f32.gmra.mxu0 %v4419
        %v4421 = vpop.f32.mrf.mxu0
        %v4422 = vadd.f32 %v4350, %v4421
        %v4423 = vpop.f32.mrf.mxu0
        %4424 = vdwg.mxu0
        %v4425 = vadd.f32 %v4422, %v1703
        %v4426 = vmax.f32 %v4425, 0.0
        %4428 = vrot.lane.b32.xlu0 %v4426, 64
        %v4429 = vpop.permute.xlu0 %4428
        %vm4431 = vcmask 785920
        %4432 = vst.msk [vmem:[%s337] sm:$0xff] %vm4431, %v4429
        %v4433 = vld [vmem:[%s291] sm:$0xff]
        %4435 = vrot.lane.b32.xlu0 %v4433, 104
        %v4436 = vpop.permute.xlu0 %4435
        %v4437 = vsel %vm345, %v4436, 0
        %4439 = vmatprep.subr.mxu0 0.0
        %4440 = vmatpush1.msra.mxu0 0.0
        %4441 = vmatprep.subr.mxu0 0.0
        %4442 = vmatpush1.msra.mxu0 0.0
        %4443 = vmatprep.subr.mxu0 0.0
        %4444 = vmatpush1.msra.mxu0 0.0
        %4445 = vmatprep.subr.mxu0 0.0
        %4446 = vmatpush1.msra.mxu0 0.0
        %4447 = vmatprep.subr.mxu0 0.0
        %4448 = vmatpush1.msra.mxu0 0.0
        %4449 = vmatprep.subr.mxu0 0.0
        %4450 = vmatpush1.msra.mxu0 0.0
        %4451 = vmatprep.subr.mxu0 0.0
        %4452 = vmatpush1.msra.mxu0 0.0
        %4453 = vmatprep.subr.mxu0 0.0
        %4454 = vmatpush1.msra.mxu0 0.0
        %4455 = vmatprep.subr.mxu0 0.0
        %4456 = vmatpush1.msra.mxu0 0.0
        %4457 = vmatprep.subr.mxu0 0.0
        %4458 = vmatpush1.msra.mxu0 0.0
        %4459 = vmatprep.subr.mxu0 0.0
        %4460 = vmatpush1.msra.mxu0 0.0
        %4461 = vmatprep.subr.mxu0 0.0
        %4462 = vmatpush1.msra.mxu0 0.0
        %4463 = vmatprep.subr.mxu0 0.0
        %4464 = vmatpush1.msra.mxu0 0.0
        %4465 = vmatprep.subr.mxu0 0.0
        %4466 = vmatpush1.msra.mxu0 0.0
        %4467 = vmatprep.subr.mxu0 0.0
        %4468 = vmatpush1.msra.mxu0 0.0
        %4469 = vmatprep.subr.mxu0 0.0
        %v4470 = vand.u32 %v340, 4294901760
        %4471 = vmatpush1.msra.mxu0 %v4470
        %4472 = vmatprep.subr.mxu0 0.0
        %4473 = vmatpush2.msra.mxu0 0.0
        %4474 = vmatprep.subr.mxu0 0.0
        %4475 = vmatpush2.msra.mxu0 0.0
        %4476 = vmatprep.subr.mxu0 0.0
        %4477 = vmatpush2.msra.mxu0 0.0
        %4478 = vmatprep.subr.mxu0 0.0
        %4479 = vmatpush2.msra.mxu0 0.0
        %4480 = vmatprep.subr.mxu0 0.0
        %4481 = vmatpush2.msra.mxu0 0.0
        %4482 = vmatprep.subr.mxu0 0.0
        %4483 = vmatpush2.msra.mxu0 0.0
        %4484 = vmatprep.subr.mxu0 0.0
        %4485 = vmatpush2.msra.mxu0 0.0
        %4486 = vmatprep.subr.mxu0 0.0
        %4487 = vmatpush2.msra.mxu0 0.0
        %4488 = vmatprep.subr.mxu0 0.0
        %4489 = vmatpush2.msra.mxu0 0.0
        %4490 = vmatprep.subr.mxu0 0.0
        %4491 = vmatpush2.msra.mxu0 0.0
        %4492 = vmatprep.subr.mxu0 0.0
        %4493 = vmatpush2.msra.mxu0 0.0
        %4494 = vmatprep.subr.mxu0 0.0
        %4495 = vmatpush2.msra.mxu0 0.0
        %4496 = vmatprep.subr.mxu0 0.0
        %4497 = vmatpush2.msra.mxu0 0.0
        %4498 = vmatprep.subr.mxu0 0.0
        %4499 = vmatpush2.msra.mxu0 0.0
        %4500 = vmatprep.subr.mxu0 0.0
        %4501 = vmatpush2.msra.mxu0 0.0
        %4502 = vmatprep.subr.mxu0 0.0
        %4503 = vmatpush2.msra.mxu0 0.0
        %4504 = vmatprep.mubr.f32.mxu0 0.0
        %v4505 = vand.u32 %v4437, 4294901760
        %v4506 = vsub.f32 %v4437, %v4505
        %v4507 = vand.u32 %v4506, 4294901760
        %v4508 = vsub.f32 %v4506, %v4507
        %v4509 = vand.u32 %v4508, 4294901760
        %4510 = vmatmul.mubr.f32.gmra.mxu0 %v4509
        %v4511 = vpop.f32.mrf.mxu0
        %v4512 = vadd.f32 0.0, %v4511
        %v4513 = vpop.f32.mrf.mxu0
        %4514 = vdwg.mxu0
        %4515 = vmatprep.subr.mxu0 0.0
        %4516 = vmatpush1.msra.mxu0 0.0
        %4517 = vmatprep.subr.mxu0 0.0
        %4518 = vmatpush1.msra.mxu0 0.0
        %4519 = vmatprep.subr.mxu0 0.0
        %4520 = vmatpush1.msra.mxu0 0.0
        %4521 = vmatprep.subr.mxu0 0.0
        %4522 = vmatpush1.msra.mxu0 0.0
        %4523 = vmatprep.subr.mxu0 0.0
        %4524 = vmatpush1.msra.mxu0 0.0
        %4525 = vmatprep.subr.mxu0 0.0
        %4526 = vmatpush1.msra.mxu0 0.0
        %4527 = vmatprep.subr.mxu0 0.0
        %4528 = vmatpush1.msra.mxu0 0.0
        %4529 = vmatprep.subr.mxu0 0.0
        %4530 = vmatpush1.msra.mxu0 0.0
        %4531 = vmatprep.subr.mxu0 0.0
        %4532 = vmatpush1.msra.mxu0 0.0
        %4533 = vmatprep.subr.mxu0 0.0
        %4534 = vmatpush1.msra.mxu0 0.0
        %4535 = vmatprep.subr.mxu0 0.0
        %4536 = vmatpush1.msra.mxu0 0.0
        %4537 = vmatprep.subr.mxu0 0.0
        %4538 = vmatpush1.msra.mxu0 0.0
        %4539 = vmatprep.subr.mxu0 0.0
        %4540 = vmatpush1.msra.mxu0 0.0
        %4541 = vmatprep.subr.mxu0 0.0
        %4542 = vmatpush1.msra.mxu0 0.0
        %4543 = vmatprep.subr.mxu0 0.0
        %4544 = vmatpush1.msra.mxu0 0.0
        %4545 = vmatprep.subr.mxu0 0.0
        %v4546 = vand.u32 %v340, 4294901760
        %v4547 = vsub.f32 %v340, %v4546
        %v4548 = vand.u32 %v4547, 4294901760
        %v4549 = vsub.f32 %v4547, %v4548
        %v4550 = vand.u32 %v4549, 4294901760
        %4551 = vmatpush1.msra.mxu0 %v4550
        %4552 = vmatprep.subr.mxu0 0.0
        %4553 = vmatpush2.msra.mxu0 0.0
        %4554 = vmatprep.subr.mxu0 0.0
        %4555 = vmatpush2.msra.mxu0 0.0
        %4556 = vmatprep.subr.mxu0 0.0
        %4557 = vmatpush2.msra.mxu0 0.0
        %4558 = vmatprep.subr.mxu0 0.0
        %4559 = vmatpush2.msra.mxu0 0.0
        %4560 = vmatprep.subr.mxu0 0.0
        %4561 = vmatpush2.msra.mxu0 0.0
        %4562 = vmatprep.subr.mxu0 0.0
        %4563 = vmatpush2.msra.mxu0 0.0
        %4564 = vmatprep.subr.mxu0 0.0
        %4565 = vmatpush2.msra.mxu0 0.0
        %4566 = vmatprep.subr.mxu0 0.0
        %4567 = vmatpush2.msra.mxu0 0.0
        %4568 = vmatprep.subr.mxu0 0.0
        %4569 = vmatpush2.msra.mxu0 0.0
        %4570 = vmatprep.subr.mxu0 0.0
        %4571 = vmatpush2.msra.mxu0 0.0
        %4572 = vmatprep.subr.mxu0 0.0
        %4573 = vmatpush2.msra.mxu0 0.0
        %4574 = vmatprep.subr.mxu0 0.0
        %4575 = vmatpush2.msra.mxu0 0.0
        %4576 = vmatprep.subr.mxu0 0.0
        %4577 = vmatpush2.msra.mxu0 0.0
        %4578 = vmatprep.subr.mxu0 0.0
        %4579 = vmatpush2.msra.mxu0 0.0
        %4580 = vmatprep.subr.mxu0 0.0
        %4581 = vmatpush2.msra.mxu0 0.0
        %4582 = vmatprep.subr.mxu0 0.0
        %4583 = vmatpush2.msra.mxu0 0.0
        %4584 = vmatprep.mubr.f32.mxu0 0.0
        %v4585 = vand.u32 %v4437, 4294901760
        %4586 = vmatmul.mubr.f32.gmra.mxu0 %v4585
        %v4587 = vpop.f32.mrf.mxu0
        %v4588 = vadd.f32 %v4512, %v4587
        %v4589 = vpop.f32.mrf.mxu0
        %4590 = vdwg.mxu0
        %4591 = vmatprep.subr.mxu0 0.0
        %4592 = vmatpush1.msra.mxu0 0.0
        %4593 = vmatprep.subr.mxu0 0.0
        %4594 = vmatpush1.msra.mxu0 0.0
        %4595 = vmatprep.subr.mxu0 0.0
        %4596 = vmatpush1.msra.mxu0 0.0
        %4597 = vmatprep.subr.mxu0 0.0
        %4598 = vmatpush1.msra.mxu0 0.0
        %4599 = vmatprep.subr.mxu0 0.0
        %4600 = vmatpush1.msra.mxu0 0.0
        %4601 = vmatprep.subr.mxu0 0.0
        %4602 = vmatpush1.msra.mxu0 0.0
        %4603 = vmatprep.subr.mxu0 0.0
        %4604 = vmatpush1.msra.mxu0 0.0
        %4605 = vmatprep.subr.mxu0 0.0
        %4606 = vmatpush1.msra.mxu0 0.0
        %4607 = vmatprep.subr.mxu0 0.0
        %4608 = vmatpush1.msra.mxu0 0.0
        %4609 = vmatprep.subr.mxu0 0.0
        %4610 = vmatpush1.msra.mxu0 0.0
        %4611 = vmatprep.subr.mxu0 0.0
        %4612 = vmatpush1.msra.mxu0 0.0
        %4613 = vmatprep.subr.mxu0 0.0
        %4614 = vmatpush1.msra.mxu0 0.0
        %4615 = vmatprep.subr.mxu0 0.0
        %4616 = vmatpush1.msra.mxu0 0.0
        %4617 = vmatprep.subr.mxu0 0.0
        %4618 = vmatpush1.msra.mxu0 0.0
        %4619 = vmatprep.subr.mxu0 0.0
        %4620 = vmatpush1.msra.mxu0 0.0
        %4621 = vmatprep.subr.mxu0 0.0
        %v4622 = vand.u32 %v340, 4294901760
        %v4623 = vsub.f32 %v340, %v4622
        %4624 = vmatpush1.msra.mxu0 %v4623
        %4625 = vmatprep.subr.mxu0 0.0
        %4626 = vmatpush2.msra.mxu0 0.0
        %4627 = vmatprep.subr.mxu0 0.0
        %4628 = vmatpush2.msra.mxu0 0.0
        %4629 = vmatprep.subr.mxu0 0.0
        %4630 = vmatpush2.msra.mxu0 0.0
        %4631 = vmatprep.subr.mxu0 0.0
        %4632 = vmatpush2.msra.mxu0 0.0
        %4633 = vmatprep.subr.mxu0 0.0
        %4634 = vmatpush2.msra.mxu0 0.0
        %4635 = vmatprep.subr.mxu0 0.0
        %4636 = vmatpush2.msra.mxu0 0.0
        %4637 = vmatprep.subr.mxu0 0.0
        %4638 = vmatpush2.msra.mxu0 0.0
        %4639 = vmatprep.subr.mxu0 0.0
        %4640 = vmatpush2.msra.mxu0 0.0
        %4641 = vmatprep.subr.mxu0 0.0
        %4642 = vmatpush2.msra.mxu0 0.0
        %4643 = vmatprep.subr.mxu0 0.0
        %4644 = vmatpush2.msra.mxu0 0.0
        %4645 = vmatprep.subr.mxu0 0.0
        %4646 = vmatpush2.msra.mxu0 0.0
        %4647 = vmatprep.subr.mxu0 0.0
        %4648 = vmatpush2.msra.mxu0 0.0
        %4649 = vmatprep.subr.mxu0 0.0
        %4650 = vmatpush2.msra.mxu0 0.0
        %4651 = vmatprep.subr.mxu0 0.0
        %4652 = vmatpush2.msra.mxu0 0.0
        %4653 = vmatprep.subr.mxu0 0.0
        %4654 = vmatpush2.msra.mxu0 0.0
        %4655 = vmatprep.subr.mxu0 0.0
        %4656 = vmatpush2.msra.mxu0 0.0
        %4657 = vmatprep.mubr.f32.mxu0 0.0
        %v4658 = vand.u32 %v4437, 4294901760
        %v4659 = vsub.f32 %v4437, %v4658
        %4660 = vmatmul.mubr.f32.gmra.mxu0 %v4659
        %v4661 = vpop.f32.mrf.mxu0
        %v4662 = vadd.f32 %v4588, %v4661
        %v4663 = vpop.f32.mrf.mxu0
        %4664 = vdwg.mxu0
        %4665 = vmatprep.subr.mxu0 0.0
        %4666 = vmatpush1.msra.mxu0 0.0
        %4667 = vmatprep.subr.mxu0 0.0
        %4668 = vmatpush1.msra.mxu0 0.0
        %4669 = vmatprep.subr.mxu0 0.0
        %4670 = vmatpush1.msra.mxu0 0.0
        %4671 = vmatprep.subr.mxu0 0.0
        %4672 = vmatpush1.msra.mxu0 0.0
        %4673 = vmatprep.subr.mxu0 0.0
        %4674 = vmatpush1.msra.mxu0 0.0
        %4675 = vmatprep.subr.mxu0 0.0
        %4676 = vmatpush1.msra.mxu0 0.0
        %4677 = vmatprep.subr.mxu0 0.0
        %4678 = vmatpush1.msra.mxu0 0.0
        %4679 = vmatprep.subr.mxu0 0.0
        %4680 = vmatpush1.msra.mxu0 0.0
        %4681 = vmatprep.subr.mxu0 0.0
        %4682 = vmatpush1.msra.mxu0 0.0
        %4683 = vmatprep.subr.mxu0 0.0
        %4684 = vmatpush1.msra.mxu0 0.0
        %4685 = vmatprep.subr.mxu0 0.0
        %4686 = vmatpush1.msra.mxu0 0.0
        %4687 = vmatprep.subr.mxu0 0.0
        %4688 = vmatpush1.msra.mxu0 0.0
        %4689 = vmatprep.subr.mxu0 0.0
        %4690 = vmatpush1.msra.mxu0 0.0
        %4691 = vmatprep.subr.mxu0 0.0
        %4692 = vmatpush1.msra.mxu0 0.0
        %4693 = vmatprep.subr.mxu0 0.0
        %4694 = vmatpush1.msra.mxu0 0.0
        %4695 = vmatprep.subr.mxu0 0.0
        %v4696 = vand.u32 %v340, 4294901760
        %4697 = vmatpush1.msra.mxu0 %v4696
        %4698 = vmatprep.subr.mxu0 0.0
        %4699 = vmatpush2.msra.mxu0 0.0
        %4700 = vmatprep.subr.mxu0 0.0
        %4701 = vmatpush2.msra.mxu0 0.0
        %4702 = vmatprep.subr.mxu0 0.0
        %4703 = vmatpush2.msra.mxu0 0.0
        %4704 = vmatprep.subr.mxu0 0.0
        %4705 = vmatpush2.msra.mxu0 0.0
        %4706 = vmatprep.subr.mxu0 0.0
        %4707 = vmatpush2.msra.mxu0 0.0
        %4708 = vmatprep.subr.mxu0 0.0
        %4709 = vmatpush2.msra.mxu0 0.0
        %4710 = vmatprep.subr.mxu0 0.0
        %4711 = vmatpush2.msra.mxu0 0.0
        %4712 = vmatprep.subr.mxu0 0.0
        %4713 = vmatpush2.msra.mxu0 0.0
        %4714 = vmatprep.subr.mxu0 0.0
        %4715 = vmatpush2.msra.mxu0 0.0
        %4716 = vmatprep.subr.mxu0 0.0
        %4717 = vmatpush2.msra.mxu0 0.0
        %4718 = vmatprep.subr.mxu0 0.0
        %4719 = vmatpush2.msra.mxu0 0.0
        %4720 = vmatprep.subr.mxu0 0.0
        %4721 = vmatpush2.msra.mxu0 0.0
        %4722 = vmatprep.subr.mxu0 0.0
        %4723 = vmatpush2.msra.mxu0 0.0
        %4724 = vmatprep.subr.mxu0 0.0
        %4725 = vmatpush2.msra.mxu0 0.0
        %4726 = vmatprep.subr.mxu0 0.0
        %4727 = vmatpush2.msra.mxu0 0.0
        %4728 = vmatprep.subr.mxu0 0.0
        %4729 = vmatpush2.msra.mxu0 0.0
        %4730 = vmatprep.mubr.f32.mxu0 0.0
        %v4731 = vand.u32 %v4437, 4294901760
        %v4732 = vsub.f32 %v4437, %v4731
        %v4733 = vand.u32 %v4732, 4294901760
        %4734 = vmatmul.mubr.f32.gmra.mxu0 %v4733
        %v4735 = vpop.f32.mrf.mxu0
        %v4736 = vadd.f32 %v4662, %v4735
        %v4737 = vpop.f32.mrf.mxu0
        %4738 = vdwg.mxu0
        %4739 = vmatprep.subr.mxu0 0.0
        %4740 = vmatpush1.msra.mxu0 0.0
        %4741 = vmatprep.subr.mxu0 0.0
        %4742 = vmatpush1.msra.mxu0 0.0
        %4743 = vmatprep.subr.mxu0 0.0
        %4744 = vmatpush1.msra.mxu0 0.0
        %4745 = vmatprep.subr.mxu0 0.0
        %4746 = vmatpush1.msra.mxu0 0.0
        %4747 = vmatprep.subr.mxu0 0.0
        %4748 = vmatpush1.msra.mxu0 0.0
        %4749 = vmatprep.subr.mxu0 0.0
        %4750 = vmatpush1.msra.mxu0 0.0
        %4751 = vmatprep.subr.mxu0 0.0
        %4752 = vmatpush1.msra.mxu0 0.0
        %4753 = vmatprep.subr.mxu0 0.0
        %4754 = vmatpush1.msra.mxu0 0.0
        %4755 = vmatprep.subr.mxu0 0.0
        %4756 = vmatpush1.msra.mxu0 0.0
        %4757 = vmatprep.subr.mxu0 0.0
        %4758 = vmatpush1.msra.mxu0 0.0
        %4759 = vmatprep.subr.mxu0 0.0
        %4760 = vmatpush1.msra.mxu0 0.0
        %4761 = vmatprep.subr.mxu0 0.0
        %4762 = vmatpush1.msra.mxu0 0.0
        %4763 = vmatprep.subr.mxu0 0.0
        %4764 = vmatpush1.msra.mxu0 0.0
        %4765 = vmatprep.subr.mxu0 0.0
        %4766 = vmatpush1.msra.mxu0 0.0
        %4767 = vmatprep.subr.mxu0 0.0
        %4768 = vmatpush1.msra.mxu0 0.0
        %4769 = vmatprep.subr.mxu0 0.0
        %v4770 = vand.u32 %v340, 4294901760
        %v4771 = vsub.f32 %v340, %v4770
        %v4772 = vand.u32 %v4771, 4294901760
        %4773 = vmatpush1.msra.mxu0 %v4772
        %4774 = vmatprep.subr.mxu0 0.0
        %4775 = vmatpush2.msra.mxu0 0.0
        %4776 = vmatprep.subr.mxu0 0.0
        %4777 = vmatpush2.msra.mxu0 0.0
        %4778 = vmatprep.subr.mxu0 0.0
        %4779 = vmatpush2.msra.mxu0 0.0
        %4780 = vmatprep.subr.mxu0 0.0
        %4781 = vmatpush2.msra.mxu0 0.0
        %4782 = vmatprep.subr.mxu0 0.0
        %4783 = vmatpush2.msra.mxu0 0.0
        %4784 = vmatprep.subr.mxu0 0.0
        %4785 = vmatpush2.msra.mxu0 0.0
        %4786 = vmatprep.subr.mxu0 0.0
        %4787 = vmatpush2.msra.mxu0 0.0
        %4788 = vmatprep.subr.mxu0 0.0
        %4789 = vmatpush2.msra.mxu0 0.0
        %4790 = vmatprep.subr.mxu0 0.0
        %4791 = vmatpush2.msra.mxu0 0.0
        %4792 = vmatprep.subr.mxu0 0.0
        %4793 = vmatpush2.msra.mxu0 0.0
        %4794 = vmatprep.subr.mxu0 0.0
        %4795 = vmatpush2.msra.mxu0 0.0
        %4796 = vmatprep.subr.mxu0 0.0
        %4797 = vmatpush2.msra.mxu0 0.0
        %4798 = vmatprep.subr.mxu0 0.0
        %4799 = vmatpush2.msra.mxu0 0.0
        %4800 = vmatprep.subr.mxu0 0.0
        %4801 = vmatpush2.msra.mxu0 0.0
        %4802 = vmatprep.subr.mxu0 0.0
        %4803 = vmatpush2.msra.mxu0 0.0
        %4804 = vmatprep.subr.mxu0 0.0
        %4805 = vmatpush2.msra.mxu0 0.0
        %4806 = vmatprep.mubr.f32.mxu0 0.0
        %v4807 = vand.u32 %v4437, 4294901760
        %4808 = vmatmul.mubr.f32.gmra.mxu0 %v4807
        %v4809 = vpop.f32.mrf.mxu0
        %v4810 = vadd.f32 %v4736, %v4809
        %v4811 = vpop.f32.mrf.mxu0
        %4812 = vdwg.mxu0
        %4813 = vmatprep.subr.mxu0 0.0
        %4814 = vmatpush1.msra.mxu0 0.0
        %4815 = vmatprep.subr.mxu0 0.0
        %4816 = vmatpush1.msra.mxu0 0.0
        %4817 = vmatprep.subr.mxu0 0.0
        %4818 = vmatpush1.msra.mxu0 0.0
        %4819 = vmatprep.subr.mxu0 0.0
        %4820 = vmatpush1.msra.mxu0 0.0
        %4821 = vmatprep.subr.mxu0 0.0
        %4822 = vmatpush1.msra.mxu0 0.0
        %4823 = vmatprep.subr.mxu0 0.0
        %4824 = vmatpush1.msra.mxu0 0.0
        %4825 = vmatprep.subr.mxu0 0.0
        %4826 = vmatpush1.msra.mxu0 0.0
        %4827 = vmatprep.subr.mxu0 0.0
        %4828 = vmatpush1.msra.mxu0 0.0
        %4829 = vmatprep.subr.mxu0 0.0
        %4830 = vmatpush1.msra.mxu0 0.0
        %4831 = vmatprep.subr.mxu0 0.0
        %4832 = vmatpush1.msra.mxu0 0.0
        %4833 = vmatprep.subr.mxu0 0.0
        %4834 = vmatpush1.msra.mxu0 0.0
        %4835 = vmatprep.subr.mxu0 0.0
        %4836 = vmatpush1.msra.mxu0 0.0
        %4837 = vmatprep.subr.mxu0 0.0
        %4838 = vmatpush1.msra.mxu0 0.0
        %4839 = vmatprep.subr.mxu0 0.0
        %4840 = vmatpush1.msra.mxu0 0.0
        %4841 = vmatprep.subr.mxu0 0.0
        %4842 = vmatpush1.msra.mxu0 0.0
        %4843 = vmatprep.subr.mxu0 0.0
        %v4844 = vand.u32 %v340, 4294901760
        %4845 = vmatpush1.msra.mxu0 %v4844
        %4846 = vmatprep.subr.mxu0 0.0
        %4847 = vmatpush2.msra.mxu0 0.0
        %4848 = vmatprep.subr.mxu0 0.0
        %4849 = vmatpush2.msra.mxu0 0.0
        %4850 = vmatprep.subr.mxu0 0.0
        %4851 = vmatpush2.msra.mxu0 0.0
        %4852 = vmatprep.subr.mxu0 0.0
        %4853 = vmatpush2.msra.mxu0 0.0
        %4854 = vmatprep.subr.mxu0 0.0
        %4855 = vmatpush2.msra.mxu0 0.0
        %4856 = vmatprep.subr.mxu0 0.0
        %4857 = vmatpush2.msra.mxu0 0.0
        %4858 = vmatprep.subr.mxu0 0.0
        %4859 = vmatpush2.msra.mxu0 0.0
        %4860 = vmatprep.subr.mxu0 0.0
        %4861 = vmatpush2.msra.mxu0 0.0
        %4862 = vmatprep.subr.mxu0 0.0
        %4863 = vmatpush2.msra.mxu0 0.0
        %4864 = vmatprep.subr.mxu0 0.0
        %4865 = vmatpush2.msra.mxu0 0.0
        %4866 = vmatprep.subr.mxu0 0.0
        %4867 = vmatpush2.msra.mxu0 0.0
        %4868 = vmatprep.subr.mxu0 0.0
        %4869 = vmatpush2.msra.mxu0 0.0
        %4870 = vmatprep.subr.mxu0 0.0
        %4871 = vmatpush2.msra.mxu0 0.0
        %4872 = vmatprep.subr.mxu0 0.0
        %4873 = vmatpush2.msra.mxu0 0.0
        %4874 = vmatprep.subr.mxu0 0.0
        %4875 = vmatpush2.msra.mxu0 0.0
        %4876 = vmatprep.subr.mxu0 0.0
        %4877 = vmatpush2.msra.mxu0 0.0
        %4878 = vmatprep.mubr.f32.mxu0 0.0
        %v4879 = vand.u32 %v4437, 4294901760
        %4880 = vmatmul.mubr.f32.gmra.mxu0 %v4879
        %v4881 = vpop.f32.mrf.mxu0
        %v4882 = vadd.f32 %v4810, %v4881
        %v4883 = vpop.f32.mrf.mxu0
        %4884 = vdwg.mxu0
        %4885 = vmatprep.subr.mxu0 0.0
        %4886 = vmatpush1.msra.mxu0 0.0
        %4887 = vmatprep.subr.mxu0 0.0
        %4888 = vmatpush1.msra.mxu0 0.0
        %4889 = vmatprep.subr.mxu0 0.0
        %4890 = vmatpush1.msra.mxu0 0.0
        %4891 = vmatprep.subr.mxu0 0.0
        %4892 = vmatpush1.msra.mxu0 0.0
        %4893 = vmatprep.subr.mxu0 0.0
        %4894 = vmatpush1.msra.mxu0 0.0
        %4895 = vmatprep.subr.mxu0 0.0
        %4896 = vmatpush1.msra.mxu0 0.0
        %4897 = vmatprep.subr.mxu0 0.0
        %4898 = vmatpush1.msra.mxu0 0.0
        %4899 = vmatprep.subr.mxu0 0.0
        %4900 = vmatpush1.msra.mxu0 0.0
        %4901 = vmatprep.subr.mxu0 0.0
        %4902 = vmatpush1.msra.mxu0 0.0
        %4903 = vmatprep.subr.mxu0 0.0
        %4904 = vmatpush1.msra.mxu0 0.0
        %4905 = vmatprep.subr.mxu0 0.0
        %4906 = vmatpush1.msra.mxu0 0.0
        %4907 = vmatprep.subr.mxu0 0.0
        %4908 = vmatpush1.msra.mxu0 0.0
        %4909 = vmatprep.subr.mxu0 0.0
        %4910 = vmatpush1.msra.mxu0 0.0
        %4911 = vmatprep.subr.mxu0 0.0
        %4912 = vmatpush1.msra.mxu0 0.0
        %4913 = vmatprep.subr.mxu0 0.0
        %4914 = vmatpush1.msra.mxu0 0.0
        %4915 = vmatprep.subr.mxu0 0.0
        %v4916 = vand.u32 %v4882, 4294901760
        %4917 = vmatpush1.msra.mxu0 %v4916
        %4918 = vmatprep.subr.mxu0 0.0
        %4919 = vmatpush2.msra.mxu0 0.0
        %4920 = vmatprep.subr.mxu0 0.0
        %4921 = vmatpush2.msra.mxu0 0.0
        %4922 = vmatprep.subr.mxu0 0.0
        %4923 = vmatpush2.msra.mxu0 0.0
        %4924 = vmatprep.subr.mxu0 0.0
        %4925 = vmatpush2.msra.mxu0 0.0
        %4926 = vmatprep.subr.mxu0 0.0
        %4927 = vmatpush2.msra.mxu0 0.0
        %4928 = vmatprep.subr.mxu0 0.0
        %4929 = vmatpush2.msra.mxu0 0.0
        %4930 = vmatprep.subr.mxu0 0.0
        %4931 = vmatpush2.msra.mxu0 0.0
        %4932 = vmatprep.subr.mxu0 0.0
        %4933 = vmatpush2.msra.mxu0 0.0
        %4934 = vmatprep.subr.mxu0 0.0
        %4935 = vmatpush2.msra.mxu0 0.0
        %4936 = vmatprep.subr.mxu0 0.0
        %4937 = vmatpush2.msra.mxu0 0.0
        %4938 = vmatprep.subr.mxu0 0.0
        %4939 = vmatpush2.msra.mxu0 0.0
        %4940 = vmatprep.subr.mxu0 0.0
        %4941 = vmatpush2.msra.mxu0 0.0
        %4942 = vmatprep.subr.mxu0 0.0
        %4943 = vmatpush2.msra.mxu0 0.0
        %4944 = vmatprep.subr.mxu0 0.0
        %4945 = vmatpush2.msra.mxu0 0.0
        %4946 = vmatprep.subr.mxu0 0.0
        %4947 = vmatpush2.msra.mxu0 0.0
        %4948 = vmatprep.subr.mxu0 0.0
        %4949 = vmatpush2.msra.mxu0 0.0
        %4950 = vmatprep.mubr.f32.mxu0 0.0
        %v4951 = vand.u32 %v796, 4294901760
        %v4952 = vsub.f32 %v796, %v4951
        %v4953 = vand.u32 %v4952, 4294901760
        %v4954 = vsub.f32 %v4952, %v4953
        %v4955 = vand.u32 %v4954, 4294901760
        %4956 = vmatmul.mubr.f32.gmra.mxu0 %v4955
        %v4957 = vpop.f32.mrf.mxu0
        %v4958 = vadd.f32 0.0, %v4957
        %v4959 = vpop.f32.mrf.mxu0
        %4960 = vdwg.mxu0
        %4961 = vmatprep.subr.mxu0 0.0
        %4962 = vmatpush1.msra.mxu0 0.0
        %4963 = vmatprep.subr.mxu0 0.0
        %4964 = vmatpush1.msra.mxu0 0.0
        %4965 = vmatprep.subr.mxu0 0.0
        %4966 = vmatpush1.msra.mxu0 0.0
        %4967 = vmatprep.subr.mxu0 0.0
        %4968 = vmatpush1.msra.mxu0 0.0
        %4969 = vmatprep.subr.mxu0 0.0
        %4970 = vmatpush1.msra.mxu0 0.0
        %4971 = vmatprep.subr.mxu0 0.0
        %4972 = vmatpush1.msra.mxu0 0.0
        %4973 = vmatprep.subr.mxu0 0.0
        %4974 = vmatpush1.msra.mxu0 0.0
        %4975 = vmatprep.subr.mxu0 0.0
        %4976 = vmatpush1.msra.mxu0 0.0
        %4977 = vmatprep.subr.mxu0 0.0
        %4978 = vmatpush1.msra.mxu0 0.0
        %4979 = vmatprep.subr.mxu0 0.0
        %4980 = vmatpush1.msra.mxu0 0.0
        %4981 = vmatprep.subr.mxu0 0.0
        %4982 = vmatpush1.msra.mxu0 0.0
        %4983 = vmatprep.subr.mxu0 0.0
        %4984 = vmatpush1.msra.mxu0 0.0
        %4985 = vmatprep.subr.mxu0 0.0
        %4986 = vmatpush1.msra.mxu0 0.0
        %4987 = vmatprep.subr.mxu0 0.0
        %4988 = vmatpush1.msra.mxu0 0.0
        %4989 = vmatprep.subr.mxu0 0.0
        %4990 = vmatpush1.msra.mxu0 0.0
        %4991 = vmatprep.subr.mxu0 0.0
        %v4992 = vand.u32 %v4882, 4294901760
        %v4993 = vsub.f32 %v4882, %v4992
        %v4994 = vand.u32 %v4993, 4294901760
        %v4995 = vsub.f32 %v4993, %v4994
        %v4996 = vand.u32 %v4995, 4294901760
        %4997 = vmatpush1.msra.mxu0 %v4996
        %4998 = vmatprep.subr.mxu0 0.0
        %4999 = vmatpush2.msra.mxu0 0.0
        %5000 = vmatprep.subr.mxu0 0.0
        %5001 = vmatpush2.msra.mxu0 0.0
        %5002 = vmatprep.subr.mxu0 0.0
        %5003 = vmatpush2.msra.mxu0 0.0
        %5004 = vmatprep.subr.mxu0 0.0
        %5005 = vmatpush2.msra.mxu0 0.0
        %5006 = vmatprep.subr.mxu0 0.0
        %5007 = vmatpush2.msra.mxu0 0.0
        %5008 = vmatprep.subr.mxu0 0.0
        %5009 = vmatpush2.msra.mxu0 0.0
        %5010 = vmatprep.subr.mxu0 0.0
        %5011 = vmatpush2.msra.mxu0 0.0
        %5012 = vmatprep.subr.mxu0 0.0
        %5013 = vmatpush2.msra.mxu0 0.0
        %5014 = vmatprep.subr.mxu0 0.0
        %5015 = vmatpush2.msra.mxu0 0.0
        %5016 = vmatprep.subr.mxu0 0.0
        %5017 = vmatpush2.msra.mxu0 0.0
        %5018 = vmatprep.subr.mxu0 0.0
        %5019 = vmatpush2.msra.mxu0 0.0
        %5020 = vmatprep.subr.mxu0 0.0
        %5021 = vmatpush2.msra.mxu0 0.0
        %5022 = vmatprep.subr.mxu0 0.0
        %5023 = vmatpush2.msra.mxu0 0.0
        %5024 = vmatprep.subr.mxu0 0.0
        %5025 = vmatpush2.msra.mxu0 0.0
        %5026 = vmatprep.subr.mxu0 0.0
        %5027 = vmatpush2.msra.mxu0 0.0
        %5028 = vmatprep.subr.mxu0 0.0
        %5029 = vmatpush2.msra.mxu0 0.0
        %5030 = vmatprep.mubr.f32.mxu0 0.0
        %v5031 = vand.u32 %v796, 4294901760
        %5032 = vmatmul.mubr.f32.gmra.mxu0 %v5031
        %v5033 = vpop.f32.mrf.mxu0
        %v5034 = vadd.f32 %v4958, %v5033
        %v5035 = vpop.f32.mrf.mxu0
        %5036 = vdwg.mxu0
        %5037 = vmatprep.subr.mxu0 0.0
        %5038 = vmatpush1.msra.mxu0 0.0
        %5039 = vmatprep.subr.mxu0 0.0
        %5040 = vmatpush1.msra.mxu0 0.0
        %5041 = vmatprep.subr.mxu0 0.0
        %5042 = vmatpush1.msra.mxu0 0.0
        %5043 = vmatprep.subr.mxu0 0.0
        %5044 = vmatpush1.msra.mxu0 0.0
        %5045 = vmatprep.subr.mxu0 0.0
        %5046 = vmatpush1.msra.mxu0 0.0
        %5047 = vmatprep.subr.mxu0 0.0
        %5048 = vmatpush1.msra.mxu0 0.0
        %5049 = vmatprep.subr.mxu0 0.0
        %5050 = vmatpush1.msra.mxu0 0.0
        %5051 = vmatprep.subr.mxu0 0.0
        %5052 = vmatpush1.msra.mxu0 0.0
        %5053 = vmatprep.subr.mxu0 0.0
        %5054 = vmatpush1.msra.mxu0 0.0
        %5055 = vmatprep.subr.mxu0 0.0
        %5056 = vmatpush1.msra.mxu0 0.0
        %5057 = vmatprep.subr.mxu0 0.0
        %5058 = vmatpush1.msra.mxu0 0.0
        %5059 = vmatprep.subr.mxu0 0.0
        %5060 = vmatpush1.msra.mxu0 0.0
        %5061 = vmatprep.subr.mxu0 0.0
        %5062 = vmatpush1.msra.mxu0 0.0
        %5063 = vmatprep.subr.mxu0 0.0
        %5064 = vmatpush1.msra.mxu0 0.0
        %5065 = vmatprep.subr.mxu0 0.0
        %5066 = vmatpush1.msra.mxu0 0.0
        %5067 = vmatprep.subr.mxu0 0.0
        %v5068 = vand.u32 %v4882, 4294901760
        %v5069 = vsub.f32 %v4882, %v5068
        %5070 = vmatpush1.msra.mxu0 %v5069
        %5071 = vmatprep.subr.mxu0 0.0
        %5072 = vmatpush2.msra.mxu0 0.0
        %5073 = vmatprep.subr.mxu0 0.0
        %5074 = vmatpush2.msra.mxu0 0.0
        %5075 = vmatprep.subr.mxu0 0.0
        %5076 = vmatpush2.msra.mxu0 0.0
        %5077 = vmatprep.subr.mxu0 0.0
        %5078 = vmatpush2.msra.mxu0 0.0
        %5079 = vmatprep.subr.mxu0 0.0
        %5080 = vmatpush2.msra.mxu0 0.0
        %5081 = vmatprep.subr.mxu0 0.0
        %5082 = vmatpush2.msra.mxu0 0.0
        %5083 = vmatprep.subr.mxu0 0.0
        %5084 = vmatpush2.msra.mxu0 0.0
        %5085 = vmatprep.subr.mxu0 0.0
        %5086 = vmatpush2.msra.mxu0 0.0
        %5087 = vmatprep.subr.mxu0 0.0
        %5088 = vmatpush2.msra.mxu0 0.0
        %5089 = vmatprep.subr.mxu0 0.0
        %5090 = vmatpush2.msra.mxu0 0.0
        %5091 = vmatprep.subr.mxu0 0.0
        %5092 = vmatpush2.msra.mxu0 0.0
        %5093 = vmatprep.subr.mxu0 0.0
        %5094 = vmatpush2.msra.mxu0 0.0
        %5095 = vmatprep.subr.mxu0 0.0
        %5096 = vmatpush2.msra.mxu0 0.0
        %5097 = vmatprep.subr.mxu0 0.0
        %5098 = vmatpush2.msra.mxu0 0.0
        %5099 = vmatprep.subr.mxu0 0.0
        %5100 = vmatpush2.msra.mxu0 0.0
        %5101 = vmatprep.subr.mxu0 0.0
        %5102 = vmatpush2.msra.mxu0 0.0
        %5103 = vmatprep.mubr.f32.mxu0 0.0
        %v5104 = vand.u32 %v796, 4294901760
        %v5105 = vsub.f32 %v796, %v5104
        %5106 = vmatmul.mubr.f32.gmra.mxu0 %v5105
        %v5107 = vpop.f32.mrf.mxu0
        %v5108 = vadd.f32 %v5034, %v5107
        %v5109 = vpop.f32.mrf.mxu0
        %5110 = vdwg.mxu0
        %5111 = vmatprep.subr.mxu0 0.0
        %5112 = vmatpush1.msra.mxu0 0.0
        %5113 = vmatprep.subr.mxu0 0.0
        %5114 = vmatpush1.msra.mxu0 0.0
        %5115 = vmatprep.subr.mxu0 0.0
        %5116 = vmatpush1.msra.mxu0 0.0
        %5117 = vmatprep.subr.mxu0 0.0
        %5118 = vmatpush1.msra.mxu0 0.0
        %5119 = vmatprep.subr.mxu0 0.0
        %5120 = vmatpush1.msra.mxu0 0.0
        %5121 = vmatprep.subr.mxu0 0.0
        %5122 = vmatpush1.msra.mxu0 0.0
        %5123 = vmatprep.subr.mxu0 0.0
        %5124 = vmatpush1.msra.mxu0 0.0
        %5125 = vmatprep.subr.mxu0 0.0
        %5126 = vmatpush1.msra.mxu0 0.0
        %5127 = vmatprep.subr.mxu0 0.0
        %5128 = vmatpush1.msra.mxu0 0.0
        %5129 = vmatprep.subr.mxu0 0.0
        %5130 = vmatpush1.msra.mxu0 0.0
        %5131 = vmatprep.subr.mxu0 0.0
        %5132 = vmatpush1.msra.mxu0 0.0
        %5133 = vmatprep.subr.mxu0 0.0
        %5134 = vmatpush1.msra.mxu0 0.0
        %5135 = vmatprep.subr.mxu0 0.0
        %5136 = vmatpush1.msra.mxu0 0.0
        %5137 = vmatprep.subr.mxu0 0.0
        %5138 = vmatpush1.msra.mxu0 0.0
        %5139 = vmatprep.subr.mxu0 0.0
        %5140 = vmatpush1.msra.mxu0 0.0
        %5141 = vmatprep.subr.mxu0 0.0
        %v5142 = vand.u32 %v4882, 4294901760
        %5143 = vmatpush1.msra.mxu0 %v5142
        %5144 = vmatprep.subr.mxu0 0.0
        %5145 = vmatpush2.msra.mxu0 0.0
        %5146 = vmatprep.subr.mxu0 0.0
        %5147 = vmatpush2.msra.mxu0 0.0
        %5148 = vmatprep.subr.mxu0 0.0
        %5149 = vmatpush2.msra.mxu0 0.0
        %5150 = vmatprep.subr.mxu0 0.0
        %5151 = vmatpush2.msra.mxu0 0.0
        %5152 = vmatprep.subr.mxu0 0.0
        %5153 = vmatpush2.msra.mxu0 0.0
        %5154 = vmatprep.subr.mxu0 0.0
        %5155 = vmatpush2.msra.mxu0 0.0
        %5156 = vmatprep.subr.mxu0 0.0
        %5157 = vmatpush2.msra.mxu0 0.0
        %5158 = vmatprep.subr.mxu0 0.0
        %5159 = vmatpush2.msra.mxu0 0.0
        %5160 = vmatprep.subr.mxu0 0.0
        %5161 = vmatpush2.msra.mxu0 0.0
        %5162 = vmatprep.subr.mxu0 0.0
        %5163 = vmatpush2.msra.mxu0 0.0
        %5164 = vmatprep.subr.mxu0 0.0
        %5165 = vmatpush2.msra.mxu0 0.0
        %5166 = vmatprep.subr.mxu0 0.0
        %5167 = vmatpush2.msra.mxu0 0.0
        %5168 = vmatprep.subr.mxu0 0.0
        %5169 = vmatpush2.msra.mxu0 0.0
        %5170 = vmatprep.subr.mxu0 0.0
        %5171 = vmatpush2.msra.mxu0 0.0
        %5172 = vmatprep.subr.mxu0 0.0
        %5173 = vmatpush2.msra.mxu0 0.0
        %5174 = vmatprep.subr.mxu0 0.0
        %5175 = vmatpush2.msra.mxu0 0.0
        %5176 = vmatprep.mubr.f32.mxu0 0.0
        %v5177 = vand.u32 %v796, 4294901760
        %v5178 = vsub.f32 %v796, %v5177
        %v5179 = vand.u32 %v5178, 4294901760
        %5180 = vmatmul.mubr.f32.gmra.mxu0 %v5179
        %v5181 = vpop.f32.mrf.mxu0
        %v5182 = vadd.f32 %v5108, %v5181
        %v5183 = vpop.f32.mrf.mxu0
        %5184 = vdwg.mxu0
        %5185 = vmatprep.subr.mxu0 0.0
        %5186 = vmatpush1.msra.mxu0 0.0
        %5187 = vmatprep.subr.mxu0 0.0
        %5188 = vmatpush1.msra.mxu0 0.0
        %5189 = vmatprep.subr.mxu0 0.0
        %5190 = vmatpush1.msra.mxu0 0.0
        %5191 = vmatprep.subr.mxu0 0.0
        %5192 = vmatpush1.msra.mxu0 0.0
        %5193 = vmatprep.subr.mxu0 0.0
        %5194 = vmatpush1.msra.mxu0 0.0
        %5195 = vmatprep.subr.mxu0 0.0
        %5196 = vmatpush1.msra.mxu0 0.0
        %5197 = vmatprep.subr.mxu0 0.0
        %5198 = vmatpush1.msra.mxu0 0.0
        %5199 = vmatprep.subr.mxu0 0.0
        %5200 = vmatpush1.msra.mxu0 0.0
        %5201 = vmatprep.subr.mxu0 0.0
        %5202 = vmatpush1.msra.mxu0 0.0
        %5203 = vmatprep.subr.mxu0 0.0
        %5204 = vmatpush1.msra.mxu0 0.0
        %5205 = vmatprep.subr.mxu0 0.0
        %5206 = vmatpush1.msra.mxu0 0.0
        %5207 = vmatprep.subr.mxu0 0.0
        %5208 = vmatpush1.msra.mxu0 0.0
        %5209 = vmatprep.subr.mxu0 0.0
        %5210 = vmatpush1.msra.mxu0 0.0
        %5211 = vmatprep.subr.mxu0 0.0
        %5212 = vmatpush1.msra.mxu0 0.0
        %5213 = vmatprep.subr.mxu0 0.0
        %5214 = vmatpush1.msra.mxu0 0.0
        %5215 = vmatprep.subr.mxu0 0.0
        %v5216 = vand.u32 %v4882, 4294901760
        %v5217 = vsub.f32 %v4882, %v5216
        %v5218 = vand.u32 %v5217, 4294901760
        %5219 = vmatpush1.msra.mxu0 %v5218
        %5220 = vmatprep.subr.mxu0 0.0
        %5221 = vmatpush2.msra.mxu0 0.0
        %5222 = vmatprep.subr.mxu0 0.0
        %5223 = vmatpush2.msra.mxu0 0.0
        %5224 = vmatprep.subr.mxu0 0.0
        %5225 = vmatpush2.msra.mxu0 0.0
        %5226 = vmatprep.subr.mxu0 0.0
        %5227 = vmatpush2.msra.mxu0 0.0
        %5228 = vmatprep.subr.mxu0 0.0
        %5229 = vmatpush2.msra.mxu0 0.0
        %5230 = vmatprep.subr.mxu0 0.0
        %5231 = vmatpush2.msra.mxu0 0.0
        %5232 = vmatprep.subr.mxu0 0.0
        %5233 = vmatpush2.msra.mxu0 0.0
        %5234 = vmatprep.subr.mxu0 0.0
        %5235 = vmatpush2.msra.mxu0 0.0
        %5236 = vmatprep.subr.mxu0 0.0
        %5237 = vmatpush2.msra.mxu0 0.0
        %5238 = vmatprep.subr.mxu0 0.0
        %5239 = vmatpush2.msra.mxu0 0.0
        %5240 = vmatprep.subr.mxu0 0.0
        %5241 = vmatpush2.msra.mxu0 0.0
        %5242 = vmatprep.subr.mxu0 0.0
        %5243 = vmatpush2.msra.mxu0 0.0
        %5244 = vmatprep.subr.mxu0 0.0
        %5245 = vmatpush2.msra.mxu0 0.0
        %5246 = vmatprep.subr.mxu0 0.0
        %5247 = vmatpush2.msra.mxu0 0.0
        %5248 = vmatprep.subr.mxu0 0.0
        %5249 = vmatpush2.msra.mxu0 0.0
        %5250 = vmatprep.subr.mxu0 0.0
        %5251 = vmatpush2.msra.mxu0 0.0
        %5252 = vmatprep.mubr.f32.mxu0 0.0
        %v5253 = vand.u32 %v796, 4294901760
        %5254 = vmatmul.mubr.f32.gmra.mxu0 %v5253
        %v5255 = vpop.f32.mrf.mxu0
        %v5256 = vadd.f32 %v5182, %v5255
        %v5257 = vpop.f32.mrf.mxu0
        %5258 = vdwg.mxu0
        %5259 = vmatprep.subr.mxu0 0.0
        %5260 = vmatpush1.msra.mxu0 0.0
        %5261 = vmatprep.subr.mxu0 0.0
        %5262 = vmatpush1.msra.mxu0 0.0
        %5263 = vmatprep.subr.mxu0 0.0
        %5264 = vmatpush1.msra.mxu0 0.0
        %5265 = vmatprep.subr.mxu0 0.0
        %5266 = vmatpush1.msra.mxu0 0.0
        %5267 = vmatprep.subr.mxu0 0.0
        %5268 = vmatpush1.msra.mxu0 0.0
        %5269 = vmatprep.subr.mxu0 0.0
        %5270 = vmatpush1.msra.mxu0 0.0
        %5271 = vmatprep.subr.mxu0 0.0
        %5272 = vmatpush1.msra.mxu0 0.0
        %5273 = vmatprep.subr.mxu0 0.0
        %5274 = vmatpush1.msra.mxu0 0.0
        %5275 = vmatprep.subr.mxu0 0.0
        %5276 = vmatpush1.msra.mxu0 0.0
        %5277 = vmatprep.subr.mxu0 0.0
        %5278 = vmatpush1.msra.mxu0 0.0
        %5279 = vmatprep.subr.mxu0 0.0
        %5280 = vmatpush1.msra.mxu0 0.0
        %5281 = vmatprep.subr.mxu0 0.0
        %5282 = vmatpush1.msra.mxu0 0.0
        %5283 = vmatprep.subr.mxu0 0.0
        %5284 = vmatpush1.msra.mxu0 0.0
        %5285 = vmatprep.subr.mxu0 0.0
        %5286 = vmatpush1.msra.mxu0 0.0
        %5287 = vmatprep.subr.mxu0 0.0
        %5288 = vmatpush1.msra.mxu0 0.0
        %5289 = vmatprep.subr.mxu0 0.0
        %v5290 = vand.u32 %v4882, 4294901760
        %5291 = vmatpush1.msra.mxu0 %v5290
        %5292 = vmatprep.subr.mxu0 0.0
        %5293 = vmatpush2.msra.mxu0 0.0
        %5294 = vmatprep.subr.mxu0 0.0
        %5295 = vmatpush2.msra.mxu0 0.0
        %5296 = vmatprep.subr.mxu0 0.0
        %5297 = vmatpush2.msra.mxu0 0.0
        %5298 = vmatprep.subr.mxu0 0.0
        %5299 = vmatpush2.msra.mxu0 0.0
        %5300 = vmatprep.subr.mxu0 0.0
        %5301 = vmatpush2.msra.mxu0 0.0
        %5302 = vmatprep.subr.mxu0 0.0
        %5303 = vmatpush2.msra.mxu0 0.0
        %5304 = vmatprep.subr.mxu0 0.0
        %5305 = vmatpush2.msra.mxu0 0.0
        %5306 = vmatprep.subr.mxu0 0.0
        %5307 = vmatpush2.msra.mxu0 0.0
        %5308 = vmatprep.subr.mxu0 0.0
        %5309 = vmatpush2.msra.mxu0 0.0
        %5310 = vmatprep.subr.mxu0 0.0
        %5311 = vmatpush2.msra.mxu0 0.0
        %5312 = vmatprep.subr.mxu0 0.0
        %5313 = vmatpush2.msra.mxu0 0.0
        %5314 = vmatprep.subr.mxu0 0.0
        %5315 = vmatpush2.msra.mxu0 0.0
        %5316 = vmatprep.subr.mxu0 0.0
        %5317 = vmatpush2.msra.mxu0 0.0
        %5318 = vmatprep.subr.mxu0 0.0
        %5319 = vmatpush2.msra.mxu0 0.0
        %5320 = vmatprep.subr.mxu0 0.0
        %5321 = vmatpush2.msra.mxu0 0.0
        %5322 = vmatprep.subr.mxu0 0.0
        %5323 = vmatpush2.msra.mxu0 0.0
        %5324 = vmatprep.mubr.f32.mxu0 0.0
        %v5325 = vand.u32 %v796, 4294901760
        %5326 = vmatmul.mubr.f32.gmra.mxu0 %v5325
        %v5327 = vpop.f32.mrf.mxu0
        %v5328 = vadd.f32 %v5256, %v5327
        %v5329 = vpop.f32.mrf.mxu0
        %5330 = vdwg.mxu0
        %v5331 = vld [vmem:[%s300] sm:$0xff]
        %5333 = vrot.lane.b32.xlu0 %v5328, 16
        %v5334 = vpop.permute.xlu0 %5333
        %v5336 = vsel %vm1249, %v5328, %v5334
        %5338 = vrot.lane.b32.xlu0 %v5331, 32
        %v5339 = vpop.permute.xlu0 %5338
        %5341 = vmatprep.subr.mxu0 0.0
        %5342 = vmatpush1.msra.mxu0 0.0
        %5343 = vmatprep.subr.mxu0 0.0
        %5344 = vmatpush1.msra.mxu0 0.0
        %5345 = vmatprep.subr.mxu0 0.0
        %5346 = vmatpush1.msra.mxu0 0.0
        %5347 = vmatprep.subr.mxu0 0.0
        %5348 = vmatpush1.msra.mxu0 0.0
        %5349 = vmatprep.subr.mxu0 0.0
        %5350 = vmatpush1.msra.mxu0 0.0
        %5351 = vmatprep.subr.mxu0 0.0
        %5352 = vmatpush1.msra.mxu0 0.0
        %5353 = vmatprep.subr.mxu0 0.0
        %5354 = vmatpush1.msra.mxu0 0.0
        %5355 = vmatprep.subr.mxu0 0.0
        %5356 = vmatpush1.msra.mxu0 0.0
        %5357 = vmatprep.subr.mxu0 0.0
        %5358 = vmatpush1.msra.mxu0 0.0
        %5359 = vmatprep.subr.mxu0 0.0
        %5360 = vmatpush1.msra.mxu0 0.0
        %5361 = vmatprep.subr.mxu0 0.0
        %5362 = vmatpush1.msra.mxu0 0.0
        %5363 = vmatprep.subr.mxu0 0.0
        %5364 = vmatpush1.msra.mxu0 0.0
        %5365 = vmatprep.subr.mxu0 0.0
        %5366 = vmatpush1.msra.mxu0 0.0
        %5367 = vmatprep.subr.mxu0 0.0
        %5368 = vmatpush1.msra.mxu0 0.0
        %5369 = vmatprep.subr.mxu0 0.0
        %5370 = vmatpush1.msra.mxu0 0.0
        %5371 = vmatprep.subr.mxu0 0.0
        %v5372 = vand.u32 %v5339, 4294901760
        %5373 = vmatpush1.msra.mxu0 %v5372
        %5374 = vmatprep.subr.mxu0 0.0
        %5375 = vmatpush2.msra.mxu0 0.0
        %5376 = vmatprep.subr.mxu0 0.0
        %5377 = vmatpush2.msra.mxu0 0.0
        %5378 = vmatprep.subr.mxu0 0.0
        %5379 = vmatpush2.msra.mxu0 0.0
        %5380 = vmatprep.subr.mxu0 0.0
        %5381 = vmatpush2.msra.mxu0 0.0
        %5382 = vmatprep.subr.mxu0 0.0
        %5383 = vmatpush2.msra.mxu0 0.0
        %5384 = vmatprep.subr.mxu0 0.0
        %5385 = vmatpush2.msra.mxu0 0.0
        %5386 = vmatprep.subr.mxu0 0.0
        %5387 = vmatpush2.msra.mxu0 0.0
        %5388 = vmatprep.subr.mxu0 0.0
        %5389 = vmatpush2.msra.mxu0 0.0
        %5390 = vmatprep.subr.mxu0 0.0
        %5391 = vmatpush2.msra.mxu0 0.0
        %5392 = vmatprep.subr.mxu0 0.0
        %5393 = vmatpush2.msra.mxu0 0.0
        %5394 = vmatprep.subr.mxu0 0.0
        %5395 = vmatpush2.msra.mxu0 0.0
        %5396 = vmatprep.subr.mxu0 0.0
        %5397 = vmatpush2.msra.mxu0 0.0
        %5398 = vmatprep.subr.mxu0 0.0
        %5399 = vmatpush2.msra.mxu0 0.0
        %5400 = vmatprep.subr.mxu0 0.0
        %5401 = vmatpush2.msra.mxu0 0.0
        %5402 = vmatprep.subr.mxu0 0.0
        %5403 = vmatpush2.msra.mxu0 0.0
        %5404 = vmatprep.subr.mxu0 0.0
        %5405 = vmatpush2.msra.mxu0 0.0
        %5406 = vmatprep.mubr.f32.mxu0 0.0
        %v5407 = vand.u32 %v1252, 4294901760
        %v5408 = vsub.f32 %v1252, %v5407
        %v5409 = vand.u32 %v5408, 4294901760
        %v5410 = vsub.f32 %v5408, %v5409
        %v5411 = vand.u32 %v5410, 4294901760
        %5412 = vmatmul.mubr.f32.gmra.mxu0 %v5411
        %v5413 = vpop.f32.mrf.mxu0
        %v5414 = vadd.f32 %v5336, %v5413
        %v5415 = vpop.f32.mrf.mxu0
        %5416 = vdwg.mxu0
        %5417 = vmatprep.subr.mxu0 0.0
        %5418 = vmatpush1.msra.mxu0 0.0
        %5419 = vmatprep.subr.mxu0 0.0
        %5420 = vmatpush1.msra.mxu0 0.0
        %5421 = vmatprep.subr.mxu0 0.0
        %5422 = vmatpush1.msra.mxu0 0.0
        %5423 = vmatprep.subr.mxu0 0.0
        %5424 = vmatpush1.msra.mxu0 0.0
        %5425 = vmatprep.subr.mxu0 0.0
        %5426 = vmatpush1.msra.mxu0 0.0
        %5427 = vmatprep.subr.mxu0 0.0
        %5428 = vmatpush1.msra.mxu0 0.0
        %5429 = vmatprep.subr.mxu0 0.0
        %5430 = vmatpush1.msra.mxu0 0.0
        %5431 = vmatprep.subr.mxu0 0.0
        %5432 = vmatpush1.msra.mxu0 0.0
        %5433 = vmatprep.subr.mxu0 0.0
        %5434 = vmatpush1.msra.mxu0 0.0
        %5435 = vmatprep.subr.mxu0 0.0
        %5436 = vmatpush1.msra.mxu0 0.0
        %5437 = vmatprep.subr.mxu0 0.0
        %5438 = vmatpush1.msra.mxu0 0.0
        %5439 = vmatprep.subr.mxu0 0.0
        %5440 = vmatpush1.msra.mxu0 0.0
        %5441 = vmatprep.subr.mxu0 0.0
        %5442 = vmatpush1.msra.mxu0 0.0
        %5443 = vmatprep.subr.mxu0 0.0
        %5444 = vmatpush1.msra.mxu0 0.0
        %5445 = vmatprep.subr.mxu0 0.0
        %5446 = vmatpush1.msra.mxu0 0.0
        %5447 = vmatprep.subr.mxu0 0.0
        %v5448 = vand.u32 %v5339, 4294901760
        %v5449 = vsub.f32 %v5339, %v5448
        %v5450 = vand.u32 %v5449, 4294901760
        %v5451 = vsub.f32 %v5449, %v5450
        %v5452 = vand.u32 %v5451, 4294901760
        %5453 = vmatpush1.msra.mxu0 %v5452
        %5454 = vmatprep.subr.mxu0 0.0
        %5455 = vmatpush2.msra.mxu0 0.0
        %5456 = vmatprep.subr.mxu0 0.0
        %5457 = vmatpush2.msra.mxu0 0.0
        %5458 = vmatprep.subr.mxu0 0.0
        %5459 = vmatpush2.msra.mxu0 0.0
        %5460 = vmatprep.subr.mxu0 0.0
        %5461 = vmatpush2.msra.mxu0 0.0
        %5462 = vmatprep.subr.mxu0 0.0
        %5463 = vmatpush2.msra.mxu0 0.0
        %5464 = vmatprep.subr.mxu0 0.0
        %5465 = vmatpush2.msra.mxu0 0.0
        %5466 = vmatprep.subr.mxu0 0.0
        %5467 = vmatpush2.msra.mxu0 0.0
        %5468 = vmatprep.subr.mxu0 0.0
        %5469 = vmatpush2.msra.mxu0 0.0
        %5470 = vmatprep.subr.mxu0 0.0
        %5471 = vmatpush2.msra.mxu0 0.0
        %5472 = vmatprep.subr.mxu0 0.0
        %5473 = vmatpush2.msra.mxu0 0.0
        %5474 = vmatprep.subr.mxu0 0.0
        %5475 = vmatpush2.msra.mxu0 0.0
        %5476 = vmatprep.subr.mxu0 0.0
        %5477 = vmatpush2.msra.mxu0 0.0
        %5478 = vmatprep.subr.mxu0 0.0
        %5479 = vmatpush2.msra.mxu0 0.0
        %5480 = vmatprep.subr.mxu0 0.0
        %5481 = vmatpush2.msra.mxu0 0.0
        %5482 = vmatprep.subr.mxu0 0.0
        %5483 = vmatpush2.msra.mxu0 0.0
        %5484 = vmatprep.subr.mxu0 0.0
        %5485 = vmatpush2.msra.mxu0 0.0
        %5486 = vmatprep.mubr.f32.mxu0 0.0
        %v5487 = vand.u32 %v1252, 4294901760
        %5488 = vmatmul.mubr.f32.gmra.mxu0 %v5487
        %v5489 = vpop.f32.mrf.mxu0
        %v5490 = vadd.f32 %v5414, %v5489
        %v5491 = vpop.f32.mrf.mxu0
        %5492 = vdwg.mxu0
        %5493 = vmatprep.subr.mxu0 0.0
        %5494 = vmatpush1.msra.mxu0 0.0
        %5495 = vmatprep.subr.mxu0 0.0
        %5496 = vmatpush1.msra.mxu0 0.0
        %5497 = vmatprep.subr.mxu0 0.0
        %5498 = vmatpush1.msra.mxu0 0.0
        %5499 = vmatprep.subr.mxu0 0.0
        %5500 = vmatpush1.msra.mxu0 0.0
        %5501 = vmatprep.subr.mxu0 0.0
        %5502 = vmatpush1.msra.mxu0 0.0
        %5503 = vmatprep.subr.mxu0 0.0
        %5504 = vmatpush1.msra.mxu0 0.0
        %5505 = vmatprep.subr.mxu0 0.0
        %5506 = vmatpush1.msra.mxu0 0.0
        %5507 = vmatprep.subr.mxu0 0.0
        %5508 = vmatpush1.msra.mxu0 0.0
        %5509 = vmatprep.subr.mxu0 0.0
        %5510 = vmatpush1.msra.mxu0 0.0
        %5511 = vmatprep.subr.mxu0 0.0
        %5512 = vmatpush1.msra.mxu0 0.0
        %5513 = vmatprep.subr.mxu0 0.0
        %5514 = vmatpush1.msra.mxu0 0.0
        %5515 = vmatprep.subr.mxu0 0.0
        %5516 = vmatpush1.msra.mxu0 0.0
        %5517 = vmatprep.subr.mxu0 0.0
        %5518 = vmatpush1.msra.mxu0 0.0
        %5519 = vmatprep.subr.mxu0 0.0
        %5520 = vmatpush1.msra.mxu0 0.0
        %5521 = vmatprep.subr.mxu0 0.0
        %5522 = vmatpush1.msra.mxu0 0.0
        %5523 = vmatprep.subr.mxu0 0.0
        %v5524 = vand.u32 %v5339, 4294901760
        %v5525 = vsub.f32 %v5339, %v5524
        %5526 = vmatpush1.msra.mxu0 %v5525
        %5527 = vmatprep.subr.mxu0 0.0
        %5528 = vmatpush2.msra.mxu0 0.0
        %5529 = vmatprep.subr.mxu0 0.0
        %5530 = vmatpush2.msra.mxu0 0.0
        %5531 = vmatprep.subr.mxu0 0.0
        %5532 = vmatpush2.msra.mxu0 0.0
        %5533 = vmatprep.subr.mxu0 0.0
        %5534 = vmatpush2.msra.mxu0 0.0
        %5535 = vmatprep.subr.mxu0 0.0
        %5536 = vmatpush2.msra.mxu0 0.0
        %5537 = vmatprep.subr.mxu0 0.0
        %5538 = vmatpush2.msra.mxu0 0.0
        %5539 = vmatprep.subr.mxu0 0.0
        %5540 = vmatpush2.msra.mxu0 0.0
        %5541 = vmatprep.subr.mxu0 0.0
        %5542 = vmatpush2.msra.mxu0 0.0
        %5543 = vmatprep.subr.mxu0 0.0
        %5544 = vmatpush2.msra.mxu0 0.0
        %5545 = vmatprep.subr.mxu0 0.0
        %5546 = vmatpush2.msra.mxu0 0.0
        %5547 = vmatprep.subr.mxu0 0.0
        %5548 = vmatpush2.msra.mxu0 0.0
        %5549 = vmatprep.subr.mxu0 0.0
        %5550 = vmatpush2.msra.mxu0 0.0
        %5551 = vmatprep.subr.mxu0 0.0
        %5552 = vmatpush2.msra.mxu0 0.0
        %5553 = vmatprep.subr.mxu0 0.0
        %5554 = vmatpush2.msra.mxu0 0.0
        %5555 = vmatprep.subr.mxu0 0.0
        %5556 = vmatpush2.msra.mxu0 0.0
        %5557 = vmatprep.subr.mxu0 0.0
        %5558 = vmatpush2.msra.mxu0 0.0
        %5559 = vmatprep.mubr.f32.mxu0 0.0
        %v5560 = vand.u32 %v1252, 4294901760
        %v5561 = vsub.f32 %v1252, %v5560
        %5562 = vmatmul.mubr.f32.gmra.mxu0 %v5561
        %v5563 = vpop.f32.mrf.mxu0
        %v5564 = vadd.f32 %v5490, %v5563
        %v5565 = vpop.f32.mrf.mxu0
        %5566 = vdwg.mxu0
        %5567 = vmatprep.subr.mxu0 0.0
        %5568 = vmatpush1.msra.mxu0 0.0
        %5569 = vmatprep.subr.mxu0 0.0
        %5570 = vmatpush1.msra.mxu0 0.0
        %5571 = vmatprep.subr.mxu0 0.0
        %5572 = vmatpush1.msra.mxu0 0.0
        %5573 = vmatprep.subr.mxu0 0.0
        %5574 = vmatpush1.msra.mxu0 0.0
        %5575 = vmatprep.subr.mxu0 0.0
        %5576 = vmatpush1.msra.mxu0 0.0
        %5577 = vmatprep.subr.mxu0 0.0
        %5578 = vmatpush1.msra.mxu0 0.0
        %5579 = vmatprep.subr.mxu0 0.0
        %5580 = vmatpush1.msra.mxu0 0.0
        %5581 = vmatprep.subr.mxu0 0.0
        %5582 = vmatpush1.msra.mxu0 0.0
        %5583 = vmatprep.subr.mxu0 0.0
        %5584 = vmatpush1.msra.mxu0 0.0
        %5585 = vmatprep.subr.mxu0 0.0
        %5586 = vmatpush1.msra.mxu0 0.0
        %5587 = vmatprep.subr.mxu0 0.0
        %5588 = vmatpush1.msra.mxu0 0.0
        %5589 = vmatprep.subr.mxu0 0.0
        %5590 = vmatpush1.msra.mxu0 0.0
        %5591 = vmatprep.subr.mxu0 0.0
        %5592 = vmatpush1.msra.mxu0 0.0
        %5593 = vmatprep.subr.mxu0 0.0
        %5594 = vmatpush1.msra.mxu0 0.0
        %5595 = vmatprep.subr.mxu0 0.0
        %5596 = vmatpush1.msra.mxu0 0.0
        %5597 = vmatprep.subr.mxu0 0.0
        %v5598 = vand.u32 %v5339, 4294901760
        %5599 = vmatpush1.msra.mxu0 %v5598
        %5600 = vmatprep.subr.mxu0 0.0
        %5601 = vmatpush2.msra.mxu0 0.0
        %5602 = vmatprep.subr.mxu0 0.0
        %5603 = vmatpush2.msra.mxu0 0.0
        %5604 = vmatprep.subr.mxu0 0.0
        %5605 = vmatpush2.msra.mxu0 0.0
        %5606 = vmatprep.subr.mxu0 0.0
        %5607 = vmatpush2.msra.mxu0 0.0
        %5608 = vmatprep.subr.mxu0 0.0
        %5609 = vmatpush2.msra.mxu0 0.0
        %5610 = vmatprep.subr.mxu0 0.0
        %5611 = vmatpush2.msra.mxu0 0.0
        %5612 = vmatprep.subr.mxu0 0.0
        %5613 = vmatpush2.msra.mxu0 0.0
        %5614 = vmatprep.subr.mxu0 0.0
        %5615 = vmatpush2.msra.mxu0 0.0
        %5616 = vmatprep.subr.mxu0 0.0
        %5617 = vmatpush2.msra.mxu0 0.0
        %5618 = vmatprep.subr.mxu0 0.0
        %5619 = vmatpush2.msra.mxu0 0.0
        %5620 = vmatprep.subr.mxu0 0.0
        %5621 = vmatpush2.msra.mxu0 0.0
        %5622 = vmatprep.subr.mxu0 0.0
        %5623 = vmatpush2.msra.mxu0 0.0
        %5624 = vmatprep.subr.mxu0 0.0
        %5625 = vmatpush2.msra.mxu0 0.0
        %5626 = vmatprep.subr.mxu0 0.0
        %5627 = vmatpush2.msra.mxu0 0.0
        %5628 = vmatprep.subr.mxu0 0.0
        %5629 = vmatpush2.msra.mxu0 0.0
        %5630 = vmatprep.subr.mxu0 0.0
        %5631 = vmatpush2.msra.mxu0 0.0
        %5632 = vmatprep.mubr.f32.mxu0 0.0
        %v5633 = vand.u32 %v1252, 4294901760
        %v5634 = vsub.f32 %v1252, %v5633
        %v5635 = vand.u32 %v5634, 4294901760
        %5636 = vmatmul.mubr.f32.gmra.mxu0 %v5635
        %v5637 = vpop.f32.mrf.mxu0
        %v5638 = vadd.f32 %v5564, %v5637
        %v5639 = vpop.f32.mrf.mxu0
        %5640 = vdwg.mxu0
        %5641 = vmatprep.subr.mxu0 0.0
        %5642 = vmatpush1.msra.mxu0 0.0
        %5643 = vmatprep.subr.mxu0 0.0
        %5644 = vmatpush1.msra.mxu0 0.0
        %5645 = vmatprep.subr.mxu0 0.0
        %5646 = vmatpush1.msra.mxu0 0.0
        %5647 = vmatprep.subr.mxu0 0.0
        %5648 = vmatpush1.msra.mxu0 0.0
        %5649 = vmatprep.subr.mxu0 0.0
        %5650 = vmatpush1.msra.mxu0 0.0
        %5651 = vmatprep.subr.mxu0 0.0
        %5652 = vmatpush1.msra.mxu0 0.0
        %5653 = vmatprep.subr.mxu0 0.0
        %5654 = vmatpush1.msra.mxu0 0.0
        %5655 = vmatprep.subr.mxu0 0.0
        %5656 = vmatpush1.msra.mxu0 0.0
        %5657 = vmatprep.subr.mxu0 0.0
        %5658 = vmatpush1.msra.mxu0 0.0
        %5659 = vmatprep.subr.mxu0 0.0
        %5660 = vmatpush1.msra.mxu0 0.0
        %5661 = vmatprep.subr.mxu0 0.0
        %5662 = vmatpush1.msra.mxu0 0.0
        %5663 = vmatprep.subr.mxu0 0.0
        %5664 = vmatpush1.msra.mxu0 0.0
        %5665 = vmatprep.subr.mxu0 0.0
        %5666 = vmatpush1.msra.mxu0 0.0
        %5667 = vmatprep.subr.mxu0 0.0
        %5668 = vmatpush1.msra.mxu0 0.0
        %5669 = vmatprep.subr.mxu0 0.0
        %5670 = vmatpush1.msra.mxu0 0.0
        %5671 = vmatprep.subr.mxu0 0.0
        %v5672 = vand.u32 %v5339, 4294901760
        %v5673 = vsub.f32 %v5339, %v5672
        %v5674 = vand.u32 %v5673, 4294901760
        %5675 = vmatpush1.msra.mxu0 %v5674
        %5676 = vmatprep.subr.mxu0 0.0
        %5677 = vmatpush2.msra.mxu0 0.0
        %5678 = vmatprep.subr.mxu0 0.0
        %5679 = vmatpush2.msra.mxu0 0.0
        %5680 = vmatprep.subr.mxu0 0.0
        %5681 = vmatpush2.msra.mxu0 0.0
        %5682 = vmatprep.subr.mxu0 0.0
        %5683 = vmatpush2.msra.mxu0 0.0
        %5684 = vmatprep.subr.mxu0 0.0
        %5685 = vmatpush2.msra.mxu0 0.0
        %5686 = vmatprep.subr.mxu0 0.0
        %5687 = vmatpush2.msra.mxu0 0.0
        %5688 = vmatprep.subr.mxu0 0.0
        %5689 = vmatpush2.msra.mxu0 0.0
        %5690 = vmatprep.subr.mxu0 0.0
        %5691 = vmatpush2.msra.mxu0 0.0
        %5692 = vmatprep.subr.mxu0 0.0
        %5693 = vmatpush2.msra.mxu0 0.0
        %5694 = vmatprep.subr.mxu0 0.0
        %5695 = vmatpush2.msra.mxu0 0.0
        %5696 = vmatprep.subr.mxu0 0.0
        %5697 = vmatpush2.msra.mxu0 0.0
        %5698 = vmatprep.subr.mxu0 0.0
        %5699 = vmatpush2.msra.mxu0 0.0
        %5700 = vmatprep.subr.mxu0 0.0
        %5701 = vmatpush2.msra.mxu0 0.0
        %5702 = vmatprep.subr.mxu0 0.0
        %5703 = vmatpush2.msra.mxu0 0.0
        %5704 = vmatprep.subr.mxu0 0.0
        %5705 = vmatpush2.msra.mxu0 0.0
        %5706 = vmatprep.subr.mxu0 0.0
        %5707 = vmatpush2.msra.mxu0 0.0
        %5708 = vmatprep.mubr.f32.mxu0 0.0
        %v5709 = vand.u32 %v1252, 4294901760
        %5710 = vmatmul.mubr.f32.gmra.mxu0 %v5709
        %v5711 = vpop.f32.mrf.mxu0
        %v5712 = vadd.f32 %v5638, %v5711
        %v5713 = vpop.f32.mrf.mxu0
        %5714 = vdwg.mxu0
        %5715 = vmatprep.subr.mxu0 0.0
        %5716 = vmatpush1.msra.mxu0 0.0
        %5717 = vmatprep.subr.mxu0 0.0
        %5718 = vmatpush1.msra.mxu0 0.0
        %5719 = vmatprep.subr.mxu0 0.0
        %5720 = vmatpush1.msra.mxu0 0.0
        %5721 = vmatprep.subr.mxu0 0.0
        %5722 = vmatpush1.msra.mxu0 0.0
        %5723 = vmatprep.subr.mxu0 0.0
        %5724 = vmatpush1.msra.mxu0 0.0
        %5725 = vmatprep.subr.mxu0 0.0
        %5726 = vmatpush1.msra.mxu0 0.0
        %5727 = vmatprep.subr.mxu0 0.0
        %5728 = vmatpush1.msra.mxu0 0.0
        %5729 = vmatprep.subr.mxu0 0.0
        %5730 = vmatpush1.msra.mxu0 0.0
        %5731 = vmatprep.subr.mxu0 0.0
        %5732 = vmatpush1.msra.mxu0 0.0
        %5733 = vmatprep.subr.mxu0 0.0
        %5734 = vmatpush1.msra.mxu0 0.0
        %5735 = vmatprep.subr.mxu0 0.0
        %5736 = vmatpush1.msra.mxu0 0.0
        %5737 = vmatprep.subr.mxu0 0.0
        %5738 = vmatpush1.msra.mxu0 0.0
        %5739 = vmatprep.subr.mxu0 0.0
        %5740 = vmatpush1.msra.mxu0 0.0
        %5741 = vmatprep.subr.mxu0 0.0
        %5742 = vmatpush1.msra.mxu0 0.0
        %5743 = vmatprep.subr.mxu0 0.0
        %5744 = vmatpush1.msra.mxu0 0.0
        %5745 = vmatprep.subr.mxu0 0.0
        %v5746 = vand.u32 %v5339, 4294901760
        %5747 = vmatpush1.msra.mxu0 %v5746
        %5748 = vmatprep.subr.mxu0 0.0
        %5749 = vmatpush2.msra.mxu0 0.0
        %5750 = vmatprep.subr.mxu0 0.0
        %5751 = vmatpush2.msra.mxu0 0.0
        %5752 = vmatprep.subr.mxu0 0.0
        %5753 = vmatpush2.msra.mxu0 0.0
        %5754 = vmatprep.subr.mxu0 0.0
        %5755 = vmatpush2.msra.mxu0 0.0
        %5756 = vmatprep.subr.mxu0 0.0
        %5757 = vmatpush2.msra.mxu0 0.0
        %5758 = vmatprep.subr.mxu0 0.0
        %5759 = vmatpush2.msra.mxu0 0.0
        %5760 = vmatprep.subr.mxu0 0.0
        %5761 = vmatpush2.msra.mxu0 0.0
        %5762 = vmatprep.subr.mxu0 0.0
        %5763 = vmatpush2.msra.mxu0 0.0
        %5764 = vmatprep.subr.mxu0 0.0
        %5765 = vmatpush2.msra.mxu0 0.0
        %5766 = vmatprep.subr.mxu0 0.0
        %5767 = vmatpush2.msra.mxu0 0.0
        %5768 = vmatprep.subr.mxu0 0.0
        %5769 = vmatpush2.msra.mxu0 0.0
        %5770 = vmatprep.subr.mxu0 0.0
        %5771 = vmatpush2.msra.mxu0 0.0
        %5772 = vmatprep.subr.mxu0 0.0
        %5773 = vmatpush2.msra.mxu0 0.0
        %5774 = vmatprep.subr.mxu0 0.0
        %5775 = vmatpush2.msra.mxu0 0.0
        %5776 = vmatprep.subr.mxu0 0.0
        %5777 = vmatpush2.msra.mxu0 0.0
        %5778 = vmatprep.subr.mxu0 0.0
        %5779 = vmatpush2.msra.mxu0 0.0
        %5780 = vmatprep.mubr.f32.mxu0 0.0
        %v5781 = vand.u32 %v1252, 4294901760
        %5782 = vmatmul.mubr.f32.gmra.mxu0 %v5781
        %v5783 = vpop.f32.mrf.mxu0
        %v5784 = vadd.f32 %v5712, %v5783
        %v5785 = vpop.f32.mrf.mxu0
        %5786 = vdwg.mxu0
        %v5787 = vadd.f32 %v5784, %v1703
        %v5788 = vmax.f32 %v5787, 0.0
        %5790 = vrot.lane.b32.xlu0 %v5788, 96
        %v5791 = vpop.permute.xlu0 %5790
        %vm5793 = vcmask 1048320
        %5794 = vst.msk [vmem:[%s337] sm:$0xff] %vm5793, %v5791
        %v5795 = vld [vmem:[%s291] sm:$0xff]
        %5797 = vrot.lane.b32.xlu0 %v5795, 96
        %v5798 = vpop.permute.xlu0 %5797
        %v5799 = vsel %vm345, %v5798, 0
        %5801 = vmatprep.subr.mxu0 0.0
        %5802 = vmatpush1.msra.mxu0 0.0
        %5803 = vmatprep.subr.mxu0 0.0
        %5804 = vmatpush1.msra.mxu0 0.0
        %5805 = vmatprep.subr.mxu0 0.0
        %5806 = vmatpush1.msra.mxu0 0.0
        %5807 = vmatprep.subr.mxu0 0.0
        %5808 = vmatpush1.msra.mxu0 0.0
        %5809 = vmatprep.subr.mxu0 0.0
        %5810 = vmatpush1.msra.mxu0 0.0
        %5811 = vmatprep.subr.mxu0 0.0
        %5812 = vmatpush1.msra.mxu0 0.0
        %5813 = vmatprep.subr.mxu0 0.0
        %5814 = vmatpush1.msra.mxu0 0.0
        %5815 = vmatprep.subr.mxu0 0.0
        %5816 = vmatpush1.msra.mxu0 0.0
        %5817 = vmatprep.subr.mxu0 0.0
        %5818 = vmatpush1.msra.mxu0 0.0
        %5819 = vmatprep.subr.mxu0 0.0
        %5820 = vmatpush1.msra.mxu0 0.0
        %5821 = vmatprep.subr.mxu0 0.0
        %5822 = vmatpush1.msra.mxu0 0.0
        %5823 = vmatprep.subr.mxu0 0.0
        %5824 = vmatpush1.msra.mxu0 0.0
        %5825 = vmatprep.subr.mxu0 0.0
        %5826 = vmatpush1.msra.mxu0 0.0
        %5827 = vmatprep.subr.mxu0 0.0
        %5828 = vmatpush1.msra.mxu0 0.0
        %5829 = vmatprep.subr.mxu0 0.0
        %5830 = vmatpush1.msra.mxu0 0.0
        %5831 = vmatprep.subr.mxu0 0.0
        %v5832 = vand.u32 %v340, 4294901760
        %5833 = vmatpush1.msra.mxu0 %v5832
        %5834 = vmatprep.subr.mxu0 0.0
        %5835 = vmatpush2.msra.mxu0 0.0
        %5836 = vmatprep.subr.mxu0 0.0
        %5837 = vmatpush2.msra.mxu0 0.0
        %5838 = vmatprep.subr.mxu0 0.0
        %5839 = vmatpush2.msra.mxu0 0.0
        %5840 = vmatprep.subr.mxu0 0.0
        %5841 = vmatpush2.msra.mxu0 0.0
        %5842 = vmatprep.subr.mxu0 0.0
        %5843 = vmatpush2.msra.mxu0 0.0
        %5844 = vmatprep.subr.mxu0 0.0
        %5845 = vmatpush2.msra.mxu0 0.0
        %5846 = vmatprep.subr.mxu0 0.0
        %5847 = vmatpush2.msra.mxu0 0.0
        %5848 = vmatprep.subr.mxu0 0.0
        %5849 = vmatpush2.msra.mxu0 0.0
        %5850 = vmatprep.subr.mxu0 0.0
        %5851 = vmatpush2.msra.mxu0 0.0
        %5852 = vmatprep.subr.mxu0 0.0
        %5853 = vmatpush2.msra.mxu0 0.0
        %5854 = vmatprep.subr.mxu0 0.0
        %5855 = vmatpush2.msra.mxu0 0.0
        %5856 = vmatprep.subr.mxu0 0.0
        %5857 = vmatpush2.msra.mxu0 0.0
        %5858 = vmatprep.subr.mxu0 0.0
        %5859 = vmatpush2.msra.mxu0 0.0
        %5860 = vmatprep.subr.mxu0 0.0
        %5861 = vmatpush2.msra.mxu0 0.0
        %5862 = vmatprep.subr.mxu0 0.0
        %5863 = vmatpush2.msra.mxu0 0.0
        %5864 = vmatprep.subr.mxu0 0.0
        %5865 = vmatpush2.msra.mxu0 0.0
        %5866 = vmatprep.mubr.f32.mxu0 0.0
        %v5867 = vand.u32 %v5799, 4294901760
        %v5868 = vsub.f32 %v5799, %v5867
        %v5869 = vand.u32 %v5868, 4294901760
        %v5870 = vsub.f32 %v5868, %v5869
        %v5871 = vand.u32 %v5870, 4294901760
        %5872 = vmatmul.mubr.f32.gmra.mxu0 %v5871
        %v5873 = vpop.f32.mrf.mxu0
        %v5874 = vadd.f32 0.0, %v5873
        %v5875 = vpop.f32.mrf.mxu0
        %5876 = vdwg.mxu0
        %5877 = vmatprep.subr.mxu0 0.0
        %5878 = vmatpush1.msra.mxu0 0.0
        %5879 = vmatprep.subr.mxu0 0.0
        %5880 = vmatpush1.msra.mxu0 0.0
        %5881 = vmatprep.subr.mxu0 0.0
        %5882 = vmatpush1.msra.mxu0 0.0
        %5883 = vmatprep.subr.mxu0 0.0
        %5884 = vmatpush1.msra.mxu0 0.0
        %5885 = vmatprep.subr.mxu0 0.0
        %5886 = vmatpush1.msra.mxu0 0.0
        %5887 = vmatprep.subr.mxu0 0.0
        %5888 = vmatpush1.msra.mxu0 0.0
        %5889 = vmatprep.subr.mxu0 0.0
        %5890 = vmatpush1.msra.mxu0 0.0
        %5891 = vmatprep.subr.mxu0 0.0
        %5892 = vmatpush1.msra.mxu0 0.0
        %5893 = vmatprep.subr.mxu0 0.0
        %5894 = vmatpush1.msra.mxu0 0.0
        %5895 = vmatprep.subr.mxu0 0.0
        %5896 = vmatpush1.msra.mxu0 0.0
        %5897 = vmatprep.subr.mxu0 0.0
        %5898 = vmatpush1.msra.mxu0 0.0
        %5899 = vmatprep.subr.mxu0 0.0
        %5900 = vmatpush1.msra.mxu0 0.0
        %5901 = vmatprep.subr.mxu0 0.0
        %5902 = vmatpush1.msra.mxu0 0.0
        %5903 = vmatprep.subr.mxu0 0.0
        %5904 = vmatpush1.msra.mxu0 0.0
        %5905 = vmatprep.subr.mxu0 0.0
        %5906 = vmatpush1.msra.mxu0 0.0
        %5907 = vmatprep.subr.mxu0 0.0
        %v5908 = vand.u32 %v340, 4294901760
        %v5909 = vsub.f32 %v340, %v5908
        %v5910 = vand.u32 %v5909, 4294901760
        %v5911 = vsub.f32 %v5909, %v5910
        %v5912 = vand.u32 %v5911, 4294901760
        %5913 = vmatpush1.msra.mxu0 %v5912
        %5914 = vmatprep.subr.mxu0 0.0
        %5915 = vmatpush2.msra.mxu0 0.0
        %5916 = vmatprep.subr.mxu0 0.0
        %5917 = vmatpush2.msra.mxu0 0.0
        %5918 = vmatprep.subr.mxu0 0.0
        %5919 = vmatpush2.msra.mxu0 0.0
        %5920 = vmatprep.subr.mxu0 0.0
        %5921 = vmatpush2.msra.mxu0 0.0
        %5922 = vmatprep.subr.mxu0 0.0
        %5923 = vmatpush2.msra.mxu0 0.0
        %5924 = vmatprep.subr.mxu0 0.0
        %5925 = vmatpush2.msra.mxu0 0.0
        %5926 = vmatprep.subr.mxu0 0.0
        %5927 = vmatpush2.msra.mxu0 0.0
        %5928 = vmatprep.subr.mxu0 0.0
        %5929 = vmatpush2.msra.mxu0 0.0
        %5930 = vmatprep.subr.mxu0 0.0
        %5931 = vmatpush2.msra.mxu0 0.0
        %5932 = vmatprep.subr.mxu0 0.0
        %5933 = vmatpush2.msra.mxu0 0.0
        %5934 = vmatprep.subr.mxu0 0.0
        %5935 = vmatpush2.msra.mxu0 0.0
        %5936 = vmatprep.subr.mxu0 0.0
        %5937 = vmatpush2.msra.mxu0 0.0
        %5938 = vmatprep.subr.mxu0 0.0
        %5939 = vmatpush2.msra.mxu0 0.0
        %5940 = vmatprep.subr.mxu0 0.0
        %5941 = vmatpush2.msra.mxu0 0.0
        %5942 = vmatprep.subr.mxu0 0.0
        %5943 = vmatpush2.msra.mxu0 0.0
        %5944 = vmatprep.subr.mxu0 0.0
        %5945 = vmatpush2.msra.mxu0 0.0
        %5946 = vmatprep.mubr.f32.mxu0 0.0
        %v5947 = vand.u32 %v5799, 4294901760
        %5948 = vmatmul.mubr.f32.gmra.mxu0 %v5947
        %v5949 = vpop.f32.mrf.mxu0
        %v5950 = vadd.f32 %v5874, %v5949
        %v5951 = vpop.f32.mrf.mxu0
        %5952 = vdwg.mxu0
        %5953 = vmatprep.subr.mxu0 0.0
        %5954 = vmatpush1.msra.mxu0 0.0
        %5955 = vmatprep.subr.mxu0 0.0
        %5956 = vmatpush1.msra.mxu0 0.0
        %5957 = vmatprep.subr.mxu0 0.0
        %5958 = vmatpush1.msra.mxu0 0.0
        %5959 = vmatprep.subr.mxu0 0.0
        %5960 = vmatpush1.msra.mxu0 0.0
        %5961 = vmatprep.subr.mxu0 0.0
        %5962 = vmatpush1.msra.mxu0 0.0
        %5963 = vmatprep.subr.mxu0 0.0
        %5964 = vmatpush1.msra.mxu0 0.0
        %5965 = vmatprep.subr.mxu0 0.0
        %5966 = vmatpush1.msra.mxu0 0.0
        %5967 = vmatprep.subr.mxu0 0.0
        %5968 = vmatpush1.msra.mxu0 0.0
        %5969 = vmatprep.subr.mxu0 0.0
        %5970 = vmatpush1.msra.mxu0 0.0
        %5971 = vmatprep.subr.mxu0 0.0
        %5972 = vmatpush1.msra.mxu0 0.0
        %5973 = vmatprep.subr.mxu0 0.0
        %5974 = vmatpush1.msra.mxu0 0.0
        %5975 = vmatprep.subr.mxu0 0.0
        %5976 = vmatpush1.msra.mxu0 0.0
        %5977 = vmatprep.subr.mxu0 0.0
        %5978 = vmatpush1.msra.mxu0 0.0
        %5979 = vmatprep.subr.mxu0 0.0
        %5980 = vmatpush1.msra.mxu0 0.0
        %5981 = vmatprep.subr.mxu0 0.0
        %5982 = vmatpush1.msra.mxu0 0.0
        %5983 = vmatprep.subr.mxu0 0.0
        %v5984 = vand.u32 %v340, 4294901760
        %v5985 = vsub.f32 %v340, %v5984
        %5986 = vmatpush1.msra.mxu0 %v5985
        %5987 = vmatprep.subr.mxu0 0.0
        %5988 = vmatpush2.msra.mxu0 0.0
        %5989 = vmatprep.subr.mxu0 0.0
        %5990 = vmatpush2.msra.mxu0 0.0
        %5991 = vmatprep.subr.mxu0 0.0
        %5992 = vmatpush2.msra.mxu0 0.0
        %5993 = vmatprep.subr.mxu0 0.0
        %5994 = vmatpush2.msra.mxu0 0.0
        %5995 = vmatprep.subr.mxu0 0.0
        %5996 = vmatpush2.msra.mxu0 0.0
        %5997 = vmatprep.subr.mxu0 0.0
        %5998 = vmatpush2.msra.mxu0 0.0
        %5999 = vmatprep.subr.mxu0 0.0
        %6000 = vmatpush2.msra.mxu0 0.0
        %6001 = vmatprep.subr.mxu0 0.0
        %6002 = vmatpush2.msra.mxu0 0.0
        %6003 = vmatprep.subr.mxu0 0.0
        %6004 = vmatpush2.msra.mxu0 0.0
        %6005 = vmatprep.subr.mxu0 0.0
        %6006 = vmatpush2.msra.mxu0 0.0
        %6007 = vmatprep.subr.mxu0 0.0
        %6008 = vmatpush2.msra.mxu0 0.0
        %6009 = vmatprep.subr.mxu0 0.0
        %6010 = vmatpush2.msra.mxu0 0.0
        %6011 = vmatprep.subr.mxu0 0.0
        %6012 = vmatpush2.msra.mxu0 0.0
        %6013 = vmatprep.subr.mxu0 0.0
        %6014 = vmatpush2.msra.mxu0 0.0
        %6015 = vmatprep.subr.mxu0 0.0
        %6016 = vmatpush2.msra.mxu0 0.0
        %6017 = vmatprep.subr.mxu0 0.0
        %6018 = vmatpush2.msra.mxu0 0.0
        %6019 = vmatprep.mubr.f32.mxu0 0.0
        %v6020 = vand.u32 %v5799, 4294901760
        %v6021 = vsub.f32 %v5799, %v6020
        %6022 = vmatmul.mubr.f32.gmra.mxu0 %v6021
        %v6023 = vpop.f32.mrf.mxu0
        %v6024 = vadd.f32 %v5950, %v6023
        %v6025 = vpop.f32.mrf.mxu0
        %6026 = vdwg.mxu0
        %6027 = vmatprep.subr.mxu0 0.0
        %6028 = vmatpush1.msra.mxu0 0.0
        %6029 = vmatprep.subr.mxu0 0.0
        %6030 = vmatpush1.msra.mxu0 0.0
        %6031 = vmatprep.subr.mxu0 0.0
        %6032 = vmatpush1.msra.mxu0 0.0
        %6033 = vmatprep.subr.mxu0 0.0
        %6034 = vmatpush1.msra.mxu0 0.0
        %6035 = vmatprep.subr.mxu0 0.0
        %6036 = vmatpush1.msra.mxu0 0.0
        %6037 = vmatprep.subr.mxu0 0.0
        %6038 = vmatpush1.msra.mxu0 0.0
        %6039 = vmatprep.subr.mxu0 0.0
        %6040 = vmatpush1.msra.mxu0 0.0
        %6041 = vmatprep.subr.mxu0 0.0
        %6042 = vmatpush1.msra.mxu0 0.0
        %6043 = vmatprep.subr.mxu0 0.0
        %6044 = vmatpush1.msra.mxu0 0.0
        %6045 = vmatprep.subr.mxu0 0.0
        %6046 = vmatpush1.msra.mxu0 0.0
        %6047 = vmatprep.subr.mxu0 0.0
        %6048 = vmatpush1.msra.mxu0 0.0
        %6049 = vmatprep.subr.mxu0 0.0
        %6050 = vmatpush1.msra.mxu0 0.0
        %6051 = vmatprep.subr.mxu0 0.0
        %6052 = vmatpush1.msra.mxu0 0.0
        %6053 = vmatprep.subr.mxu0 0.0
        %6054 = vmatpush1.msra.mxu0 0.0
        %6055 = vmatprep.subr.mxu0 0.0
        %6056 = vmatpush1.msra.mxu0 0.0
        %6057 = vmatprep.subr.mxu0 0.0
        %v6058 = vand.u32 %v340, 4294901760
        %6059 = vmatpush1.msra.mxu0 %v6058
        %6060 = vmatprep.subr.mxu0 0.0
        %6061 = vmatpush2.msra.mxu0 0.0
        %6062 = vmatprep.subr.mxu0 0.0
        %6063 = vmatpush2.msra.mxu0 0.0
        %6064 = vmatprep.subr.mxu0 0.0
        %6065 = vmatpush2.msra.mxu0 0.0
        %6066 = vmatprep.subr.mxu0 0.0
        %6067 = vmatpush2.msra.mxu0 0.0
        %6068 = vmatprep.subr.mxu0 0.0
        %6069 = vmatpush2.msra.mxu0 0.0
        %6070 = vmatprep.subr.mxu0 0.0
        %6071 = vmatpush2.msra.mxu0 0.0
        %6072 = vmatprep.subr.mxu0 0.0
        %6073 = vmatpush2.msra.mxu0 0.0
        %6074 = vmatprep.subr.mxu0 0.0
        %6075 = vmatpush2.msra.mxu0 0.0
        %6076 = vmatprep.subr.mxu0 0.0
        %6077 = vmatpush2.msra.mxu0 0.0
        %6078 = vmatprep.subr.mxu0 0.0
        %6079 = vmatpush2.msra.mxu0 0.0
        %6080 = vmatprep.subr.mxu0 0.0
        %6081 = vmatpush2.msra.mxu0 0.0
        %6082 = vmatprep.subr.mxu0 0.0
        %6083 = vmatpush2.msra.mxu0 0.0
        %6084 = vmatprep.subr.mxu0 0.0
        %6085 = vmatpush2.msra.mxu0 0.0
        %6086 = vmatprep.subr.mxu0 0.0
        %6087 = vmatpush2.msra.mxu0 0.0
        %6088 = vmatprep.subr.mxu0 0.0
        %6089 = vmatpush2.msra.mxu0 0.0
        %6090 = vmatprep.subr.mxu0 0.0
        %6091 = vmatpush2.msra.mxu0 0.0
        %6092 = vmatprep.mubr.f32.mxu0 0.0
        %v6093 = vand.u32 %v5799, 4294901760
        %v6094 = vsub.f32 %v5799, %v6093
        %v6095 = vand.u32 %v6094, 4294901760
        %6096 = vmatmul.mubr.f32.gmra.mxu0 %v6095
        %v6097 = vpop.f32.mrf.mxu0
        %v6098 = vadd.f32 %v6024, %v6097
        %v6099 = vpop.f32.mrf.mxu0
        %6100 = vdwg.mxu0
        %6101 = vmatprep.subr.mxu0 0.0
        %6102 = vmatpush1.msra.mxu0 0.0
        %6103 = vmatprep.subr.mxu0 0.0
        %6104 = vmatpush1.msra.mxu0 0.0
        %6105 = vmatprep.subr.mxu0 0.0
        %6106 = vmatpush1.msra.mxu0 0.0
        %6107 = vmatprep.subr.mxu0 0.0
        %6108 = vmatpush1.msra.mxu0 0.0
        %6109 = vmatprep.subr.mxu0 0.0
        %6110 = vmatpush1.msra.mxu0 0.0
        %6111 = vmatprep.subr.mxu0 0.0
        %6112 = vmatpush1.msra.mxu0 0.0
        %6113 = vmatprep.subr.mxu0 0.0
        %6114 = vmatpush1.msra.mxu0 0.0
        %6115 = vmatprep.subr.mxu0 0.0
        %6116 = vmatpush1.msra.mxu0 0.0
        %6117 = vmatprep.subr.mxu0 0.0
        %6118 = vmatpush1.msra.mxu0 0.0
        %6119 = vmatprep.subr.mxu0 0.0
        %6120 = vmatpush1.msra.mxu0 0.0
        %6121 = vmatprep.subr.mxu0 0.0
        %6122 = vmatpush1.msra.mxu0 0.0
        %6123 = vmatprep.subr.mxu0 0.0
        %6124 = vmatpush1.msra.mxu0 0.0
        %6125 = vmatprep.subr.mxu0 0.0
        %6126 = vmatpush1.msra.mxu0 0.0
        %6127 = vmatprep.subr.mxu0 0.0
        %6128 = vmatpush1.msra.mxu0 0.0
        %6129 = vmatprep.subr.mxu0 0.0
        %6130 = vmatpush1.msra.mxu0 0.0
        %6131 = vmatprep.subr.mxu0 0.0
        %v6132 = vand.u32 %v340, 4294901760
        %v6133 = vsub.f32 %v340, %v6132
        %v6134 = vand.u32 %v6133, 4294901760
        %6135 = vmatpush1.msra.mxu0 %v6134
        %6136 = vmatprep.subr.mxu0 0.0
        %6137 = vmatpush2.msra.mxu0 0.0
        %6138 = vmatprep.subr.mxu0 0.0
        %6139 = vmatpush2.msra.mxu0 0.0
        %6140 = vmatprep.subr.mxu0 0.0
        %6141 = vmatpush2.msra.mxu0 0.0
        %6142 = vmatprep.subr.mxu0 0.0
        %6143 = vmatpush2.msra.mxu0 0.0
        %6144 = vmatprep.subr.mxu0 0.0
        %6145 = vmatpush2.msra.mxu0 0.0
        %6146 = vmatprep.subr.mxu0 0.0
        %6147 = vmatpush2.msra.mxu0 0.0
        %6148 = vmatprep.subr.mxu0 0.0
        %6149 = vmatpush2.msra.mxu0 0.0
        %6150 = vmatprep.subr.mxu0 0.0
        %6151 = vmatpush2.msra.mxu0 0.0
        %6152 = vmatprep.subr.mxu0 0.0
        %6153 = vmatpush2.msra.mxu0 0.0
        %6154 = vmatprep.subr.mxu0 0.0
        %6155 = vmatpush2.msra.mxu0 0.0
        %6156 = vmatprep.subr.mxu0 0.0
        %6157 = vmatpush2.msra.mxu0 0.0
        %6158 = vmatprep.subr.mxu0 0.0
        %6159 = vmatpush2.msra.mxu0 0.0
        %6160 = vmatprep.subr.mxu0 0.0
        %6161 = vmatpush2.msra.mxu0 0.0
        %6162 = vmatprep.subr.mxu0 0.0
        %6163 = vmatpush2.msra.mxu0 0.0
        %6164 = vmatprep.subr.mxu0 0.0
        %6165 = vmatpush2.msra.mxu0 0.0
        %6166 = vmatprep.subr.mxu0 0.0
        %6167 = vmatpush2.msra.mxu0 0.0
        %6168 = vmatprep.mubr.f32.mxu0 0.0
        %v6169 = vand.u32 %v5799, 4294901760
        %6170 = vmatmul.mubr.f32.gmra.mxu0 %v6169
        %v6171 = vpop.f32.mrf.mxu0
        %v6172 = vadd.f32 %v6098, %v6171
        %v6173 = vpop.f32.mrf.mxu0
        %6174 = vdwg.mxu0
        %6175 = vmatprep.subr.mxu0 0.0
        %6176 = vmatpush1.msra.mxu0 0.0
        %6177 = vmatprep.subr.mxu0 0.0
        %6178 = vmatpush1.msra.mxu0 0.0
        %6179 = vmatprep.subr.mxu0 0.0
        %6180 = vmatpush1.msra.mxu0 0.0
        %6181 = vmatprep.subr.mxu0 0.0
        %6182 = vmatpush1.msra.mxu0 0.0
        %6183 = vmatprep.subr.mxu0 0.0
        %6184 = vmatpush1.msra.mxu0 0.0
        %6185 = vmatprep.subr.mxu0 0.0
        %6186 = vmatpush1.msra.mxu0 0.0
        %6187 = vmatprep.subr.mxu0 0.0
        %6188 = vmatpush1.msra.mxu0 0.0
        %6189 = vmatprep.subr.mxu0 0.0
        %6190 = vmatpush1.msra.mxu0 0.0
        %6191 = vmatprep.subr.mxu0 0.0
        %6192 = vmatpush1.msra.mxu0 0.0
        %6193 = vmatprep.subr.mxu0 0.0
        %6194 = vmatpush1.msra.mxu0 0.0
        %6195 = vmatprep.subr.mxu0 0.0
        %6196 = vmatpush1.msra.mxu0 0.0
        %6197 = vmatprep.subr.mxu0 0.0
        %6198 = vmatpush1.msra.mxu0 0.0
        %6199 = vmatprep.subr.mxu0 0.0
        %6200 = vmatpush1.msra.mxu0 0.0
        %6201 = vmatprep.subr.mxu0 0.0
        %6202 = vmatpush1.msra.mxu0 0.0
        %6203 = vmatprep.subr.mxu0 0.0
        %6204 = vmatpush1.msra.mxu0 0.0
        %6205 = vmatprep.subr.mxu0 0.0
        %v6206 = vand.u32 %v340, 4294901760
        %6207 = vmatpush1.msra.mxu0 %v6206
        %6208 = vmatprep.subr.mxu0 0.0
        %6209 = vmatpush2.msra.mxu0 0.0
        %6210 = vmatprep.subr.mxu0 0.0
        %6211 = vmatpush2.msra.mxu0 0.0
        %6212 = vmatprep.subr.mxu0 0.0
        %6213 = vmatpush2.msra.mxu0 0.0
        %6214 = vmatprep.subr.mxu0 0.0
        %6215 = vmatpush2.msra.mxu0 0.0
        %6216 = vmatprep.subr.mxu0 0.0
        %6217 = vmatpush2.msra.mxu0 0.0
        %6218 = vmatprep.subr.mxu0 0.0
        %6219 = vmatpush2.msra.mxu0 0.0
        %6220 = vmatprep.subr.mxu0 0.0
        %6221 = vmatpush2.msra.mxu0 0.0
        %6222 = vmatprep.subr.mxu0 0.0
        %6223 = vmatpush2.msra.mxu0 0.0
        %6224 = vmatprep.subr.mxu0 0.0
        %6225 = vmatpush2.msra.mxu0 0.0
        %6226 = vmatprep.subr.mxu0 0.0
        %6227 = vmatpush2.msra.mxu0 0.0
        %6228 = vmatprep.subr.mxu0 0.0
        %6229 = vmatpush2.msra.mxu0 0.0
        %6230 = vmatprep.subr.mxu0 0.0
        %6231 = vmatpush2.msra.mxu0 0.0
        %6232 = vmatprep.subr.mxu0 0.0
        %6233 = vmatpush2.msra.mxu0 0.0
        %6234 = vmatprep.subr.mxu0 0.0
        %6235 = vmatpush2.msra.mxu0 0.0
        %6236 = vmatprep.subr.mxu0 0.0
        %6237 = vmatpush2.msra.mxu0 0.0
        %6238 = vmatprep.subr.mxu0 0.0
        %6239 = vmatpush2.msra.mxu0 0.0
        %6240 = vmatprep.mubr.f32.mxu0 0.0
        %v6241 = vand.u32 %v5799, 4294901760
        %6242 = vmatmul.mubr.f32.gmra.mxu0 %v6241
        %v6243 = vpop.f32.mrf.mxu0
        %v6244 = vadd.f32 %v6172, %v6243
        %v6245 = vpop.f32.mrf.mxu0
        %6246 = vdwg.mxu0
        %6247 = vmatprep.subr.mxu0 0.0
        %6248 = vmatpush1.msra.mxu0 0.0
        %6249 = vmatprep.subr.mxu0 0.0
        %6250 = vmatpush1.msra.mxu0 0.0
        %6251 = vmatprep.subr.mxu0 0.0
        %6252 = vmatpush1.msra.mxu0 0.0
        %6253 = vmatprep.subr.mxu0 0.0
        %6254 = vmatpush1.msra.mxu0 0.0
        %6255 = vmatprep.subr.mxu0 0.0
        %6256 = vmatpush1.msra.mxu0 0.0
        %6257 = vmatprep.subr.mxu0 0.0
        %6258 = vmatpush1.msra.mxu0 0.0
        %6259 = vmatprep.subr.mxu0 0.0
        %6260 = vmatpush1.msra.mxu0 0.0
        %6261 = vmatprep.subr.mxu0 0.0
        %6262 = vmatpush1.msra.mxu0 0.0
        %6263 = vmatprep.subr.mxu0 0.0
        %6264 = vmatpush1.msra.mxu0 0.0
        %6265 = vmatprep.subr.mxu0 0.0
        %6266 = vmatpush1.msra.mxu0 0.0
        %6267 = vmatprep.subr.mxu0 0.0
        %6268 = vmatpush1.msra.mxu0 0.0
        %6269 = vmatprep.subr.mxu0 0.0
        %6270 = vmatpush1.msra.mxu0 0.0
        %6271 = vmatprep.subr.mxu0 0.0
        %6272 = vmatpush1.msra.mxu0 0.0
        %6273 = vmatprep.subr.mxu0 0.0
        %6274 = vmatpush1.msra.mxu0 0.0
        %6275 = vmatprep.subr.mxu0 0.0
        %6276 = vmatpush1.msra.mxu0 0.0
        %6277 = vmatprep.subr.mxu0 0.0
        %v6278 = vand.u32 %v6244, 4294901760
        %6279 = vmatpush1.msra.mxu0 %v6278
        %6280 = vmatprep.subr.mxu0 0.0
        %6281 = vmatpush2.msra.mxu0 0.0
        %6282 = vmatprep.subr.mxu0 0.0
        %6283 = vmatpush2.msra.mxu0 0.0
        %6284 = vmatprep.subr.mxu0 0.0
        %6285 = vmatpush2.msra.mxu0 0.0
        %6286 = vmatprep.subr.mxu0 0.0
        %6287 = vmatpush2.msra.mxu0 0.0
        %6288 = vmatprep.subr.mxu0 0.0
        %6289 = vmatpush2.msra.mxu0 0.0
        %6290 = vmatprep.subr.mxu0 0.0
        %6291 = vmatpush2.msra.mxu0 0.0
        %6292 = vmatprep.subr.mxu0 0.0
        %6293 = vmatpush2.msra.mxu0 0.0
        %6294 = vmatprep.subr.mxu0 0.0
        %6295 = vmatpush2.msra.mxu0 0.0
        %6296 = vmatprep.subr.mxu0 0.0
        %6297 = vmatpush2.msra.mxu0 0.0
        %6298 = vmatprep.subr.mxu0 0.0
        %6299 = vmatpush2.msra.mxu0 0.0
        %6300 = vmatprep.subr.mxu0 0.0
        %6301 = vmatpush2.msra.mxu0 0.0
        %6302 = vmatprep.subr.mxu0 0.0
        %6303 = vmatpush2.msra.mxu0 0.0
        %6304 = vmatprep.subr.mxu0 0.0
        %6305 = vmatpush2.msra.mxu0 0.0
        %6306 = vmatprep.subr.mxu0 0.0
        %6307 = vmatpush2.msra.mxu0 0.0
        %6308 = vmatprep.subr.mxu0 0.0
        %6309 = vmatpush2.msra.mxu0 0.0
        %6310 = vmatprep.subr.mxu0 0.0
        %6311 = vmatpush2.msra.mxu0 0.0
        %6312 = vmatprep.mubr.f32.mxu0 0.0
        %v6313 = vand.u32 %v796, 4294901760
        %v6314 = vsub.f32 %v796, %v6313
        %v6315 = vand.u32 %v6314, 4294901760
        %v6316 = vsub.f32 %v6314, %v6315
        %v6317 = vand.u32 %v6316, 4294901760
        %6318 = vmatmul.mubr.f32.gmra.mxu0 %v6317
        %v6319 = vpop.f32.mrf.mxu0
        %v6320 = vadd.f32 0.0, %v6319
        %v6321 = vpop.f32.mrf.mxu0
        %6322 = vdwg.mxu0
        %6323 = vmatprep.subr.mxu0 0.0
        %6324 = vmatpush1.msra.mxu0 0.0
        %6325 = vmatprep.subr.mxu0 0.0
        %6326 = vmatpush1.msra.mxu0 0.0
        %6327 = vmatprep.subr.mxu0 0.0
        %6328 = vmatpush1.msra.mxu0 0.0
        %6329 = vmatprep.subr.mxu0 0.0
        %6330 = vmatpush1.msra.mxu0 0.0
        %6331 = vmatprep.subr.mxu0 0.0
        %6332 = vmatpush1.msra.mxu0 0.0
        %6333 = vmatprep.subr.mxu0 0.0
        %6334 = vmatpush1.msra.mxu0 0.0
        %6335 = vmatprep.subr.mxu0 0.0
        %6336 = vmatpush1.msra.mxu0 0.0
        %6337 = vmatprep.subr.mxu0 0.0
        %6338 = vmatpush1.msra.mxu0 0.0
        %6339 = vmatprep.subr.mxu0 0.0
        %6340 = vmatpush1.msra.mxu0 0.0
        %6341 = vmatprep.subr.mxu0 0.0
        %6342 = vmatpush1.msra.mxu0 0.0
        %6343 = vmatprep.subr.mxu0 0.0
        %6344 = vmatpush1.msra.mxu0 0.0
        %6345 = vmatprep.subr.mxu0 0.0
        %6346 = vmatpush1.msra.mxu0 0.0
        %6347 = vmatprep.subr.mxu0 0.0
        %6348 = vmatpush1.msra.mxu0 0.0
        %6349 = vmatprep.subr.mxu0 0.0
        %6350 = vmatpush1.msra.mxu0 0.0
        %6351 = vmatprep.subr.mxu0 0.0
        %6352 = vmatpush1.msra.mxu0 0.0
        %6353 = vmatprep.subr.mxu0 0.0
        %v6354 = vand.u32 %v6244, 4294901760
        %v6355 = vsub.f32 %v6244, %v6354
        %v6356 = vand.u32 %v6355, 4294901760
        %v6357 = vsub.f32 %v6355, %v6356
        %v6358 = vand.u32 %v6357, 4294901760
        %6359 = vmatpush1.msra.mxu0 %v6358
        %6360 = vmatprep.subr.mxu0 0.0
        %6361 = vmatpush2.msra.mxu0 0.0
        %6362 = vmatprep.subr.mxu0 0.0
        %6363 = vmatpush2.msra.mxu0 0.0
        %6364 = vmatprep.subr.mxu0 0.0
        %6365 = vmatpush2.msra.mxu0 0.0
        %6366 = vmatprep.subr.mxu0 0.0
        %6367 = vmatpush2.msra.mxu0 0.0
        %6368 = vmatprep.subr.mxu0 0.0
        %6369 = vmatpush2.msra.mxu0 0.0
        %6370 = vmatprep.subr.mxu0 0.0
        %6371 = vmatpush2.msra.mxu0 0.0
        %6372 = vmatprep.subr.mxu0 0.0
        %6373 = vmatpush2.msra.mxu0 0.0
        %6374 = vmatprep.subr.mxu0 0.0
        %6375 = vmatpush2.msra.mxu0 0.0
        %6376 = vmatprep.subr.mxu0 0.0
        %6377 = vmatpush2.msra.mxu0 0.0
        %6378 = vmatprep.subr.mxu0 0.0
        %6379 = vmatpush2.msra.mxu0 0.0
        %6380 = vmatprep.subr.mxu0 0.0
        %6381 = vmatpush2.msra.mxu0 0.0
        %6382 = vmatprep.subr.mxu0 0.0
        %6383 = vmatpush2.msra.mxu0 0.0
        %6384 = vmatprep.subr.mxu0 0.0
        %6385 = vmatpush2.msra.mxu0 0.0
        %6386 = vmatprep.subr.mxu0 0.0
        %6387 = vmatpush2.msra.mxu0 0.0
        %6388 = vmatprep.subr.mxu0 0.0
        %6389 = vmatpush2.msra.mxu0 0.0
        %6390 = vmatprep.subr.mxu0 0.0
        %6391 = vmatpush2.msra.mxu0 0.0
        %6392 = vmatprep.mubr.f32.mxu0 0.0
        %v6393 = vand.u32 %v796, 4294901760
        %6394 = vmatmul.mubr.f32.gmra.mxu0 %v6393
        %v6395 = vpop.f32.mrf.mxu0
        %v6396 = vadd.f32 %v6320, %v6395
        %v6397 = vpop.f32.mrf.mxu0
        %6398 = vdwg.mxu0
        %6399 = vmatprep.subr.mxu0 0.0
        %6400 = vmatpush1.msra.mxu0 0.0
        %6401 = vmatprep.subr.mxu0 0.0
        %6402 = vmatpush1.msra.mxu0 0.0
        %6403 = vmatprep.subr.mxu0 0.0
        %6404 = vmatpush1.msra.mxu0 0.0
        %6405 = vmatprep.subr.mxu0 0.0
        %6406 = vmatpush1.msra.mxu0 0.0
        %6407 = vmatprep.subr.mxu0 0.0
        %6408 = vmatpush1.msra.mxu0 0.0
        %6409 = vmatprep.subr.mxu0 0.0
        %6410 = vmatpush1.msra.mxu0 0.0
        %6411 = vmatprep.subr.mxu0 0.0
        %6412 = vmatpush1.msra.mxu0 0.0
        %6413 = vmatprep.subr.mxu0 0.0
        %6414 = vmatpush1.msra.mxu0 0.0
        %6415 = vmatprep.subr.mxu0 0.0
        %6416 = vmatpush1.msra.mxu0 0.0
        %6417 = vmatprep.subr.mxu0 0.0
        %6418 = vmatpush1.msra.mxu0 0.0
        %6419 = vmatprep.subr.mxu0 0.0
        %6420 = vmatpush1.msra.mxu0 0.0
        %6421 = vmatprep.subr.mxu0 0.0
        %6422 = vmatpush1.msra.mxu0 0.0
        %6423 = vmatprep.subr.mxu0 0.0
        %6424 = vmatpush1.msra.mxu0 0.0
        %6425 = vmatprep.subr.mxu0 0.0
        %6426 = vmatpush1.msra.mxu0 0.0
        %6427 = vmatprep.subr.mxu0 0.0
        %6428 = vmatpush1.msra.mxu0 0.0
        %6429 = vmatprep.subr.mxu0 0.0
        %v6430 = vand.u32 %v6244, 4294901760
        %v6431 = vsub.f32 %v6244, %v6430
        %6432 = vmatpush1.msra.mxu0 %v6431
        %6433 = vmatprep.subr.mxu0 0.0
        %6434 = vmatpush2.msra.mxu0 0.0
        %6435 = vmatprep.subr.mxu0 0.0
        %6436 = vmatpush2.msra.mxu0 0.0
        %6437 = vmatprep.subr.mxu0 0.0
        %6438 = vmatpush2.msra.mxu0 0.0
        %6439 = vmatprep.subr.mxu0 0.0
        %6440 = vmatpush2.msra.mxu0 0.0
        %6441 = vmatprep.subr.mxu0 0.0
        %6442 = vmatpush2.msra.mxu0 0.0
        %6443 = vmatprep.subr.mxu0 0.0
        %6444 = vmatpush2.msra.mxu0 0.0
        %6445 = vmatprep.subr.mxu0 0.0
        %6446 = vmatpush2.msra.mxu0 0.0
        %6447 = vmatprep.subr.mxu0 0.0
        %6448 = vmatpush2.msra.mxu0 0.0
        %6449 = vmatprep.subr.mxu0 0.0
        %6450 = vmatpush2.msra.mxu0 0.0
        %6451 = vmatprep.subr.mxu0 0.0
        %6452 = vmatpush2.msra.mxu0 0.0
        %6453 = vmatprep.subr.mxu0 0.0
        %6454 = vmatpush2.msra.mxu0 0.0
        %6455 = vmatprep.subr.mxu0 0.0
        %6456 = vmatpush2.msra.mxu0 0.0
        %6457 = vmatprep.subr.mxu0 0.0
        %6458 = vmatpush2.msra.mxu0 0.0
        %6459 = vmatprep.subr.mxu0 0.0
        %6460 = vmatpush2.msra.mxu0 0.0
        %6461 = vmatprep.subr.mxu0 0.0
        %6462 = vmatpush2.msra.mxu0 0.0
        %6463 = vmatprep.subr.mxu0 0.0
        %6464 = vmatpush2.msra.mxu0 0.0
        %6465 = vmatprep.mubr.f32.mxu0 0.0
        %v6466 = vand.u32 %v796, 4294901760
        %v6467 = vsub.f32 %v796, %v6466
        %6468 = vmatmul.mubr.f32.gmra.mxu0 %v6467
        %v6469 = vpop.f32.mrf.mxu0
        %v6470 = vadd.f32 %v6396, %v6469
        %v6471 = vpop.f32.mrf.mxu0
        %6472 = vdwg.mxu0
        %6473 = vmatprep.subr.mxu0 0.0
        %6474 = vmatpush1.msra.mxu0 0.0
        %6475 = vmatprep.subr.mxu0 0.0
        %6476 = vmatpush1.msra.mxu0 0.0
        %6477 = vmatprep.subr.mxu0 0.0
        %6478 = vmatpush1.msra.mxu0 0.0
        %6479 = vmatprep.subr.mxu0 0.0
        %6480 = vmatpush1.msra.mxu0 0.0
        %6481 = vmatprep.subr.mxu0 0.0
        %6482 = vmatpush1.msra.mxu0 0.0
        %6483 = vmatprep.subr.mxu0 0.0
        %6484 = vmatpush1.msra.mxu0 0.0
        %6485 = vmatprep.subr.mxu0 0.0
        %6486 = vmatpush1.msra.mxu0 0.0
        %6487 = vmatprep.subr.mxu0 0.0
        %6488 = vmatpush1.msra.mxu0 0.0
        %6489 = vmatprep.subr.mxu0 0.0
        %6490 = vmatpush1.msra.mxu0 0.0
        %6491 = vmatprep.subr.mxu0 0.0
        %6492 = vmatpush1.msra.mxu0 0.0
        %6493 = vmatprep.subr.mxu0 0.0
        %6494 = vmatpush1.msra.mxu0 0.0
        %6495 = vmatprep.subr.mxu0 0.0
        %6496 = vmatpush1.msra.mxu0 0.0
        %6497 = vmatprep.subr.mxu0 0.0
        %6498 = vmatpush1.msra.mxu0 0.0
        %6499 = vmatprep.subr.mxu0 0.0
        %6500 = vmatpush1.msra.mxu0 0.0
        %6501 = vmatprep.subr.mxu0 0.0
        %6502 = vmatpush1.msra.mxu0 0.0
        %6503 = vmatprep.subr.mxu0 0.0
        %v6504 = vand.u32 %v6244, 4294901760
        %6505 = vmatpush1.msra.mxu0 %v6504
        %6506 = vmatprep.subr.mxu0 0.0
        %6507 = vmatpush2.msra.mxu0 0.0
        %6508 = vmatprep.subr.mxu0 0.0
        %6509 = vmatpush2.msra.mxu0 0.0
        %6510 = vmatprep.subr.mxu0 0.0
        %6511 = vmatpush2.msra.mxu0 0.0
        %6512 = vmatprep.subr.mxu0 0.0
        %6513 = vmatpush2.msra.mxu0 0.0
        %6514 = vmatprep.subr.mxu0 0.0
        %6515 = vmatpush2.msra.mxu0 0.0
        %6516 = vmatprep.subr.mxu0 0.0
        %6517 = vmatpush2.msra.mxu0 0.0
        %6518 = vmatprep.subr.mxu0 0.0
        %6519 = vmatpush2.msra.mxu0 0.0
        %6520 = vmatprep.subr.mxu0 0.0
        %6521 = vmatpush2.msra.mxu0 0.0
        %6522 = vmatprep.subr.mxu0 0.0
        %6523 = vmatpush2.msra.mxu0 0.0
        %6524 = vmatprep.subr.mxu0 0.0
        %6525 = vmatpush2.msra.mxu0 0.0
        %6526 = vmatprep.subr.mxu0 0.0
        %6527 = vmatpush2.msra.mxu0 0.0
        %6528 = vmatprep.subr.mxu0 0.0
        %6529 = vmatpush2.msra.mxu0 0.0
        %6530 = vmatprep.subr.mxu0 0.0
        %6531 = vmatpush2.msra.mxu0 0.0
        %6532 = vmatprep.subr.mxu0 0.0
        %6533 = vmatpush2.msra.mxu0 0.0
        %6534 = vmatprep.subr.mxu0 0.0
        %6535 = vmatpush2.msra.mxu0 0.0
        %6536 = vmatprep.subr.mxu0 0.0
        %6537 = vmatpush2.msra.mxu0 0.0
        %6538 = vmatprep.mubr.f32.mxu0 0.0
        %v6539 = vand.u32 %v796, 4294901760
        %v6540 = vsub.f32 %v796, %v6539
        %v6541 = vand.u32 %v6540, 4294901760
        %6542 = vmatmul.mubr.f32.gmra.mxu0 %v6541
        %v6543 = vpop.f32.mrf.mxu0
        %v6544 = vadd.f32 %v6470, %v6543
        %v6545 = vpop.f32.mrf.mxu0
        %6546 = vdwg.mxu0
        %6547 = vmatprep.subr.mxu0 0.0
        %6548 = vmatpush1.msra.mxu0 0.0
        %6549 = vmatprep.subr.mxu0 0.0
        %6550 = vmatpush1.msra.mxu0 0.0
        %6551 = vmatprep.subr.mxu0 0.0
        %6552 = vmatpush1.msra.mxu0 0.0
        %6553 = vmatprep.subr.mxu0 0.0
        %6554 = vmatpush1.msra.mxu0 0.0
        %6555 = vmatprep.subr.mxu0 0.0
        %6556 = vmatpush1.msra.mxu0 0.0
        %6557 = vmatprep.subr.mxu0 0.0
        %6558 = vmatpush1.msra.mxu0 0.0
        %6559 = vmatprep.subr.mxu0 0.0
        %6560 = vmatpush1.msra.mxu0 0.0
        %6561 = vmatprep.subr.mxu0 0.0
        %6562 = vmatpush1.msra.mxu0 0.0
        %6563 = vmatprep.subr.mxu0 0.0
        %6564 = vmatpush1.msra.mxu0 0.0
        %6565 = vmatprep.subr.mxu0 0.0
        %6566 = vmatpush1.msra.mxu0 0.0
        %6567 = vmatprep.subr.mxu0 0.0
        %6568 = vmatpush1.msra.mxu0 0.0
        %6569 = vmatprep.subr.mxu0 0.0
        %6570 = vmatpush1.msra.mxu0 0.0
        %6571 = vmatprep.subr.mxu0 0.0
        %6572 = vmatpush1.msra.mxu0 0.0
        %6573 = vmatprep.subr.mxu0 0.0
        %6574 = vmatpush1.msra.mxu0 0.0
        %6575 = vmatprep.subr.mxu0 0.0
        %6576 = vmatpush1.msra.mxu0 0.0
        %6577 = vmatprep.subr.mxu0 0.0
        %v6578 = vand.u32 %v6244, 4294901760
        %v6579 = vsub.f32 %v6244, %v6578
        %v6580 = vand.u32 %v6579, 4294901760
        %6581 = vmatpush1.msra.mxu0 %v6580
        %6582 = vmatprep.subr.mxu0 0.0
        %6583 = vmatpush2.msra.mxu0 0.0
        %6584 = vmatprep.subr.mxu0 0.0
        %6585 = vmatpush2.msra.mxu0 0.0
        %6586 = vmatprep.subr.mxu0 0.0
        %6587 = vmatpush2.msra.mxu0 0.0
        %6588 = vmatprep.subr.mxu0 0.0
        %6589 = vmatpush2.msra.mxu0 0.0
        %6590 = vmatprep.subr.mxu0 0.0
        %6591 = vmatpush2.msra.mxu0 0.0
        %6592 = vmatprep.subr.mxu0 0.0
        %6593 = vmatpush2.msra.mxu0 0.0
        %6594 = vmatprep.subr.mxu0 0.0
        %6595 = vmatpush2.msra.mxu0 0.0
        %6596 = vmatprep.subr.mxu0 0.0
        %6597 = vmatpush2.msra.mxu0 0.0
        %6598 = vmatprep.subr.mxu0 0.0
        %6599 = vmatpush2.msra.mxu0 0.0
        %6600 = vmatprep.subr.mxu0 0.0
        %6601 = vmatpush2.msra.mxu0 0.0
        %6602 = vmatprep.subr.mxu0 0.0
        %6603 = vmatpush2.msra.mxu0 0.0
        %6604 = vmatprep.subr.mxu0 0.0
        %6605 = vmatpush2.msra.mxu0 0.0
        %6606 = vmatprep.subr.mxu0 0.0
        %6607 = vmatpush2.msra.mxu0 0.0
        %6608 = vmatprep.subr.mxu0 0.0
        %6609 = vmatpush2.msra.mxu0 0.0
        %6610 = vmatprep.subr.mxu0 0.0
        %6611 = vmatpush2.msra.mxu0 0.0
        %6612 = vmatprep.subr.mxu0 0.0
        %6613 = vmatpush2.msra.mxu0 0.0
        %6614 = vmatprep.mubr.f32.mxu0 0.0
        %v6615 = vand.u32 %v796, 4294901760
        %6616 = vmatmul.mubr.f32.gmra.mxu0 %v6615
        %v6617 = vpop.f32.mrf.mxu0
        %v6618 = vadd.f32 %v6544, %v6617
        %v6619 = vpop.f32.mrf.mxu0
        %6620 = vdwg.mxu0
        %6621 = vmatprep.subr.mxu0 0.0
        %6622 = vmatpush1.msra.mxu0 0.0
        %6623 = vmatprep.subr.mxu0 0.0
        %6624 = vmatpush1.msra.mxu0 0.0
        %6625 = vmatprep.subr.mxu0 0.0
        %6626 = vmatpush1.msra.mxu0 0.0
        %6627 = vmatprep.subr.mxu0 0.0
        %6628 = vmatpush1.msra.mxu0 0.0
        %6629 = vmatprep.subr.mxu0 0.0
        %6630 = vmatpush1.msra.mxu0 0.0
        %6631 = vmatprep.subr.mxu0 0.0
        %6632 = vmatpush1.msra.mxu0 0.0
        %6633 = vmatprep.subr.mxu0 0.0
        %6634 = vmatpush1.msra.mxu0 0.0
        %6635 = vmatprep.subr.mxu0 0.0
        %6636 = vmatpush1.msra.mxu0 0.0
        %6637 = vmatprep.subr.mxu0 0.0
        %6638 = vmatpush1.msra.mxu0 0.0
        %6639 = vmatprep.subr.mxu0 0.0
        %6640 = vmatpush1.msra.mxu0 0.0
        %6641 = vmatprep.subr.mxu0 0.0
        %6642 = vmatpush1.msra.mxu0 0.0
        %6643 = vmatprep.subr.mxu0 0.0
        %6644 = vmatpush1.msra.mxu0 0.0
        %6645 = vmatprep.subr.mxu0 0.0
        %6646 = vmatpush1.msra.mxu0 0.0
        %6647 = vmatprep.subr.mxu0 0.0
        %6648 = vmatpush1.msra.mxu0 0.0
        %6649 = vmatprep.subr.mxu0 0.0
        %6650 = vmatpush1.msra.mxu0 0.0
        %6651 = vmatprep.subr.mxu0 0.0
        %v6652 = vand.u32 %v6244, 4294901760
        %6653 = vmatpush1.msra.mxu0 %v6652
        %6654 = vmatprep.subr.mxu0 0.0
        %6655 = vmatpush2.msra.mxu0 0.0
        %6656 = vmatprep.subr.mxu0 0.0
        %6657 = vmatpush2.msra.mxu0 0.0
        %6658 = vmatprep.subr.mxu0 0.0
        %6659 = vmatpush2.msra.mxu0 0.0
        %6660 = vmatprep.subr.mxu0 0.0
        %6661 = vmatpush2.msra.mxu0 0.0
        %6662 = vmatprep.subr.mxu0 0.0
        %6663 = vmatpush2.msra.mxu0 0.0
        %6664 = vmatprep.subr.mxu0 0.0
        %6665 = vmatpush2.msra.mxu0 0.0
        %6666 = vmatprep.subr.mxu0 0.0
        %6667 = vmatpush2.msra.mxu0 0.0
        %6668 = vmatprep.subr.mxu0 0.0
        %6669 = vmatpush2.msra.mxu0 0.0
        %6670 = vmatprep.subr.mxu0 0.0
        %6671 = vmatpush2.msra.mxu0 0.0
        %6672 = vmatprep.subr.mxu0 0.0
        %6673 = vmatpush2.msra.mxu0 0.0
        %6674 = vmatprep.subr.mxu0 0.0
        %6675 = vmatpush2.msra.mxu0 0.0
        %6676 = vmatprep.subr.mxu0 0.0
        %6677 = vmatpush2.msra.mxu0 0.0
        %6678 = vmatprep.subr.mxu0 0.0
        %6679 = vmatpush2.msra.mxu0 0.0
        %6680 = vmatprep.subr.mxu0 0.0
        %6681 = vmatpush2.msra.mxu0 0.0
        %6682 = vmatprep.subr.mxu0 0.0
        %6683 = vmatpush2.msra.mxu0 0.0
        %6684 = vmatprep.subr.mxu0 0.0
        %6685 = vmatpush2.msra.mxu0 0.0
        %6686 = vmatprep.mubr.f32.mxu0 0.0
        %v6687 = vand.u32 %v796, 4294901760
        %6688 = vmatmul.mubr.f32.gmra.mxu0 %v6687
        %v6689 = vpop.f32.mrf.mxu0
        %v6690 = vadd.f32 %v6618, %v6689
        %v6691 = vpop.f32.mrf.mxu0
        %6692 = vdwg.mxu0
        %v6693 = vld [vmem:[%s300 + $0x8] sm:$0xff]
        %6695 = vrot.lane.b32.xlu0 %v6690, 16
        %v6696 = vpop.permute.xlu0 %6695
        %v6698 = vsel %vm1249, %v6690, %v6696
        %6699 = vmatprep.subr.mxu0 0.0
        %6700 = vmatpush1.msra.mxu0 0.0
        %6701 = vmatprep.subr.mxu0 0.0
        %6702 = vmatpush1.msra.mxu0 0.0
        %6703 = vmatprep.subr.mxu0 0.0
        %6704 = vmatpush1.msra.mxu0 0.0
        %6705 = vmatprep.subr.mxu0 0.0
        %6706 = vmatpush1.msra.mxu0 0.0
        %6707 = vmatprep.subr.mxu0 0.0
        %6708 = vmatpush1.msra.mxu0 0.0
        %6709 = vmatprep.subr.mxu0 0.0
        %6710 = vmatpush1.msra.mxu0 0.0
        %6711 = vmatprep.subr.mxu0 0.0
        %6712 = vmatpush1.msra.mxu0 0.0
        %6713 = vmatprep.subr.mxu0 0.0
        %6714 = vmatpush1.msra.mxu0 0.0
        %6715 = vmatprep.subr.mxu0 0.0
        %6716 = vmatpush1.msra.mxu0 0.0
        %6717 = vmatprep.subr.mxu0 0.0
        %6718 = vmatpush1.msra.mxu0 0.0
        %6719 = vmatprep.subr.mxu0 0.0
        %6720 = vmatpush1.msra.mxu0 0.0
        %6721 = vmatprep.subr.mxu0 0.0
        %6722 = vmatpush1.msra.mxu0 0.0
        %6723 = vmatprep.subr.mxu0 0.0
        %6724 = vmatpush1.msra.mxu0 0.0
        %6725 = vmatprep.subr.mxu0 0.0
        %6726 = vmatpush1.msra.mxu0 0.0
        %6727 = vmatprep.subr.mxu0 0.0
        %6728 = vmatpush1.msra.mxu0 0.0
        %6729 = vmatprep.subr.mxu0 0.0
        %v6730 = vand.u32 %v6693, 4294901760
        %6731 = vmatpush1.msra.mxu0 %v6730
        %6732 = vmatprep.subr.mxu0 0.0
        %6733 = vmatpush2.msra.mxu0 0.0
        %6734 = vmatprep.subr.mxu0 0.0
        %6735 = vmatpush2.msra.mxu0 0.0
        %6736 = vmatprep.subr.mxu0 0.0
        %6737 = vmatpush2.msra.mxu0 0.0
        %6738 = vmatprep.subr.mxu0 0.0
        %6739 = vmatpush2.msra.mxu0 0.0
        %6740 = vmatprep.subr.mxu0 0.0
        %6741 = vmatpush2.msra.mxu0 0.0
        %6742 = vmatprep.subr.mxu0 0.0
        %6743 = vmatpush2.msra.mxu0 0.0
        %6744 = vmatprep.subr.mxu0 0.0
        %6745 = vmatpush2.msra.mxu0 0.0
        %6746 = vmatprep.subr.mxu0 0.0
        %6747 = vmatpush2.msra.mxu0 0.0
        %6748 = vmatprep.subr.mxu0 0.0
        %6749 = vmatpush2.msra.mxu0 0.0
        %6750 = vmatprep.subr.mxu0 0.0
        %6751 = vmatpush2.msra.mxu0 0.0
        %6752 = vmatprep.subr.mxu0 0.0
        %6753 = vmatpush2.msra.mxu0 0.0
        %6754 = vmatprep.subr.mxu0 0.0
        %6755 = vmatpush2.msra.mxu0 0.0
        %6756 = vmatprep.subr.mxu0 0.0
        %6757 = vmatpush2.msra.mxu0 0.0
        %6758 = vmatprep.subr.mxu0 0.0
        %6759 = vmatpush2.msra.mxu0 0.0
        %6760 = vmatprep.subr.mxu0 0.0
        %6761 = vmatpush2.msra.mxu0 0.0
        %6762 = vmatprep.subr.mxu0 0.0
        %6763 = vmatpush2.msra.mxu0 0.0
        %6764 = vmatprep.mubr.f32.mxu0 0.0
        %v6765 = vand.u32 %v1252, 4294901760
        %v6766 = vsub.f32 %v1252, %v6765
        %v6767 = vand.u32 %v6766, 4294901760
        %v6768 = vsub.f32 %v6766, %v6767
        %v6769 = vand.u32 %v6768, 4294901760
        %6770 = vmatmul.mubr.f32.gmra.mxu0 %v6769
        %v6771 = vpop.f32.mrf.mxu0
        %v6772 = vadd.f32 %v6698, %v6771
        %v6773 = vpop.f32.mrf.mxu0
        %6774 = vdwg.mxu0
        %6775 = vmatprep.subr.mxu0 0.0
        %6776 = vmatpush1.msra.mxu0 0.0
        %6777 = vmatprep.subr.mxu0 0.0
        %6778 = vmatpush1.msra.mxu0 0.0
        %6779 = vmatprep.subr.mxu0 0.0
        %6780 = vmatpush1.msra.mxu0 0.0
        %6781 = vmatprep.subr.mxu0 0.0
        %6782 = vmatpush1.msra.mxu0 0.0
        %6783 = vmatprep.subr.mxu0 0.0
        %6784 = vmatpush1.msra.mxu0 0.0
        %6785 = vmatprep.subr.mxu0 0.0
        %6786 = vmatpush1.msra.mxu0 0.0
        %6787 = vmatprep.subr.mxu0 0.0
        %6788 = vmatpush1.msra.mxu0 0.0
        %6789 = vmatprep.subr.mxu0 0.0
        %6790 = vmatpush1.msra.mxu0 0.0
        %6791 = vmatprep.subr.mxu0 0.0
        %6792 = vmatpush1.msra.mxu0 0.0
        %6793 = vmatprep.subr.mxu0 0.0
        %6794 = vmatpush1.msra.mxu0 0.0
        %6795 = vmatprep.subr.mxu0 0.0
        %6796 = vmatpush1.msra.mxu0 0.0
        %6797 = vmatprep.subr.mxu0 0.0
        %6798 = vmatpush1.msra.mxu0 0.0
        %6799 = vmatprep.subr.mxu0 0.0
        %6800 = vmatpush1.msra.mxu0 0.0
        %6801 = vmatprep.subr.mxu0 0.0
        %6802 = vmatpush1.msra.mxu0 0.0
        %6803 = vmatprep.subr.mxu0 0.0
        %6804 = vmatpush1.msra.mxu0 0.0
        %6805 = vmatprep.subr.mxu0 0.0
        %v6806 = vand.u32 %v6693, 4294901760
        %v6807 = vsub.f32 %v6693, %v6806
        %v6808 = vand.u32 %v6807, 4294901760
        %v6809 = vsub.f32 %v6807, %v6808
        %v6810 = vand.u32 %v6809, 4294901760
        %6811 = vmatpush1.msra.mxu0 %v6810
        %6812 = vmatprep.subr.mxu0 0.0
        %6813 = vmatpush2.msra.mxu0 0.0
        %6814 = vmatprep.subr.mxu0 0.0
        %6815 = vmatpush2.msra.mxu0 0.0
        %6816 = vmatprep.subr.mxu0 0.0
        %6817 = vmatpush2.msra.mxu0 0.0
        %6818 = vmatprep.subr.mxu0 0.0
        %6819 = vmatpush2.msra.mxu0 0.0
        %6820 = vmatprep.subr.mxu0 0.0
        %6821 = vmatpush2.msra.mxu0 0.0
        %6822 = vmatprep.subr.mxu0 0.0
        %6823 = vmatpush2.msra.mxu0 0.0
        %6824 = vmatprep.subr.mxu0 0.0
        %6825 = vmatpush2.msra.mxu0 0.0
        %6826 = vmatprep.subr.mxu0 0.0
        %6827 = vmatpush2.msra.mxu0 0.0
        %6828 = vmatprep.subr.mxu0 0.0
        %6829 = vmatpush2.msra.mxu0 0.0
        %6830 = vmatprep.subr.mxu0 0.0
        %6831 = vmatpush2.msra.mxu0 0.0
        %6832 = vmatprep.subr.mxu0 0.0
        %6833 = vmatpush2.msra.mxu0 0.0
        %6834 = vmatprep.subr.mxu0 0.0
        %6835 = vmatpush2.msra.mxu0 0.0
        %6836 = vmatprep.subr.mxu0 0.0
        %6837 = vmatpush2.msra.mxu0 0.0
        %6838 = vmatprep.subr.mxu0 0.0
        %6839 = vmatpush2.msra.mxu0 0.0
        %6840 = vmatprep.subr.mxu0 0.0
        %6841 = vmatpush2.msra.mxu0 0.0
        %6842 = vmatprep.subr.mxu0 0.0
        %6843 = vmatpush2.msra.mxu0 0.0
        %6844 = vmatprep.mubr.f32.mxu0 0.0
        %v6845 = vand.u32 %v1252, 4294901760
        %6846 = vmatmul.mubr.f32.gmra.mxu0 %v6845
        %v6847 = vpop.f32.mrf.mxu0
        %v6848 = vadd.f32 %v6772, %v6847
        %v6849 = vpop.f32.mrf.mxu0
        %6850 = vdwg.mxu0
        %6851 = vmatprep.subr.mxu0 0.0
        %6852 = vmatpush1.msra.mxu0 0.0
        %6853 = vmatprep.subr.mxu0 0.0
        %6854 = vmatpush1.msra.mxu0 0.0
        %6855 = vmatprep.subr.mxu0 0.0
        %6856 = vmatpush1.msra.mxu0 0.0
        %6857 = vmatprep.subr.mxu0 0.0
        %6858 = vmatpush1.msra.mxu0 0.0
        %6859 = vmatprep.subr.mxu0 0.0
        %6860 = vmatpush1.msra.mxu0 0.0
        %6861 = vmatprep.subr.mxu0 0.0
        %6862 = vmatpush1.msra.mxu0 0.0
        %6863 = vmatprep.subr.mxu0 0.0
        %6864 = vmatpush1.msra.mxu0 0.0
        %6865 = vmatprep.subr.mxu0 0.0
        %6866 = vmatpush1.msra.mxu0 0.0
        %6867 = vmatprep.subr.mxu0 0.0
        %6868 = vmatpush1.msra.mxu0 0.0
        %6869 = vmatprep.subr.mxu0 0.0
        %6870 = vmatpush1.msra.mxu0 0.0
        %6871 = vmatprep.subr.mxu0 0.0
        %6872 = vmatpush1.msra.mxu0 0.0
        %6873 = vmatprep.subr.mxu0 0.0
        %6874 = vmatpush1.msra.mxu0 0.0
        %6875 = vmatprep.subr.mxu0 0.0
        %6876 = vmatpush1.msra.mxu0 0.0
        %6877 = vmatprep.subr.mxu0 0.0
        %6878 = vmatpush1.msra.mxu0 0.0
        %6879 = vmatprep.subr.mxu0 0.0
        %6880 = vmatpush1.msra.mxu0 0.0
        %6881 = vmatprep.subr.mxu0 0.0
        %v6882 = vand.u32 %v6693, 4294901760
        %v6883 = vsub.f32 %v6693, %v6882
        %6884 = vmatpush1.msra.mxu0 %v6883
        %6885 = vmatprep.subr.mxu0 0.0
        %6886 = vmatpush2.msra.mxu0 0.0
        %6887 = vmatprep.subr.mxu0 0.0
        %6888 = vmatpush2.msra.mxu0 0.0
        %6889 = vmatprep.subr.mxu0 0.0
        %6890 = vmatpush2.msra.mxu0 0.0
        %6891 = vmatprep.subr.mxu0 0.0
        %6892 = vmatpush2.msra.mxu0 0.0
        %6893 = vmatprep.subr.mxu0 0.0
        %6894 = vmatpush2.msra.mxu0 0.0
        %6895 = vmatprep.subr.mxu0 0.0
        %6896 = vmatpush2.msra.mxu0 0.0
        %6897 = vmatprep.subr.mxu0 0.0
        %6898 = vmatpush2.msra.mxu0 0.0
        %6899 = vmatprep.subr.mxu0 0.0
        %6900 = vmatpush2.msra.mxu0 0.0
        %6901 = vmatprep.subr.mxu0 0.0
        %6902 = vmatpush2.msra.mxu0 0.0
        %6903 = vmatprep.subr.mxu0 0.0
        %6904 = vmatpush2.msra.mxu0 0.0
        %6905 = vmatprep.subr.mxu0 0.0
        %6906 = vmatpush2.msra.mxu0 0.0
        %6907 = vmatprep.subr.mxu0 0.0
        %6908 = vmatpush2.msra.mxu0 0.0
        %6909 = vmatprep.subr.mxu0 0.0
        %6910 = vmatpush2.msra.mxu0 0.0
        %6911 = vmatprep.subr.mxu0 0.0
        %6912 = vmatpush2.msra.mxu0 0.0
        %6913 = vmatprep.subr.mxu0 0.0
        %6914 = vmatpush2.msra.mxu0 0.0
        %6915 = vmatprep.subr.mxu0 0.0
        %6916 = vmatpush2.msra.mxu0 0.0
        %6917 = vmatprep.mubr.f32.mxu0 0.0
        %v6918 = vand.u32 %v1252, 4294901760
        %v6919 = vsub.f32 %v1252, %v6918
        %6920 = vmatmul.mubr.f32.gmra.mxu0 %v6919
        %v6921 = vpop.f32.mrf.mxu0
        %v6922 = vadd.f32 %v6848, %v6921
        %v6923 = vpop.f32.mrf.mxu0
        %6924 = vdwg.mxu0
        %6925 = vmatprep.subr.mxu0 0.0
        %6926 = vmatpush1.msra.mxu0 0.0
        %6927 = vmatprep.subr.mxu0 0.0
        %6928 = vmatpush1.msra.mxu0 0.0
        %6929 = vmatprep.subr.mxu0 0.0
        %6930 = vmatpush1.msra.mxu0 0.0
        %6931 = vmatprep.subr.mxu0 0.0
        %6932 = vmatpush1.msra.mxu0 0.0
        %6933 = vmatprep.subr.mxu0 0.0
        %6934 = vmatpush1.msra.mxu0 0.0
        %6935 = vmatprep.subr.mxu0 0.0
        %6936 = vmatpush1.msra.mxu0 0.0
        %6937 = vmatprep.subr.mxu0 0.0
        %6938 = vmatpush1.msra.mxu0 0.0
        %6939 = vmatprep.subr.mxu0 0.0
        %6940 = vmatpush1.msra.mxu0 0.0
        %6941 = vmatprep.subr.mxu0 0.0
        %6942 = vmatpush1.msra.mxu0 0.0
        %6943 = vmatprep.subr.mxu0 0.0
        %6944 = vmatpush1.msra.mxu0 0.0
        %6945 = vmatprep.subr.mxu0 0.0
        %6946 = vmatpush1.msra.mxu0 0.0
        %6947 = vmatprep.subr.mxu0 0.0
        %6948 = vmatpush1.msra.mxu0 0.0
        %6949 = vmatprep.subr.mxu0 0.0
        %6950 = vmatpush1.msra.mxu0 0.0
        %6951 = vmatprep.subr.mxu0 0.0
        %6952 = vmatpush1.msra.mxu0 0.0
        %6953 = vmatprep.subr.mxu0 0.0
        %6954 = vmatpush1.msra.mxu0 0.0
        %6955 = vmatprep.subr.mxu0 0.0
        %v6956 = vand.u32 %v6693, 4294901760
        %6957 = vmatpush1.msra.mxu0 %v6956
        %6958 = vmatprep.subr.mxu0 0.0
        %6959 = vmatpush2.msra.mxu0 0.0
        %6960 = vmatprep.subr.mxu0 0.0
        %6961 = vmatpush2.msra.mxu0 0.0
        %6962 = vmatprep.subr.mxu0 0.0
        %6963 = vmatpush2.msra.mxu0 0.0
        %6964 = vmatprep.subr.mxu0 0.0
        %6965 = vmatpush2.msra.mxu0 0.0
        %6966 = vmatprep.subr.mxu0 0.0
        %6967 = vmatpush2.msra.mxu0 0.0
        %6968 = vmatprep.subr.mxu0 0.0
        %6969 = vmatpush2.msra.mxu0 0.0
        %6970 = vmatprep.subr.mxu0 0.0
        %6971 = vmatpush2.msra.mxu0 0.0
        %6972 = vmatprep.subr.mxu0 0.0
        %6973 = vmatpush2.msra.mxu0 0.0
        %6974 = vmatprep.subr.mxu0 0.0
        %6975 = vmatpush2.msra.mxu0 0.0
        %6976 = vmatprep.subr.mxu0 0.0
        %6977 = vmatpush2.msra.mxu0 0.0
        %6978 = vmatprep.subr.mxu0 0.0
        %6979 = vmatpush2.msra.mxu0 0.0
        %6980 = vmatprep.subr.mxu0 0.0
        %6981 = vmatpush2.msra.mxu0 0.0
        %6982 = vmatprep.subr.mxu0 0.0
        %6983 = vmatpush2.msra.mxu0 0.0
        %6984 = vmatprep.subr.mxu0 0.0
        %6985 = vmatpush2.msra.mxu0 0.0
        %6986 = vmatprep.subr.mxu0 0.0
        %6987 = vmatpush2.msra.mxu0 0.0
        %6988 = vmatprep.subr.mxu0 0.0
        %6989 = vmatpush2.msra.mxu0 0.0
        %6990 = vmatprep.mubr.f32.mxu0 0.0
        %v6991 = vand.u32 %v1252, 4294901760
        %v6992 = vsub.f32 %v1252, %v6991
        %v6993 = vand.u32 %v6992, 4294901760
        %6994 = vmatmul.mubr.f32.gmra.mxu0 %v6993
        %v6995 = vpop.f32.mrf.mxu0
        %v6996 = vadd.f32 %v6922, %v6995
        %v6997 = vpop.f32.mrf.mxu0
        %6998 = vdwg.mxu0
        %6999 = vmatprep.subr.mxu0 0.0
        %7000 = vmatpush1.msra.mxu0 0.0
        %7001 = vmatprep.subr.mxu0 0.0
        %7002 = vmatpush1.msra.mxu0 0.0
        %7003 = vmatprep.subr.mxu0 0.0
        %7004 = vmatpush1.msra.mxu0 0.0
        %7005 = vmatprep.subr.mxu0 0.0
        %7006 = vmatpush1.msra.mxu0 0.0
        %7007 = vmatprep.subr.mxu0 0.0
        %7008 = vmatpush1.msra.mxu0 0.0
        %7009 = vmatprep.subr.mxu0 0.0
        %7010 = vmatpush1.msra.mxu0 0.0
        %7011 = vmatprep.subr.mxu0 0.0
        %7012 = vmatpush1.msra.mxu0 0.0
        %7013 = vmatprep.subr.mxu0 0.0
        %7014 = vmatpush1.msra.mxu0 0.0
        %7015 = vmatprep.subr.mxu0 0.0
        %7016 = vmatpush1.msra.mxu0 0.0
        %7017 = vmatprep.subr.mxu0 0.0
        %7018 = vmatpush1.msra.mxu0 0.0
        %7019 = vmatprep.subr.mxu0 0.0
        %7020 = vmatpush1.msra.mxu0 0.0
        %7021 = vmatprep.subr.mxu0 0.0
        %7022 = vmatpush1.msra.mxu0 0.0
        %7023 = vmatprep.subr.mxu0 0.0
        %7024 = vmatpush1.msra.mxu0 0.0
        %7025 = vmatprep.subr.mxu0 0.0
        %7026 = vmatpush1.msra.mxu0 0.0
        %7027 = vmatprep.subr.mxu0 0.0
        %7028 = vmatpush1.msra.mxu0 0.0
        %7029 = vmatprep.subr.mxu0 0.0
        %v7030 = vand.u32 %v6693, 4294901760
        %v7031 = vsub.f32 %v6693, %v7030
        %v7032 = vand.u32 %v7031, 4294901760
        %7033 = vmatpush1.msra.mxu0 %v7032
        %7034 = vmatprep.subr.mxu0 0.0
        %7035 = vmatpush2.msra.mxu0 0.0
        %7036 = vmatprep.subr.mxu0 0.0
        %7037 = vmatpush2.msra.mxu0 0.0
        %7038 = vmatprep.subr.mxu0 0.0
        %7039 = vmatpush2.msra.mxu0 0.0
        %7040 = vmatprep.subr.mxu0 0.0
        %7041 = vmatpush2.msra.mxu0 0.0
        %7042 = vmatprep.subr.mxu0 0.0
        %7043 = vmatpush2.msra.mxu0 0.0
        %7044 = vmatprep.subr.mxu0 0.0
        %7045 = vmatpush2.msra.mxu0 0.0
        %7046 = vmatprep.subr.mxu0 0.0
        %7047 = vmatpush2.msra.mxu0 0.0
        %7048 = vmatprep.subr.mxu0 0.0
        %7049 = vmatpush2.msra.mxu0 0.0
        %7050 = vmatprep.subr.mxu0 0.0
        %7051 = vmatpush2.msra.mxu0 0.0
        %7052 = vmatprep.subr.mxu0 0.0
        %7053 = vmatpush2.msra.mxu0 0.0
        %7054 = vmatprep.subr.mxu0 0.0
        %7055 = vmatpush2.msra.mxu0 0.0
        %7056 = vmatprep.subr.mxu0 0.0
        %7057 = vmatpush2.msra.mxu0 0.0
        %7058 = vmatprep.subr.mxu0 0.0
        %7059 = vmatpush2.msra.mxu0 0.0
        %7060 = vmatprep.subr.mxu0 0.0
        %7061 = vmatpush2.msra.mxu0 0.0
        %7062 = vmatprep.subr.mxu0 0.0
        %7063 = vmatpush2.msra.mxu0 0.0
        %7064 = vmatprep.subr.mxu0 0.0
        %7065 = vmatpush2.msra.mxu0 0.0
        %7066 = vmatprep.mubr.f32.mxu0 0.0
        %v7067 = vand.u32 %v1252, 4294901760
        %7068 = vmatmul.mubr.f32.gmra.mxu0 %v7067
        %v7069 = vpop.f32.mrf.mxu0
        %v7070 = vadd.f32 %v6996, %v7069
        %v7071 = vpop.f32.mrf.mxu0
        %7072 = vdwg.mxu0
        %7073 = vmatprep.subr.mxu0 0.0
        %7074 = vmatpush1.msra.mxu0 0.0
        %7075 = vmatprep.subr.mxu0 0.0
        %7076 = vmatpush1.msra.mxu0 0.0
        %7077 = vmatprep.subr.mxu0 0.0
        %7078 = vmatpush1.msra.mxu0 0.0
        %7079 = vmatprep.subr.mxu0 0.0
        %7080 = vmatpush1.msra.mxu0 0.0
        %7081 = vmatprep.subr.mxu0 0.0
        %7082 = vmatpush1.msra.mxu0 0.0
        %7083 = vmatprep.subr.mxu0 0.0
        %7084 = vmatpush1.msra.mxu0 0.0
        %7085 = vmatprep.subr.mxu0 0.0
        %7086 = vmatpush1.msra.mxu0 0.0
        %7087 = vmatprep.subr.mxu0 0.0
        %7088 = vmatpush1.msra.mxu0 0.0
        %7089 = vmatprep.subr.mxu0 0.0
        %7090 = vmatpush1.msra.mxu0 0.0
        %7091 = vmatprep.subr.mxu0 0.0
        %7092 = vmatpush1.msra.mxu0 0.0
        %7093 = vmatprep.subr.mxu0 0.0
        %7094 = vmatpush1.msra.mxu0 0.0
        %7095 = vmatprep.subr.mxu0 0.0
        %7096 = vmatpush1.msra.mxu0 0.0
        %7097 = vmatprep.subr.mxu0 0.0
        %7098 = vmatpush1.msra.mxu0 0.0
        %7099 = vmatprep.subr.mxu0 0.0
        %7100 = vmatpush1.msra.mxu0 0.0
        %7101 = vmatprep.subr.mxu0 0.0
        %7102 = vmatpush1.msra.mxu0 0.0
        %7103 = vmatprep.subr.mxu0 0.0
        %v7104 = vand.u32 %v6693, 4294901760
        %7105 = vmatpush1.msra.mxu0 %v7104
        %7106 = vmatprep.subr.mxu0 0.0
        %7107 = vmatpush2.msra.mxu0 0.0
        %7108 = vmatprep.subr.mxu0 0.0
        %7109 = vmatpush2.msra.mxu0 0.0
        %7110 = vmatprep.subr.mxu0 0.0
        %7111 = vmatpush2.msra.mxu0 0.0
        %7112 = vmatprep.subr.mxu0 0.0
        %7113 = vmatpush2.msra.mxu0 0.0
        %7114 = vmatprep.subr.mxu0 0.0
        %7115 = vmatpush2.msra.mxu0 0.0
        %7116 = vmatprep.subr.mxu0 0.0
        %7117 = vmatpush2.msra.mxu0 0.0
        %7118 = vmatprep.subr.mxu0 0.0
        %7119 = vmatpush2.msra.mxu0 0.0
        %7120 = vmatprep.subr.mxu0 0.0
        %7121 = vmatpush2.msra.mxu0 0.0
        %7122 = vmatprep.subr.mxu0 0.0
        %7123 = vmatpush2.msra.mxu0 0.0
        %7124 = vmatprep.subr.mxu0 0.0
        %7125 = vmatpush2.msra.mxu0 0.0
        %7126 = vmatprep.subr.mxu0 0.0
        %7127 = vmatpush2.msra.mxu0 0.0
        %7128 = vmatprep.subr.mxu0 0.0
        %7129 = vmatpush2.msra.mxu0 0.0
        %7130 = vmatprep.subr.mxu0 0.0
        %7131 = vmatpush2.msra.mxu0 0.0
        %7132 = vmatprep.subr.mxu0 0.0
        %7133 = vmatpush2.msra.mxu0 0.0
        %7134 = vmatprep.subr.mxu0 0.0
        %7135 = vmatpush2.msra.mxu0 0.0
        %7136 = vmatprep.subr.mxu0 0.0
        %7137 = vmatpush2.msra.mxu0 0.0
        %7138 = vmatprep.mubr.f32.mxu0 0.0
        %v7139 = vand.u32 %v1252, 4294901760
        %7140 = vmatmul.mubr.f32.gmra.mxu0 %v7139
        %v7141 = vpop.f32.mrf.mxu0
        %v7142 = vadd.f32 %v7070, %v7141
        %v7143 = vpop.f32.mrf.mxu0
        %7144 = vdwg.mxu0
        %v7145 = vadd.f32 %v7142, %v1703
        %v7146 = vmax.f32 %v7145, 0.0
        %7147 = vst.msk [vmem:[%s337 + $0x8] sm:$0xff] %vm1707, %v7146
        %v7148 = vld [vmem:[%s291] sm:$0xff]
        %7150 = vrot.lane.b32.xlu0 %v7148, 88
        %v7151 = vpop.permute.xlu0 %7150
        %v7152 = vsel %vm345, %v7151, 0
        %7154 = vmatprep.subr.mxu0 0.0
        %7155 = vmatpush1.msra.mxu0 0.0
        %7156 = vmatprep.subr.mxu0 0.0
        %7157 = vmatpush1.msra.mxu0 0.0
        %7158 = vmatprep.subr.mxu0 0.0
        %7159 = vmatpush1.msra.mxu0 0.0
        %7160 = vmatprep.subr.mxu0 0.0
        %7161 = vmatpush1.msra.mxu0 0.0
        %7162 = vmatprep.subr.mxu0 0.0
        %7163 = vmatpush1.msra.mxu0 0.0
        %7164 = vmatprep.subr.mxu0 0.0
        %7165 = vmatpush1.msra.mxu0 0.0
        %7166 = vmatprep.subr.mxu0 0.0
        %7167 = vmatpush1.msra.mxu0 0.0
        %7168 = vmatprep.subr.mxu0 0.0
        %7169 = vmatpush1.msra.mxu0 0.0
        %7170 = vmatprep.subr.mxu0 0.0
        %7171 = vmatpush1.msra.mxu0 0.0
        %7172 = vmatprep.subr.mxu0 0.0
        %7173 = vmatpush1.msra.mxu0 0.0
        %7174 = vmatprep.subr.mxu0 0.0
        %7175 = vmatpush1.msra.mxu0 0.0
        %7176 = vmatprep.subr.mxu0 0.0
        %7177 = vmatpush1.msra.mxu0 0.0
        %7178 = vmatprep.subr.mxu0 0.0
        %7179 = vmatpush1.msra.mxu0 0.0
        %7180 = vmatprep.subr.mxu0 0.0
        %7181 = vmatpush1.msra.mxu0 0.0
        %7182 = vmatprep.subr.mxu0 0.0
        %7183 = vmatpush1.msra.mxu0 0.0
        %7184 = vmatprep.subr.mxu0 0.0
        %v7185 = vand.u32 %v340, 4294901760
        %7186 = vmatpush1.msra.mxu0 %v7185
        %7187 = vmatprep.subr.mxu0 0.0
        %7188 = vmatpush2.msra.mxu0 0.0
        %7189 = vmatprep.subr.mxu0 0.0
        %7190 = vmatpush2.msra.mxu0 0.0
        %7191 = vmatprep.subr.mxu0 0.0
        %7192 = vmatpush2.msra.mxu0 0.0
        %7193 = vmatprep.subr.mxu0 0.0
        %7194 = vmatpush2.msra.mxu0 0.0
        %7195 = vmatprep.subr.mxu0 0.0
        %7196 = vmatpush2.msra.mxu0 0.0
        %7197 = vmatprep.subr.mxu0 0.0
        %7198 = vmatpush2.msra.mxu0 0.0
        %7199 = vmatprep.subr.mxu0 0.0
        %7200 = vmatpush2.msra.mxu0 0.0
        %7201 = vmatprep.subr.mxu0 0.0
        %7202 = vmatpush2.msra.mxu0 0.0
        %7203 = vmatprep.subr.mxu0 0.0
        %7204 = vmatpush2.msra.mxu0 0.0
        %7205 = vmatprep.subr.mxu0 0.0
        %7206 = vmatpush2.msra.mxu0 0.0
        %7207 = vmatprep.subr.mxu0 0.0
        %7208 = vmatpush2.msra.mxu0 0.0
        %7209 = vmatprep.subr.mxu0 0.0
        %7210 = vmatpush2.msra.mxu0 0.0
        %7211 = vmatprep.subr.mxu0 0.0
        %7212 = vmatpush2.msra.mxu0 0.0
        %7213 = vmatprep.subr.mxu0 0.0
        %7214 = vmatpush2.msra.mxu0 0.0
        %7215 = vmatprep.subr.mxu0 0.0
        %7216 = vmatpush2.msra.mxu0 0.0
        %7217 = vmatprep.subr.mxu0 0.0
        %7218 = vmatpush2.msra.mxu0 0.0
        %7219 = vmatprep.mubr.f32.mxu0 0.0
        %v7220 = vand.u32 %v7152, 4294901760
        %v7221 = vsub.f32 %v7152, %v7220
        %v7222 = vand.u32 %v7221, 4294901760
        %v7223 = vsub.f32 %v7221, %v7222
        %v7224 = vand.u32 %v7223, 4294901760
        %7225 = vmatmul.mubr.f32.gmra.mxu0 %v7224
        %v7226 = vpop.f32.mrf.mxu0
        %v7227 = vadd.f32 0.0, %v7226
        %v7228 = vpop.f32.mrf.mxu0
        %7229 = vdwg.mxu0
        %7230 = vmatprep.subr.mxu0 0.0
        %7231 = vmatpush1.msra.mxu0 0.0
        %7232 = vmatprep.subr.mxu0 0.0
        %7233 = vmatpush1.msra.mxu0 0.0
        %7234 = vmatprep.subr.mxu0 0.0
        %7235 = vmatpush1.msra.mxu0 0.0
        %7236 = vmatprep.subr.mxu0 0.0
        %7237 = vmatpush1.msra.mxu0 0.0
        %7238 = vmatprep.subr.mxu0 0.0
        %7239 = vmatpush1.msra.mxu0 0.0
        %7240 = vmatprep.subr.mxu0 0.0
        %7241 = vmatpush1.msra.mxu0 0.0
        %7242 = vmatprep.subr.mxu0 0.0
        %7243 = vmatpush1.msra.mxu0 0.0
        %7244 = vmatprep.subr.mxu0 0.0
        %7245 = vmatpush1.msra.mxu0 0.0
        %7246 = vmatprep.subr.mxu0 0.0
        %7247 = vmatpush1.msra.mxu0 0.0
        %7248 = vmatprep.subr.mxu0 0.0
        %7249 = vmatpush1.msra.mxu0 0.0
        %7250 = vmatprep.subr.mxu0 0.0
        %7251 = vmatpush1.msra.mxu0 0.0
        %7252 = vmatprep.subr.mxu0 0.0
        %7253 = vmatpush1.msra.mxu0 0.0
        %7254 = vmatprep.subr.mxu0 0.0
        %7255 = vmatpush1.msra.mxu0 0.0
        %7256 = vmatprep.subr.mxu0 0.0
        %7257 = vmatpush1.msra.mxu0 0.0
        %7258 = vmatprep.subr.mxu0 0.0
        %7259 = vmatpush1.msra.mxu0 0.0
        %7260 = vmatprep.subr.mxu0 0.0
        %v7261 = vand.u32 %v340, 4294901760
        %v7262 = vsub.f32 %v340, %v7261
        %v7263 = vand.u32 %v7262, 4294901760
        %v7264 = vsub.f32 %v7262, %v7263
        %v7265 = vand.u32 %v7264, 4294901760
        %7266 = vmatpush1.msra.mxu0 %v7265
        %7267 = vmatprep.subr.mxu0 0.0
        %7268 = vmatpush2.msra.mxu0 0.0
        %7269 = vmatprep.subr.mxu0 0.0
        %7270 = vmatpush2.msra.mxu0 0.0
        %7271 = vmatprep.subr.mxu0 0.0
        %7272 = vmatpush2.msra.mxu0 0.0
        %7273 = vmatprep.subr.mxu0 0.0
        %7274 = vmatpush2.msra.mxu0 0.0
        %7275 = vmatprep.subr.mxu0 0.0
        %7276 = vmatpush2.msra.mxu0 0.0
        %7277 = vmatprep.subr.mxu0 0.0
        %7278 = vmatpush2.msra.mxu0 0.0
        %7279 = vmatprep.subr.mxu0 0.0
        %7280 = vmatpush2.msra.mxu0 0.0
        %7281 = vmatprep.subr.mxu0 0.0
        %7282 = vmatpush2.msra.mxu0 0.0
        %7283 = vmatprep.subr.mxu0 0.0
        %7284 = vmatpush2.msra.mxu0 0.0
        %7285 = vmatprep.subr.mxu0 0.0
        %7286 = vmatpush2.msra.mxu0 0.0
        %7287 = vmatprep.subr.mxu0 0.0
        %7288 = vmatpush2.msra.mxu0 0.0
        %7289 = vmatprep.subr.mxu0 0.0
        %7290 = vmatpush2.msra.mxu0 0.0
        %7291 = vmatprep.subr.mxu0 0.0
        %7292 = vmatpush2.msra.mxu0 0.0
        %7293 = vmatprep.subr.mxu0 0.0
        %7294 = vmatpush2.msra.mxu0 0.0
        %7295 = vmatprep.subr.mxu0 0.0
        %7296 = vmatpush2.msra.mxu0 0.0
        %7297 = vmatprep.subr.mxu0 0.0
        %7298 = vmatpush2.msra.mxu0 0.0
        %7299 = vmatprep.mubr.f32.mxu0 0.0
        %v7300 = vand.u32 %v7152, 4294901760
        %7301 = vmatmul.mubr.f32.gmra.mxu0 %v7300
        %v7302 = vpop.f32.mrf.mxu0
        %v7303 = vadd.f32 %v7227, %v7302
        %v7304 = vpop.f32.mrf.mxu0
        %7305 = vdwg.mxu0
        %7306 = vmatprep.subr.mxu0 0.0
        %7307 = vmatpush1.msra.mxu0 0.0
        %7308 = vmatprep.subr.mxu0 0.0
        %7309 = vmatpush1.msra.mxu0 0.0
        %7310 = vmatprep.subr.mxu0 0.0
        %7311 = vmatpush1.msra.mxu0 0.0
        %7312 = vmatprep.subr.mxu0 0.0
        %7313 = vmatpush1.msra.mxu0 0.0
        %7314 = vmatprep.subr.mxu0 0.0
        %7315 = vmatpush1.msra.mxu0 0.0
        %7316 = vmatprep.subr.mxu0 0.0
        %7317 = vmatpush1.msra.mxu0 0.0
        %7318 = vmatprep.subr.mxu0 0.0
        %7319 = vmatpush1.msra.mxu0 0.0
        %7320 = vmatprep.subr.mxu0 0.0
        %7321 = vmatpush1.msra.mxu0 0.0
        %7322 = vmatprep.subr.mxu0 0.0
        %7323 = vmatpush1.msra.mxu0 0.0
        %7324 = vmatprep.subr.mxu0 0.0
        %7325 = vmatpush1.msra.mxu0 0.0
        %7326 = vmatprep.subr.mxu0 0.0
        %7327 = vmatpush1.msra.mxu0 0.0
        %7328 = vmatprep.subr.mxu0 0.0
        %7329 = vmatpush1.msra.mxu0 0.0
        %7330 = vmatprep.subr.mxu0 0.0
        %7331 = vmatpush1.msra.mxu0 0.0
        %7332 = vmatprep.subr.mxu0 0.0
        %7333 = vmatpush1.msra.mxu0 0.0
        %7334 = vmatprep.subr.mxu0 0.0
        %7335 = vmatpush1.msra.mxu0 0.0
        %7336 = vmatprep.subr.mxu0 0.0
        %v7337 = vand.u32 %v340, 4294901760
        %v7338 = vsub.f32 %v340, %v7337
        %7339 = vmatpush1.msra.mxu0 %v7338
        %7340 = vmatprep.subr.mxu0 0.0
        %7341 = vmatpush2.msra.mxu0 0.0
        %7342 = vmatprep.subr.mxu0 0.0
        %7343 = vmatpush2.msra.mxu0 0.0
        %7344 = vmatprep.subr.mxu0 0.0
        %7345 = vmatpush2.msra.mxu0 0.0
        %7346 = vmatprep.subr.mxu0 0.0
        %7347 = vmatpush2.msra.mxu0 0.0
        %7348 = vmatprep.subr.mxu0 0.0
        %7349 = vmatpush2.msra.mxu0 0.0
        %7350 = vmatprep.subr.mxu0 0.0
        %7351 = vmatpush2.msra.mxu0 0.0
        %7352 = vmatprep.subr.mxu0 0.0
        %7353 = vmatpush2.msra.mxu0 0.0
        %7354 = vmatprep.subr.mxu0 0.0
        %7355 = vmatpush2.msra.mxu0 0.0
        %7356 = vmatprep.subr.mxu0 0.0
        %7357 = vmatpush2.msra.mxu0 0.0
        %7358 = vmatprep.subr.mxu0 0.0
        %7359 = vmatpush2.msra.mxu0 0.0
        %7360 = vmatprep.subr.mxu0 0.0
        %7361 = vmatpush2.msra.mxu0 0.0
        %7362 = vmatprep.subr.mxu0 0.0
        %7363 = vmatpush2.msra.mxu0 0.0
        %7364 = vmatprep.subr.mxu0 0.0
        %7365 = vmatpush2.msra.mxu0 0.0
        %7366 = vmatprep.subr.mxu0 0.0
        %7367 = vmatpush2.msra.mxu0 0.0
        %7368 = vmatprep.subr.mxu0 0.0
        %7369 = vmatpush2.msra.mxu0 0.0
        %7370 = vmatprep.subr.mxu0 0.0
        %7371 = vmatpush2.msra.mxu0 0.0
        %7372 = vmatprep.mubr.f32.mxu0 0.0
        %v7373 = vand.u32 %v7152, 4294901760
        %v7374 = vsub.f32 %v7152, %v7373
        %7375 = vmatmul.mubr.f32.gmra.mxu0 %v7374
        %v7376 = vpop.f32.mrf.mxu0
        %v7377 = vadd.f32 %v7303, %v7376
        %v7378 = vpop.f32.mrf.mxu0
        %7379 = vdwg.mxu0
        %7380 = vmatprep.subr.mxu0 0.0
        %7381 = vmatpush1.msra.mxu0 0.0
        %7382 = vmatprep.subr.mxu0 0.0
        %7383 = vmatpush1.msra.mxu0 0.0
        %7384 = vmatprep.subr.mxu0 0.0
        %7385 = vmatpush1.msra.mxu0 0.0
        %7386 = vmatprep.subr.mxu0 0.0
        %7387 = vmatpush1.msra.mxu0 0.0
        %7388 = vmatprep.subr.mxu0 0.0
        %7389 = vmatpush1.msra.mxu0 0.0
        %7390 = vmatprep.subr.mxu0 0.0
        %7391 = vmatpush1.msra.mxu0 0.0
        %7392 = vmatprep.subr.mxu0 0.0
        %7393 = vmatpush1.msra.mxu0 0.0
        %7394 = vmatprep.subr.mxu0 0.0
        %7395 = vmatpush1.msra.mxu0 0.0
        %7396 = vmatprep.subr.mxu0 0.0
        %7397 = vmatpush1.msra.mxu0 0.0
        %7398 = vmatprep.subr.mxu0 0.0
        %7399 = vmatpush1.msra.mxu0 0.0
        %7400 = vmatprep.subr.mxu0 0.0
        %7401 = vmatpush1.msra.mxu0 0.0
        %7402 = vmatprep.subr.mxu0 0.0
        %7403 = vmatpush1.msra.mxu0 0.0
        %7404 = vmatprep.subr.mxu0 0.0
        %7405 = vmatpush1.msra.mxu0 0.0
        %7406 = vmatprep.subr.mxu0 0.0
        %7407 = vmatpush1.msra.mxu0 0.0
        %7408 = vmatprep.subr.mxu0 0.0
        %7409 = vmatpush1.msra.mxu0 0.0
        %7410 = vmatprep.subr.mxu0 0.0
        %v7411 = vand.u32 %v340, 4294901760
        %7412 = vmatpush1.msra.mxu0 %v7411
        %7413 = vmatprep.subr.mxu0 0.0
        %7414 = vmatpush2.msra.mxu0 0.0
        %7415 = vmatprep.subr.mxu0 0.0
        %7416 = vmatpush2.msra.mxu0 0.0
        %7417 = vmatprep.subr.mxu0 0.0
        %7418 = vmatpush2.msra.mxu0 0.0
        %7419 = vmatprep.subr.mxu0 0.0
        %7420 = vmatpush2.msra.mxu0 0.0
        %7421 = vmatprep.subr.mxu0 0.0
        %7422 = vmatpush2.msra.mxu0 0.0
        %7423 = vmatprep.subr.mxu0 0.0
        %7424 = vmatpush2.msra.mxu0 0.0
        %7425 = vmatprep.subr.mxu0 0.0
        %7426 = vmatpush2.msra.mxu0 0.0
        %7427 = vmatprep.subr.mxu0 0.0
        %7428 = vmatpush2.msra.mxu0 0.0
        %7429 = vmatprep.subr.mxu0 0.0
        %7430 = vmatpush2.msra.mxu0 0.0
        %7431 = vmatprep.subr.mxu0 0.0
        %7432 = vmatpush2.msra.mxu0 0.0
        %7433 = vmatprep.subr.mxu0 0.0
        %7434 = vmatpush2.msra.mxu0 0.0
        %7435 = vmatprep.subr.mxu0 0.0
        %7436 = vmatpush2.msra.mxu0 0.0
        %7437 = vmatprep.subr.mxu0 0.0
        %7438 = vmatpush2.msra.mxu0 0.0
        %7439 = vmatprep.subr.mxu0 0.0
        %7440 = vmatpush2.msra.mxu0 0.0
        %7441 = vmatprep.subr.mxu0 0.0
        %7442 = vmatpush2.msra.mxu0 0.0
        %7443 = vmatprep.subr.mxu0 0.0
        %7444 = vmatpush2.msra.mxu0 0.0
        %7445 = vmatprep.mubr.f32.mxu0 0.0
        %v7446 = vand.u32 %v7152, 4294901760
        %v7447 = vsub.f32 %v7152, %v7446
        %v7448 = vand.u32 %v7447, 4294901760
        %7449 = vmatmul.mubr.f32.gmra.mxu0 %v7448
        %v7450 = vpop.f32.mrf.mxu0
        %v7451 = vadd.f32 %v7377, %v7450
        %v7452 = vpop.f32.mrf.mxu0
        %7453 = vdwg.mxu0
        %7454 = vmatprep.subr.mxu0 0.0
        %7455 = vmatpush1.msra.mxu0 0.0
        %7456 = vmatprep.subr.mxu0 0.0
        %7457 = vmatpush1.msra.mxu0 0.0
        %7458 = vmatprep.subr.mxu0 0.0
        %7459 = vmatpush1.msra.mxu0 0.0
        %7460 = vmatprep.subr.mxu0 0.0
        %7461 = vmatpush1.msra.mxu0 0.0
        %7462 = vmatprep.subr.mxu0 0.0
        %7463 = vmatpush1.msra.mxu0 0.0
        %7464 = vmatprep.subr.mxu0 0.0
        %7465 = vmatpush1.msra.mxu0 0.0
        %7466 = vmatprep.subr.mxu0 0.0
        %7467 = vmatpush1.msra.mxu0 0.0
        %7468 = vmatprep.subr.mxu0 0.0
        %7469 = vmatpush1.msra.mxu0 0.0
        %7470 = vmatprep.subr.mxu0 0.0
        %7471 = vmatpush1.msra.mxu0 0.0
        %7472 = vmatprep.subr.mxu0 0.0
        %7473 = vmatpush1.msra.mxu0 0.0
        %7474 = vmatprep.subr.mxu0 0.0
        %7475 = vmatpush1.msra.mxu0 0.0
        %7476 = vmatprep.subr.mxu0 0.0
        %7477 = vmatpush1.msra.mxu0 0.0
        %7478 = vmatprep.subr.mxu0 0.0
        %7479 = vmatpush1.msra.mxu0 0.0
        %7480 = vmatprep.subr.mxu0 0.0
        %7481 = vmatpush1.msra.mxu0 0.0
        %7482 = vmatprep.subr.mxu0 0.0
        %7483 = vmatpush1.msra.mxu0 0.0
        %7484 = vmatprep.subr.mxu0 0.0
        %v7485 = vand.u32 %v340, 4294901760
        %v7486 = vsub.f32 %v340, %v7485
        %v7487 = vand.u32 %v7486, 4294901760
        %7488 = vmatpush1.msra.mxu0 %v7487
        %7489 = vmatprep.subr.mxu0 0.0
        %7490 = vmatpush2.msra.mxu0 0.0
        %7491 = vmatprep.subr.mxu0 0.0
        %7492 = vmatpush2.msra.mxu0 0.0
        %7493 = vmatprep.subr.mxu0 0.0
        %7494 = vmatpush2.msra.mxu0 0.0
        %7495 = vmatprep.subr.mxu0 0.0
        %7496 = vmatpush2.msra.mxu0 0.0
        %7497 = vmatprep.subr.mxu0 0.0
        %7498 = vmatpush2.msra.mxu0 0.0
        %7499 = vmatprep.subr.mxu0 0.0
        %7500 = vmatpush2.msra.mxu0 0.0
        %7501 = vmatprep.subr.mxu0 0.0
        %7502 = vmatpush2.msra.mxu0 0.0
        %7503 = vmatprep.subr.mxu0 0.0
        %7504 = vmatpush2.msra.mxu0 0.0
        %7505 = vmatprep.subr.mxu0 0.0
        %7506 = vmatpush2.msra.mxu0 0.0
        %7507 = vmatprep.subr.mxu0 0.0
        %7508 = vmatpush2.msra.mxu0 0.0
        %7509 = vmatprep.subr.mxu0 0.0
        %7510 = vmatpush2.msra.mxu0 0.0
        %7511 = vmatprep.subr.mxu0 0.0
        %7512 = vmatpush2.msra.mxu0 0.0
        %7513 = vmatprep.subr.mxu0 0.0
        %7514 = vmatpush2.msra.mxu0 0.0
        %7515 = vmatprep.subr.mxu0 0.0
        %7516 = vmatpush2.msra.mxu0 0.0
        %7517 = vmatprep.subr.mxu0 0.0
        %7518 = vmatpush2.msra.mxu0 0.0
        %7519 = vmatprep.subr.mxu0 0.0
        %7520 = vmatpush2.msra.mxu0 0.0
        %7521 = vmatprep.mubr.f32.mxu0 0.0
        %v7522 = vand.u32 %v7152, 4294901760
        %7523 = vmatmul.mubr.f32.gmra.mxu0 %v7522
        %v7524 = vpop.f32.mrf.mxu0
        %v7525 = vadd.f32 %v7451, %v7524
        %v7526 = vpop.f32.mrf.mxu0
        %7527 = vdwg.mxu0
        %7528 = vmatprep.subr.mxu0 0.0
        %7529 = vmatpush1.msra.mxu0 0.0
        %7530 = vmatprep.subr.mxu0 0.0
        %7531 = vmatpush1.msra.mxu0 0.0
        %7532 = vmatprep.subr.mxu0 0.0
        %7533 = vmatpush1.msra.mxu0 0.0
        %7534 = vmatprep.subr.mxu0 0.0
        %7535 = vmatpush1.msra.mxu0 0.0
        %7536 = vmatprep.subr.mxu0 0.0
        %7537 = vmatpush1.msra.mxu0 0.0
        %7538 = vmatprep.subr.mxu0 0.0
        %7539 = vmatpush1.msra.mxu0 0.0
        %7540 = vmatprep.subr.mxu0 0.0
        %7541 = vmatpush1.msra.mxu0 0.0
        %7542 = vmatprep.subr.mxu0 0.0
        %7543 = vmatpush1.msra.mxu0 0.0
        %7544 = vmatprep.subr.mxu0 0.0
        %7545 = vmatpush1.msra.mxu0 0.0
        %7546 = vmatprep.subr.mxu0 0.0
        %7547 = vmatpush1.msra.mxu0 0.0
        %7548 = vmatprep.subr.mxu0 0.0
        %7549 = vmatpush1.msra.mxu0 0.0
        %7550 = vmatprep.subr.mxu0 0.0
        %7551 = vmatpush1.msra.mxu0 0.0
        %7552 = vmatprep.subr.mxu0 0.0
        %7553 = vmatpush1.msra.mxu0 0.0
        %7554 = vmatprep.subr.mxu0 0.0
        %7555 = vmatpush1.msra.mxu0 0.0
        %7556 = vmatprep.subr.mxu0 0.0
        %7557 = vmatpush1.msra.mxu0 0.0
        %7558 = vmatprep.subr.mxu0 0.0
        %v7559 = vand.u32 %v340, 4294901760
        %7560 = vmatpush1.msra.mxu0 %v7559
        %7561 = vmatprep.subr.mxu0 0.0
        %7562 = vmatpush2.msra.mxu0 0.0
        %7563 = vmatprep.subr.mxu0 0.0
        %7564 = vmatpush2.msra.mxu0 0.0
        %7565 = vmatprep.subr.mxu0 0.0
        %7566 = vmatpush2.msra.mxu0 0.0
        %7567 = vmatprep.subr.mxu0 0.0
        %7568 = vmatpush2.msra.mxu0 0.0
        %7569 = vmatprep.subr.mxu0 0.0
        %7570 = vmatpush2.msra.mxu0 0.0
        %7571 = vmatprep.subr.mxu0 0.0
        %7572 = vmatpush2.msra.mxu0 0.0
        %7573 = vmatprep.subr.mxu0 0.0
        %7574 = vmatpush2.msra.mxu0 0.0
        %7575 = vmatprep.subr.mxu0 0.0
        %7576 = vmatpush2.msra.mxu0 0.0
        %7577 = vmatprep.subr.mxu0 0.0
        %7578 = vmatpush2.msra.mxu0 0.0
        %7579 = vmatprep.subr.mxu0 0.0
        %7580 = vmatpush2.msra.mxu0 0.0
        %7581 = vmatprep.subr.mxu0 0.0
        %7582 = vmatpush2.msra.mxu0 0.0
        %7583 = vmatprep.subr.mxu0 0.0
        %7584 = vmatpush2.msra.mxu0 0.0
        %7585 = vmatprep.subr.mxu0 0.0
        %7586 = vmatpush2.msra.mxu0 0.0
        %7587 = vmatprep.subr.mxu0 0.0
        %7588 = vmatpush2.msra.mxu0 0.0
        %7589 = vmatprep.subr.mxu0 0.0
        %7590 = vmatpush2.msra.mxu0 0.0
        %7591 = vmatprep.subr.mxu0 0.0
        %7592 = vmatpush2.msra.mxu0 0.0
        %7593 = vmatprep.mubr.f32.mxu0 0.0
        %v7594 = vand.u32 %v7152, 4294901760
        %7595 = vmatmul.mubr.f32.gmra.mxu0 %v7594
        %v7596 = vpop.f32.mrf.mxu0
        %v7597 = vadd.f32 %v7525, %v7596
        %v7598 = vpop.f32.mrf.mxu0
        %7599 = vdwg.mxu0
        %7600 = vmatprep.subr.mxu0 0.0
        %7601 = vmatpush1.msra.mxu0 0.0
        %7602 = vmatprep.subr.mxu0 0.0
        %7603 = vmatpush1.msra.mxu0 0.0
        %7604 = vmatprep.subr.mxu0 0.0
        %7605 = vmatpush1.msra.mxu0 0.0
        %7606 = vmatprep.subr.mxu0 0.0
        %7607 = vmatpush1.msra.mxu0 0.0
        %7608 = vmatprep.subr.mxu0 0.0
        %7609 = vmatpush1.msra.mxu0 0.0
        %7610 = vmatprep.subr.mxu0 0.0
        %7611 = vmatpush1.msra.mxu0 0.0
        %7612 = vmatprep.subr.mxu0 0.0
        %7613 = vmatpush1.msra.mxu0 0.0
        %7614 = vmatprep.subr.mxu0 0.0
        %7615 = vmatpush1.msra.mxu0 0.0
        %7616 = vmatprep.subr.mxu0 0.0
        %7617 = vmatpush1.msra.mxu0 0.0
        %7618 = vmatprep.subr.mxu0 0.0
        %7619 = vmatpush1.msra.mxu0 0.0
        %7620 = vmatprep.subr.mxu0 0.0
        %7621 = vmatpush1.msra.mxu0 0.0
        %7622 = vmatprep.subr.mxu0 0.0
        %7623 = vmatpush1.msra.mxu0 0.0
        %7624 = vmatprep.subr.mxu0 0.0
        %7625 = vmatpush1.msra.mxu0 0.0
        %7626 = vmatprep.subr.mxu0 0.0
        %7627 = vmatpush1.msra.mxu0 0.0
        %7628 = vmatprep.subr.mxu0 0.0
        %7629 = vmatpush1.msra.mxu0 0.0
        %7630 = vmatprep.subr.mxu0 0.0
        %v7631 = vand.u32 %v7597, 4294901760
        %7632 = vmatpush1.msra.mxu0 %v7631
        %7633 = vmatprep.subr.mxu0 0.0
        %7634 = vmatpush2.msra.mxu0 0.0
        %7635 = vmatprep.subr.mxu0 0.0
        %7636 = vmatpush2.msra.mxu0 0.0
        %7637 = vmatprep.subr.mxu0 0.0
        %7638 = vmatpush2.msra.mxu0 0.0
        %7639 = vmatprep.subr.mxu0 0.0
        %7640 = vmatpush2.msra.mxu0 0.0
        %7641 = vmatprep.subr.mxu0 0.0
        %7642 = vmatpush2.msra.mxu0 0.0
        %7643 = vmatprep.subr.mxu0 0.0
        %7644 = vmatpush2.msra.mxu0 0.0
        %7645 = vmatprep.subr.mxu0 0.0
        %7646 = vmatpush2.msra.mxu0 0.0
        %7647 = vmatprep.subr.mxu0 0.0
        %7648 = vmatpush2.msra.mxu0 0.0
        %7649 = vmatprep.subr.mxu0 0.0
        %7650 = vmatpush2.msra.mxu0 0.0
        %7651 = vmatprep.subr.mxu0 0.0
        %7652 = vmatpush2.msra.mxu0 0.0
        %7653 = vmatprep.subr.mxu0 0.0
        %7654 = vmatpush2.msra.mxu0 0.0
        %7655 = vmatprep.subr.mxu0 0.0
        %7656 = vmatpush2.msra.mxu0 0.0
        %7657 = vmatprep.subr.mxu0 0.0
        %7658 = vmatpush2.msra.mxu0 0.0
        %7659 = vmatprep.subr.mxu0 0.0
        %7660 = vmatpush2.msra.mxu0 0.0
        %7661 = vmatprep.subr.mxu0 0.0
        %7662 = vmatpush2.msra.mxu0 0.0
        %7663 = vmatprep.subr.mxu0 0.0
        %7664 = vmatpush2.msra.mxu0 0.0
        %7665 = vmatprep.mubr.f32.mxu0 0.0
        %v7666 = vand.u32 %v796, 4294901760
        %v7667 = vsub.f32 %v796, %v7666
        %v7668 = vand.u32 %v7667, 4294901760
        %v7669 = vsub.f32 %v7667, %v7668
        %v7670 = vand.u32 %v7669, 4294901760
        %7671 = vmatmul.mubr.f32.gmra.mxu0 %v7670
        %v7672 = vpop.f32.mrf.mxu0
        %v7673 = vadd.f32 0.0, %v7672
        %v7674 = vpop.f32.mrf.mxu0
        %7675 = vdwg.mxu0
        %7676 = vmatprep.subr.mxu0 0.0
        %7677 = vmatpush1.msra.mxu0 0.0
        %7678 = vmatprep.subr.mxu0 0.0
        %7679 = vmatpush1.msra.mxu0 0.0
        %7680 = vmatprep.subr.mxu0 0.0
        %7681 = vmatpush1.msra.mxu0 0.0
        %7682 = vmatprep.subr.mxu0 0.0
        %7683 = vmatpush1.msra.mxu0 0.0
        %7684 = vmatprep.subr.mxu0 0.0
        %7685 = vmatpush1.msra.mxu0 0.0
        %7686 = vmatprep.subr.mxu0 0.0
        %7687 = vmatpush1.msra.mxu0 0.0
        %7688 = vmatprep.subr.mxu0 0.0
        %7689 = vmatpush1.msra.mxu0 0.0
        %7690 = vmatprep.subr.mxu0 0.0
        %7691 = vmatpush1.msra.mxu0 0.0
        %7692 = vmatprep.subr.mxu0 0.0
        %7693 = vmatpush1.msra.mxu0 0.0
        %7694 = vmatprep.subr.mxu0 0.0
        %7695 = vmatpush1.msra.mxu0 0.0
        %7696 = vmatprep.subr.mxu0 0.0
        %7697 = vmatpush1.msra.mxu0 0.0
        %7698 = vmatprep.subr.mxu0 0.0
        %7699 = vmatpush1.msra.mxu0 0.0
        %7700 = vmatprep.subr.mxu0 0.0
        %7701 = vmatpush1.msra.mxu0 0.0
        %7702 = vmatprep.subr.mxu0 0.0
        %7703 = vmatpush1.msra.mxu0 0.0
        %7704 = vmatprep.subr.mxu0 0.0
        %7705 = vmatpush1.msra.mxu0 0.0
        %7706 = vmatprep.subr.mxu0 0.0
        %v7707 = vand.u32 %v7597, 4294901760
        %v7708 = vsub.f32 %v7597, %v7707
        %v7709 = vand.u32 %v7708, 4294901760
        %v7710 = vsub.f32 %v7708, %v7709
        %v7711 = vand.u32 %v7710, 4294901760
        %7712 = vmatpush1.msra.mxu0 %v7711
        %7713 = vmatprep.subr.mxu0 0.0
        %7714 = vmatpush2.msra.mxu0 0.0
        %7715 = vmatprep.subr.mxu0 0.0
        %7716 = vmatpush2.msra.mxu0 0.0
        %7717 = vmatprep.subr.mxu0 0.0
        %7718 = vmatpush2.msra.mxu0 0.0
        %7719 = vmatprep.subr.mxu0 0.0
        %7720 = vmatpush2.msra.mxu0 0.0
        %7721 = vmatprep.subr.mxu0 0.0
        %7722 = vmatpush2.msra.mxu0 0.0
        %7723 = vmatprep.subr.mxu0 0.0
        %7724 = vmatpush2.msra.mxu0 0.0
        %7725 = vmatprep.subr.mxu0 0.0
        %7726 = vmatpush2.msra.mxu0 0.0
        %7727 = vmatprep.subr.mxu0 0.0
        %7728 = vmatpush2.msra.mxu0 0.0
        %7729 = vmatprep.subr.mxu0 0.0
        %7730 = vmatpush2.msra.mxu0 0.0
        %7731 = vmatprep.subr.mxu0 0.0
        %7732 = vmatpush2.msra.mxu0 0.0
        %7733 = vmatprep.subr.mxu0 0.0
        %7734 = vmatpush2.msra.mxu0 0.0
        %7735 = vmatprep.subr.mxu0 0.0
        %7736 = vmatpush2.msra.mxu0 0.0
        %7737 = vmatprep.subr.mxu0 0.0
        %7738 = vmatpush2.msra.mxu0 0.0
        %7739 = vmatprep.subr.mxu0 0.0
        %7740 = vmatpush2.msra.mxu0 0.0
        %7741 = vmatprep.subr.mxu0 0.0
        %7742 = vmatpush2.msra.mxu0 0.0
        %7743 = vmatprep.subr.mxu0 0.0
        %7744 = vmatpush2.msra.mxu0 0.0
        %7745 = vmatprep.mubr.f32.mxu0 0.0
        %v7746 = vand.u32 %v796, 4294901760
        %7747 = vmatmul.mubr.f32.gmra.mxu0 %v7746
        %v7748 = vpop.f32.mrf.mxu0
        %v7749 = vadd.f32 %v7673, %v7748
        %v7750 = vpop.f32.mrf.mxu0
        %7751 = vdwg.mxu0
        %7752 = vmatprep.subr.mxu0 0.0
        %7753 = vmatpush1.msra.mxu0 0.0
        %7754 = vmatprep.subr.mxu0 0.0
        %7755 = vmatpush1.msra.mxu0 0.0
        %7756 = vmatprep.subr.mxu0 0.0
        %7757 = vmatpush1.msra.mxu0 0.0
        %7758 = vmatprep.subr.mxu0 0.0
        %7759 = vmatpush1.msra.mxu0 0.0
        %7760 = vmatprep.subr.mxu0 0.0
        %7761 = vmatpush1.msra.mxu0 0.0
        %7762 = vmatprep.subr.mxu0 0.0
        %7763 = vmatpush1.msra.mxu0 0.0
        %7764 = vmatprep.subr.mxu0 0.0
        %7765 = vmatpush1.msra.mxu0 0.0
        %7766 = vmatprep.subr.mxu0 0.0
        %7767 = vmatpush1.msra.mxu0 0.0
        %7768 = vmatprep.subr.mxu0 0.0
        %7769 = vmatpush1.msra.mxu0 0.0
        %7770 = vmatprep.subr.mxu0 0.0
        %7771 = vmatpush1.msra.mxu0 0.0
        %7772 = vmatprep.subr.mxu0 0.0
        %7773 = vmatpush1.msra.mxu0 0.0
        %7774 = vmatprep.subr.mxu0 0.0
        %7775 = vmatpush1.msra.mxu0 0.0
        %7776 = vmatprep.subr.mxu0 0.0
        %7777 = vmatpush1.msra.mxu0 0.0
        %7778 = vmatprep.subr.mxu0 0.0
        %7779 = vmatpush1.msra.mxu0 0.0
        %7780 = vmatprep.subr.mxu0 0.0
        %7781 = vmatpush1.msra.mxu0 0.0
        %7782 = vmatprep.subr.mxu0 0.0
        %v7783 = vand.u32 %v7597, 4294901760
        %v7784 = vsub.f32 %v7597, %v7783
        %7785 = vmatpush1.msra.mxu0 %v7784
        %7786 = vmatprep.subr.mxu0 0.0
        %7787 = vmatpush2.msra.mxu0 0.0
        %7788 = vmatprep.subr.mxu0 0.0
        %7789 = vmatpush2.msra.mxu0 0.0
        %7790 = vmatprep.subr.mxu0 0.0
        %7791 = vmatpush2.msra.mxu0 0.0
        %7792 = vmatprep.subr.mxu0 0.0
        %7793 = vmatpush2.msra.mxu0 0.0
        %7794 = vmatprep.subr.mxu0 0.0
        %7795 = vmatpush2.msra.mxu0 0.0
        %7796 = vmatprep.subr.mxu0 0.0
        %7797 = vmatpush2.msra.mxu0 0.0
        %7798 = vmatprep.subr.mxu0 0.0
        %7799 = vmatpush2.msra.mxu0 0.0
        %7800 = vmatprep.subr.mxu0 0.0
        %7801 = vmatpush2.msra.mxu0 0.0
        %7802 = vmatprep.subr.mxu0 0.0
        %7803 = vmatpush2.msra.mxu0 0.0
        %7804 = vmatprep.subr.mxu0 0.0
        %7805 = vmatpush2.msra.mxu0 0.0
        %7806 = vmatprep.subr.mxu0 0.0
        %7807 = vmatpush2.msra.mxu0 0.0
        %7808 = vmatprep.subr.mxu0 0.0
        %7809 = vmatpush2.msra.mxu0 0.0
        %7810 = vmatprep.subr.mxu0 0.0
        %7811 = vmatpush2.msra.mxu0 0.0
        %7812 = vmatprep.subr.mxu0 0.0
        %7813 = vmatpush2.msra.mxu0 0.0
        %7814 = vmatprep.subr.mxu0 0.0
        %7815 = vmatpush2.msra.mxu0 0.0
        %7816 = vmatprep.subr.mxu0 0.0
        %7817 = vmatpush2.msra.mxu0 0.0
        %7818 = vmatprep.mubr.f32.mxu0 0.0
        %v7819 = vand.u32 %v796, 4294901760
        %v7820 = vsub.f32 %v796, %v7819
        %7821 = vmatmul.mubr.f32.gmra.mxu0 %v7820
        %v7822 = vpop.f32.mrf.mxu0
        %v7823 = vadd.f32 %v7749, %v7822
        %v7824 = vpop.f32.mrf.mxu0
        %7825 = vdwg.mxu0
        %7826 = vmatprep.subr.mxu0 0.0
        %7827 = vmatpush1.msra.mxu0 0.0
        %7828 = vmatprep.subr.mxu0 0.0
        %7829 = vmatpush1.msra.mxu0 0.0
        %7830 = vmatprep.subr.mxu0 0.0
        %7831 = vmatpush1.msra.mxu0 0.0
        %7832 = vmatprep.subr.mxu0 0.0
        %7833 = vmatpush1.msra.mxu0 0.0
        %7834 = vmatprep.subr.mxu0 0.0
        %7835 = vmatpush1.msra.mxu0 0.0
        %7836 = vmatprep.subr.mxu0 0.0
        %7837 = vmatpush1.msra.mxu0 0.0
        %7838 = vmatprep.subr.mxu0 0.0
        %7839 = vmatpush1.msra.mxu0 0.0
        %7840 = vmatprep.subr.mxu0 0.0
        %7841 = vmatpush1.msra.mxu0 0.0
        %7842 = vmatprep.subr.mxu0 0.0
        %7843 = vmatpush1.msra.mxu0 0.0
        %7844 = vmatprep.subr.mxu0 0.0
        %7845 = vmatpush1.msra.mxu0 0.0
        %7846 = vmatprep.subr.mxu0 0.0
        %7847 = vmatpush1.msra.mxu0 0.0
        %7848 = vmatprep.subr.mxu0 0.0
        %7849 = vmatpush1.msra.mxu0 0.0
        %7850 = vmatprep.subr.mxu0 0.0
        %7851 = vmatpush1.msra.mxu0 0.0
        %7852 = vmatprep.subr.mxu0 0.0
        %7853 = vmatpush1.msra.mxu0 0.0
        %7854 = vmatprep.subr.mxu0 0.0
        %7855 = vmatpush1.msra.mxu0 0.0
        %7856 = vmatprep.subr.mxu0 0.0
        %v7857 = vand.u32 %v7597, 4294901760
        %7858 = vmatpush1.msra.mxu0 %v7857
        %7859 = vmatprep.subr.mxu0 0.0
        %7860 = vmatpush2.msra.mxu0 0.0
        %7861 = vmatprep.subr.mxu0 0.0
        %7862 = vmatpush2.msra.mxu0 0.0
        %7863 = vmatprep.subr.mxu0 0.0
        %7864 = vmatpush2.msra.mxu0 0.0
        %7865 = vmatprep.subr.mxu0 0.0
        %7866 = vmatpush2.msra.mxu0 0.0
        %7867 = vmatprep.subr.mxu0 0.0
        %7868 = vmatpush2.msra.mxu0 0.0
        %7869 = vmatprep.subr.mxu0 0.0
        %7870 = vmatpush2.msra.mxu0 0.0
        %7871 = vmatprep.subr.mxu0 0.0
        %7872 = vmatpush2.msra.mxu0 0.0
        %7873 = vmatprep.subr.mxu0 0.0
        %7874 = vmatpush2.msra.mxu0 0.0
        %7875 = vmatprep.subr.mxu0 0.0
        %7876 = vmatpush2.msra.mxu0 0.0
        %7877 = vmatprep.subr.mxu0 0.0
        %7878 = vmatpush2.msra.mxu0 0.0
        %7879 = vmatprep.subr.mxu0 0.0
        %7880 = vmatpush2.msra.mxu0 0.0
        %7881 = vmatprep.subr.mxu0 0.0
        %7882 = vmatpush2.msra.mxu0 0.0
        %7883 = vmatprep.subr.mxu0 0.0
        %7884 = vmatpush2.msra.mxu0 0.0
        %7885 = vmatprep.subr.mxu0 0.0
        %7886 = vmatpush2.msra.mxu0 0.0
        %7887 = vmatprep.subr.mxu0 0.0
        %7888 = vmatpush2.msra.mxu0 0.0
        %7889 = vmatprep.subr.mxu0 0.0
        %7890 = vmatpush2.msra.mxu0 0.0
        %7891 = vmatprep.mubr.f32.mxu0 0.0
        %v7892 = vand.u32 %v796, 4294901760
        %v7893 = vsub.f32 %v796, %v7892
        %v7894 = vand.u32 %v7893, 4294901760
        %7895 = vmatmul.mubr.f32.gmra.mxu0 %v7894
        %v7896 = vpop.f32.mrf.mxu0
        %v7897 = vadd.f32 %v7823, %v7896
        %v7898 = vpop.f32.mrf.mxu0
        %7899 = vdwg.mxu0
        %7900 = vmatprep.subr.mxu0 0.0
        %7901 = vmatpush1.msra.mxu0 0.0
        %7902 = vmatprep.subr.mxu0 0.0
        %7903 = vmatpush1.msra.mxu0 0.0
        %7904 = vmatprep.subr.mxu0 0.0
        %7905 = vmatpush1.msra.mxu0 0.0
        %7906 = vmatprep.subr.mxu0 0.0
        %7907 = vmatpush1.msra.mxu0 0.0
        %7908 = vmatprep.subr.mxu0 0.0
        %7909 = vmatpush1.msra.mxu0 0.0
        %7910 = vmatprep.subr.mxu0 0.0
        %7911 = vmatpush1.msra.mxu0 0.0
        %7912 = vmatprep.subr.mxu0 0.0
        %7913 = vmatpush1.msra.mxu0 0.0
        %7914 = vmatprep.subr.mxu0 0.0
        %7915 = vmatpush1.msra.mxu0 0.0
        %7916 = vmatprep.subr.mxu0 0.0
        %7917 = vmatpush1.msra.mxu0 0.0
        %7918 = vmatprep.subr.mxu0 0.0
        %7919 = vmatpush1.msra.mxu0 0.0
        %7920 = vmatprep.subr.mxu0 0.0
        %7921 = vmatpush1.msra.mxu0 0.0
        %7922 = vmatprep.subr.mxu0 0.0
        %7923 = vmatpush1.msra.mxu0 0.0
        %7924 = vmatprep.subr.mxu0 0.0
        %7925 = vmatpush1.msra.mxu0 0.0
        %7926 = vmatprep.subr.mxu0 0.0
        %7927 = vmatpush1.msra.mxu0 0.0
        %7928 = vmatprep.subr.mxu0 0.0
        %7929 = vmatpush1.msra.mxu0 0.0
        %7930 = vmatprep.subr.mxu0 0.0
        %v7931 = vand.u32 %v7597, 4294901760
        %v7932 = vsub.f32 %v7597, %v7931
        %v7933 = vand.u32 %v7932, 4294901760
        %7934 = vmatpush1.msra.mxu0 %v7933
        %7935 = vmatprep.subr.mxu0 0.0
        %7936 = vmatpush2.msra.mxu0 0.0
        %7937 = vmatprep.subr.mxu0 0.0
        %7938 = vmatpush2.msra.mxu0 0.0
        %7939 = vmatprep.subr.mxu0 0.0
        %7940 = vmatpush2.msra.mxu0 0.0
        %7941 = vmatprep.subr.mxu0 0.0
        %7942 = vmatpush2.msra.mxu0 0.0
        %7943 = vmatprep.subr.mxu0 0.0
        %7944 = vmatpush2.msra.mxu0 0.0
        %7945 = vmatprep.subr.mxu0 0.0
        %7946 = vmatpush2.msra.mxu0 0.0
        %7947 = vmatprep.subr.mxu0 0.0
        %7948 = vmatpush2.msra.mxu0 0.0
        %7949 = vmatprep.subr.mxu0 0.0
        %7950 = vmatpush2.msra.mxu0 0.0
        %7951 = vmatprep.subr.mxu0 0.0
        %7952 = vmatpush2.msra.mxu0 0.0
        %7953 = vmatprep.subr.mxu0 0.0
        %7954 = vmatpush2.msra.mxu0 0.0
        %7955 = vmatprep.subr.mxu0 0.0
        %7956 = vmatpush2.msra.mxu0 0.0
        %7957 = vmatprep.subr.mxu0 0.0
        %7958 = vmatpush2.msra.mxu0 0.0
        %7959 = vmatprep.subr.mxu0 0.0
        %7960 = vmatpush2.msra.mxu0 0.0
        %7961 = vmatprep.subr.mxu0 0.0
        %7962 = vmatpush2.msra.mxu0 0.0
        %7963 = vmatprep.subr.mxu0 0.0
        %7964 = vmatpush2.msra.mxu0 0.0
        %7965 = vmatprep.subr.mxu0 0.0
        %7966 = vmatpush2.msra.mxu0 0.0
        %7967 = vmatprep.mubr.f32.mxu0 0.0
        %v7968 = vand.u32 %v796, 4294901760
        %7969 = vmatmul.mubr.f32.gmra.mxu0 %v7968
        %v7970 = vpop.f32.mrf.mxu0
        %v7971 = vadd.f32 %v7897, %v7970
        %v7972 = vpop.f32.mrf.mxu0
        %7973 = vdwg.mxu0
        %7974 = vmatprep.subr.mxu0 0.0
        %7975 = vmatpush1.msra.mxu0 0.0
        %7976 = vmatprep.subr.mxu0 0.0
        %7977 = vmatpush1.msra.mxu0 0.0
        %7978 = vmatprep.subr.mxu0 0.0
        %7979 = vmatpush1.msra.mxu0 0.0
        %7980 = vmatprep.subr.mxu0 0.0
        %7981 = vmatpush1.msra.mxu0 0.0
        %7982 = vmatprep.subr.mxu0 0.0
        %7983 = vmatpush1.msra.mxu0 0.0
        %7984 = vmatprep.subr.mxu0 0.0
        %7985 = vmatpush1.msra.mxu0 0.0
        %7986 = vmatprep.subr.mxu0 0.0
        %7987 = vmatpush1.msra.mxu0 0.0
        %7988 = vmatprep.subr.mxu0 0.0
        %7989 = vmatpush1.msra.mxu0 0.0
        %7990 = vmatprep.subr.mxu0 0.0
        %7991 = vmatpush1.msra.mxu0 0.0
        %7992 = vmatprep.subr.mxu0 0.0
        %7993 = vmatpush1.msra.mxu0 0.0
        %7994 = vmatprep.subr.mxu0 0.0
        %7995 = vmatpush1.msra.mxu0 0.0
        %7996 = vmatprep.subr.mxu0 0.0
        %7997 = vmatpush1.msra.mxu0 0.0
        %7998 = vmatprep.subr.mxu0 0.0
        %7999 = vmatpush1.msra.mxu0 0.0
        %8000 = vmatprep.subr.mxu0 0.0
        %8001 = vmatpush1.msra.mxu0 0.0
        %8002 = vmatprep.subr.mxu0 0.0
        %8003 = vmatpush1.msra.mxu0 0.0
        %8004 = vmatprep.subr.mxu0 0.0
        %v8005 = vand.u32 %v7597, 4294901760
        %8006 = vmatpush1.msra.mxu0 %v8005
        %8007 = vmatprep.subr.mxu0 0.0
        %8008 = vmatpush2.msra.mxu0 0.0
        %8009 = vmatprep.subr.mxu0 0.0
        %8010 = vmatpush2.msra.mxu0 0.0
        %8011 = vmatprep.subr.mxu0 0.0
        %8012 = vmatpush2.msra.mxu0 0.0
        %8013 = vmatprep.subr.mxu0 0.0
        %8014 = vmatpush2.msra.mxu0 0.0
        %8015 = vmatprep.subr.mxu0 0.0
        %8016 = vmatpush2.msra.mxu0 0.0
        %8017 = vmatprep.subr.mxu0 0.0
        %8018 = vmatpush2.msra.mxu0 0.0
        %8019 = vmatprep.subr.mxu0 0.0
        %8020 = vmatpush2.msra.mxu0 0.0
        %8021 = vmatprep.subr.mxu0 0.0
        %8022 = vmatpush2.msra.mxu0 0.0
        %8023 = vmatprep.subr.mxu0 0.0
        %8024 = vmatpush2.msra.mxu0 0.0
        %8025 = vmatprep.subr.mxu0 0.0
        %8026 = vmatpush2.msra.mxu0 0.0
        %8027 = vmatprep.subr.mxu0 0.0
        %8028 = vmatpush2.msra.mxu0 0.0
        %8029 = vmatprep.subr.mxu0 0.0
        %8030 = vmatpush2.msra.mxu0 0.0
        %8031 = vmatprep.subr.mxu0 0.0
        %8032 = vmatpush2.msra.mxu0 0.0
        %8033 = vmatprep.subr.mxu0 0.0
        %8034 = vmatpush2.msra.mxu0 0.0
        %8035 = vmatprep.subr.mxu0 0.0
        %8036 = vmatpush2.msra.mxu0 0.0
        %8037 = vmatprep.subr.mxu0 0.0
        %8038 = vmatpush2.msra.mxu0 0.0
        %8039 = vmatprep.mubr.f32.mxu0 0.0
        %v8040 = vand.u32 %v796, 4294901760
        %8041 = vmatmul.mubr.f32.gmra.mxu0 %v8040
        %v8042 = vpop.f32.mrf.mxu0
        %v8043 = vadd.f32 %v7971, %v8042
        %v8044 = vpop.f32.mrf.mxu0
        %8045 = vdwg.mxu0
        %v8046 = vld [vmem:[%s300 + $0x8] sm:$0xff]
        %8048 = vrot.lane.b32.xlu0 %v8043, 16
        %v8049 = vpop.permute.xlu0 %8048
        %v8051 = vsel %vm1249, %v8043, %v8049
        %8053 = vrot.lane.b32.xlu0 %v8046, 96
        %v8054 = vpop.permute.xlu0 %8053
        %8056 = vmatprep.subr.mxu0 0.0
        %8057 = vmatpush1.msra.mxu0 0.0
        %8058 = vmatprep.subr.mxu0 0.0
        %8059 = vmatpush1.msra.mxu0 0.0
        %8060 = vmatprep.subr.mxu0 0.0
        %8061 = vmatpush1.msra.mxu0 0.0
        %8062 = vmatprep.subr.mxu0 0.0
        %8063 = vmatpush1.msra.mxu0 0.0
        %8064 = vmatprep.subr.mxu0 0.0
        %8065 = vmatpush1.msra.mxu0 0.0
        %8066 = vmatprep.subr.mxu0 0.0
        %8067 = vmatpush1.msra.mxu0 0.0
        %8068 = vmatprep.subr.mxu0 0.0
        %8069 = vmatpush1.msra.mxu0 0.0
        %8070 = vmatprep.subr.mxu0 0.0
        %8071 = vmatpush1.msra.mxu0 0.0
        %8072 = vmatprep.subr.mxu0 0.0
        %8073 = vmatpush1.msra.mxu0 0.0
        %8074 = vmatprep.subr.mxu0 0.0
        %8075 = vmatpush1.msra.mxu0 0.0
        %8076 = vmatprep.subr.mxu0 0.0
        %8077 = vmatpush1.msra.mxu0 0.0
        %8078 = vmatprep.subr.mxu0 0.0
        %8079 = vmatpush1.msra.mxu0 0.0
        %8080 = vmatprep.subr.mxu0 0.0
        %8081 = vmatpush1.msra.mxu0 0.0
        %8082 = vmatprep.subr.mxu0 0.0
        %8083 = vmatpush1.msra.mxu0 0.0
        %8084 = vmatprep.subr.mxu0 0.0
        %8085 = vmatpush1.msra.mxu0 0.0
        %8086 = vmatprep.subr.mxu0 0.0
        %v8087 = vand.u32 %v8054, 4294901760
        %8088 = vmatpush1.msra.mxu0 %v8087
        %8089 = vmatprep.subr.mxu0 0.0
        %8090 = vmatpush2.msra.mxu0 0.0
        %8091 = vmatprep.subr.mxu0 0.0
        %8092 = vmatpush2.msra.mxu0 0.0
        %8093 = vmatprep.subr.mxu0 0.0
        %8094 = vmatpush2.msra.mxu0 0.0
        %8095 = vmatprep.subr.mxu0 0.0
        %8096 = vmatpush2.msra.mxu0 0.0
        %8097 = vmatprep.subr.mxu0 0.0
        %8098 = vmatpush2.msra.mxu0 0.0
        %8099 = vmatprep.subr.mxu0 0.0
        %8100 = vmatpush2.msra.mxu0 0.0
        %8101 = vmatprep.subr.mxu0 0.0
        %8102 = vmatpush2.msra.mxu0 0.0
        %8103 = vmatprep.subr.mxu0 0.0
        %8104 = vmatpush2.msra.mxu0 0.0
        %8105 = vmatprep.subr.mxu0 0.0
        %8106 = vmatpush2.msra.mxu0 0.0
        %8107 = vmatprep.subr.mxu0 0.0
        %8108 = vmatpush2.msra.mxu0 0.0
        %8109 = vmatprep.subr.mxu0 0.0
        %8110 = vmatpush2.msra.mxu0 0.0
        %8111 = vmatprep.subr.mxu0 0.0
        %8112 = vmatpush2.msra.mxu0 0.0
        %8113 = vmatprep.subr.mxu0 0.0
        %8114 = vmatpush2.msra.mxu0 0.0
        %8115 = vmatprep.subr.mxu0 0.0
        %8116 = vmatpush2.msra.mxu0 0.0
        %8117 = vmatprep.subr.mxu0 0.0
        %8118 = vmatpush2.msra.mxu0 0.0
        %8119 = vmatprep.subr.mxu0 0.0
        %8120 = vmatpush2.msra.mxu0 0.0
        %8121 = vmatprep.mubr.f32.mxu0 0.0
        %v8122 = vand.u32 %v1252, 4294901760
        %v8123 = vsub.f32 %v1252, %v8122
        %v8124 = vand.u32 %v8123, 4294901760
        %v8125 = vsub.f32 %v8123, %v8124
        %v8126 = vand.u32 %v8125, 4294901760
        %8127 = vmatmul.mubr.f32.gmra.mxu0 %v8126
        %v8128 = vpop.f32.mrf.mxu0
        %v8129 = vadd.f32 %v8051, %v8128
        %v8130 = vpop.f32.mrf.mxu0
        %8131 = vdwg.mxu0
        %8132 = vmatprep.subr.mxu0 0.0
        %8133 = vmatpush1.msra.mxu0 0.0
        %8134 = vmatprep.subr.mxu0 0.0
        %8135 = vmatpush1.msra.mxu0 0.0
        %8136 = vmatprep.subr.mxu0 0.0
        %8137 = vmatpush1.msra.mxu0 0.0
        %8138 = vmatprep.subr.mxu0 0.0
        %8139 = vmatpush1.msra.mxu0 0.0
        %8140 = vmatprep.subr.mxu0 0.0
        %8141 = vmatpush1.msra.mxu0 0.0
        %8142 = vmatprep.subr.mxu0 0.0
        %8143 = vmatpush1.msra.mxu0 0.0
        %8144 = vmatprep.subr.mxu0 0.0
        %8145 = vmatpush1.msra.mxu0 0.0
        %8146 = vmatprep.subr.mxu0 0.0
        %8147 = vmatpush1.msra.mxu0 0.0
        %8148 = vmatprep.subr.mxu0 0.0
        %8149 = vmatpush1.msra.mxu0 0.0
        %8150 = vmatprep.subr.mxu0 0.0
        %8151 = vmatpush1.msra.mxu0 0.0
        %8152 = vmatprep.subr.mxu0 0.0
        %8153 = vmatpush1.msra.mxu0 0.0
        %8154 = vmatprep.subr.mxu0 0.0
        %8155 = vmatpush1.msra.mxu0 0.0
        %8156 = vmatprep.subr.mxu0 0.0
        %8157 = vmatpush1.msra.mxu0 0.0
        %8158 = vmatprep.subr.mxu0 0.0
        %8159 = vmatpush1.msra.mxu0 0.0
        %8160 = vmatprep.subr.mxu0 0.0
        %8161 = vmatpush1.msra.mxu0 0.0
        %8162 = vmatprep.subr.mxu0 0.0
        %v8163 = vand.u32 %v8054, 4294901760
        %v8164 = vsub.f32 %v8054, %v8163
        %v8165 = vand.u32 %v8164, 4294901760
        %v8166 = vsub.f32 %v8164, %v8165
        %v8167 = vand.u32 %v8166, 4294901760
        %8168 = vmatpush1.msra.mxu0 %v8167
        %8169 = vmatprep.subr.mxu0 0.0
        %8170 = vmatpush2.msra.mxu0 0.0
        %8171 = vmatprep.subr.mxu0 0.0
        %8172 = vmatpush2.msra.mxu0 0.0
        %8173 = vmatprep.subr.mxu0 0.0
        %8174 = vmatpush2.msra.mxu0 0.0
        %8175 = vmatprep.subr.mxu0 0.0
        %8176 = vmatpush2.msra.mxu0 0.0
        %8177 = vmatprep.subr.mxu0 0.0
        %8178 = vmatpush2.msra.mxu0 0.0
        %8179 = vmatprep.subr.mxu0 0.0
        %8180 = vmatpush2.msra.mxu0 0.0
        %8181 = vmatprep.subr.mxu0 0.0
        %8182 = vmatpush2.msra.mxu0 0.0
        %8183 = vmatprep.subr.mxu0 0.0
        %8184 = vmatpush2.msra.mxu0 0.0
        %8185 = vmatprep.subr.mxu0 0.0
        %8186 = vmatpush2.msra.mxu0 0.0
        %8187 = vmatprep.subr.mxu0 0.0
        %8188 = vmatpush2.msra.mxu0 0.0
        %8189 = vmatprep.subr.mxu0 0.0
        %8190 = vmatpush2.msra.mxu0 0.0
        %8191 = vmatprep.subr.mxu0 0.0
        %8192 = vmatpush2.msra.mxu0 0.0
        %8193 = vmatprep.subr.mxu0 0.0
        %8194 = vmatpush2.msra.mxu0 0.0
        %8195 = vmatprep.subr.mxu0 0.0
        %8196 = vmatpush2.msra.mxu0 0.0
        %8197 = vmatprep.subr.mxu0 0.0
        %8198 = vmatpush2.msra.mxu0 0.0
        %8199 = vmatprep.subr.mxu0 0.0
        %8200 = vmatpush2.msra.mxu0 0.0
        %8201 = vmatprep.mubr.f32.mxu0 0.0
        %v8202 = vand.u32 %v1252, 4294901760
        %8203 = vmatmul.mubr.f32.gmra.mxu0 %v8202
        %v8204 = vpop.f32.mrf.mxu0
        %v8205 = vadd.f32 %v8129, %v8204
        %v8206 = vpop.f32.mrf.mxu0
        %8207 = vdwg.mxu0
        %8208 = vmatprep.subr.mxu0 0.0
        %8209 = vmatpush1.msra.mxu0 0.0
        %8210 = vmatprep.subr.mxu0 0.0
        %8211 = vmatpush1.msra.mxu0 0.0
        %8212 = vmatprep.subr.mxu0 0.0
        %8213 = vmatpush1.msra.mxu0 0.0
        %8214 = vmatprep.subr.mxu0 0.0
        %8215 = vmatpush1.msra.mxu0 0.0
        %8216 = vmatprep.subr.mxu0 0.0
        %8217 = vmatpush1.msra.mxu0 0.0
        %8218 = vmatprep.subr.mxu0 0.0
        %8219 = vmatpush1.msra.mxu0 0.0
        %8220 = vmatprep.subr.mxu0 0.0
        %8221 = vmatpush1.msra.mxu0 0.0
        %8222 = vmatprep.subr.mxu0 0.0
        %8223 = vmatpush1.msra.mxu0 0.0
        %8224 = vmatprep.subr.mxu0 0.0
        %8225 = vmatpush1.msra.mxu0 0.0
        %8226 = vmatprep.subr.mxu0 0.0
        %8227 = vmatpush1.msra.mxu0 0.0
        %8228 = vmatprep.subr.mxu0 0.0
        %8229 = vmatpush1.msra.mxu0 0.0
        %8230 = vmatprep.subr.mxu0 0.0
        %8231 = vmatpush1.msra.mxu0 0.0
        %8232 = vmatprep.subr.mxu0 0.0
        %8233 = vmatpush1.msra.mxu0 0.0
        %8234 = vmatprep.subr.mxu0 0.0
        %8235 = vmatpush1.msra.mxu0 0.0
        %8236 = vmatprep.subr.mxu0 0.0
        %8237 = vmatpush1.msra.mxu0 0.0
        %8238 = vmatprep.subr.mxu0 0.0
        %v8239 = vand.u32 %v8054, 4294901760
        %v8240 = vsub.f32 %v8054, %v8239
        %8241 = vmatpush1.msra.mxu0 %v8240
        %8242 = vmatprep.subr.mxu0 0.0
        %8243 = vmatpush2.msra.mxu0 0.0
        %8244 = vmatprep.subr.mxu0 0.0
        %8245 = vmatpush2.msra.mxu0 0.0
        %8246 = vmatprep.subr.mxu0 0.0
        %8247 = vmatpush2.msra.mxu0 0.0
        %8248 = vmatprep.subr.mxu0 0.0
        %8249 = vmatpush2.msra.mxu0 0.0
        %8250 = vmatprep.subr.mxu0 0.0
        %8251 = vmatpush2.msra.mxu0 0.0
        %8252 = vmatprep.subr.mxu0 0.0
        %8253 = vmatpush2.msra.mxu0 0.0
        %8254 = vmatprep.subr.mxu0 0.0
        %8255 = vmatpush2.msra.mxu0 0.0
        %8256 = vmatprep.subr.mxu0 0.0
        %8257 = vmatpush2.msra.mxu0 0.0
        %8258 = vmatprep.subr.mxu0 0.0
        %8259 = vmatpush2.msra.mxu0 0.0
        %8260 = vmatprep.subr.mxu0 0.0
        %8261 = vmatpush2.msra.mxu0 0.0
        %8262 = vmatprep.subr.mxu0 0.0
        %8263 = vmatpush2.msra.mxu0 0.0
        %8264 = vmatprep.subr.mxu0 0.0
        %8265 = vmatpush2.msra.mxu0 0.0
        %8266 = vmatprep.subr.mxu0 0.0
        %8267 = vmatpush2.msra.mxu0 0.0
        %8268 = vmatprep.subr.mxu0 0.0
        %8269 = vmatpush2.msra.mxu0 0.0
        %8270 = vmatprep.subr.mxu0 0.0
        %8271 = vmatpush2.msra.mxu0 0.0
        %8272 = vmatprep.subr.mxu0 0.0
        %8273 = vmatpush2.msra.mxu0 0.0
        %8274 = vmatprep.mubr.f32.mxu0 0.0
        %v8275 = vand.u32 %v1252, 4294901760
        %v8276 = vsub.f32 %v1252, %v8275
        %8277 = vmatmul.mubr.f32.gmra.mxu0 %v8276
        %v8278 = vpop.f32.mrf.mxu0
        %v8279 = vadd.f32 %v8205, %v8278
        %v8280 = vpop.f32.mrf.mxu0
        %8281 = vdwg.mxu0
        %8282 = vmatprep.subr.mxu0 0.0
        %8283 = vmatpush1.msra.mxu0 0.0
        %8284 = vmatprep.subr.mxu0 0.0
        %8285 = vmatpush1.msra.mxu0 0.0
        %8286 = vmatprep.subr.mxu0 0.0
        %8287 = vmatpush1.msra.mxu0 0.0
        %8288 = vmatprep.subr.mxu0 0.0
        %8289 = vmatpush1.msra.mxu0 0.0
        %8290 = vmatprep.subr.mxu0 0.0
        %8291 = vmatpush1.msra.mxu0 0.0
        %8292 = vmatprep.subr.mxu0 0.0
        %8293 = vmatpush1.msra.mxu0 0.0
        %8294 = vmatprep.subr.mxu0 0.0
        %8295 = vmatpush1.msra.mxu0 0.0
        %8296 = vmatprep.subr.mxu0 0.0
        %8297 = vmatpush1.msra.mxu0 0.0
        %8298 = vmatprep.subr.mxu0 0.0
        %8299 = vmatpush1.msra.mxu0 0.0
        %8300 = vmatprep.subr.mxu0 0.0
        %8301 = vmatpush1.msra.mxu0 0.0
        %8302 = vmatprep.subr.mxu0 0.0
        %8303 = vmatpush1.msra.mxu0 0.0
        %8304 = vmatprep.subr.mxu0 0.0
        %8305 = vmatpush1.msra.mxu0 0.0
        %8306 = vmatprep.subr.mxu0 0.0
        %8307 = vmatpush1.msra.mxu0 0.0
        %8308 = vmatprep.subr.mxu0 0.0
        %8309 = vmatpush1.msra.mxu0 0.0
        %8310 = vmatprep.subr.mxu0 0.0
        %8311 = vmatpush1.msra.mxu0 0.0
        %8312 = vmatprep.subr.mxu0 0.0
        %v8313 = vand.u32 %v8054, 4294901760
        %8314 = vmatpush1.msra.mxu0 %v8313
        %8315 = vmatprep.subr.mxu0 0.0
        %8316 = vmatpush2.msra.mxu0 0.0
        %8317 = vmatprep.subr.mxu0 0.0
        %8318 = vmatpush2.msra.mxu0 0.0
        %8319 = vmatprep.subr.mxu0 0.0
        %8320 = vmatpush2.msra.mxu0 0.0
        %8321 = vmatprep.subr.mxu0 0.0
        %8322 = vmatpush2.msra.mxu0 0.0
        %8323 = vmatprep.subr.mxu0 0.0
        %8324 = vmatpush2.msra.mxu0 0.0
        %8325 = vmatprep.subr.mxu0 0.0
        %8326 = vmatpush2.msra.mxu0 0.0
        %8327 = vmatprep.subr.mxu0 0.0
        %8328 = vmatpush2.msra.mxu0 0.0
        %8329 = vmatprep.subr.mxu0 0.0
        %8330 = vmatpush2.msra.mxu0 0.0
        %8331 = vmatprep.subr.mxu0 0.0
        %8332 = vmatpush2.msra.mxu0 0.0
        %8333 = vmatprep.subr.mxu0 0.0
        %8334 = vmatpush2.msra.mxu0 0.0
        %8335 = vmatprep.subr.mxu0 0.0
        %8336 = vmatpush2.msra.mxu0 0.0
        %8337 = vmatprep.subr.mxu0 0.0
        %8338 = vmatpush2.msra.mxu0 0.0
        %8339 = vmatprep.subr.mxu0 0.0
        %8340 = vmatpush2.msra.mxu0 0.0
        %8341 = vmatprep.subr.mxu0 0.0
        %8342 = vmatpush2.msra.mxu0 0.0
        %8343 = vmatprep.subr.mxu0 0.0
        %8344 = vmatpush2.msra.mxu0 0.0
        %8345 = vmatprep.subr.mxu0 0.0
        %8346 = vmatpush2.msra.mxu0 0.0
        %8347 = vmatprep.mubr.f32.mxu0 0.0
        %v8348 = vand.u32 %v1252, 4294901760
        %v8349 = vsub.f32 %v1252, %v8348
        %v8350 = vand.u32 %v8349, 4294901760
        %8351 = vmatmul.mubr.f32.gmra.mxu0 %v8350
        %v8352 = vpop.f32.mrf.mxu0
        %v8353 = vadd.f32 %v8279, %v8352
        %v8354 = vpop.f32.mrf.mxu0
        %8355 = vdwg.mxu0
        %8356 = vmatprep.subr.mxu0 0.0
        %8357 = vmatpush1.msra.mxu0 0.0
        %8358 = vmatprep.subr.mxu0 0.0
        %8359 = vmatpush1.msra.mxu0 0.0
        %8360 = vmatprep.subr.mxu0 0.0
        %8361 = vmatpush1.msra.mxu0 0.0
        %8362 = vmatprep.subr.mxu0 0.0
        %8363 = vmatpush1.msra.mxu0 0.0
        %8364 = vmatprep.subr.mxu0 0.0
        %8365 = vmatpush1.msra.mxu0 0.0
        %8366 = vmatprep.subr.mxu0 0.0
        %8367 = vmatpush1.msra.mxu0 0.0
        %8368 = vmatprep.subr.mxu0 0.0
        %8369 = vmatpush1.msra.mxu0 0.0
        %8370 = vmatprep.subr.mxu0 0.0
        %8371 = vmatpush1.msra.mxu0 0.0
        %8372 = vmatprep.subr.mxu0 0.0
        %8373 = vmatpush1.msra.mxu0 0.0
        %8374 = vmatprep.subr.mxu0 0.0
        %8375 = vmatpush1.msra.mxu0 0.0
        %8376 = vmatprep.subr.mxu0 0.0
        %8377 = vmatpush1.msra.mxu0 0.0
        %8378 = vmatprep.subr.mxu0 0.0
        %8379 = vmatpush1.msra.mxu0 0.0
        %8380 = vmatprep.subr.mxu0 0.0
        %8381 = vmatpush1.msra.mxu0 0.0
        %8382 = vmatprep.subr.mxu0 0.0
        %8383 = vmatpush1.msra.mxu0 0.0
        %8384 = vmatprep.subr.mxu0 0.0
        %8385 = vmatpush1.msra.mxu0 0.0
        %8386 = vmatprep.subr.mxu0 0.0
        %v8387 = vand.u32 %v8054, 4294901760
        %v8388 = vsub.f32 %v8054, %v8387
        %v8389 = vand.u32 %v8388, 4294901760
        %8390 = vmatpush1.msra.mxu0 %v8389
        %8391 = vmatprep.subr.mxu0 0.0
        %8392 = vmatpush2.msra.mxu0 0.0
        %8393 = vmatprep.subr.mxu0 0.0
        %8394 = vmatpush2.msra.mxu0 0.0
        %8395 = vmatprep.subr.mxu0 0.0
        %8396 = vmatpush2.msra.mxu0 0.0
        %8397 = vmatprep.subr.mxu0 0.0
        %8398 = vmatpush2.msra.mxu0 0.0
        %8399 = vmatprep.subr.mxu0 0.0
        %8400 = vmatpush2.msra.mxu0 0.0
        %8401 = vmatprep.subr.mxu0 0.0
        %8402 = vmatpush2.msra.mxu0 0.0
        %8403 = vmatprep.subr.mxu0 0.0
        %8404 = vmatpush2.msra.mxu0 0.0
        %8405 = vmatprep.subr.mxu0 0.0
        %8406 = vmatpush2.msra.mxu0 0.0
        %8407 = vmatprep.subr.mxu0 0.0
        %8408 = vmatpush2.msra.mxu0 0.0
        %8409 = vmatprep.subr.mxu0 0.0
        %8410 = vmatpush2.msra.mxu0 0.0
        %8411 = vmatprep.subr.mxu0 0.0
        %8412 = vmatpush2.msra.mxu0 0.0
        %8413 = vmatprep.subr.mxu0 0.0
        %8414 = vmatpush2.msra.mxu0 0.0
        %8415 = vmatprep.subr.mxu0 0.0
        %8416 = vmatpush2.msra.mxu0 0.0
        %8417 = vmatprep.subr.mxu0 0.0
        %8418 = vmatpush2.msra.mxu0 0.0
        %8419 = vmatprep.subr.mxu0 0.0
        %8420 = vmatpush2.msra.mxu0 0.0
        %8421 = vmatprep.subr.mxu0 0.0
        %8422 = vmatpush2.msra.mxu0 0.0
        %8423 = vmatprep.mubr.f32.mxu0 0.0
        %v8424 = vand.u32 %v1252, 4294901760
        %8425 = vmatmul.mubr.f32.gmra.mxu0 %v8424
        %v8426 = vpop.f32.mrf.mxu0
        %v8427 = vadd.f32 %v8353, %v8426
        %v8428 = vpop.f32.mrf.mxu0
        %8429 = vdwg.mxu0
        %8430 = vmatprep.subr.mxu0 0.0
        %8431 = vmatpush1.msra.mxu0 0.0
        %8432 = vmatprep.subr.mxu0 0.0
        %8433 = vmatpush1.msra.mxu0 0.0
        %8434 = vmatprep.subr.mxu0 0.0
        %8435 = vmatpush1.msra.mxu0 0.0
        %8436 = vmatprep.subr.mxu0 0.0
        %8437 = vmatpush1.msra.mxu0 0.0
        %8438 = vmatprep.subr.mxu0 0.0
        %8439 = vmatpush1.msra.mxu0 0.0
        %8440 = vmatprep.subr.mxu0 0.0
        %8441 = vmatpush1.msra.mxu0 0.0
        %8442 = vmatprep.subr.mxu0 0.0
        %8443 = vmatpush1.msra.mxu0 0.0
        %8444 = vmatprep.subr.mxu0 0.0
        %8445 = vmatpush1.msra.mxu0 0.0
        %8446 = vmatprep.subr.mxu0 0.0
        %8447 = vmatpush1.msra.mxu0 0.0
        %8448 = vmatprep.subr.mxu0 0.0
        %8449 = vmatpush1.msra.mxu0 0.0
        %8450 = vmatprep.subr.mxu0 0.0
        %8451 = vmatpush1.msra.mxu0 0.0
        %8452 = vmatprep.subr.mxu0 0.0
        %8453 = vmatpush1.msra.mxu0 0.0
        %8454 = vmatprep.subr.mxu0 0.0
        %8455 = vmatpush1.msra.mxu0 0.0
        %8456 = vmatprep.subr.mxu0 0.0
        %8457 = vmatpush1.msra.mxu0 0.0
        %8458 = vmatprep.subr.mxu0 0.0
        %8459 = vmatpush1.msra.mxu0 0.0
        %8460 = vmatprep.subr.mxu0 0.0
        %v8461 = vand.u32 %v8054, 4294901760
        %8462 = vmatpush1.msra.mxu0 %v8461
        %8463 = vmatprep.subr.mxu0 0.0
        %8464 = vmatpush2.msra.mxu0 0.0
        %8465 = vmatprep.subr.mxu0 0.0
        %8466 = vmatpush2.msra.mxu0 0.0
        %8467 = vmatprep.subr.mxu0 0.0
        %8468 = vmatpush2.msra.mxu0 0.0
        %8469 = vmatprep.subr.mxu0 0.0
        %8470 = vmatpush2.msra.mxu0 0.0
        %8471 = vmatprep.subr.mxu0 0.0
        %8472 = vmatpush2.msra.mxu0 0.0
        %8473 = vmatprep.subr.mxu0 0.0
        %8474 = vmatpush2.msra.mxu0 0.0
        %8475 = vmatprep.subr.mxu0 0.0
        %8476 = vmatpush2.msra.mxu0 0.0
        %8477 = vmatprep.subr.mxu0 0.0
        %8478 = vmatpush2.msra.mxu0 0.0
        %8479 = vmatprep.subr.mxu0 0.0
        %8480 = vmatpush2.msra.mxu0 0.0
        %8481 = vmatprep.subr.mxu0 0.0
        %8482 = vmatpush2.msra.mxu0 0.0
        %8483 = vmatprep.subr.mxu0 0.0
        %8484 = vmatpush2.msra.mxu0 0.0
        %8485 = vmatprep.subr.mxu0 0.0
        %8486 = vmatpush2.msra.mxu0 0.0
        %8487 = vmatprep.subr.mxu0 0.0
        %8488 = vmatpush2.msra.mxu0 0.0
        %8489 = vmatprep.subr.mxu0 0.0
        %8490 = vmatpush2.msra.mxu0 0.0
        %8491 = vmatprep.subr.mxu0 0.0
        %8492 = vmatpush2.msra.mxu0 0.0
        %8493 = vmatprep.subr.mxu0 0.0
        %8494 = vmatpush2.msra.mxu0 0.0
        %8495 = vmatprep.mubr.f32.mxu0 0.0
        %v8496 = vand.u32 %v1252, 4294901760
        %8497 = vmatmul.mubr.f32.gmra.mxu0 %v8496
        %v8498 = vpop.f32.mrf.mxu0
        %v8499 = vadd.f32 %v8427, %v8498
        %v8500 = vpop.f32.mrf.mxu0
        %8501 = vdwg.mxu0
        %v8502 = vadd.f32 %v8499, %v1703
        %v8503 = vmax.f32 %v8502, 0.0
        %8505 = vrot.lane.b32.xlu0 %v8503, 32
        %v8506 = vpop.permute.xlu0 %8505
        %8508 = vst.msk [vmem:[%s337 + $0x8] sm:$0xff] %vm3069, %v8506
        %v8509 = vld [vmem:[%s291] sm:$0xff]
        %8511 = vrot.lane.b32.xlu0 %v8509, 80
        %v8512 = vpop.permute.xlu0 %8511
        %v8513 = vsel %vm345, %v8512, 0
        %8515 = vmatprep.subr.mxu0 0.0
        %8516 = vmatpush1.msra.mxu0 0.0
        %8517 = vmatprep.subr.mxu0 0.0
        %8518 = vmatpush1.msra.mxu0 0.0
        %8519 = vmatprep.subr.mxu0 0.0
        %8520 = vmatpush1.msra.mxu0 0.0
        %8521 = vmatprep.subr.mxu0 0.0
        %8522 = vmatpush1.msra.mxu0 0.0
        %8523 = vmatprep.subr.mxu0 0.0
        %8524 = vmatpush1.msra.mxu0 0.0
        %8525 = vmatprep.subr.mxu0 0.0
        %8526 = vmatpush1.msra.mxu0 0.0
        %8527 = vmatprep.subr.mxu0 0.0
        %8528 = vmatpush1.msra.mxu0 0.0
        %8529 = vmatprep.subr.mxu0 0.0
        %8530 = vmatpush1.msra.mxu0 0.0
        %8531 = vmatprep.subr.mxu0 0.0
        %8532 = vmatpush1.msra.mxu0 0.0
        %8533 = vmatprep.subr.mxu0 0.0
        %8534 = vmatpush1.msra.mxu0 0.0
        %8535 = vmatprep.subr.mxu0 0.0
        %8536 = vmatpush1.msra.mxu0 0.0
        %8537 = vmatprep.subr.mxu0 0.0
        %8538 = vmatpush1.msra.mxu0 0.0
        %8539 = vmatprep.subr.mxu0 0.0
        %8540 = vmatpush1.msra.mxu0 0.0
        %8541 = vmatprep.subr.mxu0 0.0
        %8542 = vmatpush1.msra.mxu0 0.0
        %8543 = vmatprep.subr.mxu0 0.0
        %8544 = vmatpush1.msra.mxu0 0.0
        %8545 = vmatprep.subr.mxu0 0.0
        %v8546 = vand.u32 %v340, 4294901760
        %8547 = vmatpush1.msra.mxu0 %v8546
        %8548 = vmatprep.subr.mxu0 0.0
        %8549 = vmatpush2.msra.mxu0 0.0
        %8550 = vmatprep.subr.mxu0 0.0
        %8551 = vmatpush2.msra.mxu0 0.0
        %8552 = vmatprep.subr.mxu0 0.0
        %8553 = vmatpush2.msra.mxu0 0.0
        %8554 = vmatprep.subr.mxu0 0.0
        %8555 = vmatpush2.msra.mxu0 0.0
        %8556 = vmatprep.subr.mxu0 0.0
        %8557 = vmatpush2.msra.mxu0 0.0
        %8558 = vmatprep.subr.mxu0 0.0
        %8559 = vmatpush2.msra.mxu0 0.0
        %8560 = vmatprep.subr.mxu0 0.0
        %8561 = vmatpush2.msra.mxu0 0.0
        %8562 = vmatprep.subr.mxu0 0.0
        %8563 = vmatpush2.msra.mxu0 0.0
        %8564 = vmatprep.subr.mxu0 0.0
        %8565 = vmatpush2.msra.mxu0 0.0
        %8566 = vmatprep.subr.mxu0 0.0
        %8567 = vmatpush2.msra.mxu0 0.0
        %8568 = vmatprep.subr.mxu0 0.0
        %8569 = vmatpush2.msra.mxu0 0.0
        %8570 = vmatprep.subr.mxu0 0.0
        %8571 = vmatpush2.msra.mxu0 0.0
        %8572 = vmatprep.subr.mxu0 0.0
        %8573 = vmatpush2.msra.mxu0 0.0
        %8574 = vmatprep.subr.mxu0 0.0
        %8575 = vmatpush2.msra.mxu0 0.0
        %8576 = vmatprep.subr.mxu0 0.0
        %8577 = vmatpush2.msra.mxu0 0.0
        %8578 = vmatprep.subr.mxu0 0.0
        %8579 = vmatpush2.msra.mxu0 0.0
        %8580 = vmatprep.mubr.f32.mxu0 0.0
        %v8581 = vand.u32 %v8513, 4294901760
        %v8582 = vsub.f32 %v8513, %v8581
        %v8583 = vand.u32 %v8582, 4294901760
        %v8584 = vsub.f32 %v8582, %v8583
        %v8585 = vand.u32 %v8584, 4294901760
        %8586 = vmatmul.mubr.f32.gmra.mxu0 %v8585
        %v8587 = vpop.f32.mrf.mxu0
        %v8588 = vadd.f32 0.0, %v8587
        %v8589 = vpop.f32.mrf.mxu0
        %8590 = vdwg.mxu0
        %8591 = vmatprep.subr.mxu0 0.0
        %8592 = vmatpush1.msra.mxu0 0.0
        %8593 = vmatprep.subr.mxu0 0.0
        %8594 = vmatpush1.msra.mxu0 0.0
        %8595 = vmatprep.subr.mxu0 0.0
        %8596 = vmatpush1.msra.mxu0 0.0
        %8597 = vmatprep.subr.mxu0 0.0
        %8598 = vmatpush1.msra.mxu0 0.0
        %8599 = vmatprep.subr.mxu0 0.0
        %8600 = vmatpush1.msra.mxu0 0.0
        %8601 = vmatprep.subr.mxu0 0.0
        %8602 = vmatpush1.msra.mxu0 0.0
        %8603 = vmatprep.subr.mxu0 0.0
        %8604 = vmatpush1.msra.mxu0 0.0
        %8605 = vmatprep.subr.mxu0 0.0
        %8606 = vmatpush1.msra.mxu0 0.0
        %8607 = vmatprep.subr.mxu0 0.0
        %8608 = vmatpush1.msra.mxu0 0.0
        %8609 = vmatprep.subr.mxu0 0.0
        %8610 = vmatpush1.msra.mxu0 0.0
        %8611 = vmatprep.subr.mxu0 0.0
        %8612 = vmatpush1.msra.mxu0 0.0
        %8613 = vmatprep.subr.mxu0 0.0
        %8614 = vmatpush1.msra.mxu0 0.0
        %8615 = vmatprep.subr.mxu0 0.0
        %8616 = vmatpush1.msra.mxu0 0.0
        %8617 = vmatprep.subr.mxu0 0.0
        %8618 = vmatpush1.msra.mxu0 0.0
        %8619 = vmatprep.subr.mxu0 0.0
        %8620 = vmatpush1.msra.mxu0 0.0
        %8621 = vmatprep.subr.mxu0 0.0
        %v8622 = vand.u32 %v340, 4294901760
        %v8623 = vsub.f32 %v340, %v8622
        %v8624 = vand.u32 %v8623, 4294901760
        %v8625 = vsub.f32 %v8623, %v8624
        %v8626 = vand.u32 %v8625, 4294901760
        %8627 = vmatpush1.msra.mxu0 %v8626
        %8628 = vmatprep.subr.mxu0 0.0
        %8629 = vmatpush2.msra.mxu0 0.0
        %8630 = vmatprep.subr.mxu0 0.0
        %8631 = vmatpush2.msra.mxu0 0.0
        %8632 = vmatprep.subr.mxu0 0.0
        %8633 = vmatpush2.msra.mxu0 0.0
        %8634 = vmatprep.subr.mxu0 0.0
        %8635 = vmatpush2.msra.mxu0 0.0
        %8636 = vmatprep.subr.mxu0 0.0
        %8637 = vmatpush2.msra.mxu0 0.0
        %8638 = vmatprep.subr.mxu0 0.0
        %8639 = vmatpush2.msra.mxu0 0.0
        %8640 = vmatprep.subr.mxu0 0.0
        %8641 = vmatpush2.msra.mxu0 0.0
        %8642 = vmatprep.subr.mxu0 0.0
        %8643 = vmatpush2.msra.mxu0 0.0
        %8644 = vmatprep.subr.mxu0 0.0
        %8645 = vmatpush2.msra.mxu0 0.0
        %8646 = vmatprep.subr.mxu0 0.0
        %8647 = vmatpush2.msra.mxu0 0.0
        %8648 = vmatprep.subr.mxu0 0.0
        %8649 = vmatpush2.msra.mxu0 0.0
        %8650 = vmatprep.subr.mxu0 0.0
        %8651 = vmatpush2.msra.mxu0 0.0
        %8652 = vmatprep.subr.mxu0 0.0
        %8653 = vmatpush2.msra.mxu0 0.0
        %8654 = vmatprep.subr.mxu0 0.0
        %8655 = vmatpush2.msra.mxu0 0.0
        %8656 = vmatprep.subr.mxu0 0.0
        %8657 = vmatpush2.msra.mxu0 0.0
        %8658 = vmatprep.subr.mxu0 0.0
        %8659 = vmatpush2.msra.mxu0 0.0
        %8660 = vmatprep.mubr.f32.mxu0 0.0
        %v8661 = vand.u32 %v8513, 4294901760
        %8662 = vmatmul.mubr.f32.gmra.mxu0 %v8661
        %v8663 = vpop.f32.mrf.mxu0
        %v8664 = vadd.f32 %v8588, %v8663
        %v8665 = vpop.f32.mrf.mxu0
        %8666 = vdwg.mxu0
        %8667 = vmatprep.subr.mxu0 0.0
        %8668 = vmatpush1.msra.mxu0 0.0
        %8669 = vmatprep.subr.mxu0 0.0
        %8670 = vmatpush1.msra.mxu0 0.0
        %8671 = vmatprep.subr.mxu0 0.0
        %8672 = vmatpush1.msra.mxu0 0.0
        %8673 = vmatprep.subr.mxu0 0.0
        %8674 = vmatpush1.msra.mxu0 0.0
        %8675 = vmatprep.subr.mxu0 0.0
        %8676 = vmatpush1.msra.mxu0 0.0
        %8677 = vmatprep.subr.mxu0 0.0
        %8678 = vmatpush1.msra.mxu0 0.0
        %8679 = vmatprep.subr.mxu0 0.0
        %8680 = vmatpush1.msra.mxu0 0.0
        %8681 = vmatprep.subr.mxu0 0.0
        %8682 = vmatpush1.msra.mxu0 0.0
        %8683 = vmatprep.subr.mxu0 0.0
        %8684 = vmatpush1.msra.mxu0 0.0
        %8685 = vmatprep.subr.mxu0 0.0
        %8686 = vmatpush1.msra.mxu0 0.0
        %8687 = vmatprep.subr.mxu0 0.0
        %8688 = vmatpush1.msra.mxu0 0.0
        %8689 = vmatprep.subr.mxu0 0.0
        %8690 = vmatpush1.msra.mxu0 0.0
        %8691 = vmatprep.subr.mxu0 0.0
        %8692 = vmatpush1.msra.mxu0 0.0
        %8693 = vmatprep.subr.mxu0 0.0
        %8694 = vmatpush1.msra.mxu0 0.0
        %8695 = vmatprep.subr.mxu0 0.0
        %8696 = vmatpush1.msra.mxu0 0.0
        %8697 = vmatprep.subr.mxu0 0.0
        %v8698 = vand.u32 %v340, 4294901760
        %v8699 = vsub.f32 %v340, %v8698
        %8700 = vmatpush1.msra.mxu0 %v8699
        %8701 = vmatprep.subr.mxu0 0.0
        %8702 = vmatpush2.msra.mxu0 0.0
        %8703 = vmatprep.subr.mxu0 0.0
        %8704 = vmatpush2.msra.mxu0 0.0
        %8705 = vmatprep.subr.mxu0 0.0
        %8706 = vmatpush2.msra.mxu0 0.0
        %8707 = vmatprep.subr.mxu0 0.0
        %8708 = vmatpush2.msra.mxu0 0.0
        %8709 = vmatprep.subr.mxu0 0.0
        %8710 = vmatpush2.msra.mxu0 0.0
        %8711 = vmatprep.subr.mxu0 0.0
        %8712 = vmatpush2.msra.mxu0 0.0
        %8713 = vmatprep.subr.mxu0 0.0
        %8714 = vmatpush2.msra.mxu0 0.0
        %8715 = vmatprep.subr.mxu0 0.0
        %8716 = vmatpush2.msra.mxu0 0.0
        %8717 = vmatprep.subr.mxu0 0.0
        %8718 = vmatpush2.msra.mxu0 0.0
        %8719 = vmatprep.subr.mxu0 0.0
        %8720 = vmatpush2.msra.mxu0 0.0
        %8721 = vmatprep.subr.mxu0 0.0
        %8722 = vmatpush2.msra.mxu0 0.0
        %8723 = vmatprep.subr.mxu0 0.0
        %8724 = vmatpush2.msra.mxu0 0.0
        %8725 = vmatprep.subr.mxu0 0.0
        %8726 = vmatpush2.msra.mxu0 0.0
        %8727 = vmatprep.subr.mxu0 0.0
        %8728 = vmatpush2.msra.mxu0 0.0
        %8729 = vmatprep.subr.mxu0 0.0
        %8730 = vmatpush2.msra.mxu0 0.0
        %8731 = vmatprep.subr.mxu0 0.0
        %8732 = vmatpush2.msra.mxu0 0.0
        %8733 = vmatprep.mubr.f32.mxu0 0.0
        %v8734 = vand.u32 %v8513, 4294901760
        %v8735 = vsub.f32 %v8513, %v8734
        %8736 = vmatmul.mubr.f32.gmra.mxu0 %v8735
        %v8737 = vpop.f32.mrf.mxu0
        %v8738 = vadd.f32 %v8664, %v8737
        %v8739 = vpop.f32.mrf.mxu0
        %8740 = vdwg.mxu0
        %8741 = vmatprep.subr.mxu0 0.0
        %8742 = vmatpush1.msra.mxu0 0.0
        %8743 = vmatprep.subr.mxu0 0.0
        %8744 = vmatpush1.msra.mxu0 0.0
        %8745 = vmatprep.subr.mxu0 0.0
        %8746 = vmatpush1.msra.mxu0 0.0
        %8747 = vmatprep.subr.mxu0 0.0
        %8748 = vmatpush1.msra.mxu0 0.0
        %8749 = vmatprep.subr.mxu0 0.0
        %8750 = vmatpush1.msra.mxu0 0.0
        %8751 = vmatprep.subr.mxu0 0.0
        %8752 = vmatpush1.msra.mxu0 0.0
        %8753 = vmatprep.subr.mxu0 0.0
        %8754 = vmatpush1.msra.mxu0 0.0
        %8755 = vmatprep.subr.mxu0 0.0
        %8756 = vmatpush1.msra.mxu0 0.0
        %8757 = vmatprep.subr.mxu0 0.0
        %8758 = vmatpush1.msra.mxu0 0.0
        %8759 = vmatprep.subr.mxu0 0.0
        %8760 = vmatpush1.msra.mxu0 0.0
        %8761 = vmatprep.subr.mxu0 0.0
        %8762 = vmatpush1.msra.mxu0 0.0
        %8763 = vmatprep.subr.mxu0 0.0
        %8764 = vmatpush1.msra.mxu0 0.0
        %8765 = vmatprep.subr.mxu0 0.0
        %8766 = vmatpush1.msra.mxu0 0.0
        %8767 = vmatprep.subr.mxu0 0.0
        %8768 = vmatpush1.msra.mxu0 0.0
        %8769 = vmatprep.subr.mxu0 0.0
        %8770 = vmatpush1.msra.mxu0 0.0
        %8771 = vmatprep.subr.mxu0 0.0
        %v8772 = vand.u32 %v340, 4294901760
        %8773 = vmatpush1.msra.mxu0 %v8772
        %8774 = vmatprep.subr.mxu0 0.0
        %8775 = vmatpush2.msra.mxu0 0.0
        %8776 = vmatprep.subr.mxu0 0.0
        %8777 = vmatpush2.msra.mxu0 0.0
        %8778 = vmatprep.subr.mxu0 0.0
        %8779 = vmatpush2.msra.mxu0 0.0
        %8780 = vmatprep.subr.mxu0 0.0
        %8781 = vmatpush2.msra.mxu0 0.0
        %8782 = vmatprep.subr.mxu0 0.0
        %8783 = vmatpush2.msra.mxu0 0.0
        %8784 = vmatprep.subr.mxu0 0.0
        %8785 = vmatpush2.msra.mxu0 0.0
        %8786 = vmatprep.subr.mxu0 0.0
        %8787 = vmatpush2.msra.mxu0 0.0
        %8788 = vmatprep.subr.mxu0 0.0
        %8789 = vmatpush2.msra.mxu0 0.0
        %8790 = vmatprep.subr.mxu0 0.0
        %8791 = vmatpush2.msra.mxu0 0.0
        %8792 = vmatprep.subr.mxu0 0.0
        %8793 = vmatpush2.msra.mxu0 0.0
        %8794 = vmatprep.subr.mxu0 0.0
        %8795 = vmatpush2.msra.mxu0 0.0
        %8796 = vmatprep.subr.mxu0 0.0
        %8797 = vmatpush2.msra.mxu0 0.0
        %8798 = vmatprep.subr.mxu0 0.0
        %8799 = vmatpush2.msra.mxu0 0.0
        %8800 = vmatprep.subr.mxu0 0.0
        %8801 = vmatpush2.msra.mxu0 0.0
        %8802 = vmatprep.subr.mxu0 0.0
        %8803 = vmatpush2.msra.mxu0 0.0
        %8804 = vmatprep.subr.mxu0 0.0
        %8805 = vmatpush2.msra.mxu0 0.0
        %8806 = vmatprep.mubr.f32.mxu0 0.0
        %v8807 = vand.u32 %v8513, 4294901760
        %v8808 = vsub.f32 %v8513, %v8807
        %v8809 = vand.u32 %v8808, 4294901760
        %8810 = vmatmul.mubr.f32.gmra.mxu0 %v8809
        %v8811 = vpop.f32.mrf.mxu0
        %v8812 = vadd.f32 %v8738, %v8811
        %v8813 = vpop.f32.mrf.mxu0
        %8814 = vdwg.mxu0
        %8815 = vmatprep.subr.mxu0 0.0
        %8816 = vmatpush1.msra.mxu0 0.0
        %8817 = vmatprep.subr.mxu0 0.0
        %8818 = vmatpush1.msra.mxu0 0.0
        %8819 = vmatprep.subr.mxu0 0.0
        %8820 = vmatpush1.msra.mxu0 0.0
        %8821 = vmatprep.subr.mxu0 0.0
        %8822 = vmatpush1.msra.mxu0 0.0
        %8823 = vmatprep.subr.mxu0 0.0
        %8824 = vmatpush1.msra.mxu0 0.0
        %8825 = vmatprep.subr.mxu0 0.0
        %8826 = vmatpush1.msra.mxu0 0.0
        %8827 = vmatprep.subr.mxu0 0.0
        %8828 = vmatpush1.msra.mxu0 0.0
        %8829 = vmatprep.subr.mxu0 0.0
        %8830 = vmatpush1.msra.mxu0 0.0
        %8831 = vmatprep.subr.mxu0 0.0
        %8832 = vmatpush1.msra.mxu0 0.0
        %8833 = vmatprep.subr.mxu0 0.0
        %8834 = vmatpush1.msra.mxu0 0.0
        %8835 = vmatprep.subr.mxu0 0.0
        %8836 = vmatpush1.msra.mxu0 0.0
        %8837 = vmatprep.subr.mxu0 0.0
        %8838 = vmatpush1.msra.mxu0 0.0
        %8839 = vmatprep.subr.mxu0 0.0
        %8840 = vmatpush1.msra.mxu0 0.0
        %8841 = vmatprep.subr.mxu0 0.0
        %8842 = vmatpush1.msra.mxu0 0.0
        %8843 = vmatprep.subr.mxu0 0.0
        %8844 = vmatpush1.msra.mxu0 0.0
        %8845 = vmatprep.subr.mxu0 0.0
        %v8846 = vand.u32 %v340, 4294901760
        %v8847 = vsub.f32 %v340, %v8846
        %v8848 = vand.u32 %v8847, 4294901760
        %8849 = vmatpush1.msra.mxu0 %v8848
        %8850 = vmatprep.subr.mxu0 0.0
        %8851 = vmatpush2.msra.mxu0 0.0
        %8852 = vmatprep.subr.mxu0 0.0
        %8853 = vmatpush2.msra.mxu0 0.0
        %8854 = vmatprep.subr.mxu0 0.0
        %8855 = vmatpush2.msra.mxu0 0.0
        %8856 = vmatprep.subr.mxu0 0.0
        %8857 = vmatpush2.msra.mxu0 0.0
        %8858 = vmatprep.subr.mxu0 0.0
        %8859 = vmatpush2.msra.mxu0 0.0
        %8860 = vmatprep.subr.mxu0 0.0
        %8861 = vmatpush2.msra.mxu0 0.0
        %8862 = vmatprep.subr.mxu0 0.0
        %8863 = vmatpush2.msra.mxu0 0.0
        %8864 = vmatprep.subr.mxu0 0.0
        %8865 = vmatpush2.msra.mxu0 0.0
        %8866 = vmatprep.subr.mxu0 0.0
        %8867 = vmatpush2.msra.mxu0 0.0
        %8868 = vmatprep.subr.mxu0 0.0
        %8869 = vmatpush2.msra.mxu0 0.0
        %8870 = vmatprep.subr.mxu0 0.0
        %8871 = vmatpush2.msra.mxu0 0.0
        %8872 = vmatprep.subr.mxu0 0.0
        %8873 = vmatpush2.msra.mxu0 0.0
        %8874 = vmatprep.subr.mxu0 0.0
        %8875 = vmatpush2.msra.mxu0 0.0
        %8876 = vmatprep.subr.mxu0 0.0
        %8877 = vmatpush2.msra.mxu0 0.0
        %8878 = vmatprep.subr.mxu0 0.0
        %8879 = vmatpush2.msra.mxu0 0.0
        %8880 = vmatprep.subr.mxu0 0.0
        %8881 = vmatpush2.msra.mxu0 0.0
        %8882 = vmatprep.mubr.f32.mxu0 0.0
        %v8883 = vand.u32 %v8513, 4294901760
        %8884 = vmatmul.mubr.f32.gmra.mxu0 %v8883
        %v8885 = vpop.f32.mrf.mxu0
        %v8886 = vadd.f32 %v8812, %v8885
        %v8887 = vpop.f32.mrf.mxu0
        %8888 = vdwg.mxu0
        %8889 = vmatprep.subr.mxu0 0.0
        %8890 = vmatpush1.msra.mxu0 0.0
        %8891 = vmatprep.subr.mxu0 0.0
        %8892 = vmatpush1.msra.mxu0 0.0
        %8893 = vmatprep.subr.mxu0 0.0
        %8894 = vmatpush1.msra.mxu0 0.0
        %8895 = vmatprep.subr.mxu0 0.0
        %8896 = vmatpush1.msra.mxu0 0.0
        %8897 = vmatprep.subr.mxu0 0.0
        %8898 = vmatpush1.msra.mxu0 0.0
        %8899 = vmatprep.subr.mxu0 0.0
        %8900 = vmatpush1.msra.mxu0 0.0
        %8901 = vmatprep.subr.mxu0 0.0
        %8902 = vmatpush1.msra.mxu0 0.0
        %8903 = vmatprep.subr.mxu0 0.0
        %8904 = vmatpush1.msra.mxu0 0.0
        %8905 = vmatprep.subr.mxu0 0.0
        %8906 = vmatpush1.msra.mxu0 0.0
        %8907 = vmatprep.subr.mxu0 0.0
        %8908 = vmatpush1.msra.mxu0 0.0
        %8909 = vmatprep.subr.mxu0 0.0
        %8910 = vmatpush1.msra.mxu0 0.0
        %8911 = vmatprep.subr.mxu0 0.0
        %8912 = vmatpush1.msra.mxu0 0.0
        %8913 = vmatprep.subr.mxu0 0.0
        %8914 = vmatpush1.msra.mxu0 0.0
        %8915 = vmatprep.subr.mxu0 0.0
        %8916 = vmatpush1.msra.mxu0 0.0
        %8917 = vmatprep.subr.mxu0 0.0
        %8918 = vmatpush1.msra.mxu0 0.0
        %8919 = vmatprep.subr.mxu0 0.0
        %v8920 = vand.u32 %v340, 4294901760
        %8921 = vmatpush1.msra.mxu0 %v8920
        %8922 = vmatprep.subr.mxu0 0.0
        %8923 = vmatpush2.msra.mxu0 0.0
        %8924 = vmatprep.subr.mxu0 0.0
        %8925 = vmatpush2.msra.mxu0 0.0
        %8926 = vmatprep.subr.mxu0 0.0
        %8927 = vmatpush2.msra.mxu0 0.0
        %8928 = vmatprep.subr.mxu0 0.0
        %8929 = vmatpush2.msra.mxu0 0.0
        %8930 = vmatprep.subr.mxu0 0.0
        %8931 = vmatpush2.msra.mxu0 0.0
        %8932 = vmatprep.subr.mxu0 0.0
        %8933 = vmatpush2.msra.mxu0 0.0
        %8934 = vmatprep.subr.mxu0 0.0
        %8935 = vmatpush2.msra.mxu0 0.0
        %8936 = vmatprep.subr.mxu0 0.0
        %8937 = vmatpush2.msra.mxu0 0.0
        %8938 = vmatprep.subr.mxu0 0.0
        %8939 = vmatpush2.msra.mxu0 0.0
        %8940 = vmatprep.subr.mxu0 0.0
        %8941 = vmatpush2.msra.mxu0 0.0
        %8942 = vmatprep.subr.mxu0 0.0
        %8943 = vmatpush2.msra.mxu0 0.0
        %8944 = vmatprep.subr.mxu0 0.0
        %8945 = vmatpush2.msra.mxu0 0.0
        %8946 = vmatprep.subr.mxu0 0.0
        %8947 = vmatpush2.msra.mxu0 0.0
        %8948 = vmatprep.subr.mxu0 0.0
        %8949 = vmatpush2.msra.mxu0 0.0
        %8950 = vmatprep.subr.mxu0 0.0
        %8951 = vmatpush2.msra.mxu0 0.0
        %8952 = vmatprep.subr.mxu0 0.0
        %8953 = vmatpush2.msra.mxu0 0.0
        %8954 = vmatprep.mubr.f32.mxu0 0.0
        %v8955 = vand.u32 %v8513, 4294901760
        %8956 = vmatmul.mubr.f32.gmra.mxu0 %v8955
        %v8957 = vpop.f32.mrf.mxu0
        %v8958 = vadd.f32 %v8886, %v8957
        %v8959 = vpop.f32.mrf.mxu0
        %8960 = vdwg.mxu0
        %8961 = vmatprep.subr.mxu0 0.0
        %8962 = vmatpush1.msra.mxu0 0.0
        %8963 = vmatprep.subr.mxu0 0.0
        %8964 = vmatpush1.msra.mxu0 0.0
        %8965 = vmatprep.subr.mxu0 0.0
        %8966 = vmatpush1.msra.mxu0 0.0
        %8967 = vmatprep.subr.mxu0 0.0
        %8968 = vmatpush1.msra.mxu0 0.0
        %8969 = vmatprep.subr.mxu0 0.0
        %8970 = vmatpush1.msra.mxu0 0.0
        %8971 = vmatprep.subr.mxu0 0.0
        %8972 = vmatpush1.msra.mxu0 0.0
        %8973 = vmatprep.subr.mxu0 0.0
        %8974 = vmatpush1.msra.mxu0 0.0
        %8975 = vmatprep.subr.mxu0 0.0
        %8976 = vmatpush1.msra.mxu0 0.0
        %8977 = vmatprep.subr.mxu0 0.0
        %8978 = vmatpush1.msra.mxu0 0.0
        %8979 = vmatprep.subr.mxu0 0.0
        %8980 = vmatpush1.msra.mxu0 0.0
        %8981 = vmatprep.subr.mxu0 0.0
        %8982 = vmatpush1.msra.mxu0 0.0
        %8983 = vmatprep.subr.mxu0 0.0
        %8984 = vmatpush1.msra.mxu0 0.0
        %8985 = vmatprep.subr.mxu0 0.0
        %8986 = vmatpush1.msra.mxu0 0.0
        %8987 = vmatprep.subr.mxu0 0.0
        %8988 = vmatpush1.msra.mxu0 0.0
        %8989 = vmatprep.subr.mxu0 0.0
        %8990 = vmatpush1.msra.mxu0 0.0
        %8991 = vmatprep.subr.mxu0 0.0
        %v8992 = vand.u32 %v8958, 4294901760
        %8993 = vmatpush1.msra.mxu0 %v8992
        %8994 = vmatprep.subr.mxu0 0.0
        %8995 = vmatpush2.msra.mxu0 0.0
        %8996 = vmatprep.subr.mxu0 0.0
        %8997 = vmatpush2.msra.mxu0 0.0
        %8998 = vmatprep.subr.mxu0 0.0
        %8999 = vmatpush2.msra.mxu0 0.0
        %9000 = vmatprep.subr.mxu0 0.0
        %9001 = vmatpush2.msra.mxu0 0.0
        %9002 = vmatprep.subr.mxu0 0.0
        %9003 = vmatpush2.msra.mxu0 0.0
        %9004 = vmatprep.subr.mxu0 0.0
        %9005 = vmatpush2.msra.mxu0 0.0
        %9006 = vmatprep.subr.mxu0 0.0
        %9007 = vmatpush2.msra.mxu0 0.0
        %9008 = vmatprep.subr.mxu0 0.0
        %9009 = vmatpush2.msra.mxu0 0.0
        %9010 = vmatprep.subr.mxu0 0.0
        %9011 = vmatpush2.msra.mxu0 0.0
        %9012 = vmatprep.subr.mxu0 0.0
        %9013 = vmatpush2.msra.mxu0 0.0
        %9014 = vmatprep.subr.mxu0 0.0
        %9015 = vmatpush2.msra.mxu0 0.0
        %9016 = vmatprep.subr.mxu0 0.0
        %9017 = vmatpush2.msra.mxu0 0.0
        %9018 = vmatprep.subr.mxu0 0.0
        %9019 = vmatpush2.msra.mxu0 0.0
        %9020 = vmatprep.subr.mxu0 0.0
        %9021 = vmatpush2.msra.mxu0 0.0
        %9022 = vmatprep.subr.mxu0 0.0
        %9023 = vmatpush2.msra.mxu0 0.0
        %9024 = vmatprep.subr.mxu0 0.0
        %9025 = vmatpush2.msra.mxu0 0.0
        %9026 = vmatprep.mubr.f32.mxu0 0.0
        %v9027 = vand.u32 %v796, 4294901760
        %v9028 = vsub.f32 %v796, %v9027
        %v9029 = vand.u32 %v9028, 4294901760
        %v9030 = vsub.f32 %v9028, %v9029
        %v9031 = vand.u32 %v9030, 4294901760
        %9032 = vmatmul.mubr.f32.gmra.mxu0 %v9031
        %v9033 = vpop.f32.mrf.mxu0
        %v9034 = vadd.f32 0.0, %v9033
        %v9035 = vpop.f32.mrf.mxu0
        %9036 = vdwg.mxu0
        %9037 = vmatprep.subr.mxu0 0.0
        %9038 = vmatpush1.msra.mxu0 0.0
        %9039 = vmatprep.subr.mxu0 0.0
        %9040 = vmatpush1.msra.mxu0 0.0
        %9041 = vmatprep.subr.mxu0 0.0
        %9042 = vmatpush1.msra.mxu0 0.0
        %9043 = vmatprep.subr.mxu0 0.0
        %9044 = vmatpush1.msra.mxu0 0.0
        %9045 = vmatprep.subr.mxu0 0.0
        %9046 = vmatpush1.msra.mxu0 0.0
        %9047 = vmatprep.subr.mxu0 0.0
        %9048 = vmatpush1.msra.mxu0 0.0
        %9049 = vmatprep.subr.mxu0 0.0
        %9050 = vmatpush1.msra.mxu0 0.0
        %9051 = vmatprep.subr.mxu0 0.0
        %9052 = vmatpush1.msra.mxu0 0.0
        %9053 = vmatprep.subr.mxu0 0.0
        %9054 = vmatpush1.msra.mxu0 0.0
        %9055 = vmatprep.subr.mxu0 0.0
        %9056 = vmatpush1.msra.mxu0 0.0
        %9057 = vmatprep.subr.mxu0 0.0
        %9058 = vmatpush1.msra.mxu0 0.0
        %9059 = vmatprep.subr.mxu0 0.0
        %9060 = vmatpush1.msra.mxu0 0.0
        %9061 = vmatprep.subr.mxu0 0.0
        %9062 = vmatpush1.msra.mxu0 0.0
        %9063 = vmatprep.subr.mxu0 0.0
        %9064 = vmatpush1.msra.mxu0 0.0
        %9065 = vmatprep.subr.mxu0 0.0
        %9066 = vmatpush1.msra.mxu0 0.0
        %9067 = vmatprep.subr.mxu0 0.0
        %v9068 = vand.u32 %v8958, 4294901760
        %v9069 = vsub.f32 %v8958, %v9068
        %v9070 = vand.u32 %v9069, 4294901760
        %v9071 = vsub.f32 %v9069, %v9070
        %v9072 = vand.u32 %v9071, 4294901760
        %9073 = vmatpush1.msra.mxu0 %v9072
        %9074 = vmatprep.subr.mxu0 0.0
        %9075 = vmatpush2.msra.mxu0 0.0
        %9076 = vmatprep.subr.mxu0 0.0
        %9077 = vmatpush2.msra.mxu0 0.0
        %9078 = vmatprep.subr.mxu0 0.0
        %9079 = vmatpush2.msra.mxu0 0.0
        %9080 = vmatprep.subr.mxu0 0.0
        %9081 = vmatpush2.msra.mxu0 0.0
        %9082 = vmatprep.subr.mxu0 0.0
        %9083 = vmatpush2.msra.mxu0 0.0
        %9084 = vmatprep.subr.mxu0 0.0
        %9085 = vmatpush2.msra.mxu0 0.0
        %9086 = vmatprep.subr.mxu0 0.0
        %9087 = vmatpush2.msra.mxu0 0.0
        %9088 = vmatprep.subr.mxu0 0.0
        %9089 = vmatpush2.msra.mxu0 0.0
        %9090 = vmatprep.subr.mxu0 0.0
        %9091 = vmatpush2.msra.mxu0 0.0
        %9092 = vmatprep.subr.mxu0 0.0
        %9093 = vmatpush2.msra.mxu0 0.0
        %9094 = vmatprep.subr.mxu0 0.0
        %9095 = vmatpush2.msra.mxu0 0.0
        %9096 = vmatprep.subr.mxu0 0.0
        %9097 = vmatpush2.msra.mxu0 0.0
        %9098 = vmatprep.subr.mxu0 0.0
        %9099 = vmatpush2.msra.mxu0 0.0
        %9100 = vmatprep.subr.mxu0 0.0
        %9101 = vmatpush2.msra.mxu0 0.0
        %9102 = vmatprep.subr.mxu0 0.0
        %9103 = vmatpush2.msra.mxu0 0.0
        %9104 = vmatprep.subr.mxu0 0.0
        %9105 = vmatpush2.msra.mxu0 0.0
        %9106 = vmatprep.mubr.f32.mxu0 0.0
        %v9107 = vand.u32 %v796, 4294901760
        %9108 = vmatmul.mubr.f32.gmra.mxu0 %v9107
        %v9109 = vpop.f32.mrf.mxu0
        %v9110 = vadd.f32 %v9034, %v9109
        %v9111 = vpop.f32.mrf.mxu0
        %9112 = vdwg.mxu0
        %9113 = vmatprep.subr.mxu0 0.0
        %9114 = vmatpush1.msra.mxu0 0.0
        %9115 = vmatprep.subr.mxu0 0.0
        %9116 = vmatpush1.msra.mxu0 0.0
        %9117 = vmatprep.subr.mxu0 0.0
        %9118 = vmatpush1.msra.mxu0 0.0
        %9119 = vmatprep.subr.mxu0 0.0
        %9120 = vmatpush1.msra.mxu0 0.0
        %9121 = vmatprep.subr.mxu0 0.0
        %9122 = vmatpush1.msra.mxu0 0.0
        %9123 = vmatprep.subr.mxu0 0.0
        %9124 = vmatpush1.msra.mxu0 0.0
        %9125 = vmatprep.subr.mxu0 0.0
        %9126 = vmatpush1.msra.mxu0 0.0
        %9127 = vmatprep.subr.mxu0 0.0
        %9128 = vmatpush1.msra.mxu0 0.0
        %9129 = vmatprep.subr.mxu0 0.0
        %9130 = vmatpush1.msra.mxu0 0.0
        %9131 = vmatprep.subr.mxu0 0.0
        %9132 = vmatpush1.msra.mxu0 0.0
        %9133 = vmatprep.subr.mxu0 0.0
        %9134 = vmatpush1.msra.mxu0 0.0
        %9135 = vmatprep.subr.mxu0 0.0
        %9136 = vmatpush1.msra.mxu0 0.0
        %9137 = vmatprep.subr.mxu0 0.0
        %9138 = vmatpush1.msra.mxu0 0.0
        %9139 = vmatprep.subr.mxu0 0.0
        %9140 = vmatpush1.msra.mxu0 0.0
        %9141 = vmatprep.subr.mxu0 0.0
        %9142 = vmatpush1.msra.mxu0 0.0
        %9143 = vmatprep.subr.mxu0 0.0
        %v9144 = vand.u32 %v8958, 4294901760
        %v9145 = vsub.f32 %v8958, %v9144
        %9146 = vmatpush1.msra.mxu0 %v9145
        %9147 = vmatprep.subr.mxu0 0.0
        %9148 = vmatpush2.msra.mxu0 0.0
        %9149 = vmatprep.subr.mxu0 0.0
        %9150 = vmatpush2.msra.mxu0 0.0
        %9151 = vmatprep.subr.mxu0 0.0
        %9152 = vmatpush2.msra.mxu0 0.0
        %9153 = vmatprep.subr.mxu0 0.0
        %9154 = vmatpush2.msra.mxu0 0.0
        %9155 = vmatprep.subr.mxu0 0.0
        %9156 = vmatpush2.msra.mxu0 0.0
        %9157 = vmatprep.subr.mxu0 0.0
        %9158 = vmatpush2.msra.mxu0 0.0
        %9159 = vmatprep.subr.mxu0 0.0
        %9160 = vmatpush2.msra.mxu0 0.0
        %9161 = vmatprep.subr.mxu0 0.0
        %9162 = vmatpush2.msra.mxu0 0.0
        %9163 = vmatprep.subr.mxu0 0.0
        %9164 = vmatpush2.msra.mxu0 0.0
        %9165 = vmatprep.subr.mxu0 0.0
        %9166 = vmatpush2.msra.mxu0 0.0
        %9167 = vmatprep.subr.mxu0 0.0
        %9168 = vmatpush2.msra.mxu0 0.0
        %9169 = vmatprep.subr.mxu0 0.0
        %9170 = vmatpush2.msra.mxu0 0.0
        %9171 = vmatprep.subr.mxu0 0.0
        %9172 = vmatpush2.msra.mxu0 0.0
        %9173 = vmatprep.subr.mxu0 0.0
        %9174 = vmatpush2.msra.mxu0 0.0
        %9175 = vmatprep.subr.mxu0 0.0
        %9176 = vmatpush2.msra.mxu0 0.0
        %9177 = vmatprep.subr.mxu0 0.0
        %9178 = vmatpush2.msra.mxu0 0.0
        %9179 = vmatprep.mubr.f32.mxu0 0.0
        %v9180 = vand.u32 %v796, 4294901760
        %v9181 = vsub.f32 %v796, %v9180
        %9182 = vmatmul.mubr.f32.gmra.mxu0 %v9181
        %v9183 = vpop.f32.mrf.mxu0
        %v9184 = vadd.f32 %v9110, %v9183
        %v9185 = vpop.f32.mrf.mxu0
        %9186 = vdwg.mxu0
        %9187 = vmatprep.subr.mxu0 0.0
        %9188 = vmatpush1.msra.mxu0 0.0
        %9189 = vmatprep.subr.mxu0 0.0
        %9190 = vmatpush1.msra.mxu0 0.0
        %9191 = vmatprep.subr.mxu0 0.0
        %9192 = vmatpush1.msra.mxu0 0.0
        %9193 = vmatprep.subr.mxu0 0.0
        %9194 = vmatpush1.msra.mxu0 0.0
        %9195 = vmatprep.subr.mxu0 0.0
        %9196 = vmatpush1.msra.mxu0 0.0
        %9197 = vmatprep.subr.mxu0 0.0
        %9198 = vmatpush1.msra.mxu0 0.0
        %9199 = vmatprep.subr.mxu0 0.0
        %9200 = vmatpush1.msra.mxu0 0.0
        %9201 = vmatprep.subr.mxu0 0.0
        %9202 = vmatpush1.msra.mxu0 0.0
        %9203 = vmatprep.subr.mxu0 0.0
        %9204 = vmatpush1.msra.mxu0 0.0
        %9205 = vmatprep.subr.mxu0 0.0
        %9206 = vmatpush1.msra.mxu0 0.0
        %9207 = vmatprep.subr.mxu0 0.0
        %9208 = vmatpush1.msra.mxu0 0.0
        %9209 = vmatprep.subr.mxu0 0.0
        %9210 = vmatpush1.msra.mxu0 0.0
        %9211 = vmatprep.subr.mxu0 0.0
        %9212 = vmatpush1.msra.mxu0 0.0
        %9213 = vmatprep.subr.mxu0 0.0
        %9214 = vmatpush1.msra.mxu0 0.0
        %9215 = vmatprep.subr.mxu0 0.0
        %9216 = vmatpush1.msra.mxu0 0.0
        %9217 = vmatprep.subr.mxu0 0.0
        %v9218 = vand.u32 %v8958, 4294901760
        %9219 = vmatpush1.msra.mxu0 %v9218
        %9220 = vmatprep.subr.mxu0 0.0
        %9221 = vmatpush2.msra.mxu0 0.0
        %9222 = vmatprep.subr.mxu0 0.0
        %9223 = vmatpush2.msra.mxu0 0.0
        %9224 = vmatprep.subr.mxu0 0.0
        %9225 = vmatpush2.msra.mxu0 0.0
        %9226 = vmatprep.subr.mxu0 0.0
        %9227 = vmatpush2.msra.mxu0 0.0
        %9228 = vmatprep.subr.mxu0 0.0
        %9229 = vmatpush2.msra.mxu0 0.0
        %9230 = vmatprep.subr.mxu0 0.0
        %9231 = vmatpush2.msra.mxu0 0.0
        %9232 = vmatprep.subr.mxu0 0.0
        %9233 = vmatpush2.msra.mxu0 0.0
        %9234 = vmatprep.subr.mxu0 0.0
        %9235 = vmatpush2.msra.mxu0 0.0
        %9236 = vmatprep.subr.mxu0 0.0
        %9237 = vmatpush2.msra.mxu0 0.0
        %9238 = vmatprep.subr.mxu0 0.0
        %9239 = vmatpush2.msra.mxu0 0.0
        %9240 = vmatprep.subr.mxu0 0.0
        %9241 = vmatpush2.msra.mxu0 0.0
        %9242 = vmatprep.subr.mxu0 0.0
        %9243 = vmatpush2.msra.mxu0 0.0
        %9244 = vmatprep.subr.mxu0 0.0
        %9245 = vmatpush2.msra.mxu0 0.0
        %9246 = vmatprep.subr.mxu0 0.0
        %9247 = vmatpush2.msra.mxu0 0.0
        %9248 = vmatprep.subr.mxu0 0.0
        %9249 = vmatpush2.msra.mxu0 0.0
        %9250 = vmatprep.subr.mxu0 0.0
        %9251 = vmatpush2.msra.mxu0 0.0
        %9252 = vmatprep.mubr.f32.mxu0 0.0
        %v9253 = vand.u32 %v796, 4294901760
        %v9254 = vsub.f32 %v796, %v9253
        %v9255 = vand.u32 %v9254, 4294901760
        %9256 = vmatmul.mubr.f32.gmra.mxu0 %v9255
        %v9257 = vpop.f32.mrf.mxu0
        %v9258 = vadd.f32 %v9184, %v9257
        %v9259 = vpop.f32.mrf.mxu0
        %9260 = vdwg.mxu0
        %9261 = vmatprep.subr.mxu0 0.0
        %9262 = vmatpush1.msra.mxu0 0.0
        %9263 = vmatprep.subr.mxu0 0.0
        %9264 = vmatpush1.msra.mxu0 0.0
        %9265 = vmatprep.subr.mxu0 0.0
        %9266 = vmatpush1.msra.mxu0 0.0
        %9267 = vmatprep.subr.mxu0 0.0
        %9268 = vmatpush1.msra.mxu0 0.0
        %9269 = vmatprep.subr.mxu0 0.0
        %9270 = vmatpush1.msra.mxu0 0.0
        %9271 = vmatprep.subr.mxu0 0.0
        %9272 = vmatpush1.msra.mxu0 0.0
        %9273 = vmatprep.subr.mxu0 0.0
        %9274 = vmatpush1.msra.mxu0 0.0
        %9275 = vmatprep.subr.mxu0 0.0
        %9276 = vmatpush1.msra.mxu0 0.0
        %9277 = vmatprep.subr.mxu0 0.0
        %9278 = vmatpush1.msra.mxu0 0.0
        %9279 = vmatprep.subr.mxu0 0.0
        %9280 = vmatpush1.msra.mxu0 0.0
        %9281 = vmatprep.subr.mxu0 0.0
        %9282 = vmatpush1.msra.mxu0 0.0
        %9283 = vmatprep.subr.mxu0 0.0
        %9284 = vmatpush1.msra.mxu0 0.0
        %9285 = vmatprep.subr.mxu0 0.0
        %9286 = vmatpush1.msra.mxu0 0.0
        %9287 = vmatprep.subr.mxu0 0.0
        %9288 = vmatpush1.msra.mxu0 0.0
        %9289 = vmatprep.subr.mxu0 0.0
        %9290 = vmatpush1.msra.mxu0 0.0
        %9291 = vmatprep.subr.mxu0 0.0
        %v9292 = vand.u32 %v8958, 4294901760
        %v9293 = vsub.f32 %v8958, %v9292
        %v9294 = vand.u32 %v9293, 4294901760
        %9295 = vmatpush1.msra.mxu0 %v9294
        %9296 = vmatprep.subr.mxu0 0.0
        %9297 = vmatpush2.msra.mxu0 0.0
        %9298 = vmatprep.subr.mxu0 0.0
        %9299 = vmatpush2.msra.mxu0 0.0
        %9300 = vmatprep.subr.mxu0 0.0
        %9301 = vmatpush2.msra.mxu0 0.0
        %9302 = vmatprep.subr.mxu0 0.0
        %9303 = vmatpush2.msra.mxu0 0.0
        %9304 = vmatprep.subr.mxu0 0.0
        %9305 = vmatpush2.msra.mxu0 0.0
        %9306 = vmatprep.subr.mxu0 0.0
        %9307 = vmatpush2.msra.mxu0 0.0
        %9308 = vmatprep.subr.mxu0 0.0
        %9309 = vmatpush2.msra.mxu0 0.0
        %9310 = vmatprep.subr.mxu0 0.0
        %9311 = vmatpush2.msra.mxu0 0.0
        %9312 = vmatprep.subr.mxu0 0.0
        %9313 = vmatpush2.msra.mxu0 0.0
        %9314 = vmatprep.subr.mxu0 0.0
        %9315 = vmatpush2.msra.mxu0 0.0
        %9316 = vmatprep.subr.mxu0 0.0
        %9317 = vmatpush2.msra.mxu0 0.0
        %9318 = vmatprep.subr.mxu0 0.0
        %9319 = vmatpush2.msra.mxu0 0.0
        %9320 = vmatprep.subr.mxu0 0.0
        %9321 = vmatpush2.msra.mxu0 0.0
        %9322 = vmatprep.subr.mxu0 0.0
        %9323 = vmatpush2.msra.mxu0 0.0
        %9324 = vmatprep.subr.mxu0 0.0
        %9325 = vmatpush2.msra.mxu0 0.0
        %9326 = vmatprep.subr.mxu0 0.0
        %9327 = vmatpush2.msra.mxu0 0.0
        %9328 = vmatprep.mubr.f32.mxu0 0.0
        %v9329 = vand.u32 %v796, 4294901760
        %9330 = vmatmul.mubr.f32.gmra.mxu0 %v9329
        %v9331 = vpop.f32.mrf.mxu0
        %v9332 = vadd.f32 %v9258, %v9331
        %v9333 = vpop.f32.mrf.mxu0
        %9334 = vdwg.mxu0
        %9335 = vmatprep.subr.mxu0 0.0
        %9336 = vmatpush1.msra.mxu0 0.0
        %9337 = vmatprep.subr.mxu0 0.0
        %9338 = vmatpush1.msra.mxu0 0.0
        %9339 = vmatprep.subr.mxu0 0.0
        %9340 = vmatpush1.msra.mxu0 0.0
        %9341 = vmatprep.subr.mxu0 0.0
        %9342 = vmatpush1.msra.mxu0 0.0
        %9343 = vmatprep.subr.mxu0 0.0
        %9344 = vmatpush1.msra.mxu0 0.0
        %9345 = vmatprep.subr.mxu0 0.0
        %9346 = vmatpush1.msra.mxu0 0.0
        %9347 = vmatprep.subr.mxu0 0.0
        %9348 = vmatpush1.msra.mxu0 0.0
        %9349 = vmatprep.subr.mxu0 0.0
        %9350 = vmatpush1.msra.mxu0 0.0
        %9351 = vmatprep.subr.mxu0 0.0
        %9352 = vmatpush1.msra.mxu0 0.0
        %9353 = vmatprep.subr.mxu0 0.0
        %9354 = vmatpush1.msra.mxu0 0.0
        %9355 = vmatprep.subr.mxu0 0.0
        %9356 = vmatpush1.msra.mxu0 0.0
        %9357 = vmatprep.subr.mxu0 0.0
        %9358 = vmatpush1.msra.mxu0 0.0
        %9359 = vmatprep.subr.mxu0 0.0
        %9360 = vmatpush1.msra.mxu0 0.0
        %9361 = vmatprep.subr.mxu0 0.0
        %9362 = vmatpush1.msra.mxu0 0.0
        %9363 = vmatprep.subr.mxu0 0.0
        %9364 = vmatpush1.msra.mxu0 0.0
        %9365 = vmatprep.subr.mxu0 0.0
        %v9366 = vand.u32 %v8958, 4294901760
        %9367 = vmatpush1.msra.mxu0 %v9366
        %9368 = vmatprep.subr.mxu0 0.0
        %9369 = vmatpush2.msra.mxu0 0.0
        %9370 = vmatprep.subr.mxu0 0.0
        %9371 = vmatpush2.msra.mxu0 0.0
        %9372 = vmatprep.subr.mxu0 0.0
        %9373 = vmatpush2.msra.mxu0 0.0
        %9374 = vmatprep.subr.mxu0 0.0
        %9375 = vmatpush2.msra.mxu0 0.0
        %9376 = vmatprep.subr.mxu0 0.0
        %9377 = vmatpush2.msra.mxu0 0.0
        %9378 = vmatprep.subr.mxu0 0.0
        %9379 = vmatpush2.msra.mxu0 0.0
        %9380 = vmatprep.subr.mxu0 0.0
        %9381 = vmatpush2.msra.mxu0 0.0
        %9382 = vmatprep.subr.mxu0 0.0
        %9383 = vmatpush2.msra.mxu0 0.0
        %9384 = vmatprep.subr.mxu0 0.0
        %9385 = vmatpush2.msra.mxu0 0.0
        %9386 = vmatprep.subr.mxu0 0.0
        %9387 = vmatpush2.msra.mxu0 0.0
        %9388 = vmatprep.subr.mxu0 0.0
        %9389 = vmatpush2.msra.mxu0 0.0
        %9390 = vmatprep.subr.mxu0 0.0
        %9391 = vmatpush2.msra.mxu0 0.0
        %9392 = vmatprep.subr.mxu0 0.0
        %9393 = vmatpush2.msra.mxu0 0.0
        %9394 = vmatprep.subr.mxu0 0.0
        %9395 = vmatpush2.msra.mxu0 0.0
        %9396 = vmatprep.subr.mxu0 0.0
        %9397 = vmatpush2.msra.mxu0 0.0
        %9398 = vmatprep.subr.mxu0 0.0
        %9399 = vmatpush2.msra.mxu0 0.0
        %9400 = vmatprep.mubr.f32.mxu0 0.0
        %v9401 = vand.u32 %v796, 4294901760
        %9402 = vmatmul.mubr.f32.gmra.mxu0 %v9401
        %v9403 = vpop.f32.mrf.mxu0
        %v9404 = vadd.f32 %v9332, %v9403
        %v9405 = vpop.f32.mrf.mxu0
        %9406 = vdwg.mxu0
        %v9407 = vld [vmem:[%s300 + $0x8] sm:$0xff]
        %9409 = vrot.lane.b32.xlu0 %v9404, 16
        %v9410 = vpop.permute.xlu0 %9409
        %v9412 = vsel %vm1249, %v9404, %v9410
        %9414 = vrot.lane.b32.xlu0 %v9407, 64
        %v9415 = vpop.permute.xlu0 %9414
        %9417 = vmatprep.subr.mxu0 0.0
        %9418 = vmatpush1.msra.mxu0 0.0
        %9419 = vmatprep.subr.mxu0 0.0
        %9420 = vmatpush1.msra.mxu0 0.0
        %9421 = vmatprep.subr.mxu0 0.0
        %9422 = vmatpush1.msra.mxu0 0.0
        %9423 = vmatprep.subr.mxu0 0.0
        %9424 = vmatpush1.msra.mxu0 0.0
        %9425 = vmatprep.subr.mxu0 0.0
        %9426 = vmatpush1.msra.mxu0 0.0
        %9427 = vmatprep.subr.mxu0 0.0
        %9428 = vmatpush1.msra.mxu0 0.0
        %9429 = vmatprep.subr.mxu0 0.0
        %9430 = vmatpush1.msra.mxu0 0.0
        %9431 = vmatprep.subr.mxu0 0.0
        %9432 = vmatpush1.msra.mxu0 0.0
        %9433 = vmatprep.subr.mxu0 0.0
        %9434 = vmatpush1.msra.mxu0 0.0
        %9435 = vmatprep.subr.mxu0 0.0
        %9436 = vmatpush1.msra.mxu0 0.0
        %9437 = vmatprep.subr.mxu0 0.0
        %9438 = vmatpush1.msra.mxu0 0.0
        %9439 = vmatprep.subr.mxu0 0.0
        %9440 = vmatpush1.msra.mxu0 0.0
        %9441 = vmatprep.subr.mxu0 0.0
        %9442 = vmatpush1.msra.mxu0 0.0
        %9443 = vmatprep.subr.mxu0 0.0
        %9444 = vmatpush1.msra.mxu0 0.0
        %9445 = vmatprep.subr.mxu0 0.0
        %9446 = vmatpush1.msra.mxu0 0.0
        %9447 = vmatprep.subr.mxu0 0.0
        %v9448 = vand.u32 %v9415, 4294901760
        %9449 = vmatpush1.msra.mxu0 %v9448
        %9450 = vmatprep.subr.mxu0 0.0
        %9451 = vmatpush2.msra.mxu0 0.0
        %9452 = vmatprep.subr.mxu0 0.0
        %9453 = vmatpush2.msra.mxu0 0.0
        %9454 = vmatprep.subr.mxu0 0.0
        %9455 = vmatpush2.msra.mxu0 0.0
        %9456 = vmatprep.subr.mxu0 0.0
        %9457 = vmatpush2.msra.mxu0 0.0
        %9458 = vmatprep.subr.mxu0 0.0
        %9459 = vmatpush2.msra.mxu0 0.0
        %9460 = vmatprep.subr.mxu0 0.0
        %9461 = vmatpush2.msra.mxu0 0.0
        %9462 = vmatprep.subr.mxu0 0.0
        %9463 = vmatpush2.msra.mxu0 0.0
        %9464 = vmatprep.subr.mxu0 0.0
        %9465 = vmatpush2.msra.mxu0 0.0
        %9466 = vmatprep.subr.mxu0 0.0
        %9467 = vmatpush2.msra.mxu0 0.0
        %9468 = vmatprep.subr.mxu0 0.0
        %9469 = vmatpush2.msra.mxu0 0.0
        %9470 = vmatprep.subr.mxu0 0.0
        %9471 = vmatpush2.msra.mxu0 0.0
        %9472 = vmatprep.subr.mxu0 0.0
        %9473 = vmatpush2.msra.mxu0 0.0
        %9474 = vmatprep.subr.mxu0 0.0
        %9475 = vmatpush2.msra.mxu0 0.0
        %9476 = vmatprep.subr.mxu0 0.0
        %9477 = vmatpush2.msra.mxu0 0.0
        %9478 = vmatprep.subr.mxu0 0.0
        %9479 = vmatpush2.msra.mxu0 0.0
        %9480 = vmatprep.subr.mxu0 0.0
        %9481 = vmatpush2.msra.mxu0 0.0
        %9482 = vmatprep.mubr.f32.mxu0 0.0
        %v9483 = vand.u32 %v1252, 4294901760
        %v9484 = vsub.f32 %v1252, %v9483
        %v9485 = vand.u32 %v9484, 4294901760
        %v9486 = vsub.f32 %v9484, %v9485
        %v9487 = vand.u32 %v9486, 4294901760
        %9488 = vmatmul.mubr.f32.gmra.mxu0 %v9487
        %v9489 = vpop.f32.mrf.mxu0
        %v9490 = vadd.f32 %v9412, %v9489
        %v9491 = vpop.f32.mrf.mxu0
        %9492 = vdwg.mxu0
        %9493 = vmatprep.subr.mxu0 0.0
        %9494 = vmatpush1.msra.mxu0 0.0
        %9495 = vmatprep.subr.mxu0 0.0
        %9496 = vmatpush1.msra.mxu0 0.0
        %9497 = vmatprep.subr.mxu0 0.0
        %9498 = vmatpush1.msra.mxu0 0.0
        %9499 = vmatprep.subr.mxu0 0.0
        %9500 = vmatpush1.msra.mxu0 0.0
        %9501 = vmatprep.subr.mxu0 0.0
        %9502 = vmatpush1.msra.mxu0 0.0
        %9503 = vmatprep.subr.mxu0 0.0
        %9504 = vmatpush1.msra.mxu0 0.0
        %9505 = vmatprep.subr.mxu0 0.0
        %9506 = vmatpush1.msra.mxu0 0.0
        %9507 = vmatprep.subr.mxu0 0.0
        %9508 = vmatpush1.msra.mxu0 0.0
        %9509 = vmatprep.subr.mxu0 0.0
        %9510 = vmatpush1.msra.mxu0 0.0
        %9511 = vmatprep.subr.mxu0 0.0
        %9512 = vmatpush1.msra.mxu0 0.0
        %9513 = vmatprep.subr.mxu0 0.0
        %9514 = vmatpush1.msra.mxu0 0.0
        %9515 = vmatprep.subr.mxu0 0.0
        %9516 = vmatpush1.msra.mxu0 0.0
        %9517 = vmatprep.subr.mxu0 0.0
        %9518 = vmatpush1.msra.mxu0 0.0
        %9519 = vmatprep.subr.mxu0 0.0
        %9520 = vmatpush1.msra.mxu0 0.0
        %9521 = vmatprep.subr.mxu0 0.0
        %9522 = vmatpush1.msra.mxu0 0.0
        %9523 = vmatprep.subr.mxu0 0.0
        %v9524 = vand.u32 %v9415, 4294901760
        %v9525 = vsub.f32 %v9415, %v9524
        %v9526 = vand.u32 %v9525, 4294901760
        %v9527 = vsub.f32 %v9525, %v9526
        %v9528 = vand.u32 %v9527, 4294901760
        %9529 = vmatpush1.msra.mxu0 %v9528
        %9530 = vmatprep.subr.mxu0 0.0
        %9531 = vmatpush2.msra.mxu0 0.0
        %9532 = vmatprep.subr.mxu0 0.0
        %9533 = vmatpush2.msra.mxu0 0.0
        %9534 = vmatprep.subr.mxu0 0.0
        %9535 = vmatpush2.msra.mxu0 0.0
        %9536 = vmatprep.subr.mxu0 0.0
        %9537 = vmatpush2.msra.mxu0 0.0
        %9538 = vmatprep.subr.mxu0 0.0
        %9539 = vmatpush2.msra.mxu0 0.0
        %9540 = vmatprep.subr.mxu0 0.0
        %9541 = vmatpush2.msra.mxu0 0.0
        %9542 = vmatprep.subr.mxu0 0.0
        %9543 = vmatpush2.msra.mxu0 0.0
        %9544 = vmatprep.subr.mxu0 0.0
        %9545 = vmatpush2.msra.mxu0 0.0
        %9546 = vmatprep.subr.mxu0 0.0
        %9547 = vmatpush2.msra.mxu0 0.0
        %9548 = vmatprep.subr.mxu0 0.0
        %9549 = vmatpush2.msra.mxu0 0.0
        %9550 = vmatprep.subr.mxu0 0.0
        %9551 = vmatpush2.msra.mxu0 0.0
        %9552 = vmatprep.subr.mxu0 0.0
        %9553 = vmatpush2.msra.mxu0 0.0
        %9554 = vmatprep.subr.mxu0 0.0
        %9555 = vmatpush2.msra.mxu0 0.0
        %9556 = vmatprep.subr.mxu0 0.0
        %9557 = vmatpush2.msra.mxu0 0.0
        %9558 = vmatprep.subr.mxu0 0.0
        %9559 = vmatpush2.msra.mxu0 0.0
        %9560 = vmatprep.subr.mxu0 0.0
        %9561 = vmatpush2.msra.mxu0 0.0
        %9562 = vmatprep.mubr.f32.mxu0 0.0
        %v9563 = vand.u32 %v1252, 4294901760
        %9564 = vmatmul.mubr.f32.gmra.mxu0 %v9563
        %v9565 = vpop.f32.mrf.mxu0
        %v9566 = vadd.f32 %v9490, %v9565
        %v9567 = vpop.f32.mrf.mxu0
        %9568 = vdwg.mxu0
        %9569 = vmatprep.subr.mxu0 0.0
        %9570 = vmatpush1.msra.mxu0 0.0
        %9571 = vmatprep.subr.mxu0 0.0
        %9572 = vmatpush1.msra.mxu0 0.0
        %9573 = vmatprep.subr.mxu0 0.0
        %9574 = vmatpush1.msra.mxu0 0.0
        %9575 = vmatprep.subr.mxu0 0.0
        %9576 = vmatpush1.msra.mxu0 0.0
        %9577 = vmatprep.subr.mxu0 0.0
        %9578 = vmatpush1.msra.mxu0 0.0
        %9579 = vmatprep.subr.mxu0 0.0
        %9580 = vmatpush1.msra.mxu0 0.0
        %9581 = vmatprep.subr.mxu0 0.0
        %9582 = vmatpush1.msra.mxu0 0.0
        %9583 = vmatprep.subr.mxu0 0.0
        %9584 = vmatpush1.msra.mxu0 0.0
        %9585 = vmatprep.subr.mxu0 0.0
        %9586 = vmatpush1.msra.mxu0 0.0
        %9587 = vmatprep.subr.mxu0 0.0
        %9588 = vmatpush1.msra.mxu0 0.0
        %9589 = vmatprep.subr.mxu0 0.0
        %9590 = vmatpush1.msra.mxu0 0.0
        %9591 = vmatprep.subr.mxu0 0.0
        %9592 = vmatpush1.msra.mxu0 0.0
        %9593 = vmatprep.subr.mxu0 0.0
        %9594 = vmatpush1.msra.mxu0 0.0
        %9595 = vmatprep.subr.mxu0 0.0
        %9596 = vmatpush1.msra.mxu0 0.0
        %9597 = vmatprep.subr.mxu0 0.0
        %9598 = vmatpush1.msra.mxu0 0.0
        %9599 = vmatprep.subr.mxu0 0.0
        %v9600 = vand.u32 %v9415, 4294901760
        %v9601 = vsub.f32 %v9415, %v9600
        %9602 = vmatpush1.msra.mxu0 %v9601
        %9603 = vmatprep.subr.mxu0 0.0
        %9604 = vmatpush2.msra.mxu0 0.0
        %9605 = vmatprep.subr.mxu0 0.0
        %9606 = vmatpush2.msra.mxu0 0.0
        %9607 = vmatprep.subr.mxu0 0.0
        %9608 = vmatpush2.msra.mxu0 0.0
        %9609 = vmatprep.subr.mxu0 0.0
        %9610 = vmatpush2.msra.mxu0 0.0
        %9611 = vmatprep.subr.mxu0 0.0
        %9612 = vmatpush2.msra.mxu0 0.0
        %9613 = vmatprep.subr.mxu0 0.0
        %9614 = vmatpush2.msra.mxu0 0.0
        %9615 = vmatprep.subr.mxu0 0.0
        %9616 = vmatpush2.msra.mxu0 0.0
        %9617 = vmatprep.subr.mxu0 0.0
        %9618 = vmatpush2.msra.mxu0 0.0
        %9619 = vmatprep.subr.mxu0 0.0
        %9620 = vmatpush2.msra.mxu0 0.0
        %9621 = vmatprep.subr.mxu0 0.0
        %9622 = vmatpush2.msra.mxu0 0.0
        %9623 = vmatprep.subr.mxu0 0.0
        %9624 = vmatpush2.msra.mxu0 0.0
        %9625 = vmatprep.subr.mxu0 0.0
        %9626 = vmatpush2.msra.mxu0 0.0
        %9627 = vmatprep.subr.mxu0 0.0
        %9628 = vmatpush2.msra.mxu0 0.0
        %9629 = vmatprep.subr.mxu0 0.0
        %9630 = vmatpush2.msra.mxu0 0.0
        %9631 = vmatprep.subr.mxu0 0.0
        %9632 = vmatpush2.msra.mxu0 0.0
        %9633 = vmatprep.subr.mxu0 0.0
        %9634 = vmatpush2.msra.mxu0 0.0
        %9635 = vmatprep.mubr.f32.mxu0 0.0
        %v9636 = vand.u32 %v1252, 4294901760
        %v9637 = vsub.f32 %v1252, %v9636
        %9638 = vmatmul.mubr.f32.gmra.mxu0 %v9637
        %v9639 = vpop.f32.mrf.mxu0
        %v9640 = vadd.f32 %v9566, %v9639
        %v9641 = vpop.f32.mrf.mxu0
        %9642 = vdwg.mxu0
        %9643 = vmatprep.subr.mxu0 0.0
        %9644 = vmatpush1.msra.mxu0 0.0
        %9645 = vmatprep.subr.mxu0 0.0
        %9646 = vmatpush1.msra.mxu0 0.0
        %9647 = vmatprep.subr.mxu0 0.0
        %9648 = vmatpush1.msra.mxu0 0.0
        %9649 = vmatprep.subr.mxu0 0.0
        %9650 = vmatpush1.msra.mxu0 0.0
        %9651 = vmatprep.subr.mxu0 0.0
        %9652 = vmatpush1.msra.mxu0 0.0
        %9653 = vmatprep.subr.mxu0 0.0
        %9654 = vmatpush1.msra.mxu0 0.0
        %9655 = vmatprep.subr.mxu0 0.0
        %9656 = vmatpush1.msra.mxu0 0.0
        %9657 = vmatprep.subr.mxu0 0.0
        %9658 = vmatpush1.msra.mxu0 0.0
        %9659 = vmatprep.subr.mxu0 0.0
        %9660 = vmatpush1.msra.mxu0 0.0
        %9661 = vmatprep.subr.mxu0 0.0
        %9662 = vmatpush1.msra.mxu0 0.0
        %9663 = vmatprep.subr.mxu0 0.0
        %9664 = vmatpush1.msra.mxu0 0.0
        %9665 = vmatprep.subr.mxu0 0.0
        %9666 = vmatpush1.msra.mxu0 0.0
        %9667 = vmatprep.subr.mxu0 0.0
        %9668 = vmatpush1.msra.mxu0 0.0
        %9669 = vmatprep.subr.mxu0 0.0
        %9670 = vmatpush1.msra.mxu0 0.0
        %9671 = vmatprep.subr.mxu0 0.0
        %9672 = vmatpush1.msra.mxu0 0.0
        %9673 = vmatprep.subr.mxu0 0.0
        %v9674 = vand.u32 %v9415, 4294901760
        %9675 = vmatpush1.msra.mxu0 %v9674
        %9676 = vmatprep.subr.mxu0 0.0
        %9677 = vmatpush2.msra.mxu0 0.0
        %9678 = vmatprep.subr.mxu0 0.0
        %9679 = vmatpush2.msra.mxu0 0.0
        %9680 = vmatprep.subr.mxu0 0.0
        %9681 = vmatpush2.msra.mxu0 0.0
        %9682 = vmatprep.subr.mxu0 0.0
        %9683 = vmatpush2.msra.mxu0 0.0
        %9684 = vmatprep.subr.mxu0 0.0
        %9685 = vmatpush2.msra.mxu0 0.0
        %9686 = vmatprep.subr.mxu0 0.0
        %9687 = vmatpush2.msra.mxu0 0.0
        %9688 = vmatprep.subr.mxu0 0.0
        %9689 = vmatpush2.msra.mxu0 0.0
        %9690 = vmatprep.subr.mxu0 0.0
        %9691 = vmatpush2.msra.mxu0 0.0
        %9692 = vmatprep.subr.mxu0 0.0
        %9693 = vmatpush2.msra.mxu0 0.0
        %9694 = vmatprep.subr.mxu0 0.0
        %9695 = vmatpush2.msra.mxu0 0.0
        %9696 = vmatprep.subr.mxu0 0.0
        %9697 = vmatpush2.msra.mxu0 0.0
        %9698 = vmatprep.subr.mxu0 0.0
        %9699 = vmatpush2.msra.mxu0 0.0
        %9700 = vmatprep.subr.mxu0 0.0
        %9701 = vmatpush2.msra.mxu0 0.0
        %9702 = vmatprep.subr.mxu0 0.0
        %9703 = vmatpush2.msra.mxu0 0.0
        %9704 = vmatprep.subr.mxu0 0.0
        %9705 = vmatpush2.msra.mxu0 0.0
        %9706 = vmatprep.subr.mxu0 0.0
        %9707 = vmatpush2.msra.mxu0 0.0
        %9708 = vmatprep.mubr.f32.mxu0 0.0
        %v9709 = vand.u32 %v1252, 4294901760
        %v9710 = vsub.f32 %v1252, %v9709
        %v9711 = vand.u32 %v9710, 4294901760
        %9712 = vmatmul.mubr.f32.gmra.mxu0 %v9711
        %v9713 = vpop.f32.mrf.mxu0
        %v9714 = vadd.f32 %v9640, %v9713
        %v9715 = vpop.f32.mrf.mxu0
        %9716 = vdwg.mxu0
        %9717 = vmatprep.subr.mxu0 0.0
        %9718 = vmatpush1.msra.mxu0 0.0
        %9719 = vmatprep.subr.mxu0 0.0
        %9720 = vmatpush1.msra.mxu0 0.0
        %9721 = vmatprep.subr.mxu0 0.0
        %9722 = vmatpush1.msra.mxu0 0.0
        %9723 = vmatprep.subr.mxu0 0.0
        %9724 = vmatpush1.msra.mxu0 0.0
        %9725 = vmatprep.subr.mxu0 0.0
        %9726 = vmatpush1.msra.mxu0 0.0
        %9727 = vmatprep.subr.mxu0 0.0
        %9728 = vmatpush1.msra.mxu0 0.0
        %9729 = vmatprep.subr.mxu0 0.0
        %9730 = vmatpush1.msra.mxu0 0.0
        %9731 = vmatprep.subr.mxu0 0.0
        %9732 = vmatpush1.msra.mxu0 0.0
        %9733 = vmatprep.subr.mxu0 0.0
        %9734 = vmatpush1.msra.mxu0 0.0
        %9735 = vmatprep.subr.mxu0 0.0
        %9736 = vmatpush1.msra.mxu0 0.0
        %9737 = vmatprep.subr.mxu0 0.0
        %9738 = vmatpush1.msra.mxu0 0.0
        %9739 = vmatprep.subr.mxu0 0.0
        %9740 = vmatpush1.msra.mxu0 0.0
        %9741 = vmatprep.subr.mxu0 0.0
        %9742 = vmatpush1.msra.mxu0 0.0
        %9743 = vmatprep.subr.mxu0 0.0
        %9744 = vmatpush1.msra.mxu0 0.0
        %9745 = vmatprep.subr.mxu0 0.0
        %9746 = vmatpush1.msra.mxu0 0.0
        %9747 = vmatprep.subr.mxu0 0.0
        %v9748 = vand.u32 %v9415, 4294901760
        %v9749 = vsub.f32 %v9415, %v9748
        %v9750 = vand.u32 %v9749, 4294901760
        %9751 = vmatpush1.msra.mxu0 %v9750
        %9752 = vmatprep.subr.mxu0 0.0
        %9753 = vmatpush2.msra.mxu0 0.0
        %9754 = vmatprep.subr.mxu0 0.0
        %9755 = vmatpush2.msra.mxu0 0.0
        %9756 = vmatprep.subr.mxu0 0.0
        %9757 = vmatpush2.msra.mxu0 0.0
        %9758 = vmatprep.subr.mxu0 0.0
        %9759 = vmatpush2.msra.mxu0 0.0
        %9760 = vmatprep.subr.mxu0 0.0
        %9761 = vmatpush2.msra.mxu0 0.0
        %9762 = vmatprep.subr.mxu0 0.0
        %9763 = vmatpush2.msra.mxu0 0.0
        %9764 = vmatprep.subr.mxu0 0.0
        %9765 = vmatpush2.msra.mxu0 0.0
        %9766 = vmatprep.subr.mxu0 0.0
        %9767 = vmatpush2.msra.mxu0 0.0
        %9768 = vmatprep.subr.mxu0 0.0
        %9769 = vmatpush2.msra.mxu0 0.0
        %9770 = vmatprep.subr.mxu0 0.0
        %9771 = vmatpush2.msra.mxu0 0.0
        %9772 = vmatprep.subr.mxu0 0.0
        %9773 = vmatpush2.msra.mxu0 0.0
        %9774 = vmatprep.subr.mxu0 0.0
        %9775 = vmatpush2.msra.mxu0 0.0
        %9776 = vmatprep.subr.mxu0 0.0
        %9777 = vmatpush2.msra.mxu0 0.0
        %9778 = vmatprep.subr.mxu0 0.0
        %9779 = vmatpush2.msra.mxu0 0.0
        %9780 = vmatprep.subr.mxu0 0.0
        %9781 = vmatpush2.msra.mxu0 0.0
        %9782 = vmatprep.subr.mxu0 0.0
        %9783 = vmatpush2.msra.mxu0 0.0
        %9784 = vmatprep.mubr.f32.mxu0 0.0
        %v9785 = vand.u32 %v1252, 4294901760
        %9786 = vmatmul.mubr.f32.gmra.mxu0 %v9785
        %v9787 = vpop.f32.mrf.mxu0
        %v9788 = vadd.f32 %v9714, %v9787
        %v9789 = vpop.f32.mrf.mxu0
        %9790 = vdwg.mxu0
        %9791 = vmatprep.subr.mxu0 0.0
        %9792 = vmatpush1.msra.mxu0 0.0
        %9793 = vmatprep.subr.mxu0 0.0
        %9794 = vmatpush1.msra.mxu0 0.0
        %9795 = vmatprep.subr.mxu0 0.0
        %9796 = vmatpush1.msra.mxu0 0.0
        %9797 = vmatprep.subr.mxu0 0.0
        %9798 = vmatpush1.msra.mxu0 0.0
        %9799 = vmatprep.subr.mxu0 0.0
        %9800 = vmatpush1.msra.mxu0 0.0
        %9801 = vmatprep.subr.mxu0 0.0
        %9802 = vmatpush1.msra.mxu0 0.0
        %9803 = vmatprep.subr.mxu0 0.0
        %9804 = vmatpush1.msra.mxu0 0.0
        %9805 = vmatprep.subr.mxu0 0.0
        %9806 = vmatpush1.msra.mxu0 0.0
        %9807 = vmatprep.subr.mxu0 0.0
        %9808 = vmatpush1.msra.mxu0 0.0
        %9809 = vmatprep.subr.mxu0 0.0
        %9810 = vmatpush1.msra.mxu0 0.0
        %9811 = vmatprep.subr.mxu0 0.0
        %9812 = vmatpush1.msra.mxu0 0.0
        %9813 = vmatprep.subr.mxu0 0.0
        %9814 = vmatpush1.msra.mxu0 0.0
        %9815 = vmatprep.subr.mxu0 0.0
        %9816 = vmatpush1.msra.mxu0 0.0
        %9817 = vmatprep.subr.mxu0 0.0
        %9818 = vmatpush1.msra.mxu0 0.0
        %9819 = vmatprep.subr.mxu0 0.0
        %9820 = vmatpush1.msra.mxu0 0.0
        %9821 = vmatprep.subr.mxu0 0.0
        %v9822 = vand.u32 %v9415, 4294901760
        %9823 = vmatpush1.msra.mxu0 %v9822
        %9824 = vmatprep.subr.mxu0 0.0
        %9825 = vmatpush2.msra.mxu0 0.0
        %9826 = vmatprep.subr.mxu0 0.0
        %9827 = vmatpush2.msra.mxu0 0.0
        %9828 = vmatprep.subr.mxu0 0.0
        %9829 = vmatpush2.msra.mxu0 0.0
        %9830 = vmatprep.subr.mxu0 0.0
        %9831 = vmatpush2.msra.mxu0 0.0
        %9832 = vmatprep.subr.mxu0 0.0
        %9833 = vmatpush2.msra.mxu0 0.0
        %9834 = vmatprep.subr.mxu0 0.0
        %9835 = vmatpush2.msra.mxu0 0.0
        %9836 = vmatprep.subr.mxu0 0.0
        %9837 = vmatpush2.msra.mxu0 0.0
        %9838 = vmatprep.subr.mxu0 0.0
        %9839 = vmatpush2.msra.mxu0 0.0
        %9840 = vmatprep.subr.mxu0 0.0
        %9841 = vmatpush2.msra.mxu0 0.0
        %9842 = vmatprep.subr.mxu0 0.0
        %9843 = vmatpush2.msra.mxu0 0.0
        %9844 = vmatprep.subr.mxu0 0.0
        %9845 = vmatpush2.msra.mxu0 0.0
        %9846 = vmatprep.subr.mxu0 0.0
        %9847 = vmatpush2.msra.mxu0 0.0
        %9848 = vmatprep.subr.mxu0 0.0
        %9849 = vmatpush2.msra.mxu0 0.0
        %9850 = vmatprep.subr.mxu0 0.0
        %9851 = vmatpush2.msra.mxu0 0.0
        %9852 = vmatprep.subr.mxu0 0.0
        %9853 = vmatpush2.msra.mxu0 0.0
        %9854 = vmatprep.subr.mxu0 0.0
        %9855 = vmatpush2.msra.mxu0 0.0
        %9856 = vmatprep.mubr.f32.mxu0 0.0
        %v9857 = vand.u32 %v1252, 4294901760
        %9858 = vmatmul.mubr.f32.gmra.mxu0 %v9857
        %v9859 = vpop.f32.mrf.mxu0
        %v9860 = vadd.f32 %v9788, %v9859
        %v9861 = vpop.f32.mrf.mxu0
        %9862 = vdwg.mxu0
        %v9863 = vadd.f32 %v9860, %v1703
        %v9864 = vmax.f32 %v9863, 0.0
        %9866 = vrot.lane.b32.xlu0 %v9864, 64
        %v9867 = vpop.permute.xlu0 %9866
        %9869 = vst.msk [vmem:[%s337 + $0x8] sm:$0xff] %vm4431, %v9867
        %v9870 = vld [vmem:[%s291] sm:$0xff]
        %9872 = vrot.lane.b32.xlu0 %v9870, 72
        %v9873 = vpop.permute.xlu0 %9872
        %v9874 = vsel %vm345, %v9873, 0
        %9876 = vmatprep.subr.mxu0 0.0
        %9877 = vmatpush1.msra.mxu0 0.0
        %9878 = vmatprep.subr.mxu0 0.0
        %9879 = vmatpush1.msra.mxu0 0.0
        %9880 = vmatprep.subr.mxu0 0.0
        %9881 = vmatpush1.msra.mxu0 0.0
        %9882 = vmatprep.subr.mxu0 0.0
        %9883 = vmatpush1.msra.mxu0 0.0
        %9884 = vmatprep.subr.mxu0 0.0
        %9885 = vmatpush1.msra.mxu0 0.0
        %9886 = vmatprep.subr.mxu0 0.0
        %9887 = vmatpush1.msra.mxu0 0.0
        %9888 = vmatprep.subr.mxu0 0.0
        %9889 = vmatpush1.msra.mxu0 0.0
        %9890 = vmatprep.subr.mxu0 0.0
        %9891 = vmatpush1.msra.mxu0 0.0
        %9892 = vmatprep.subr.mxu0 0.0
        %9893 = vmatpush1.msra.mxu0 0.0
        %9894 = vmatprep.subr.mxu0 0.0
        %9895 = vmatpush1.msra.mxu0 0.0
        %9896 = vmatprep.subr.mxu0 0.0
        %9897 = vmatpush1.msra.mxu0 0.0
        %9898 = vmatprep.subr.mxu0 0.0
        %9899 = vmatpush1.msra.mxu0 0.0
        %9900 = vmatprep.subr.mxu0 0.0
        %9901 = vmatpush1.msra.mxu0 0.0
        %9902 = vmatprep.subr.mxu0 0.0
        %9903 = vmatpush1.msra.mxu0 0.0
        %9904 = vmatprep.subr.mxu0 0.0
        %9905 = vmatpush1.msra.mxu0 0.0
        %9906 = vmatprep.subr.mxu0 0.0
        %v9907 = vand.u32 %v340, 4294901760
        %9908 = vmatpush1.msra.mxu0 %v9907
        %9909 = vmatprep.subr.mxu0 0.0
        %9910 = vmatpush2.msra.mxu0 0.0
        %9911 = vmatprep.subr.mxu0 0.0
        %9912 = vmatpush2.msra.mxu0 0.0
        %9913 = vmatprep.subr.mxu0 0.0
        %9914 = vmatpush2.msra.mxu0 0.0
        %9915 = vmatprep.subr.mxu0 0.0
        %9916 = vmatpush2.msra.mxu0 0.0
        %9917 = vmatprep.subr.mxu0 0.0
        %9918 = vmatpush2.msra.mxu0 0.0
        %9919 = vmatprep.subr.mxu0 0.0
        %9920 = vmatpush2.msra.mxu0 0.0
        %9921 = vmatprep.subr.mxu0 0.0
        %9922 = vmatpush2.msra.mxu0 0.0
        %9923 = vmatprep.subr.mxu0 0.0
        %9924 = vmatpush2.msra.mxu0 0.0
        %9925 = vmatprep.subr.mxu0 0.0
        %9926 = vmatpush2.msra.mxu0 0.0
        %9927 = vmatprep.subr.mxu0 0.0
        %9928 = vmatpush2.msra.mxu0 0.0
        %9929 = vmatprep.subr.mxu0 0.0
        %9930 = vmatpush2.msra.mxu0 0.0
        %9931 = vmatprep.subr.mxu0 0.0
        %9932 = vmatpush2.msra.mxu0 0.0
        %9933 = vmatprep.subr.mxu0 0.0
        %9934 = vmatpush2.msra.mxu0 0.0
        %9935 = vmatprep.subr.mxu0 0.0
        %9936 = vmatpush2.msra.mxu0 0.0
        %9937 = vmatprep.subr.mxu0 0.0
        %9938 = vmatpush2.msra.mxu0 0.0
        %9939 = vmatprep.subr.mxu0 0.0
        %9940 = vmatpush2.msra.mxu0 0.0
        %9941 = vmatprep.mubr.f32.mxu0 0.0
        %v9942 = vand.u32 %v9874, 4294901760
        %v9943 = vsub.f32 %v9874, %v9942
        %v9944 = vand.u32 %v9943, 4294901760
        %v9945 = vsub.f32 %v9943, %v9944
        %v9946 = vand.u32 %v9945, 4294901760
        %9947 = vmatmul.mubr.f32.gmra.mxu0 %v9946
        %v9948 = vpop.f32.mrf.mxu0
        %v9949 = vadd.f32 0.0, %v9948
        %v9950 = vpop.f32.mrf.mxu0
        %9951 = vdwg.mxu0
        %9952 = vmatprep.subr.mxu0 0.0
        %9953 = vmatpush1.msra.mxu0 0.0
        %9954 = vmatprep.subr.mxu0 0.0
        %9955 = vmatpush1.msra.mxu0 0.0
        %9956 = vmatprep.subr.mxu0 0.0
        %9957 = vmatpush1.msra.mxu0 0.0
        %9958 = vmatprep.subr.mxu0 0.0
        %9959 = vmatpush1.msra.mxu0 0.0
        %9960 = vmatprep.subr.mxu0 0.0
        %9961 = vmatpush1.msra.mxu0 0.0
        %9962 = vmatprep.subr.mxu0 0.0
        %9963 = vmatpush1.msra.mxu0 0.0
        %9964 = vmatprep.subr.mxu0 0.0
        %9965 = vmatpush1.msra.mxu0 0.0
        %9966 = vmatprep.subr.mxu0 0.0
        %9967 = vmatpush1.msra.mxu0 0.0
        %9968 = vmatprep.subr.mxu0 0.0
        %9969 = vmatpush1.msra.mxu0 0.0
        %9970 = vmatprep.subr.mxu0 0.0
        %9971 = vmatpush1.msra.mxu0 0.0
        %9972 = vmatprep.subr.mxu0 0.0
        %9973 = vmatpush1.msra.mxu0 0.0
        %9974 = vmatprep.subr.mxu0 0.0
        %9975 = vmatpush1.msra.mxu0 0.0
        %9976 = vmatprep.subr.mxu0 0.0
        %9977 = vmatpush1.msra.mxu0 0.0
        %9978 = vmatprep.subr.mxu0 0.0
        %9979 = vmatpush1.msra.mxu0 0.0
        %9980 = vmatprep.subr.mxu0 0.0
        %9981 = vmatpush1.msra.mxu0 0.0
        %9982 = vmatprep.subr.mxu0 0.0
        %v9983 = vand.u32 %v340, 4294901760
        %v9984 = vsub.f32 %v340, %v9983
        %v9985 = vand.u32 %v9984, 4294901760
        %v9986 = vsub.f32 %v9984, %v9985
        %v9987 = vand.u32 %v9986, 4294901760
        %9988 = vmatpush1.msra.mxu0 %v9987
        %9989 = vmatprep.subr.mxu0 0.0
        %9990 = vmatpush2.msra.mxu0 0.0
        %9991 = vmatprep.subr.mxu0 0.0
        %9992 = vmatpush2.msra.mxu0 0.0
        %9993 = vmatprep.subr.mxu0 0.0
        %9994 = vmatpush2.msra.mxu0 0.0
        %9995 = vmatprep.subr.mxu0 0.0
        %9996 = vmatpush2.msra.mxu0 0.0
        %9997 = vmatprep.subr.mxu0 0.0
        %9998 = vmatpush2.msra.mxu0 0.0
        %9999 = vmatprep.subr.mxu0 0.0
        %10000 = vmatpush2.msra.mxu0 0.0
        %10001 = vmatprep.subr.mxu0 0.0
        %10002 = vmatpush2.msra.mxu0 0.0
        %10003 = vmatprep.subr.mxu0 0.0
        %10004 = vmatpush2.msra.mxu0 0.0
        %10005 = vmatprep.subr.mxu0 0.0
        %10006 = vmatpush2.msra.mxu0 0.0
        %10007 = vmatprep.subr.mxu0 0.0
        %10008 = vmatpush2.msra.mxu0 0.0
        %10009 = vmatprep.subr.mxu0 0.0
        %10010 = vmatpush2.msra.mxu0 0.0
        %10011 = vmatprep.subr.mxu0 0.0
        %10012 = vmatpush2.msra.mxu0 0.0
        %10013 = vmatprep.subr.mxu0 0.0
        %10014 = vmatpush2.msra.mxu0 0.0
        %10015 = vmatprep.subr.mxu0 0.0
        %10016 = vmatpush2.msra.mxu0 0.0
        %10017 = vmatprep.subr.mxu0 0.0
        %10018 = vmatpush2.msra.mxu0 0.0
        %10019 = vmatprep.subr.mxu0 0.0
        %10020 = vmatpush2.msra.mxu0 0.0
        %10021 = vmatprep.mubr.f32.mxu0 0.0
        %v10022 = vand.u32 %v9874, 4294901760
        %10023 = vmatmul.mubr.f32.gmra.mxu0 %v10022
        %v10024 = vpop.f32.mrf.mxu0
        %v10025 = vadd.f32 %v9949, %v10024
        %v10026 = vpop.f32.mrf.mxu0
        %10027 = vdwg.mxu0
        %10028 = vmatprep.subr.mxu0 0.0
        %10029 = vmatpush1.msra.mxu0 0.0
        %10030 = vmatprep.subr.mxu0 0.0
        %10031 = vmatpush1.msra.mxu0 0.0
        %10032 = vmatprep.subr.mxu0 0.0
        %10033 = vmatpush1.msra.mxu0 0.0
        %10034 = vmatprep.subr.mxu0 0.0
        %10035 = vmatpush1.msra.mxu0 0.0
        %10036 = vmatprep.subr.mxu0 0.0
        %10037 = vmatpush1.msra.mxu0 0.0
        %10038 = vmatprep.subr.mxu0 0.0
        %10039 = vmatpush1.msra.mxu0 0.0
        %10040 = vmatprep.subr.mxu0 0.0
        %10041 = vmatpush1.msra.mxu0 0.0
        %10042 = vmatprep.subr.mxu0 0.0
        %10043 = vmatpush1.msra.mxu0 0.0
        %10044 = vmatprep.subr.mxu0 0.0
        %10045 = vmatpush1.msra.mxu0 0.0
        %10046 = vmatprep.subr.mxu0 0.0
        %10047 = vmatpush1.msra.mxu0 0.0
        %10048 = vmatprep.subr.mxu0 0.0
        %10049 = vmatpush1.msra.mxu0 0.0
        %10050 = vmatprep.subr.mxu0 0.0
        %10051 = vmatpush1.msra.mxu0 0.0
        %10052 = vmatprep.subr.mxu0 0.0
        %10053 = vmatpush1.msra.mxu0 0.0
        %10054 = vmatprep.subr.mxu0 0.0
        %10055 = vmatpush1.msra.mxu0 0.0
        %10056 = vmatprep.subr.mxu0 0.0
        %10057 = vmatpush1.msra.mxu0 0.0
        %10058 = vmatprep.subr.mxu0 0.0
        %v10059 = vand.u32 %v340, 4294901760
        %v10060 = vsub.f32 %v340, %v10059
        %10061 = vmatpush1.msra.mxu0 %v10060
        %10062 = vmatprep.subr.mxu0 0.0
        %10063 = vmatpush2.msra.mxu0 0.0
        %10064 = vmatprep.subr.mxu0 0.0
        %10065 = vmatpush2.msra.mxu0 0.0
        %10066 = vmatprep.subr.mxu0 0.0
        %10067 = vmatpush2.msra.mxu0 0.0
        %10068 = vmatprep.subr.mxu0 0.0
        %10069 = vmatpush2.msra.mxu0 0.0
        %10070 = vmatprep.subr.mxu0 0.0
        %10071 = vmatpush2.msra.mxu0 0.0
        %10072 = vmatprep.subr.mxu0 0.0
        %10073 = vmatpush2.msra.mxu0 0.0
        %10074 = vmatprep.subr.mxu0 0.0
        %10075 = vmatpush2.msra.mxu0 0.0
        %10076 = vmatprep.subr.mxu0 0.0
        %10077 = vmatpush2.msra.mxu0 0.0
        %10078 = vmatprep.subr.mxu0 0.0
        %10079 = vmatpush2.msra.mxu0 0.0
        %10080 = vmatprep.subr.mxu0 0.0
        %10081 = vmatpush2.msra.mxu0 0.0
        %10082 = vmatprep.subr.mxu0 0.0
        %10083 = vmatpush2.msra.mxu0 0.0
        %10084 = vmatprep.subr.mxu0 0.0
        %10085 = vmatpush2.msra.mxu0 0.0
        %10086 = vmatprep.subr.mxu0 0.0
        %10087 = vmatpush2.msra.mxu0 0.0
        %10088 = vmatprep.subr.mxu0 0.0
        %10089 = vmatpush2.msra.mxu0 0.0
        %10090 = vmatprep.subr.mxu0 0.0
        %10091 = vmatpush2.msra.mxu0 0.0
        %10092 = vmatprep.subr.mxu0 0.0
        %10093 = vmatpush2.msra.mxu0 0.0
        %10094 = vmatprep.mubr.f32.mxu0 0.0
        %v10095 = vand.u32 %v9874, 4294901760
        %v10096 = vsub.f32 %v9874, %v10095
        %10097 = vmatmul.mubr.f32.gmra.mxu0 %v10096
        %v10098 = vpop.f32.mrf.mxu0
        %v10099 = vadd.f32 %v10025, %v10098
        %v10100 = vpop.f32.mrf.mxu0
        %10101 = vdwg.mxu0
        %10102 = vmatprep.subr.mxu0 0.0
        %10103 = vmatpush1.msra.mxu0 0.0
        %10104 = vmatprep.subr.mxu0 0.0
        %10105 = vmatpush1.msra.mxu0 0.0
        %10106 = vmatprep.subr.mxu0 0.0
        %10107 = vmatpush1.msra.mxu0 0.0
        %10108 = vmatprep.subr.mxu0 0.0
        %10109 = vmatpush1.msra.mxu0 0.0
        %10110 = vmatprep.subr.mxu0 0.0
        %10111 = vmatpush1.msra.mxu0 0.0
        %10112 = vmatprep.subr.mxu0 0.0
        %10113 = vmatpush1.msra.mxu0 0.0
        %10114 = vmatprep.subr.mxu0 0.0
        %10115 = vmatpush1.msra.mxu0 0.0
        %10116 = vmatprep.subr.mxu0 0.0
        %10117 = vmatpush1.msra.mxu0 0.0
        %10118 = vmatprep.subr.mxu0 0.0
        %10119 = vmatpush1.msra.mxu0 0.0
        %10120 = vmatprep.subr.mxu0 0.0
        %10121 = vmatpush1.msra.mxu0 0.0
        %10122 = vmatprep.subr.mxu0 0.0
        %10123 = vmatpush1.msra.mxu0 0.0
        %10124 = vmatprep.subr.mxu0 0.0
        %10125 = vmatpush1.msra.mxu0 0.0
        %10126 = vmatprep.subr.mxu0 0.0
        %10127 = vmatpush1.msra.mxu0 0.0
        %10128 = vmatprep.subr.mxu0 0.0
        %10129 = vmatpush1.msra.mxu0 0.0
        %10130 = vmatprep.subr.mxu0 0.0
        %10131 = vmatpush1.msra.mxu0 0.0
        %10132 = vmatprep.subr.mxu0 0.0
        %v10133 = vand.u32 %v340, 4294901760
        %10134 = vmatpush1.msra.mxu0 %v10133
        %10135 = vmatprep.subr.mxu0 0.0
        %10136 = vmatpush2.msra.mxu0 0.0
        %10137 = vmatprep.subr.mxu0 0.0
        %10138 = vmatpush2.msra.mxu0 0.0
        %10139 = vmatprep.subr.mxu0 0.0
        %10140 = vmatpush2.msra.mxu0 0.0
        %10141 = vmatprep.subr.mxu0 0.0
        %10142 = vmatpush2.msra.mxu0 0.0
        %10143 = vmatprep.subr.mxu0 0.0
        %10144 = vmatpush2.msra.mxu0 0.0
        %10145 = vmatprep.subr.mxu0 0.0
        %10146 = vmatpush2.msra.mxu0 0.0
        %10147 = vmatprep.subr.mxu0 0.0
        %10148 = vmatpush2.msra.mxu0 0.0
        %10149 = vmatprep.subr.mxu0 0.0
        %10150 = vmatpush2.msra.mxu0 0.0
        %10151 = vmatprep.subr.mxu0 0.0
        %10152 = vmatpush2.msra.mxu0 0.0
        %10153 = vmatprep.subr.mxu0 0.0
        %10154 = vmatpush2.msra.mxu0 0.0
        %10155 = vmatprep.subr.mxu0 0.0
        %10156 = vmatpush2.msra.mxu0 0.0
        %10157 = vmatprep.subr.mxu0 0.0
        %10158 = vmatpush2.msra.mxu0 0.0
        %10159 = vmatprep.subr.mxu0 0.0
        %10160 = vmatpush2.msra.mxu0 0.0
        %10161 = vmatprep.subr.mxu0 0.0
        %10162 = vmatpush2.msra.mxu0 0.0
        %10163 = vmatprep.subr.mxu0 0.0
        %10164 = vmatpush2.msra.mxu0 0.0
        %10165 = vmatprep.subr.mxu0 0.0
        %10166 = vmatpush2.msra.mxu0 0.0
        %10167 = vmatprep.mubr.f32.mxu0 0.0
        %v10168 = vand.u32 %v9874, 4294901760
        %v10169 = vsub.f32 %v9874, %v10168
        %v10170 = vand.u32 %v10169, 4294901760
        %10171 = vmatmul.mubr.f32.gmra.mxu0 %v10170
        %v10172 = vpop.f32.mrf.mxu0
        %v10173 = vadd.f32 %v10099, %v10172
        %v10174 = vpop.f32.mrf.mxu0
        %10175 = vdwg.mxu0
        %10176 = vmatprep.subr.mxu0 0.0
        %10177 = vmatpush1.msra.mxu0 0.0
        %10178 = vmatprep.subr.mxu0 0.0
        %10179 = vmatpush1.msra.mxu0 0.0
        %10180 = vmatprep.subr.mxu0 0.0
        %10181 = vmatpush1.msra.mxu0 0.0
        %10182 = vmatprep.subr.mxu0 0.0
        %10183 = vmatpush1.msra.mxu0 0.0
        %10184 = vmatprep.subr.mxu0 0.0
        %10185 = vmatpush1.msra.mxu0 0.0
        %10186 = vmatprep.subr.mxu0 0.0
        %10187 = vmatpush1.msra.mxu0 0.0
        %10188 = vmatprep.subr.mxu0 0.0
        %10189 = vmatpush1.msra.mxu0 0.0
        %10190 = vmatprep.subr.mxu0 0.0
        %10191 = vmatpush1.msra.mxu0 0.0
        %10192 = vmatprep.subr.mxu0 0.0
        %10193 = vmatpush1.msra.mxu0 0.0
        %10194 = vmatprep.subr.mxu0 0.0
        %10195 = vmatpush1.msra.mxu0 0.0
        %10196 = vmatprep.subr.mxu0 0.0
        %10197 = vmatpush1.msra.mxu0 0.0
        %10198 = vmatprep.subr.mxu0 0.0
        %10199 = vmatpush1.msra.mxu0 0.0
        %10200 = vmatprep.subr.mxu0 0.0
        %10201 = vmatpush1.msra.mxu0 0.0
        %10202 = vmatprep.subr.mxu0 0.0
        %10203 = vmatpush1.msra.mxu0 0.0
        %10204 = vmatprep.subr.mxu0 0.0
        %10205 = vmatpush1.msra.mxu0 0.0
        %10206 = vmatprep.subr.mxu0 0.0
        %v10207 = vand.u32 %v340, 4294901760
        %v10208 = vsub.f32 %v340, %v10207
        %v10209 = vand.u32 %v10208, 4294901760
        %10210 = vmatpush1.msra.mxu0 %v10209
        %10211 = vmatprep.subr.mxu0 0.0
        %10212 = vmatpush2.msra.mxu0 0.0
        %10213 = vmatprep.subr.mxu0 0.0
        %10214 = vmatpush2.msra.mxu0 0.0
        %10215 = vmatprep.subr.mxu0 0.0
        %10216 = vmatpush2.msra.mxu0 0.0
        %10217 = vmatprep.subr.mxu0 0.0
        %10218 = vmatpush2.msra.mxu0 0.0
        %10219 = vmatprep.subr.mxu0 0.0
        %10220 = vmatpush2.msra.mxu0 0.0
        %10221 = vmatprep.subr.mxu0 0.0
        %10222 = vmatpush2.msra.mxu0 0.0
        %10223 = vmatprep.subr.mxu0 0.0
        %10224 = vmatpush2.msra.mxu0 0.0
        %10225 = vmatprep.subr.mxu0 0.0
        %10226 = vmatpush2.msra.mxu0 0.0
        %10227 = vmatprep.subr.mxu0 0.0
        %10228 = vmatpush2.msra.mxu0 0.0
        %10229 = vmatprep.subr.mxu0 0.0
        %10230 = vmatpush2.msra.mxu0 0.0
        %10231 = vmatprep.subr.mxu0 0.0
        %10232 = vmatpush2.msra.mxu0 0.0
        %10233 = vmatprep.subr.mxu0 0.0
        %10234 = vmatpush2.msra.mxu0 0.0
        %10235 = vmatprep.subr.mxu0 0.0
        %10236 = vmatpush2.msra.mxu0 0.0
        %10237 = vmatprep.subr.mxu0 0.0
        %10238 = vmatpush2.msra.mxu0 0.0
        %10239 = vmatprep.subr.mxu0 0.0
        %10240 = vmatpush2.msra.mxu0 0.0
        %10241 = vmatprep.subr.mxu0 0.0
        %10242 = vmatpush2.msra.mxu0 0.0
        %10243 = vmatprep.mubr.f32.mxu0 0.0
        %v10244 = vand.u32 %v9874, 4294901760
        %10245 = vmatmul.mubr.f32.gmra.mxu0 %v10244
        %v10246 = vpop.f32.mrf.mxu0
        %v10247 = vadd.f32 %v10173, %v10246
        %v10248 = vpop.f32.mrf.mxu0
        %10249 = vdwg.mxu0
        %10250 = vmatprep.subr.mxu0 0.0
        %10251 = vmatpush1.msra.mxu0 0.0
        %10252 = vmatprep.subr.mxu0 0.0
        %10253 = vmatpush1.msra.mxu0 0.0
        %10254 = vmatprep.subr.mxu0 0.0
        %10255 = vmatpush1.msra.mxu0 0.0
        %10256 = vmatprep.subr.mxu0 0.0
        %10257 = vmatpush1.msra.mxu0 0.0
        %10258 = vmatprep.subr.mxu0 0.0
        %10259 = vmatpush1.msra.mxu0 0.0
        %10260 = vmatprep.subr.mxu0 0.0
        %10261 = vmatpush1.msra.mxu0 0.0
        %10262 = vmatprep.subr.mxu0 0.0
        %10263 = vmatpush1.msra.mxu0 0.0
        %10264 = vmatprep.subr.mxu0 0.0
        %10265 = vmatpush1.msra.mxu0 0.0
        %10266 = vmatprep.subr.mxu0 0.0
        %10267 = vmatpush1.msra.mxu0 0.0
        %10268 = vmatprep.subr.mxu0 0.0
        %10269 = vmatpush1.msra.mxu0 0.0
        %10270 = vmatprep.subr.mxu0 0.0
        %10271 = vmatpush1.msra.mxu0 0.0
        %10272 = vmatprep.subr.mxu0 0.0
        %10273 = vmatpush1.msra.mxu0 0.0
        %10274 = vmatprep.subr.mxu0 0.0
        %10275 = vmatpush1.msra.mxu0 0.0
        %10276 = vmatprep.subr.mxu0 0.0
        %10277 = vmatpush1.msra.mxu0 0.0
        %10278 = vmatprep.subr.mxu0 0.0
        %10279 = vmatpush1.msra.mxu0 0.0
        %10280 = vmatprep.subr.mxu0 0.0
        %v10281 = vand.u32 %v340, 4294901760
        %10282 = vmatpush1.msra.mxu0 %v10281
        %10283 = vmatprep.subr.mxu0 0.0
        %10284 = vmatpush2.msra.mxu0 0.0
        %10285 = vmatprep.subr.mxu0 0.0
        %10286 = vmatpush2.msra.mxu0 0.0
        %10287 = vmatprep.subr.mxu0 0.0
        %10288 = vmatpush2.msra.mxu0 0.0
        %10289 = vmatprep.subr.mxu0 0.0
        %10290 = vmatpush2.msra.mxu0 0.0
        %10291 = vmatprep.subr.mxu0 0.0
        %10292 = vmatpush2.msra.mxu0 0.0
        %10293 = vmatprep.subr.mxu0 0.0
        %10294 = vmatpush2.msra.mxu0 0.0
        %10295 = vmatprep.subr.mxu0 0.0
        %10296 = vmatpush2.msra.mxu0 0.0
        %10297 = vmatprep.subr.mxu0 0.0
        %10298 = vmatpush2.msra.mxu0 0.0
        %10299 = vmatprep.subr.mxu0 0.0
        %10300 = vmatpush2.msra.mxu0 0.0
        %10301 = vmatprep.subr.mxu0 0.0
        %10302 = vmatpush2.msra.mxu0 0.0
        %10303 = vmatprep.subr.mxu0 0.0
        %10304 = vmatpush2.msra.mxu0 0.0
        %10305 = vmatprep.subr.mxu0 0.0
        %10306 = vmatpush2.msra.mxu0 0.0
        %10307 = vmatprep.subr.mxu0 0.0
        %10308 = vmatpush2.msra.mxu0 0.0
        %10309 = vmatprep.subr.mxu0 0.0
        %10310 = vmatpush2.msra.mxu0 0.0
        %10311 = vmatprep.subr.mxu0 0.0
        %10312 = vmatpush2.msra.mxu0 0.0
        %10313 = vmatprep.subr.mxu0 0.0
        %10314 = vmatpush2.msra.mxu0 0.0
        %10315 = vmatprep.mubr.f32.mxu0 0.0
        %v10316 = vand.u32 %v9874, 4294901760
        %10317 = vmatmul.mubr.f32.gmra.mxu0 %v10316
        %v10318 = vpop.f32.mrf.mxu0
        %v10319 = vadd.f32 %v10247, %v10318
        %v10320 = vpop.f32.mrf.mxu0
        %10321 = vdwg.mxu0
        %10322 = vmatprep.subr.mxu0 0.0
        %10323 = vmatpush1.msra.mxu0 0.0
        %10324 = vmatprep.subr.mxu0 0.0
        %10325 = vmatpush1.msra.mxu0 0.0
        %10326 = vmatprep.subr.mxu0 0.0
        %10327 = vmatpush1.msra.mxu0 0.0
        %10328 = vmatprep.subr.mxu0 0.0
        %10329 = vmatpush1.msra.mxu0 0.0
        %10330 = vmatprep.subr.mxu0 0.0
        %10331 = vmatpush1.msra.mxu0 0.0
        %10332 = vmatprep.subr.mxu0 0.0
        %10333 = vmatpush1.msra.mxu0 0.0
        %10334 = vmatprep.subr.mxu0 0.0
        %10335 = vmatpush1.msra.mxu0 0.0
        %10336 = vmatprep.subr.mxu0 0.0
        %10337 = vmatpush1.msra.mxu0 0.0
        %10338 = vmatprep.subr.mxu0 0.0
        %10339 = vmatpush1.msra.mxu0 0.0
        %10340 = vmatprep.subr.mxu0 0.0
        %10341 = vmatpush1.msra.mxu0 0.0
        %10342 = vmatprep.subr.mxu0 0.0
        %10343 = vmatpush1.msra.mxu0 0.0
        %10344 = vmatprep.subr.mxu0 0.0
        %10345 = vmatpush1.msra.mxu0 0.0
        %10346 = vmatprep.subr.mxu0 0.0
        %10347 = vmatpush1.msra.mxu0 0.0
        %10348 = vmatprep.subr.mxu0 0.0
        %10349 = vmatpush1.msra.mxu0 0.0
        %10350 = vmatprep.subr.mxu0 0.0
        %10351 = vmatpush1.msra.mxu0 0.0
        %10352 = vmatprep.subr.mxu0 0.0
        %v10353 = vand.u32 %v10319, 4294901760
        %10354 = vmatpush1.msra.mxu0 %v10353
        %10355 = vmatprep.subr.mxu0 0.0
        %10356 = vmatpush2.msra.mxu0 0.0
        %10357 = vmatprep.subr.mxu0 0.0
        %10358 = vmatpush2.msra.mxu0 0.0
        %10359 = vmatprep.subr.mxu0 0.0
        %10360 = vmatpush2.msra.mxu0 0.0
        %10361 = vmatprep.subr.mxu0 0.0
        %10362 = vmatpush2.msra.mxu0 0.0
        %10363 = vmatprep.subr.mxu0 0.0
        %10364 = vmatpush2.msra.mxu0 0.0
        %10365 = vmatprep.subr.mxu0 0.0
        %10366 = vmatpush2.msra.mxu0 0.0
        %10367 = vmatprep.subr.mxu0 0.0
        %10368 = vmatpush2.msra.mxu0 0.0
        %10369 = vmatprep.subr.mxu0 0.0
        %10370 = vmatpush2.msra.mxu0 0.0
        %10371 = vmatprep.subr.mxu0 0.0
        %10372 = vmatpush2.msra.mxu0 0.0
        %10373 = vmatprep.subr.mxu0 0.0
        %10374 = vmatpush2.msra.mxu0 0.0
        %10375 = vmatprep.subr.mxu0 0.0
        %10376 = vmatpush2.msra.mxu0 0.0
        %10377 = vmatprep.subr.mxu0 0.0
        %10378 = vmatpush2.msra.mxu0 0.0
        %10379 = vmatprep.subr.mxu0 0.0
        %10380 = vmatpush2.msra.mxu0 0.0
        %10381 = vmatprep.subr.mxu0 0.0
        %10382 = vmatpush2.msra.mxu0 0.0
        %10383 = vmatprep.subr.mxu0 0.0
        %10384 = vmatpush2.msra.mxu0 0.0
        %10385 = vmatprep.subr.mxu0 0.0
        %10386 = vmatpush2.msra.mxu0 0.0
        %10387 = vmatprep.mubr.f32.mxu0 0.0
        %v10388 = vand.u32 %v796, 4294901760
        %v10389 = vsub.f32 %v796, %v10388
        %v10390 = vand.u32 %v10389, 4294901760
        %v10391 = vsub.f32 %v10389, %v10390
        %v10392 = vand.u32 %v10391, 4294901760
        %10393 = vmatmul.mubr.f32.gmra.mxu0 %v10392
        %v10394 = vpop.f32.mrf.mxu0
        %v10395 = vadd.f32 0.0, %v10394
        %v10396 = vpop.f32.mrf.mxu0
        %10397 = vdwg.mxu0
        %10398 = vmatprep.subr.mxu0 0.0
        %10399 = vmatpush1.msra.mxu0 0.0
        %10400 = vmatprep.subr.mxu0 0.0
        %10401 = vmatpush1.msra.mxu0 0.0
        %10402 = vmatprep.subr.mxu0 0.0
        %10403 = vmatpush1.msra.mxu0 0.0
        %10404 = vmatprep.subr.mxu0 0.0
        %10405 = vmatpush1.msra.mxu0 0.0
        %10406 = vmatprep.subr.mxu0 0.0
        %10407 = vmatpush1.msra.mxu0 0.0
        %10408 = vmatprep.subr.mxu0 0.0
        %10409 = vmatpush1.msra.mxu0 0.0
        %10410 = vmatprep.subr.mxu0 0.0
        %10411 = vmatpush1.msra.mxu0 0.0
        %10412 = vmatprep.subr.mxu0 0.0
        %10413 = vmatpush1.msra.mxu0 0.0
        %10414 = vmatprep.subr.mxu0 0.0
        %10415 = vmatpush1.msra.mxu0 0.0
        %10416 = vmatprep.subr.mxu0 0.0
        %10417 = vmatpush1.msra.mxu0 0.0
        %10418 = vmatprep.subr.mxu0 0.0
        %10419 = vmatpush1.msra.mxu0 0.0
        %10420 = vmatprep.subr.mxu0 0.0
        %10421 = vmatpush1.msra.mxu0 0.0
        %10422 = vmatprep.subr.mxu0 0.0
        %10423 = vmatpush1.msra.mxu0 0.0
        %10424 = vmatprep.subr.mxu0 0.0
        %10425 = vmatpush1.msra.mxu0 0.0
        %10426 = vmatprep.subr.mxu0 0.0
        %10427 = vmatpush1.msra.mxu0 0.0
        %10428 = vmatprep.subr.mxu0 0.0
        %v10429 = vand.u32 %v10319, 4294901760
        %v10430 = vsub.f32 %v10319, %v10429
        %v10431 = vand.u32 %v10430, 4294901760
        %v10432 = vsub.f32 %v10430, %v10431
        %v10433 = vand.u32 %v10432, 4294901760
        %10434 = vmatpush1.msra.mxu0 %v10433
        %10435 = vmatprep.subr.mxu0 0.0
        %10436 = vmatpush2.msra.mxu0 0.0
        %10437 = vmatprep.subr.mxu0 0.0
        %10438 = vmatpush2.msra.mxu0 0.0
        %10439 = vmatprep.subr.mxu0 0.0
        %10440 = vmatpush2.msra.mxu0 0.0
        %10441 = vmatprep.subr.mxu0 0.0
        %10442 = vmatpush2.msra.mxu0 0.0
        %10443 = vmatprep.subr.mxu0 0.0
        %10444 = vmatpush2.msra.mxu0 0.0
        %10445 = vmatprep.subr.mxu0 0.0
        %10446 = vmatpush2.msra.mxu0 0.0
        %10447 = vmatprep.subr.mxu0 0.0
        %10448 = vmatpush2.msra.mxu0 0.0
        %10449 = vmatprep.subr.mxu0 0.0
        %10450 = vmatpush2.msra.mxu0 0.0
        %10451 = vmatprep.subr.mxu0 0.0
        %10452 = vmatpush2.msra.mxu0 0.0
        %10453 = vmatprep.subr.mxu0 0.0
        %10454 = vmatpush2.msra.mxu0 0.0
        %10455 = vmatprep.subr.mxu0 0.0
        %10456 = vmatpush2.msra.mxu0 0.0
        %10457 = vmatprep.subr.mxu0 0.0
        %10458 = vmatpush2.msra.mxu0 0.0
        %10459 = vmatprep.subr.mxu0 0.0
        %10460 = vmatpush2.msra.mxu0 0.0
        %10461 = vmatprep.subr.mxu0 0.0
        %10462 = vmatpush2.msra.mxu0 0.0
        %10463 = vmatprep.subr.mxu0 0.0
        %10464 = vmatpush2.msra.mxu0 0.0
        %10465 = vmatprep.subr.mxu0 0.0
        %10466 = vmatpush2.msra.mxu0 0.0
        %10467 = vmatprep.mubr.f32.mxu0 0.0
        %v10468 = vand.u32 %v796, 4294901760
        %10469 = vmatmul.mubr.f32.gmra.mxu0 %v10468
        %v10470 = vpop.f32.mrf.mxu0
        %v10471 = vadd.f32 %v10395, %v10470
        %v10472 = vpop.f32.mrf.mxu0
        %10473 = vdwg.mxu0
        %10474 = vmatprep.subr.mxu0 0.0
        %10475 = vmatpush1.msra.mxu0 0.0
        %10476 = vmatprep.subr.mxu0 0.0
        %10477 = vmatpush1.msra.mxu0 0.0
        %10478 = vmatprep.subr.mxu0 0.0
        %10479 = vmatpush1.msra.mxu0 0.0
        %10480 = vmatprep.subr.mxu0 0.0
        %10481 = vmatpush1.msra.mxu0 0.0
        %10482 = vmatprep.subr.mxu0 0.0
        %10483 = vmatpush1.msra.mxu0 0.0
        %10484 = vmatprep.subr.mxu0 0.0
        %10485 = vmatpush1.msra.mxu0 0.0
        %10486 = vmatprep.subr.mxu0 0.0
        %10487 = vmatpush1.msra.mxu0 0.0
        %10488 = vmatprep.subr.mxu0 0.0
        %10489 = vmatpush1.msra.mxu0 0.0
        %10490 = vmatprep.subr.mxu0 0.0
        %10491 = vmatpush1.msra.mxu0 0.0
        %10492 = vmatprep.subr.mxu0 0.0
        %10493 = vmatpush1.msra.mxu0 0.0
        %10494 = vmatprep.subr.mxu0 0.0
        %10495 = vmatpush1.msra.mxu0 0.0
        %10496 = vmatprep.subr.mxu0 0.0
        %10497 = vmatpush1.msra.mxu0 0.0
        %10498 = vmatprep.subr.mxu0 0.0
        %10499 = vmatpush1.msra.mxu0 0.0
        %10500 = vmatprep.subr.mxu0 0.0
        %10501 = vmatpush1.msra.mxu0 0.0
        %10502 = vmatprep.subr.mxu0 0.0
        %10503 = vmatpush1.msra.mxu0 0.0
        %10504 = vmatprep.subr.mxu0 0.0
        %v10505 = vand.u32 %v10319, 4294901760
        %v10506 = vsub.f32 %v10319, %v10505
        %10507 = vmatpush1.msra.mxu0 %v10506
        %10508 = vmatprep.subr.mxu0 0.0
        %10509 = vmatpush2.msra.mxu0 0.0
        %10510 = vmatprep.subr.mxu0 0.0
        %10511 = vmatpush2.msra.mxu0 0.0
        %10512 = vmatprep.subr.mxu0 0.0
        %10513 = vmatpush2.msra.mxu0 0.0
        %10514 = vmatprep.subr.mxu0 0.0
        %10515 = vmatpush2.msra.mxu0 0.0
        %10516 = vmatprep.subr.mxu0 0.0
        %10517 = vmatpush2.msra.mxu0 0.0
        %10518 = vmatprep.subr.mxu0 0.0
        %10519 = vmatpush2.msra.mxu0 0.0
        %10520 = vmatprep.subr.mxu0 0.0
        %10521 = vmatpush2.msra.mxu0 0.0
        %10522 = vmatprep.subr.mxu0 0.0
        %10523 = vmatpush2.msra.mxu0 0.0
        %10524 = vmatprep.subr.mxu0 0.0
        %10525 = vmatpush2.msra.mxu0 0.0
        %10526 = vmatprep.subr.mxu0 0.0
        %10527 = vmatpush2.msra.mxu0 0.0
        %10528 = vmatprep.subr.mxu0 0.0
        %10529 = vmatpush2.msra.mxu0 0.0
        %10530 = vmatprep.subr.mxu0 0.0
        %10531 = vmatpush2.msra.mxu0 0.0
        %10532 = vmatprep.subr.mxu0 0.0
        %10533 = vmatpush2.msra.mxu0 0.0
        %10534 = vmatprep.subr.mxu0 0.0
        %10535 = vmatpush2.msra.mxu0 0.0
        %10536 = vmatprep.subr.mxu0 0.0
        %10537 = vmatpush2.msra.mxu0 0.0
        %10538 = vmatprep.subr.mxu0 0.0
        %10539 = vmatpush2.msra.mxu0 0.0
        %10540 = vmatprep.mubr.f32.mxu0 0.0
        %v10541 = vand.u32 %v796, 4294901760
        %v10542 = vsub.f32 %v796, %v10541
        %10543 = vmatmul.mubr.f32.gmra.mxu0 %v10542
        %v10544 = vpop.f32.mrf.mxu0
        %v10545 = vadd.f32 %v10471, %v10544
        %v10546 = vpop.f32.mrf.mxu0
        %10547 = vdwg.mxu0
        %10548 = vmatprep.subr.mxu0 0.0
        %10549 = vmatpush1.msra.mxu0 0.0
        %10550 = vmatprep.subr.mxu0 0.0
        %10551 = vmatpush1.msra.mxu0 0.0
        %10552 = vmatprep.subr.mxu0 0.0
        %10553 = vmatpush1.msra.mxu0 0.0
        %10554 = vmatprep.subr.mxu0 0.0
        %10555 = vmatpush1.msra.mxu0 0.0
        %10556 = vmatprep.subr.mxu0 0.0
        %10557 = vmatpush1.msra.mxu0 0.0
        %10558 = vmatprep.subr.mxu0 0.0
        %10559 = vmatpush1.msra.mxu0 0.0
        %10560 = vmatprep.subr.mxu0 0.0
        %10561 = vmatpush1.msra.mxu0 0.0
        %10562 = vmatprep.subr.mxu0 0.0
        %10563 = vmatpush1.msra.mxu0 0.0
        %10564 = vmatprep.subr.mxu0 0.0
        %10565 = vmatpush1.msra.mxu0 0.0
        %10566 = vmatprep.subr.mxu0 0.0
        %10567 = vmatpush1.msra.mxu0 0.0
        %10568 = vmatprep.subr.mxu0 0.0
        %10569 = vmatpush1.msra.mxu0 0.0
        %10570 = vmatprep.subr.mxu0 0.0
        %10571 = vmatpush1.msra.mxu0 0.0
        %10572 = vmatprep.subr.mxu0 0.0
        %10573 = vmatpush1.msra.mxu0 0.0
        %10574 = vmatprep.subr.mxu0 0.0
        %10575 = vmatpush1.msra.mxu0 0.0
        %10576 = vmatprep.subr.mxu0 0.0
        %10577 = vmatpush1.msra.mxu0 0.0
        %10578 = vmatprep.subr.mxu0 0.0
        %v10579 = vand.u32 %v10319, 4294901760
        %10580 = vmatpush1.msra.mxu0 %v10579
        %10581 = vmatprep.subr.mxu0 0.0
        %10582 = vmatpush2.msra.mxu0 0.0
        %10583 = vmatprep.subr.mxu0 0.0
        %10584 = vmatpush2.msra.mxu0 0.0
        %10585 = vmatprep.subr.mxu0 0.0
        %10586 = vmatpush2.msra.mxu0 0.0
        %10587 = vmatprep.subr.mxu0 0.0
        %10588 = vmatpush2.msra.mxu0 0.0
        %10589 = vmatprep.subr.mxu0 0.0
        %10590 = vmatpush2.msra.mxu0 0.0
        %10591 = vmatprep.subr.mxu0 0.0
        %10592 = vmatpush2.msra.mxu0 0.0
        %10593 = vmatprep.subr.mxu0 0.0
        %10594 = vmatpush2.msra.mxu0 0.0
        %10595 = vmatprep.subr.mxu0 0.0
        %10596 = vmatpush2.msra.mxu0 0.0
        %10597 = vmatprep.subr.mxu0 0.0
        %10598 = vmatpush2.msra.mxu0 0.0
        %10599 = vmatprep.subr.mxu0 0.0
        %10600 = vmatpush2.msra.mxu0 0.0
        %10601 = vmatprep.subr.mxu0 0.0
        %10602 = vmatpush2.msra.mxu0 0.0
        %10603 = vmatprep.subr.mxu0 0.0
        %10604 = vmatpush2.msra.mxu0 0.0
        %10605 = vmatprep.subr.mxu0 0.0
        %10606 = vmatpush2.msra.mxu0 0.0
        %10607 = vmatprep.subr.mxu0 0.0
        %10608 = vmatpush2.msra.mxu0 0.0
        %10609 = vmatprep.subr.mxu0 0.0
        %10610 = vmatpush2.msra.mxu0 0.0
        %10611 = vmatprep.subr.mxu0 0.0
        %10612 = vmatpush2.msra.mxu0 0.0
        %10613 = vmatprep.mubr.f32.mxu0 0.0
        %v10614 = vand.u32 %v796, 4294901760
        %v10615 = vsub.f32 %v796, %v10614
        %v10616 = vand.u32 %v10615, 4294901760
        %10617 = vmatmul.mubr.f32.gmra.mxu0 %v10616
        %v10618 = vpop.f32.mrf.mxu0
        %v10619 = vadd.f32 %v10545, %v10618
        %v10620 = vpop.f32.mrf.mxu0
        %10621 = vdwg.mxu0
        %10622 = vmatprep.subr.mxu0 0.0
        %10623 = vmatpush1.msra.mxu0 0.0
        %10624 = vmatprep.subr.mxu0 0.0
        %10625 = vmatpush1.msra.mxu0 0.0
        %10626 = vmatprep.subr.mxu0 0.0
        %10627 = vmatpush1.msra.mxu0 0.0
        %10628 = vmatprep.subr.mxu0 0.0
        %10629 = vmatpush1.msra.mxu0 0.0
        %10630 = vmatprep.subr.mxu0 0.0
        %10631 = vmatpush1.msra.mxu0 0.0
        %10632 = vmatprep.subr.mxu0 0.0
        %10633 = vmatpush1.msra.mxu0 0.0
        %10634 = vmatprep.subr.mxu0 0.0
        %10635 = vmatpush1.msra.mxu0 0.0
        %10636 = vmatprep.subr.mxu0 0.0
        %10637 = vmatpush1.msra.mxu0 0.0
        %10638 = vmatprep.subr.mxu0 0.0
        %10639 = vmatpush1.msra.mxu0 0.0
        %10640 = vmatprep.subr.mxu0 0.0
        %10641 = vmatpush1.msra.mxu0 0.0
        %10642 = vmatprep.subr.mxu0 0.0
        %10643 = vmatpush1.msra.mxu0 0.0
        %10644 = vmatprep.subr.mxu0 0.0
        %10645 = vmatpush1.msra.mxu0 0.0
        %10646 = vmatprep.subr.mxu0 0.0
        %10647 = vmatpush1.msra.mxu0 0.0
        %10648 = vmatprep.subr.mxu0 0.0
        %10649 = vmatpush1.msra.mxu0 0.0
        %10650 = vmatprep.subr.mxu0 0.0
        %10651 = vmatpush1.msra.mxu0 0.0
        %10652 = vmatprep.subr.mxu0 0.0
        %v10653 = vand.u32 %v10319, 4294901760
        %v10654 = vsub.f32 %v10319, %v10653
        %v10655 = vand.u32 %v10654, 4294901760
        %10656 = vmatpush1.msra.mxu0 %v10655
        %10657 = vmatprep.subr.mxu0 0.0
        %10658 = vmatpush2.msra.mxu0 0.0
        %10659 = vmatprep.subr.mxu0 0.0
        %10660 = vmatpush2.msra.mxu0 0.0
        %10661 = vmatprep.subr.mxu0 0.0
        %10662 = vmatpush2.msra.mxu0 0.0
        %10663 = vmatprep.subr.mxu0 0.0
        %10664 = vmatpush2.msra.mxu0 0.0
        %10665 = vmatprep.subr.mxu0 0.0
        %10666 = vmatpush2.msra.mxu0 0.0
        %10667 = vmatprep.subr.mxu0 0.0
        %10668 = vmatpush2.msra.mxu0 0.0
        %10669 = vmatprep.subr.mxu0 0.0
        %10670 = vmatpush2.msra.mxu0 0.0
        %10671 = vmatprep.subr.mxu0 0.0
        %10672 = vmatpush2.msra.mxu0 0.0
        %10673 = vmatprep.subr.mxu0 0.0
        %10674 = vmatpush2.msra.mxu0 0.0
        %10675 = vmatprep.subr.mxu0 0.0
        %10676 = vmatpush2.msra.mxu0 0.0
        %10677 = vmatprep.subr.mxu0 0.0
        %10678 = vmatpush2.msra.mxu0 0.0
        %10679 = vmatprep.subr.mxu0 0.0
        %10680 = vmatpush2.msra.mxu0 0.0
        %10681 = vmatprep.subr.mxu0 0.0
        %10682 = vmatpush2.msra.mxu0 0.0
        %10683 = vmatprep.subr.mxu0 0.0
        %10684 = vmatpush2.msra.mxu0 0.0
        %10685 = vmatprep.subr.mxu0 0.0
        %10686 = vmatpush2.msra.mxu0 0.0
        %10687 = vmatprep.subr.mxu0 0.0
        %10688 = vmatpush2.msra.mxu0 0.0
        %10689 = vmatprep.mubr.f32.mxu0 0.0
        %v10690 = vand.u32 %v796, 4294901760
        %10691 = vmatmul.mubr.f32.gmra.mxu0 %v10690
        %v10692 = vpop.f32.mrf.mxu0
        %v10693 = vadd.f32 %v10619, %v10692
        %v10694 = vpop.f32.mrf.mxu0
        %10695 = vdwg.mxu0
        %10696 = vmatprep.subr.mxu0 0.0
        %10697 = vmatpush1.msra.mxu0 0.0
        %10698 = vmatprep.subr.mxu0 0.0
        %10699 = vmatpush1.msra.mxu0 0.0
        %10700 = vmatprep.subr.mxu0 0.0
        %10701 = vmatpush1.msra.mxu0 0.0
        %10702 = vmatprep.subr.mxu0 0.0
        %10703 = vmatpush1.msra.mxu0 0.0
        %10704 = vmatprep.subr.mxu0 0.0
        %10705 = vmatpush1.msra.mxu0 0.0
        %10706 = vmatprep.subr.mxu0 0.0
        %10707 = vmatpush1.msra.mxu0 0.0
        %10708 = vmatprep.subr.mxu0 0.0
        %10709 = vmatpush1.msra.mxu0 0.0
        %10710 = vmatprep.subr.mxu0 0.0
        %10711 = vmatpush1.msra.mxu0 0.0
        %10712 = vmatprep.subr.mxu0 0.0
        %10713 = vmatpush1.msra.mxu0 0.0
        %10714 = vmatprep.subr.mxu0 0.0
        %10715 = vmatpush1.msra.mxu0 0.0
        %10716 = vmatprep.subr.mxu0 0.0
        %10717 = vmatpush1.msra.mxu0 0.0
        %10718 = vmatprep.subr.mxu0 0.0
        %10719 = vmatpush1.msra.mxu0 0.0
        %10720 = vmatprep.subr.mxu0 0.0
        %10721 = vmatpush1.msra.mxu0 0.0
        %10722 = vmatprep.subr.mxu0 0.0
        %10723 = vmatpush1.msra.mxu0 0.0
        %10724 = vmatprep.subr.mxu0 0.0
        %10725 = vmatpush1.msra.mxu0 0.0
        %10726 = vmatprep.subr.mxu0 0.0
        %v10727 = vand.u32 %v10319, 4294901760
        %10728 = vmatpush1.msra.mxu0 %v10727
        %10729 = vmatprep.subr.mxu0 0.0
        %10730 = vmatpush2.msra.mxu0 0.0
        %10731 = vmatprep.subr.mxu0 0.0
        %10732 = vmatpush2.msra.mxu0 0.0
        %10733 = vmatprep.subr.mxu0 0.0
        %10734 = vmatpush2.msra.mxu0 0.0
        %10735 = vmatprep.subr.mxu0 0.0
        %10736 = vmatpush2.msra.mxu0 0.0
        %10737 = vmatprep.subr.mxu0 0.0
        %10738 = vmatpush2.msra.mxu0 0.0
        %10739 = vmatprep.subr.mxu0 0.0
        %10740 = vmatpush2.msra.mxu0 0.0
        %10741 = vmatprep.subr.mxu0 0.0
        %10742 = vmatpush2.msra.mxu0 0.0
        %10743 = vmatprep.subr.mxu0 0.0
        %10744 = vmatpush2.msra.mxu0 0.0
        %10745 = vmatprep.subr.mxu0 0.0
        %10746 = vmatpush2.msra.mxu0 0.0
        %10747 = vmatprep.subr.mxu0 0.0
        %10748 = vmatpush2.msra.mxu0 0.0
        %10749 = vmatprep.subr.mxu0 0.0
        %10750 = vmatpush2.msra.mxu0 0.0
        %10751 = vmatprep.subr.mxu0 0.0
        %10752 = vmatpush2.msra.mxu0 0.0
        %10753 = vmatprep.subr.mxu0 0.0
        %10754 = vmatpush2.msra.mxu0 0.0
        %10755 = vmatprep.subr.mxu0 0.0
        %10756 = vmatpush2.msra.mxu0 0.0
        %10757 = vmatprep.subr.mxu0 0.0
        %10758 = vmatpush2.msra.mxu0 0.0
        %10759 = vmatprep.subr.mxu0 0.0
        %10760 = vmatpush2.msra.mxu0 0.0
        %10761 = vmatprep.mubr.f32.mxu0 0.0
        %v10762 = vand.u32 %v796, 4294901760
        %10763 = vmatmul.mubr.f32.gmra.mxu0 %v10762
        %v10764 = vpop.f32.mrf.mxu0
        %v10765 = vadd.f32 %v10693, %v10764
        %v10766 = vpop.f32.mrf.mxu0
        %10767 = vdwg.mxu0
        %v10768 = vld [vmem:[%s300 + $0x8] sm:$0xff]
        %10770 = vrot.lane.b32.xlu0 %v10765, 16
        %v10771 = vpop.permute.xlu0 %10770
        %v10773 = vsel %vm1249, %v10765, %v10771
        %10775 = vrot.lane.b32.xlu0 %v10768, 32
        %v10776 = vpop.permute.xlu0 %10775
        %10778 = vmatprep.subr.mxu0 0.0
        %10779 = vmatpush1.msra.mxu0 0.0
        %10780 = vmatprep.subr.mxu0 0.0
        %10781 = vmatpush1.msra.mxu0 0.0
        %10782 = vmatprep.subr.mxu0 0.0
        %10783 = vmatpush1.msra.mxu0 0.0
        %10784 = vmatprep.subr.mxu0 0.0
        %10785 = vmatpush1.msra.mxu0 0.0
        %10786 = vmatprep.subr.mxu0 0.0
        %10787 = vmatpush1.msra.mxu0 0.0
        %10788 = vmatprep.subr.mxu0 0.0
        %10789 = vmatpush1.msra.mxu0 0.0
        %10790 = vmatprep.subr.mxu0 0.0
        %10791 = vmatpush1.msra.mxu0 0.0
        %10792 = vmatprep.subr.mxu0 0.0
        %10793 = vmatpush1.msra.mxu0 0.0
        %10794 = vmatprep.subr.mxu0 0.0
        %10795 = vmatpush1.msra.mxu0 0.0
        %10796 = vmatprep.subr.mxu0 0.0
        %10797 = vmatpush1.msra.mxu0 0.0
        %10798 = vmatprep.subr.mxu0 0.0
        %10799 = vmatpush1.msra.mxu0 0.0
        %10800 = vmatprep.subr.mxu0 0.0
        %10801 = vmatpush1.msra.mxu0 0.0
        %10802 = vmatprep.subr.mxu0 0.0
        %10803 = vmatpush1.msra.mxu0 0.0
        %10804 = vmatprep.subr.mxu0 0.0
        %10805 = vmatpush1.msra.mxu0 0.0
        %10806 = vmatprep.subr.mxu0 0.0
        %10807 = vmatpush1.msra.mxu0 0.0
        %10808 = vmatprep.subr.mxu0 0.0
        %v10809 = vand.u32 %v10776, 4294901760
        %10810 = vmatpush1.msra.mxu0 %v10809
        %10811 = vmatprep.subr.mxu0 0.0
        %10812 = vmatpush2.msra.mxu0 0.0
        %10813 = vmatprep.subr.mxu0 0.0
        %10814 = vmatpush2.msra.mxu0 0.0
        %10815 = vmatprep.subr.mxu0 0.0
        %10816 = vmatpush2.msra.mxu0 0.0
        %10817 = vmatprep.subr.mxu0 0.0
        %10818 = vmatpush2.msra.mxu0 0.0
        %10819 = vmatprep.subr.mxu0 0.0
        %10820 = vmatpush2.msra.mxu0 0.0
        %10821 = vmatprep.subr.mxu0 0.0
        %10822 = vmatpush2.msra.mxu0 0.0
        %10823 = vmatprep.subr.mxu0 0.0
        %10824 = vmatpush2.msra.mxu0 0.0
        %10825 = vmatprep.subr.mxu0 0.0
        %10826 = vmatpush2.msra.mxu0 0.0
        %10827 = vmatprep.subr.mxu0 0.0
        %10828 = vmatpush2.msra.mxu0 0.0
        %10829 = vmatprep.subr.mxu0 0.0
        %10830 = vmatpush2.msra.mxu0 0.0
        %10831 = vmatprep.subr.mxu0 0.0
        %10832 = vmatpush2.msra.mxu0 0.0
        %10833 = vmatprep.subr.mxu0 0.0
        %10834 = vmatpush2.msra.mxu0 0.0
        %10835 = vmatprep.subr.mxu0 0.0
        %10836 = vmatpush2.msra.mxu0 0.0
        %10837 = vmatprep.subr.mxu0 0.0
        %10838 = vmatpush2.msra.mxu0 0.0
        %10839 = vmatprep.subr.mxu0 0.0
        %10840 = vmatpush2.msra.mxu0 0.0
        %10841 = vmatprep.subr.mxu0 0.0
        %10842 = vmatpush2.msra.mxu0 0.0
        %10843 = vmatprep.mubr.f32.mxu0 0.0
        %v10844 = vand.u32 %v1252, 4294901760
        %v10845 = vsub.f32 %v1252, %v10844
        %v10846 = vand.u32 %v10845, 4294901760
        %v10847 = vsub.f32 %v10845, %v10846
        %v10848 = vand.u32 %v10847, 4294901760
        %10849 = vmatmul.mubr.f32.gmra.mxu0 %v10848
        %v10850 = vpop.f32.mrf.mxu0
        %v10851 = vadd.f32 %v10773, %v10850
        %v10852 = vpop.f32.mrf.mxu0
        %10853 = vdwg.mxu0
        %10854 = vmatprep.subr.mxu0 0.0
        %10855 = vmatpush1.msra.mxu0 0.0
        %10856 = vmatprep.subr.mxu0 0.0
        %10857 = vmatpush1.msra.mxu0 0.0
        %10858 = vmatprep.subr.mxu0 0.0
        %10859 = vmatpush1.msra.mxu0 0.0
        %10860 = vmatprep.subr.mxu0 0.0
        %10861 = vmatpush1.msra.mxu0 0.0
        %10862 = vmatprep.subr.mxu0 0.0
        %10863 = vmatpush1.msra.mxu0 0.0
        %10864 = vmatprep.subr.mxu0 0.0
        %10865 = vmatpush1.msra.mxu0 0.0
        %10866 = vmatprep.subr.mxu0 0.0
        %10867 = vmatpush1.msra.mxu0 0.0
        %10868 = vmatprep.subr.mxu0 0.0
        %10869 = vmatpush1.msra.mxu0 0.0
        %10870 = vmatprep.subr.mxu0 0.0
        %10871 = vmatpush1.msra.mxu0 0.0
        %10872 = vmatprep.subr.mxu0 0.0
        %10873 = vmatpush1.msra.mxu0 0.0
        %10874 = vmatprep.subr.mxu0 0.0
        %10875 = vmatpush1.msra.mxu0 0.0
        %10876 = vmatprep.subr.mxu0 0.0
        %10877 = vmatpush1.msra.mxu0 0.0
        %10878 = vmatprep.subr.mxu0 0.0
        %10879 = vmatpush1.msra.mxu0 0.0
        %10880 = vmatprep.subr.mxu0 0.0
        %10881 = vmatpush1.msra.mxu0 0.0
        %10882 = vmatprep.subr.mxu0 0.0
        %10883 = vmatpush1.msra.mxu0 0.0
        %10884 = vmatprep.subr.mxu0 0.0
        %v10885 = vand.u32 %v10776, 4294901760
        %v10886 = vsub.f32 %v10776, %v10885
        %v10887 = vand.u32 %v10886, 4294901760
        %v10888 = vsub.f32 %v10886, %v10887
        %v10889 = vand.u32 %v10888, 4294901760
        %10890 = vmatpush1.msra.mxu0 %v10889
        %10891 = vmatprep.subr.mxu0 0.0
        %10892 = vmatpush2.msra.mxu0 0.0
        %10893 = vmatprep.subr.mxu0 0.0
        %10894 = vmatpush2.msra.mxu0 0.0
        %10895 = vmatprep.subr.mxu0 0.0
        %10896 = vmatpush2.msra.mxu0 0.0
        %10897 = vmatprep.subr.mxu0 0.0
        %10898 = vmatpush2.msra.mxu0 0.0
        %10899 = vmatprep.subr.mxu0 0.0
        %10900 = vmatpush2.msra.mxu0 0.0
        %10901 = vmatprep.subr.mxu0 0.0
        %10902 = vmatpush2.msra.mxu0 0.0
        %10903 = vmatprep.subr.mxu0 0.0
        %10904 = vmatpush2.msra.mxu0 0.0
        %10905 = vmatprep.subr.mxu0 0.0
        %10906 = vmatpush2.msra.mxu0 0.0
        %10907 = vmatprep.subr.mxu0 0.0
        %10908 = vmatpush2.msra.mxu0 0.0
        %10909 = vmatprep.subr.mxu0 0.0
        %10910 = vmatpush2.msra.mxu0 0.0
        %10911 = vmatprep.subr.mxu0 0.0
        %10912 = vmatpush2.msra.mxu0 0.0
        %10913 = vmatprep.subr.mxu0 0.0
        %10914 = vmatpush2.msra.mxu0 0.0
        %10915 = vmatprep.subr.mxu0 0.0
        %10916 = vmatpush2.msra.mxu0 0.0
        %10917 = vmatprep.subr.mxu0 0.0
        %10918 = vmatpush2.msra.mxu0 0.0
        %10919 = vmatprep.subr.mxu0 0.0
        %10920 = vmatpush2.msra.mxu0 0.0
        %10921 = vmatprep.subr.mxu0 0.0
        %10922 = vmatpush2.msra.mxu0 0.0
        %10923 = vmatprep.mubr.f32.mxu0 0.0
        %v10924 = vand.u32 %v1252, 4294901760
        %10925 = vmatmul.mubr.f32.gmra.mxu0 %v10924
        %v10926 = vpop.f32.mrf.mxu0
        %v10927 = vadd.f32 %v10851, %v10926
        %v10928 = vpop.f32.mrf.mxu0
        %10929 = vdwg.mxu0
        %10930 = vmatprep.subr.mxu0 0.0
        %10931 = vmatpush1.msra.mxu0 0.0
        %10932 = vmatprep.subr.mxu0 0.0
        %10933 = vmatpush1.msra.mxu0 0.0
        %10934 = vmatprep.subr.mxu0 0.0
        %10935 = vmatpush1.msra.mxu0 0.0
        %10936 = vmatprep.subr.mxu0 0.0
        %10937 = vmatpush1.msra.mxu0 0.0
        %10938 = vmatprep.subr.mxu0 0.0
        %10939 = vmatpush1.msra.mxu0 0.0
        %10940 = vmatprep.subr.mxu0 0.0
        %10941 = vmatpush1.msra.mxu0 0.0
        %10942 = vmatprep.subr.mxu0 0.0
        %10943 = vmatpush1.msra.mxu0 0.0
        %10944 = vmatprep.subr.mxu0 0.0
        %10945 = vmatpush1.msra.mxu0 0.0
        %10946 = vmatprep.subr.mxu0 0.0
        %10947 = vmatpush1.msra.mxu0 0.0
        %10948 = vmatprep.subr.mxu0 0.0
        %10949 = vmatpush1.msra.mxu0 0.0
        %10950 = vmatprep.subr.mxu0 0.0
        %10951 = vmatpush1.msra.mxu0 0.0
        %10952 = vmatprep.subr.mxu0 0.0
        %10953 = vmatpush1.msra.mxu0 0.0
        %10954 = vmatprep.subr.mxu0 0.0
        %10955 = vmatpush1.msra.mxu0 0.0
        %10956 = vmatprep.subr.mxu0 0.0
        %10957 = vmatpush1.msra.mxu0 0.0
        %10958 = vmatprep.subr.mxu0 0.0
        %10959 = vmatpush1.msra.mxu0 0.0
        %10960 = vmatprep.subr.mxu0 0.0
        %v10961 = vand.u32 %v10776, 4294901760
        %v10962 = vsub.f32 %v10776, %v10961
        %10963 = vmatpush1.msra.mxu0 %v10962
        %10964 = vmatprep.subr.mxu0 0.0
        %10965 = vmatpush2.msra.mxu0 0.0
        %10966 = vmatprep.subr.mxu0 0.0
        %10967 = vmatpush2.msra.mxu0 0.0
        %10968 = vmatprep.subr.mxu0 0.0
        %10969 = vmatpush2.msra.mxu0 0.0
        %10970 = vmatprep.subr.mxu0 0.0
        %10971 = vmatpush2.msra.mxu0 0.0
        %10972 = vmatprep.subr.mxu0 0.0
        %10973 = vmatpush2.msra.mxu0 0.0
        %10974 = vmatprep.subr.mxu0 0.0
        %10975 = vmatpush2.msra.mxu0 0.0
        %10976 = vmatprep.subr.mxu0 0.0
        %10977 = vmatpush2.msra.mxu0 0.0
        %10978 = vmatprep.subr.mxu0 0.0
        %10979 = vmatpush2.msra.mxu0 0.0
        %10980 = vmatprep.subr.mxu0 0.0
        %10981 = vmatpush2.msra.mxu0 0.0
        %10982 = vmatprep.subr.mxu0 0.0
        %10983 = vmatpush2.msra.mxu0 0.0
        %10984 = vmatprep.subr.mxu0 0.0
        %10985 = vmatpush2.msra.mxu0 0.0
        %10986 = vmatprep.subr.mxu0 0.0
        %10987 = vmatpush2.msra.mxu0 0.0
        %10988 = vmatprep.subr.mxu0 0.0
        %10989 = vmatpush2.msra.mxu0 0.0
        %10990 = vmatprep.subr.mxu0 0.0
        %10991 = vmatpush2.msra.mxu0 0.0
        %10992 = vmatprep.subr.mxu0 0.0
        %10993 = vmatpush2.msra.mxu0 0.0
        %10994 = vmatprep.subr.mxu0 0.0
        %10995 = vmatpush2.msra.mxu0 0.0
        %10996 = vmatprep.mubr.f32.mxu0 0.0
        %v10997 = vand.u32 %v1252, 4294901760
        %v10998 = vsub.f32 %v1252, %v10997
        %10999 = vmatmul.mubr.f32.gmra.mxu0 %v10998
        %v11000 = vpop.f32.mrf.mxu0
        %v11001 = vadd.f32 %v10927, %v11000
        %v11002 = vpop.f32.mrf.mxu0
        %11003 = vdwg.mxu0
        %11004 = vmatprep.subr.mxu0 0.0
        %11005 = vmatpush1.msra.mxu0 0.0
        %11006 = vmatprep.subr.mxu0 0.0
        %11007 = vmatpush1.msra.mxu0 0.0
        %11008 = vmatprep.subr.mxu0 0.0
        %11009 = vmatpush1.msra.mxu0 0.0
        %11010 = vmatprep.subr.mxu0 0.0
        %11011 = vmatpush1.msra.mxu0 0.0
        %11012 = vmatprep.subr.mxu0 0.0
        %11013 = vmatpush1.msra.mxu0 0.0
        %11014 = vmatprep.subr.mxu0 0.0
        %11015 = vmatpush1.msra.mxu0 0.0
        %11016 = vmatprep.subr.mxu0 0.0
        %11017 = vmatpush1.msra.mxu0 0.0
        %11018 = vmatprep.subr.mxu0 0.0
        %11019 = vmatpush1.msra.mxu0 0.0
        %11020 = vmatprep.subr.mxu0 0.0
        %11021 = vmatpush1.msra.mxu0 0.0
        %11022 = vmatprep.subr.mxu0 0.0
        %11023 = vmatpush1.msra.mxu0 0.0
        %11024 = vmatprep.subr.mxu0 0.0
        %11025 = vmatpush1.msra.mxu0 0.0
        %11026 = vmatprep.subr.mxu0 0.0
        %11027 = vmatpush1.msra.mxu0 0.0
        %11028 = vmatprep.subr.mxu0 0.0
        %11029 = vmatpush1.msra.mxu0 0.0
        %11030 = vmatprep.subr.mxu0 0.0
        %11031 = vmatpush1.msra.mxu0 0.0
        %11032 = vmatprep.subr.mxu0 0.0
        %11033 = vmatpush1.msra.mxu0 0.0
        %11034 = vmatprep.subr.mxu0 0.0
        %v11035 = vand.u32 %v10776, 4294901760
        %11036 = vmatpush1.msra.mxu0 %v11035
        %11037 = vmatprep.subr.mxu0 0.0
        %11038 = vmatpush2.msra.mxu0 0.0
        %11039 = vmatprep.subr.mxu0 0.0
        %11040 = vmatpush2.msra.mxu0 0.0
        %11041 = vmatprep.subr.mxu0 0.0
        %11042 = vmatpush2.msra.mxu0 0.0
        %11043 = vmatprep.subr.mxu0 0.0
        %11044 = vmatpush2.msra.mxu0 0.0
        %11045 = vmatprep.subr.mxu0 0.0
        %11046 = vmatpush2.msra.mxu0 0.0
        %11047 = vmatprep.subr.mxu0 0.0
        %11048 = vmatpush2.msra.mxu0 0.0
        %11049 = vmatprep.subr.mxu0 0.0
        %11050 = vmatpush2.msra.mxu0 0.0
        %11051 = vmatprep.subr.mxu0 0.0
        %11052 = vmatpush2.msra.mxu0 0.0
        %11053 = vmatprep.subr.mxu0 0.0
        %11054 = vmatpush2.msra.mxu0 0.0
        %11055 = vmatprep.subr.mxu0 0.0
        %11056 = vmatpush2.msra.mxu0 0.0
        %11057 = vmatprep.subr.mxu0 0.0
        %11058 = vmatpush2.msra.mxu0 0.0
        %11059 = vmatprep.subr.mxu0 0.0
        %11060 = vmatpush2.msra.mxu0 0.0
        %11061 = vmatprep.subr.mxu0 0.0
        %11062 = vmatpush2.msra.mxu0 0.0
        %11063 = vmatprep.subr.mxu0 0.0
        %11064 = vmatpush2.msra.mxu0 0.0
        %11065 = vmatprep.subr.mxu0 0.0
        %11066 = vmatpush2.msra.mxu0 0.0
        %11067 = vmatprep.subr.mxu0 0.0
        %11068 = vmatpush2.msra.mxu0 0.0
        %11069 = vmatprep.mubr.f32.mxu0 0.0
        %v11070 = vand.u32 %v1252, 4294901760
        %v11071 = vsub.f32 %v1252, %v11070
        %v11072 = vand.u32 %v11071, 4294901760
        %11073 = vmatmul.mubr.f32.gmra.mxu0 %v11072
        %v11074 = vpop.f32.mrf.mxu0
        %v11075 = vadd.f32 %v11001, %v11074
        %v11076 = vpop.f32.mrf.mxu0
        %11077 = vdwg.mxu0
        %11078 = vmatprep.subr.mxu0 0.0
        %11079 = vmatpush1.msra.mxu0 0.0
        %11080 = vmatprep.subr.mxu0 0.0
        %11081 = vmatpush1.msra.mxu0 0.0
        %11082 = vmatprep.subr.mxu0 0.0
        %11083 = vmatpush1.msra.mxu0 0.0
        %11084 = vmatprep.subr.mxu0 0.0
        %11085 = vmatpush1.msra.mxu0 0.0
        %11086 = vmatprep.subr.mxu0 0.0
        %11087 = vmatpush1.msra.mxu0 0.0
        %11088 = vmatprep.subr.mxu0 0.0
        %11089 = vmatpush1.msra.mxu0 0.0
        %11090 = vmatprep.subr.mxu0 0.0
        %11091 = vmatpush1.msra.mxu0 0.0
        %11092 = vmatprep.subr.mxu0 0.0
        %11093 = vmatpush1.msra.mxu0 0.0
        %11094 = vmatprep.subr.mxu0 0.0
        %11095 = vmatpush1.msra.mxu0 0.0
        %11096 = vmatprep.subr.mxu0 0.0
        %11097 = vmatpush1.msra.mxu0 0.0
        %11098 = vmatprep.subr.mxu0 0.0
        %11099 = vmatpush1.msra.mxu0 0.0
        %11100 = vmatprep.subr.mxu0 0.0
        %11101 = vmatpush1.msra.mxu0 0.0
        %11102 = vmatprep.subr.mxu0 0.0
        %11103 = vmatpush1.msra.mxu0 0.0
        %11104 = vmatprep.subr.mxu0 0.0
        %11105 = vmatpush1.msra.mxu0 0.0
        %11106 = vmatprep.subr.mxu0 0.0
        %11107 = vmatpush1.msra.mxu0 0.0
        %11108 = vmatprep.subr.mxu0 0.0
        %v11109 = vand.u32 %v10776, 4294901760
        %v11110 = vsub.f32 %v10776, %v11109
        %v11111 = vand.u32 %v11110, 4294901760
        %11112 = vmatpush1.msra.mxu0 %v11111
        %11113 = vmatprep.subr.mxu0 0.0
        %11114 = vmatpush2.msra.mxu0 0.0
        %11115 = vmatprep.subr.mxu0 0.0
        %11116 = vmatpush2.msra.mxu0 0.0
        %11117 = vmatprep.subr.mxu0 0.0
        %11118 = vmatpush2.msra.mxu0 0.0
        %11119 = vmatprep.subr.mxu0 0.0
        %11120 = vmatpush2.msra.mxu0 0.0
        %11121 = vmatprep.subr.mxu0 0.0
        %11122 = vmatpush2.msra.mxu0 0.0
        %11123 = vmatprep.subr.mxu0 0.0
        %11124 = vmatpush2.msra.mxu0 0.0
        %11125 = vmatprep.subr.mxu0 0.0
        %11126 = vmatpush2.msra.mxu0 0.0
        %11127 = vmatprep.subr.mxu0 0.0
        %11128 = vmatpush2.msra.mxu0 0.0
        %11129 = vmatprep.subr.mxu0 0.0
        %11130 = vmatpush2.msra.mxu0 0.0
        %11131 = vmatprep.subr.mxu0 0.0
        %11132 = vmatpush2.msra.mxu0 0.0
        %11133 = vmatprep.subr.mxu0 0.0
        %11134 = vmatpush2.msra.mxu0 0.0
        %11135 = vmatprep.subr.mxu0 0.0
        %11136 = vmatpush2.msra.mxu0 0.0
        %11137 = vmatprep.subr.mxu0 0.0
        %11138 = vmatpush2.msra.mxu0 0.0
        %11139 = vmatprep.subr.mxu0 0.0
        %11140 = vmatpush2.msra.mxu0 0.0
        %11141 = vmatprep.subr.mxu0 0.0
        %11142 = vmatpush2.msra.mxu0 0.0
        %11143 = vmatprep.subr.mxu0 0.0
        %11144 = vmatpush2.msra.mxu0 0.0
        %11145 = vmatprep.mubr.f32.mxu0 0.0
        %v11146 = vand.u32 %v1252, 4294901760
        %11147 = vmatmul.mubr.f32.gmra.mxu0 %v11146
        %v11148 = vpop.f32.mrf.mxu0
        %v11149 = vadd.f32 %v11075, %v11148
        %v11150 = vpop.f32.mrf.mxu0
        %11151 = vdwg.mxu0
        %11152 = vmatprep.subr.mxu0 0.0
        %11153 = vmatpush1.msra.mxu0 0.0
        %11154 = vmatprep.subr.mxu0 0.0
        %11155 = vmatpush1.msra.mxu0 0.0
        %11156 = vmatprep.subr.mxu0 0.0
        %11157 = vmatpush1.msra.mxu0 0.0
        %11158 = vmatprep.subr.mxu0 0.0
        %11159 = vmatpush1.msra.mxu0 0.0
        %11160 = vmatprep.subr.mxu0 0.0
        %11161 = vmatpush1.msra.mxu0 0.0
        %11162 = vmatprep.subr.mxu0 0.0
        %11163 = vmatpush1.msra.mxu0 0.0
        %11164 = vmatprep.subr.mxu0 0.0
        %11165 = vmatpush1.msra.mxu0 0.0
        %11166 = vmatprep.subr.mxu0 0.0
        %11167 = vmatpush1.msra.mxu0 0.0
        %11168 = vmatprep.subr.mxu0 0.0
        %11169 = vmatpush1.msra.mxu0 0.0
        %11170 = vmatprep.subr.mxu0 0.0
        %11171 = vmatpush1.msra.mxu0 0.0
        %11172 = vmatprep.subr.mxu0 0.0
        %11173 = vmatpush1.msra.mxu0 0.0
        %11174 = vmatprep.subr.mxu0 0.0
        %11175 = vmatpush1.msra.mxu0 0.0
        %11176 = vmatprep.subr.mxu0 0.0
        %11177 = vmatpush1.msra.mxu0 0.0
        %11178 = vmatprep.subr.mxu0 0.0
        %11179 = vmatpush1.msra.mxu0 0.0
        %11180 = vmatprep.subr.mxu0 0.0
        %11181 = vmatpush1.msra.mxu0 0.0
        %11182 = vmatprep.subr.mxu0 0.0
        %v11183 = vand.u32 %v10776, 4294901760
        %11184 = vmatpush1.msra.mxu0 %v11183
        %11185 = vmatprep.subr.mxu0 0.0
        %11186 = vmatpush2.msra.mxu0 0.0
        %11187 = vmatprep.subr.mxu0 0.0
        %11188 = vmatpush2.msra.mxu0 0.0
        %11189 = vmatprep.subr.mxu0 0.0
        %11190 = vmatpush2.msra.mxu0 0.0
        %11191 = vmatprep.subr.mxu0 0.0
        %11192 = vmatpush2.msra.mxu0 0.0
        %11193 = vmatprep.subr.mxu0 0.0
        %11194 = vmatpush2.msra.mxu0 0.0
        %11195 = vmatprep.subr.mxu0 0.0
        %11196 = vmatpush2.msra.mxu0 0.0
        %11197 = vmatprep.subr.mxu0 0.0
        %11198 = vmatpush2.msra.mxu0 0.0
        %11199 = vmatprep.subr.mxu0 0.0
        %11200 = vmatpush2.msra.mxu0 0.0
        %11201 = vmatprep.subr.mxu0 0.0
        %11202 = vmatpush2.msra.mxu0 0.0
        %11203 = vmatprep.subr.mxu0 0.0
        %11204 = vmatpush2.msra.mxu0 0.0
        %11205 = vmatprep.subr.mxu0 0.0
        %11206 = vmatpush2.msra.mxu0 0.0
        %11207 = vmatprep.subr.mxu0 0.0
        %11208 = vmatpush2.msra.mxu0 0.0
        %11209 = vmatprep.subr.mxu0 0.0
        %11210 = vmatpush2.msra.mxu0 0.0
        %11211 = vmatprep.subr.mxu0 0.0
        %11212 = vmatpush2.msra.mxu0 0.0
        %11213 = vmatprep.subr.mxu0 0.0
        %11214 = vmatpush2.msra.mxu0 0.0
        %11215 = vmatprep.subr.mxu0 0.0
        %11216 = vmatpush2.msra.mxu0 0.0
        %11217 = vmatprep.mubr.f32.mxu0 0.0
        %v11218 = vand.u32 %v1252, 4294901760
        %11219 = vmatmul.mubr.f32.gmra.mxu0 %v11218
        %v11220 = vpop.f32.mrf.mxu0
        %v11221 = vadd.f32 %v11149, %v11220
        %v11222 = vpop.f32.mrf.mxu0
        %11223 = vdwg.mxu0
        %v11224 = vadd.f32 %v11221, %v1703
        %v11225 = vmax.f32 %v11224, 0.0
        %11227 = vrot.lane.b32.xlu0 %v11225, 96
        %v11228 = vpop.permute.xlu0 %11227
        %11230 = vst.msk [vmem:[%s337 + $0x8] sm:$0xff] %vm5793, %v11228
        %s11231 = sand.u32 %s188, 1
        %s11232 = scalar_lea.sflag [#allocation4], %s11231
        %s11233 = sand.u32 %s188, 1
        %s11234 = smul.addr %s11233, 16
        %s11235 = scalar_lea.vmem [#allocation8], %s11234
        // Predicated region
        $region57: #{tpu_custom_call.1} parent=43 // pred_check
          %p11236 = pneg %p198
        $region58: #{tpu_custom_call.1} parent=43 // pred_check_branch
          %11238 = sbr.rel (%p11236) target = $region60
        $region59: #{tpu_custom_call.1} parent=43 // pred_region
          %s11239 = smul.u32 2, %s31
          %s11241 = ssub.s32 256, 256
          %11242 = vsyncadd %s11232, %s11241
          %s11243 = smul.addr %s30, 2
          %s11244 = sadd.s32 %s11239, %s11243
          %s11245 = smul.addr %s11244, 128
          %s11246 = scalar_lea.hbm %s6, %s11245
          %s11248 = sshll.u32 %s11235, 4
          %s11249 = int_to_ptr.vmem [resolvable:$true] %s11248
          %11251 = dma.vmem_to_hbm [thread:$0]  %s11249, 256, %s11246, %s11232
        $region60: #{tpu_custom_call.1} parent=43 // pred_fallthru
          _
      $region44: #{tpu_custom_call.1} parent=5 // pred_fallthru
        _
      %p11252 = scmp.le.s32.totalorder 2, %s21
      // Predicated region
      $region61: #{tpu_custom_call.1} parent=5 // pred_check
        %p11253 = pneg %p11252
      $region62: #{tpu_custom_call.1} parent=5 // pred_check_branch
        %11255 = sbr.rel (%p11253) target = $region64
      $region63: #{tpu_custom_call.1} parent=5 // pred_region
        %s11256 = ssub.s32 %s21, 2
        // Predicated region
        $region65: #{tpu_custom_call.1} parent=63 // pred_check
          %p11257 = pneg %p204
        $region66: #{tpu_custom_call.1} parent=63 // pred_check_branch
          %11259 = sbr.rel (%p11257) target = $region68
        $region67: #{tpu_custom_call.1} parent=63 // pred_region
          %s11260 = sand.u32 %s189, 1
          %s11261 = scalar_lea.sflag [#allocation4], %s11260
          %s11262 = sand.u32 %s189, 1
          %s11263 = smul.addr %s11262, 16
          %s11264 = scalar_lea.vmem [#allocation8], %s11263
          %11265 = dma.done %s11261, 256
        $region68: #{tpu_custom_call.1} parent=63 // pred_fallthru
          _
      $region64: #{tpu_custom_call.1} parent=5 // pred_fallthru
        _
    $region6: #{tpu_custom_call.1} parent=1 // loop_footer
      %s25 = sadd.s32 1, %s21
    $region7: #{tpu_custom_call.1} parent=1 // loop_footer_branch
      %20 = sbr.rel target = $region3
    $region8: #{tpu_custom_call.1} parent=1 // loop_exit
      _
    %11266 = vsyncpa [#allocation3], 1
    %s11267 = scalar_lea.sflag [#allocation3], 1
    %11268 = vsyncpa %s11267, 1
    %11269 = vsyncpa [#allocation6], 1
    %s11270 = scalar_lea.sflag [#allocation6], 1
    %11271 = vsyncpa %s11270, 1
    %11272 = vsyncpa [#allocation4], 1
    %s11273 = scalar_lea.sflag [#allocation4], 1
    %11274 = vsyncpa %s11273, 1

</llo_original>
